<compile_context>
chip_gen: v6e
topology: v6e:2x2x1
jax: 0.10.0
libtpu: 0.0.40
codegen_flags: <defaults>
</compile_context>

<pallas_src>
import math

import jax
import jax.numpy as jnp
from jax import lax
from jax.experimental import pallas as pl
from jax.experimental.pallas import tpu as pltpu

BN_EPS = 1e-5
NEG_BIG = -9e15  # same large negative used by SemGraphConv


# ----------------------------------------------------------------------------
# Fused whole-network kernel.
# ----------------------------------------------------------------------------
def _semgcn_kernel(x_ref, adj_ref,
                   w_in_ref, b_in_ref, e_in_ref, g_in_ref, bt_in_ref,
                   w_res_ref, b_res_ref, e_res_ref, g_res_ref, bt_res_ref,
                   w_out_ref, b_out_ref, e_out_ref,
                   o_ref):
    adj = adj_ref[...]                       # (J, J) binary mask
    J = adj.shape[0]
    BJ = x_ref.shape[0]                      # B * J
    B = BJ // J

    # ---- batch/layer-independent constants (built once, reused by all layers)
    rJ = lax.broadcasted_iota(jnp.int32, (J, J), 0)
    cJ = lax.broadcasted_iota(jnp.int32, (J, J), 1)
    eye = (rJ == cJ).astype(jnp.float32)                       # (J, J)

    # P[p, j]  = 1 iff j == p mod J            (BJ, J)
    # Pt[j, q] = 1 iff j == q mod J            (J, BJ)
    # blk[p,q] = 1 iff p // J == q // J        (BJ, BJ) block-diagonal mask
    rP = lax.broadcasted_iota(jnp.int32, (BJ, J), 0)
    cP = lax.broadcasted_iota(jnp.int32, (BJ, J), 1)
    rT = lax.broadcasted_iota(jnp.int32, (J, BJ), 0)
    cT = lax.broadcasted_iota(jnp.int32, (J, BJ), 1)
    rB = lax.broadcasted_iota(jnp.int32, (BJ, BJ), 0)
    cB = lax.broadcasted_iota(jnp.int32, (BJ, BJ), 1)
    P = jnp.zeros((BJ, J), jnp.float32)
    Pt = jnp.zeros((J, BJ), jnp.float32)
    blk = jnp.zeros((BJ, BJ), jnp.float32)
    for b in range(B):  # B is a static Python int; avoids vector int div/mod
        P = P + (rP == cP + b * J).astype(jnp.float32)
        Pt = Pt + (rT + b * J == cT).astype(jnp.float32)
        rin = jnp.logical_and(rB >= b * J, rB < (b + 1) * J)
        cin_ = jnp.logical_and(cB >= b * J, cB < (b + 1) * J)
        blk = blk + jnp.logical_and(rin, cin_).astype(jnp.float32)

    masked_neg = (1.0 - adj) * NEG_BIG

    def attention(e):
        # masked row-softmax over the (J, J) adjacency, done once per layer
        logits = adj * e + masked_neg
        mx = jnp.max(logits, axis=1, keepdims=True)
        p = jnp.exp(logits - mx)
        a = p / jnp.sum(p, axis=1, keepdims=True)              # (J, J)
        # diagonal of a, expanded to (BJ, 1) for an elementwise row scale
        diag_row = jnp.sum(a * eye, axis=0, keepdims=True)     # (1, J)
        diag_big = jnp.sum(P * diag_row, axis=1, keepdims=True)  # (BJ, 1)
        # off-diagonal part, expanded to a block-diagonal (BJ, BJ) matrix so
        # the aggregation over all batch elements is ONE 2-D matmul
        a_off = a * (1.0 - eye)
        a_big = jnp.dot(jnp.dot(P, a_off, preferred_element_type=jnp.float32),
                        Pt, preferred_element_type=jnp.float32) * blk
        return diag_big, a_big

    def gconv(h, wcat, bias, e):
        # h: (BJ, Cin), wcat: (Cin, 2*Cout) = [W0 | W1], bias: (1, Cout)
        cout = wcat.shape[1] // 2
        diag_big, a_big = attention(e)
        hc = jnp.dot(h, wcat, preferred_element_type=jnp.float32)  # (BJ, 2*Cout)
        h0 = hc[:, :cout]
        h1 = hc[:, cout:]
        return (diag_big * h0
                + jnp.dot(a_big, h1, preferred_element_type=jnp.float32)
                + bias)

    def bn_relu(y, gamma, beta):
        # BatchNorm1d training-mode stats over (B, J) == flattened rows,
        # biased variance, eps=1e-5, affine; then ReLU.
        inv_n = 1.0 / y.shape[0]
        mean = jnp.sum(y, axis=0, keepdims=True) * inv_n
        c = y - mean
        var = jnp.sum(c * c, axis=0, keepdims=True) * inv_n
        return jnp.maximum(c * lax.rsqrt(var + BN_EPS) * gamma + beta, 0.0)

    # ---- input _GraphConv: gconv + BN + ReLU
    h = bn_relu(gconv(x_ref[...], w_in_ref[...], b_in_ref[...], e_in_ref[...]),
                g_in_ref[...], bt_in_ref[...])

    # ---- _ResGraphConv blocks (parameters stacked along axis 0)
    n_res = w_res_ref.shape[0]          # 2 * num_layers gconvs
    for i in range(0, n_res, 2):
        residual = h
        h = bn_relu(gconv(h, w_res_ref[i], b_res_ref[i], e_res_ref[i]),
                    g_res_ref[i], bt_res_ref[i])
        h = bn_relu(gconv(h, w_res_ref[i + 1], b_res_ref[i + 1], e_res_ref[i + 1]),
                    g_res_ref[i + 1], bt_res_ref[i + 1])
        h = residual + h

    # ---- output SemGraphConv (no BN / ReLU)
    o_ref[...] = gconv(h, w_out_ref[...], b_out_ref[...], e_out_ref[...])


# ----------------------------------------------------------------------------
# Parameter init (deterministic, mirrors the PyTorch __init__ shapes).
# ----------------------------------------------------------------------------
def _init_sem_gconv(key, cin, cout, J):
    kw, kb = jax.random.split(key)
    # xavier_uniform_ with gain=1.414 on a (2, cin, cout) tensor
    fan_in, fan_out = cin * cout, 2 * cout
    bound = 1.414 * math.sqrt(6.0 / (fan_in + fan_out))
    W = jax.random.uniform(kw, (2, cin, cout), jnp.float32, -bound, bound)
    stdv = 1.0 / math.sqrt(cout)
    b = jax.random.uniform(kb, (cout,), jnp.float32, -stdv, stdv)
    e = jnp.ones((J, J), jnp.float32)
    return {"W": W, "b": b, "e": e}


def _init_graph_conv(key, cin, cout, J):
    p = _init_sem_gconv(key, cin, cout, J)
    p["gamma"] = jnp.ones((cout,), jnp.float32)   # BatchNorm1d weight
    p["beta"] = jnp.zeros((cout,), jnp.float32)   # BatchNorm1d bias
    return p


def init_semgcn(key, J, hid_dim, coords_dim, num_layers):
    keys = jax.random.split(key, 2 + 2 * num_layers)
    params = {"input": _init_graph_conv(keys[0], coords_dim[0], hid_dim, J),
              "res": [],
              "output": _init_sem_gconv(keys[-1], hid_dim, coords_dim[1], J)}
    for i in range(num_layers):
        p1 = _init_graph_conv(keys[1 + 2 * i], hid_dim, hid_dim, J)
        p2 = _init_graph_conv(keys[2 + 2 * i], hid_dim, hid_dim, J)
        params["res"].append((p1, p2))
    return params


# ----------------------------------------------------------------------------
# Wrapper: pack parameters and run the single fused pallas_call.
# ----------------------------------------------------------------------------
def semgcn_forward(x, params, adj):
    J = adj.shape[0]
    B = x.shape[0]
    cin = params["input"]["W"].shape[1]
    cout = params["output"]["W"].shape[2]
    x2d = x.reshape(B * J, cin).astype(jnp.float32)

    def cat_w(W):          # (2, cin, cout) -> (cin, 2*cout) = [W0 | W1]
        return jnp.concatenate([W[0], W[1]], axis=1)

    pin = params["input"]
    w_in = cat_w(pin["W"])
    b_in = pin["b"].reshape(1, -1)
    g_in = pin["gamma"].reshape(1, -1)
    bt_in = pin["beta"].reshape(1, -1)

    res_list = []
    for (p1, p2) in params["res"]:
        res_list += [p1, p2]
    assert res_list, "expect num_layers >= 1"
    w_res = jnp.stack([cat_w(p["W"]) for p in res_list])          # (2L, H, 2H)
    b_res = jnp.stack([p["b"].reshape(1, -1) for p in res_list])   # (2L, 1, H)
    e_res = jnp.stack([p["e"] for p in res_list])                  # (2L, J, J)
    g_res = jnp.stack([p["gamma"].reshape(1, -1) for p in res_list])
    bt_res = jnp.stack([p["beta"].reshape(1, -1) for p in res_list])

    pout = params["output"]
    w_out = cat_w(pout["W"])
    b_out = pout["b"].reshape(1, -1)

    vmem = pl.BlockSpec(memory_space=pltpu.MemorySpace.VMEM)
    out2d = pl.pallas_call(
        _semgcn_kernel,
        out_shape=jax.ShapeDtypeStruct((B * J, cout), jnp.float32),
        in_specs=[vmem] * 15,
        out_specs=vmem,
    )(x2d, adj.astype(jnp.float32),
      w_in, b_in, pin["e"], g_in, bt_in,
      w_res, b_res, e_res, g_res, bt_res,
      w_out, b_out, pout["e"])
    return out2d.reshape(B, J, cout)


# ----------------------------------------------------------------------------
if __name__ == "__main__":
    J = 16            # number of joints (len(adj))
    HID = 32          # hid_dim
    COORDS = (5, 3)   # coords_dim
    NUM_LAYERS = 4
    B = 2

    # simple chain graph with self loops as the adjacency mask
    adj = jnp.eye(J, dtype=jnp.float32)
    adj = adj + jnp.eye(J, k=1, dtype=jnp.float32) + jnp.eye(J, k=-1, dtype=jnp.float32)
    adj = jnp.clip(adj, 0.0, 1.0)

    key = jax.random.PRNGKey(0)
    k_param, k_x = jax.random.split(key)
    params = init_semgcn(k_param, J, HID, COORDS, NUM_LAYERS)
    x = jax.random.normal(k_x, (B, J, COORDS[0]), dtype=jnp.float32)

    fwd = jax.jit(semgcn_forward)
    out = fwd(x, params, adj)
    out = jax.block_until_ready(out)

    assert out.shape == (B, J, COORDS[1]), out.shape
    assert out.dtype == jnp.float32
    assert bool(jnp.all(jnp.isfinite(out)))
    print("KERNEL_OK")
</pallas_src>

<mosaic_0001>
module attributes {stable_mosaic.version = 11 : i64} {
  func.func @_semgcn_kernel(%arg0: memref<32x5xf32, #tpu.memory_space<vmem>>, %arg1: memref<16x16xf32, #tpu.memory_space<vmem>>, %arg2: memref<5x64xf32, #tpu.memory_space<vmem>>, %arg3: memref<1x32xf32, #tpu.memory_space<vmem>>, %arg4: memref<16x16xf32, #tpu.memory_space<vmem>>, %arg5: memref<1x32xf32, #tpu.memory_space<vmem>>, %arg6: memref<1x32xf32, #tpu.memory_space<vmem>>, %arg7: memref<8x32x64xf32, #tpu.memory_space<vmem>>, %arg8: memref<8x1x32xf32, #tpu.memory_space<vmem>>, %arg9: memref<8x16x16xf32, #tpu.memory_space<vmem>>, %arg10: memref<8x1x32xf32, #tpu.memory_space<vmem>>, %arg11: memref<8x1x32xf32, #tpu.memory_space<vmem>>, %arg12: memref<32x6xf32, #tpu.memory_space<vmem>>, %arg13: memref<1x3xf32, #tpu.memory_space<vmem>>, %arg14: memref<16x16xf32, #tpu.memory_space<vmem>>, %arg15: memref<32x3xf32, #tpu.memory_space<vmem>>) attributes {dimension_semantics = [], scalar_prefetch = 0 : i64, scratch_operands = 0 : i64, tpu.core_type = #tpu.core_type<tc>} {
    %c0 = arith.constant 0 : index
    %c0_0 = arith.constant 0 : index
    %0 = vector.load %arg1[%c0, %c0_0] : memref<16x16xf32, #tpu.memory_space<vmem>>, vector<16x16xf32>
    %1 = tpu.iota {dimensions = array<i32: 0>} : vector<16x16xi32>
    %2 = tpu.iota {dimensions = array<i32: 1>} : vector<16x16xi32>
    %3 = arith.cmpi eq, %1, %2 : vector<16x16xi32>
    %4 = arith.extui %3 : vector<16x16xi1> to vector<16x16xi32>
    %5 = arith.sitofp %4 : vector<16x16xi32> to vector<16x16xf32>
    %6 = tpu.iota {dimensions = array<i32: 0>} : vector<32x16xi32>
    %7 = tpu.iota {dimensions = array<i32: 1>} : vector<32x16xi32>
    %8 = tpu.iota {dimensions = array<i32: 0>} : vector<16x32xi32>
    %9 = tpu.iota {dimensions = array<i32: 1>} : vector<16x32xi32>
    %10 = tpu.iota {dimensions = array<i32: 0>} : vector<32x32xi32>
    %11 = tpu.iota {dimensions = array<i32: 1>} : vector<32x32xi32>
    %cst = arith.constant 0.000000e+00 : f32
    %12 = vector.broadcast %cst : f32 to vector<32x16xf32>
    %cst_1 = arith.constant 0.000000e+00 : f32
    %13 = vector.broadcast %cst_1 : f32 to vector<16x32xf32>
    %cst_2 = arith.constant 0.000000e+00 : f32
    %14 = vector.broadcast %cst_2 : f32 to vector<32x32xf32>
    %c0_i32 = arith.constant 0 : i32
    %15 = vector.broadcast %c0_i32 : i32 to vector<32x16xi32>
    %16 = arith.addi %7, %15 : vector<32x16xi32>
    %17 = arith.cmpi eq, %6, %16 : vector<32x16xi32>
    %18 = arith.extui %17 : vector<32x16xi1> to vector<32x16xi32>
    %19 = arith.sitofp %18 : vector<32x16xi32> to vector<32x16xf32>
    %20 = arith.addf %12, %19 : vector<32x16xf32>
    %c0_i32_3 = arith.constant 0 : i32
    %21 = vector.broadcast %c0_i32_3 : i32 to vector<16x32xi32>
    %22 = arith.addi %8, %21 : vector<16x32xi32>
    %23 = arith.cmpi eq, %22, %9 : vector<16x32xi32>
    %24 = arith.extui %23 : vector<16x32xi1> to vector<16x32xi32>
    %25 = arith.sitofp %24 : vector<16x32xi32> to vector<16x32xf32>
    %26 = arith.addf %13, %25 : vector<16x32xf32>
    %c0_i32_4 = arith.constant 0 : i32
    %27 = vector.broadcast %c0_i32_4 : i32 to vector<32x32xi32>
    %28 = arith.cmpi sge, %10, %27 : vector<32x32xi32>
    %c16_i32 = arith.constant 16 : i32
    %29 = vector.broadcast %c16_i32 : i32 to vector<32x32xi32>
    %30 = arith.cmpi slt, %10, %29 : vector<32x32xi32>
    %31 = arith.andi %28, %30 : vector<32x32xi1>
    %c0_i32_5 = arith.constant 0 : i32
    %32 = vector.broadcast %c0_i32_5 : i32 to vector<32x32xi32>
    %33 = arith.cmpi sge, %11, %32 : vector<32x32xi32>
    %c16_i32_6 = arith.constant 16 : i32
    %34 = vector.broadcast %c16_i32_6 : i32 to vector<32x32xi32>
    %35 = arith.cmpi slt, %11, %34 : vector<32x32xi32>
    %36 = arith.andi %33, %35 : vector<32x32xi1>
    %37 = arith.andi %31, %36 : vector<32x32xi1>
    %38 = arith.extui %37 : vector<32x32xi1> to vector<32x32xi32>
    %39 = arith.sitofp %38 : vector<32x32xi32> to vector<32x32xf32>
    %40 = arith.addf %14, %39 : vector<32x32xf32>
    %c16_i32_7 = arith.constant 16 : i32
    %41 = vector.broadcast %c16_i32_7 : i32 to vector<32x16xi32>
    %42 = arith.addi %7, %41 : vector<32x16xi32>
    %43 = arith.cmpi eq, %6, %42 : vector<32x16xi32>
    %44 = arith.extui %43 : vector<32x16xi1> to vector<32x16xi32>
    %45 = arith.sitofp %44 : vector<32x16xi32> to vector<32x16xf32>
    %46 = arith.addf %20, %45 : vector<32x16xf32>
    %c16_i32_8 = arith.constant 16 : i32
    %47 = vector.broadcast %c16_i32_8 : i32 to vector<16x32xi32>
    %48 = arith.addi %8, %47 : vector<16x32xi32>
    %49 = arith.cmpi eq, %48, %9 : vector<16x32xi32>
    %50 = arith.extui %49 : vector<16x32xi1> to vector<16x32xi32>
    %51 = arith.sitofp %50 : vector<16x32xi32> to vector<16x32xf32>
    %52 = arith.addf %26, %51 : vector<16x32xf32>
    %c16_i32_9 = arith.constant 16 : i32
    %53 = vector.broadcast %c16_i32_9 : i32 to vector<32x32xi32>
    %54 = arith.cmpi sge, %10, %53 : vector<32x32xi32>
    %c32_i32 = arith.constant 32 : i32
    %55 = vector.broadcast %c32_i32 : i32 to vector<32x32xi32>
    %56 = arith.cmpi slt, %10, %55 : vector<32x32xi32>
    %57 = arith.andi %54, %56 : vector<32x32xi1>
    %c16_i32_10 = arith.constant 16 : i32
    %58 = vector.broadcast %c16_i32_10 : i32 to vector<32x32xi32>
    %59 = arith.cmpi sge, %11, %58 : vector<32x32xi32>
    %c32_i32_11 = arith.constant 32 : i32
    %60 = vector.broadcast %c32_i32_11 : i32 to vector<32x32xi32>
    %61 = arith.cmpi slt, %11, %60 : vector<32x32xi32>
    %62 = arith.andi %59, %61 : vector<32x32xi1>
    %63 = arith.andi %57, %62 : vector<32x32xi1>
    %64 = arith.extui %63 : vector<32x32xi1> to vector<32x32xi32>
    %65 = arith.sitofp %64 : vector<32x32xi32> to vector<32x32xf32>
    %66 = arith.addf %40, %65 : vector<32x32xf32>
    %cst_12 = arith.constant 1.000000e+00 : f32
    %67 = vector.broadcast %cst_12 : f32 to vector<16x16xf32>
    %68 = arith.subf %67, %0 : vector<16x16xf32>
    %cst_13 = arith.constant -9.000000e+15 : f32
    %69 = vector.broadcast %cst_13 : f32 to vector<16x16xf32>
    %70 = arith.mulf %68, %69 : vector<16x16xf32>
    %c0_14 = arith.constant 0 : index
    %c0_15 = arith.constant 0 : index
    %71 = vector.load %arg0[%c0_14, %c0_15] : memref<32x5xf32, #tpu.memory_space<vmem>>, vector<32x5xf32>
    %c0_16 = arith.constant 0 : index
    %c0_17 = arith.constant 0 : index
    %72 = vector.load %arg2[%c0_16, %c0_17] : memref<5x64xf32, #tpu.memory_space<vmem>>, vector<5x64xf32>
    %c0_18 = arith.constant 0 : index
    %c0_19 = arith.constant 0 : index
    %73 = vector.load %arg3[%c0_18, %c0_19] : memref<1x32xf32, #tpu.memory_space<vmem>>, vector<1x32xf32>
    %c0_20 = arith.constant 0 : index
    %c0_21 = arith.constant 0 : index
    %74 = vector.load %arg4[%c0_20, %c0_21] : memref<16x16xf32, #tpu.memory_space<vmem>>, vector<16x16xf32>
    %75 = arith.mulf %0, %74 : vector<16x16xf32>
    %76 = arith.addf %75, %70 : vector<16x16xf32>
    %cst_22 = arith.constant dense<0xFF800000> : vector<16xf32>
    %77 = vector.multi_reduction <maximumf>, %76, %cst_22 [1] : vector<16x16xf32> to vector<16xf32>
    %78 = vector.shape_cast %77 : vector<16xf32> to vector<16x1xf32>
    %79 = vector.broadcast %78 : vector<16x1xf32> to vector<16x16xf32>
    %80 = arith.subf %76, %79 : vector<16x16xf32>
    %81 = math.exp %80 : vector<16x16xf32>
    %cst_23 = arith.constant dense<0.000000e+00> : vector<16xf32>
    %82 = vector.multi_reduction <add>, %81, %cst_23 [1] : vector<16x16xf32> to vector<16xf32>
    %83 = vector.shape_cast %82 : vector<16xf32> to vector<16x1xf32>
    %84 = vector.broadcast %83 : vector<16x1xf32> to vector<16x16xf32>
    %85 = arith.divf %81, %84 : vector<16x16xf32>
    %86 = arith.mulf %85, %5 : vector<16x16xf32>
    %cst_24 = arith.constant dense<0.000000e+00> : vector<16xf32>
    %87 = vector.multi_reduction <add>, %86, %cst_24 [0] : vector<16x16xf32> to vector<16xf32>
    %88 = vector.shape_cast %87 : vector<16xf32> to vector<1x16xf32>
    %89 = vector.broadcast %88 : vector<1x16xf32> to vector<32x16xf32>
    %90 = arith.mulf %46, %89 : vector<32x16xf32>
    %cst_25 = arith.constant dense<0.000000e+00> : vector<32xf32>
    %91 = vector.multi_reduction <add>, %90, %cst_25 [1] : vector<32x16xf32> to vector<32xf32>
    %92 = vector.shape_cast %91 : vector<32xf32> to vector<32x1xf32>
    %cst_26 = arith.constant 1.000000e+00 : f32
    %93 = vector.broadcast %cst_26 : f32 to vector<16x16xf32>
    %94 = arith.subf %93, %5 : vector<16x16xf32>
    %95 = arith.mulf %85, %94 : vector<16x16xf32>
    %cst_27 = arith.constant dense<0.000000e+00> : vector<32x16xf32>
    %96 = tpu.matmul %46, %95, %cst_27 {dimension_numbers = #tpu.dot_dimension_numbers<[1], [0], [0], [1], [0, 0, 1, 1], [], []>} : vector<32x16xf32>, vector<16x16xf32>, vector<32x16xf32> -> vector<32x16xf32>
    %cst_28 = arith.constant dense<0.000000e+00> : vector<32x32xf32>
    %97 = tpu.matmul %96, %52, %cst_28 {dimension_numbers = #tpu.dot_dimension_numbers<[1], [0], [0], [1], [0, 0, 1, 1], [], []>} : vector<32x16xf32>, vector<16x32xf32>, vector<32x32xf32> -> vector<32x32xf32>
    %98 = arith.mulf %97, %66 : vector<32x32xf32>
    %cst_29 = arith.constant dense<0.000000e+00> : vector<32x64xf32>
    %99 = tpu.matmul %71, %72, %cst_29 {dimension_numbers = #tpu.dot_dimension_numbers<[1], [0], [0], [1], [0, 0, 1, 1], [], []>} : vector<32x5xf32>, vector<5x64xf32>, vector<32x64xf32> -> vector<32x64xf32>
    %100 = vector.extract_strided_slice %99 {offsets = [0, 0], sizes = [32, 32], strides = [1, 1]} : vector<32x64xf32> to vector<32x32xf32>
    %101 = vector.extract_strided_slice %99 {offsets = [0, 32], sizes = [32, 32], strides = [1, 1]} : vector<32x64xf32> to vector<32x32xf32>
    %102 = vector.broadcast %92 : vector<32x1xf32> to vector<32x32xf32>
    %103 = arith.mulf %102, %100 : vector<32x32xf32>
    %cst_30 = arith.constant dense<0.000000e+00> : vector<32x32xf32>
    %104 = tpu.matmul %98, %101, %cst_30 {dimension_numbers = #tpu.dot_dimension_numbers<[1], [0], [0], [1], [0, 0, 1, 1], [], []>} : vector<32x32xf32>, vector<32x32xf32>, vector<32x32xf32> -> vector<32x32xf32>
    %105 = arith.addf %103, %104 : vector<32x32xf32>
    %106 = vector.broadcast %73 : vector<1x32xf32> to vector<32x32xf32>
    %107 = arith.addf %105, %106 : vector<32x32xf32>
    %c0_31 = arith.constant 0 : index
    %c0_32 = arith.constant 0 : index
    %108 = vector.load %arg5[%c0_31, %c0_32] : memref<1x32xf32, #tpu.memory_space<vmem>>, vector<1x32xf32>
    %c0_33 = arith.constant 0 : index
    %c0_34 = arith.constant 0 : index
    %109 = vector.load %arg6[%c0_33, %c0_34] : memref<1x32xf32, #tpu.memory_space<vmem>>, vector<1x32xf32>
    %cst_35 = arith.constant dense<0.000000e+00> : vector<32xf32>
    %110 = vector.multi_reduction <add>, %107, %cst_35 [0] : vector<32x32xf32> to vector<32xf32>
    %111 = vector.shape_cast %110 : vector<32xf32> to vector<1x32xf32>
    %cst_36 = arith.constant 3.125000e-02 : f32
    %112 = vector.broadcast %cst_36 : f32 to vector<1x32xf32>
    %113 = arith.mulf %111, %112 : vector<1x32xf32>
    %114 = vector.broadcast %113 : vector<1x32xf32> to vector<32x32xf32>
    %115 = arith.subf %107, %114 : vector<32x32xf32>
    %116 = arith.mulf %115, %115 : vector<32x32xf32>
    %cst_37 = arith.constant dense<0.000000e+00> : vector<32xf32>
    %117 = vector.multi_reduction <add>, %116, %cst_37 [0] : vector<32x32xf32> to vector<32xf32>
    %118 = vector.shape_cast %117 : vector<32xf32> to vector<1x32xf32>
    %cst_38 = arith.constant 3.125000e-02 : f32
    %119 = vector.broadcast %cst_38 : f32 to vector<1x32xf32>
    %120 = arith.mulf %118, %119 : vector<1x32xf32>
    %cst_39 = arith.constant 9.99999974E-6 : f32
    %121 = vector.broadcast %cst_39 : f32 to vector<1x32xf32>
    %122 = arith.addf %120, %121 : vector<1x32xf32>
    %123 = math.rsqrt %122 : vector<1x32xf32>
    %124 = vector.broadcast %123 : vector<1x32xf32> to vector<32x32xf32>
    %125 = arith.mulf %115, %124 : vector<32x32xf32>
    %126 = vector.broadcast %108 : vector<1x32xf32> to vector<32x32xf32>
    %127 = arith.mulf %125, %126 : vector<32x32xf32>
    %128 = vector.broadcast %109 : vector<1x32xf32> to vector<32x32xf32>
    %129 = arith.addf %127, %128 : vector<32x32xf32>
    %cst_40 = arith.constant 0.000000e+00 : f32
    %130 = vector.broadcast %cst_40 : f32 to vector<32x32xf32>
    %131 = arith.maximumf %129, %130 : vector<32x32xf32>
    %c0_41 = arith.constant 0 : index
    %c0_42 = arith.constant 0 : index
    %c0_43 = arith.constant 0 : index
    %132 = vector.load %arg7[%c0_41, %c0_42, %c0_43] : memref<8x32x64xf32, #tpu.memory_space<vmem>>, vector<1x32x64xf32>
    %133 = vector.shape_cast %132 : vector<1x32x64xf32> to vector<32x64xf32>
    %c0_44 = arith.constant 0 : index
    %c0_45 = arith.constant 0 : index
    %c0_46 = arith.constant 0 : index
    %134 = vector.load %arg8[%c0_44, %c0_45, %c0_46] : memref<8x1x32xf32, #tpu.memory_space<vmem>>, vector<1x1x32xf32>
    %135 = vector.shape_cast %134 : vector<1x1x32xf32> to vector<1x32xf32>
    %c0_47 = arith.constant 0 : index
    %c0_48 = arith.constant 0 : index
    %c0_49 = arith.constant 0 : index
    %136 = vector.load %arg9[%c0_47, %c0_48, %c0_49] : memref<8x16x16xf32, #tpu.memory_space<vmem>>, vector<1x16x16xf32>
    %137 = vector.shape_cast %136 : vector<1x16x16xf32> to vector<16x16xf32>
    %138 = arith.mulf %0, %137 : vector<16x16xf32>
    %139 = arith.addf %138, %70 : vector<16x16xf32>
    %cst_50 = arith.constant dense<0xFF800000> : vector<16xf32>
    %140 = vector.multi_reduction <maximumf>, %139, %cst_50 [1] : vector<16x16xf32> to vector<16xf32>
    %141 = vector.shape_cast %140 : vector<16xf32> to vector<16x1xf32>
    %142 = vector.broadcast %141 : vector<16x1xf32> to vector<16x16xf32>
    %143 = arith.subf %139, %142 : vector<16x16xf32>
    %144 = math.exp %143 : vector<16x16xf32>
    %cst_51 = arith.constant dense<0.000000e+00> : vector<16xf32>
    %145 = vector.multi_reduction <add>, %144, %cst_51 [1] : vector<16x16xf32> to vector<16xf32>
    %146 = vector.shape_cast %145 : vector<16xf32> to vector<16x1xf32>
    %147 = vector.broadcast %146 : vector<16x1xf32> to vector<16x16xf32>
    %148 = arith.divf %144, %147 : vector<16x16xf32>
    %149 = arith.mulf %148, %5 : vector<16x16xf32>
    %cst_52 = arith.constant dense<0.000000e+00> : vector<16xf32>
    %150 = vector.multi_reduction <add>, %149, %cst_52 [0] : vector<16x16xf32> to vector<16xf32>
    %151 = vector.shape_cast %150 : vector<16xf32> to vector<1x16xf32>
    %152 = vector.broadcast %151 : vector<1x16xf32> to vector<32x16xf32>
    %153 = arith.mulf %46, %152 : vector<32x16xf32>
    %cst_53 = arith.constant dense<0.000000e+00> : vector<32xf32>
    %154 = vector.multi_reduction <add>, %153, %cst_53 [1] : vector<32x16xf32> to vector<32xf32>
    %155 = vector.shape_cast %154 : vector<32xf32> to vector<32x1xf32>
    %cst_54 = arith.constant 1.000000e+00 : f32
    %156 = vector.broadcast %cst_54 : f32 to vector<16x16xf32>
    %157 = arith.subf %156, %5 : vector<16x16xf32>
    %158 = arith.mulf %148, %157 : vector<16x16xf32>
    %cst_55 = arith.constant dense<0.000000e+00> : vector<32x16xf32>
    %159 = tpu.matmul %46, %158, %cst_55 {dimension_numbers = #tpu.dot_dimension_numbers<[1], [0], [0], [1], [0, 0, 1, 1], [], []>} : vector<32x16xf32>, vector<16x16xf32>, vector<32x16xf32> -> vector<32x16xf32>
    %cst_56 = arith.constant dense<0.000000e+00> : vector<32x32xf32>
    %160 = tpu.matmul %159, %52, %cst_56 {dimension_numbers = #tpu.dot_dimension_numbers<[1], [0], [0], [1], [0, 0, 1, 1], [], []>} : vector<32x16xf32>, vector<16x32xf32>, vector<32x32xf32> -> vector<32x32xf32>
    %161 = arith.mulf %160, %66 : vector<32x32xf32>
    %cst_57 = arith.constant dense<0.000000e+00> : vector<32x64xf32>
    %162 = tpu.matmul %131, %133, %cst_57 {dimension_numbers = #tpu.dot_dimension_numbers<[1], [0], [0], [1], [0, 0, 1, 1], [], []>} : vector<32x32xf32>, vector<32x64xf32>, vector<32x64xf32> -> vector<32x64xf32>
    %163 = vector.extract_strided_slice %162 {offsets = [0, 0], sizes = [32, 32], strides = [1, 1]} : vector<32x64xf32> to vector<32x32xf32>
    %164 = vector.extract_strided_slice %162 {offsets = [0, 32], sizes = [32, 32], strides = [1, 1]} : vector<32x64xf32> to vector<32x32xf32>
    %165 = vector.broadcast %155 : vector<32x1xf32> to vector<32x32xf32>
    %166 = arith.mulf %165, %163 : vector<32x32xf32>
    %cst_58 = arith.constant dense<0.000000e+00> : vector<32x32xf32>
    %167 = tpu.matmul %161, %164, %cst_58 {dimension_numbers = #tpu.dot_dimension_numbers<[1], [0], [0], [1], [0, 0, 1, 1], [], []>} : vector<32x32xf32>, vector<32x32xf32>, vector<32x32xf32> -> vector<32x32xf32>
    %168 = arith.addf %166, %167 : vector<32x32xf32>
    %169 = vector.broadcast %135 : vector<1x32xf32> to vector<32x32xf32>
    %170 = arith.addf %168, %169 : vector<32x32xf32>
    %c0_59 = arith.constant 0 : index
    %c0_60 = arith.constant 0 : index
    %c0_61 = arith.constant 0 : index
    %171 = vector.load %arg10[%c0_59, %c0_60, %c0_61] : memref<8x1x32xf32, #tpu.memory_space<vmem>>, vector<1x1x32xf32>
    %172 = vector.shape_cast %171 : vector<1x1x32xf32> to vector<1x32xf32>
    %c0_62 = arith.constant 0 : index
    %c0_63 = arith.constant 0 : index
    %c0_64 = arith.constant 0 : index
    %173 = vector.load %arg11[%c0_62, %c0_63, %c0_64] : memref<8x1x32xf32, #tpu.memory_space<vmem>>, vector<1x1x32xf32>
    %174 = vector.shape_cast %173 : vector<1x1x32xf32> to vector<1x32xf32>
    %cst_65 = arith.constant dense<0.000000e+00> : vector<32xf32>
    %175 = vector.multi_reduction <add>, %170, %cst_65 [0] : vector<32x32xf32> to vector<32xf32>
    %176 = vector.shape_cast %175 : vector<32xf32> to vector<1x32xf32>
    %cst_66 = arith.constant 3.125000e-02 : f32
    %177 = vector.broadcast %cst_66 : f32 to vector<1x32xf32>
    %178 = arith.mulf %176, %177 : vector<1x32xf32>
    %179 = vector.broadcast %178 : vector<1x32xf32> to vector<32x32xf32>
    %180 = arith.subf %170, %179 : vector<32x32xf32>
    %181 = arith.mulf %180, %180 : vector<32x32xf32>
    %cst_67 = arith.constant dense<0.000000e+00> : vector<32xf32>
    %182 = vector.multi_reduction <add>, %181, %cst_67 [0] : vector<32x32xf32> to vector<32xf32>
    %183 = vector.shape_cast %182 : vector<32xf32> to vector<1x32xf32>
    %cst_68 = arith.constant 3.125000e-02 : f32
    %184 = vector.broadcast %cst_68 : f32 to vector<1x32xf32>
    %185 = arith.mulf %183, %184 : vector<1x32xf32>
    %cst_69 = arith.constant 9.99999974E-6 : f32
    %186 = vector.broadcast %cst_69 : f32 to vector<1x32xf32>
    %187 = arith.addf %185, %186 : vector<1x32xf32>
    %188 = math.rsqrt %187 : vector<1x32xf32>
    %189 = vector.broadcast %188 : vector<1x32xf32> to vector<32x32xf32>
    %190 = arith.mulf %180, %189 : vector<32x32xf32>
    %191 = vector.broadcast %172 : vector<1x32xf32> to vector<32x32xf32>
    %192 = arith.mulf %190, %191 : vector<32x32xf32>
    %193 = vector.broadcast %174 : vector<1x32xf32> to vector<32x32xf32>
    %194 = arith.addf %192, %193 : vector<32x32xf32>
    %cst_70 = arith.constant 0.000000e+00 : f32
    %195 = vector.broadcast %cst_70 : f32 to vector<32x32xf32>
    %196 = arith.maximumf %194, %195 : vector<32x32xf32>
    %c1 = arith.constant 1 : index
    %c0_71 = arith.constant 0 : index
    %c0_72 = arith.constant 0 : index
    %197 = vector.load %arg7[%c1, %c0_71, %c0_72] : memref<8x32x64xf32, #tpu.memory_space<vmem>>, vector<1x32x64xf32>
    %198 = vector.shape_cast %197 : vector<1x32x64xf32> to vector<32x64xf32>
    %c1_73 = arith.constant 1 : index
    %c0_74 = arith.constant 0 : index
    %c0_75 = arith.constant 0 : index
    %199 = vector.load %arg8[%c1_73, %c0_74, %c0_75] : memref<8x1x32xf32, #tpu.memory_space<vmem>>, vector<1x1x32xf32>
    %200 = vector.shape_cast %199 : vector<1x1x32xf32> to vector<1x32xf32>
    %c1_76 = arith.constant 1 : index
    %c0_77 = arith.constant 0 : index
    %c0_78 = arith.constant 0 : index
    %201 = vector.load %arg9[%c1_76, %c0_77, %c0_78] : memref<8x16x16xf32, #tpu.memory_space<vmem>>, vector<1x16x16xf32>
    %202 = vector.shape_cast %201 : vector<1x16x16xf32> to vector<16x16xf32>
    %203 = arith.mulf %0, %202 : vector<16x16xf32>
    %204 = arith.addf %203, %70 : vector<16x16xf32>
    %cst_79 = arith.constant dense<0xFF800000> : vector<16xf32>
    %205 = vector.multi_reduction <maximumf>, %204, %cst_79 [1] : vector<16x16xf32> to vector<16xf32>
    %206 = vector.shape_cast %205 : vector<16xf32> to vector<16x1xf32>
    %207 = vector.broadcast %206 : vector<16x1xf32> to vector<16x16xf32>
    %208 = arith.subf %204, %207 : vector<16x16xf32>
    %209 = math.exp %208 : vector<16x16xf32>
    %cst_80 = arith.constant dense<0.000000e+00> : vector<16xf32>
    %210 = vector.multi_reduction <add>, %209, %cst_80 [1] : vector<16x16xf32> to vector<16xf32>
    %211 = vector.shape_cast %210 : vector<16xf32> to vector<16x1xf32>
    %212 = vector.broadcast %211 : vector<16x1xf32> to vector<16x16xf32>
    %213 = arith.divf %209, %212 : vector<16x16xf32>
    %214 = arith.mulf %213, %5 : vector<16x16xf32>
    %cst_81 = arith.constant dense<0.000000e+00> : vector<16xf32>
    %215 = vector.multi_reduction <add>, %214, %cst_81 [0] : vector<16x16xf32> to vector<16xf32>
    %216 = vector.shape_cast %215 : vector<16xf32> to vector<1x16xf32>
    %217 = vector.broadcast %216 : vector<1x16xf32> to vector<32x16xf32>
    %218 = arith.mulf %46, %217 : vector<32x16xf32>
    %cst_82 = arith.constant dense<0.000000e+00> : vector<32xf32>
    %219 = vector.multi_reduction <add>, %218, %cst_82 [1] : vector<32x16xf32> to vector<32xf32>
    %220 = vector.shape_cast %219 : vector<32xf32> to vector<32x1xf32>
    %cst_83 = arith.constant 1.000000e+00 : f32
    %221 = vector.broadcast %cst_83 : f32 to vector<16x16xf32>
    %222 = arith.subf %221, %5 : vector<16x16xf32>
    %223 = arith.mulf %213, %222 : vector<16x16xf32>
    %cst_84 = arith.constant dense<0.000000e+00> : vector<32x16xf32>
    %224 = tpu.matmul %46, %223, %cst_84 {dimension_numbers = #tpu.dot_dimension_numbers<[1], [0], [0], [1], [0, 0, 1, 1], [], []>} : vector<32x16xf32>, vector<16x16xf32>, vector<32x16xf32> -> vector<32x16xf32>
    %cst_85 = arith.constant dense<0.000000e+00> : vector<32x32xf32>
    %225 = tpu.matmul %224, %52, %cst_85 {dimension_numbers = #tpu.dot_dimension_numbers<[1], [0], [0], [1], [0, 0, 1, 1], [], []>} : vector<32x16xf32>, vector<16x32xf32>, vector<32x32xf32> -> vector<32x32xf32>
    %226 = arith.mulf %225, %66 : vector<32x32xf32>
    %cst_86 = arith.constant dense<0.000000e+00> : vector<32x64xf32>
    %227 = tpu.matmul %196, %198, %cst_86 {dimension_numbers = #tpu.dot_dimension_numbers<[1], [0], [0], [1], [0, 0, 1, 1], [], []>} : vector<32x32xf32>, vector<32x64xf32>, vector<32x64xf32> -> vector<32x64xf32>
    %228 = vector.extract_strided_slice %227 {offsets = [0, 0], sizes = [32, 32], strides = [1, 1]} : vector<32x64xf32> to vector<32x32xf32>
    %229 = vector.extract_strided_slice %227 {offsets = [0, 32], sizes = [32, 32], strides = [1, 1]} : vector<32x64xf32> to vector<32x32xf32>
    %230 = vector.broadcast %220 : vector<32x1xf32> to vector<32x32xf32>
    %231 = arith.mulf %230, %228 : vector<32x32xf32>
    %cst_87 = arith.constant dense<0.000000e+00> : vector<32x32xf32>
    %232 = tpu.matmul %226, %229, %cst_87 {dimension_numbers = #tpu.dot_dimension_numbers<[1], [0], [0], [1], [0, 0, 1, 1], [], []>} : vector<32x32xf32>, vector<32x32xf32>, vector<32x32xf32> -> vector<32x32xf32>
    %233 = arith.addf %231, %232 : vector<32x32xf32>
    %234 = vector.broadcast %200 : vector<1x32xf32> to vector<32x32xf32>
    %235 = arith.addf %233, %234 : vector<32x32xf32>
    %c1_88 = arith.constant 1 : index
    %c0_89 = arith.constant 0 : index
    %c0_90 = arith.constant 0 : index
    %236 = vector.load %arg10[%c1_88, %c0_89, %c0_90] : memref<8x1x32xf32, #tpu.memory_space<vmem>>, vector<1x1x32xf32>
    %237 = vector.shape_cast %236 : vector<1x1x32xf32> to vector<1x32xf32>
    %c1_91 = arith.constant 1 : index
    %c0_92 = arith.constant 0 : index
    %c0_93 = arith.constant 0 : index
    %238 = vector.load %arg11[%c1_91, %c0_92, %c0_93] : memref<8x1x32xf32, #tpu.memory_space<vmem>>, vector<1x1x32xf32>
    %239 = vector.shape_cast %238 : vector<1x1x32xf32> to vector<1x32xf32>
    %cst_94 = arith.constant dense<0.000000e+00> : vector<32xf32>
    %240 = vector.multi_reduction <add>, %235, %cst_94 [0] : vector<32x32xf32> to vector<32xf32>
    %241 = vector.shape_cast %240 : vector<32xf32> to vector<1x32xf32>
    %cst_95 = arith.constant 3.125000e-02 : f32
    %242 = vector.broadcast %cst_95 : f32 to vector<1x32xf32>
    %243 = arith.mulf %241, %242 : vector<1x32xf32>
    %244 = vector.broadcast %243 : vector<1x32xf32> to vector<32x32xf32>
    %245 = arith.subf %235, %244 : vector<32x32xf32>
    %246 = arith.mulf %245, %245 : vector<32x32xf32>
    %cst_96 = arith.constant dense<0.000000e+00> : vector<32xf32>
    %247 = vector.multi_reduction <add>, %246, %cst_96 [0] : vector<32x32xf32> to vector<32xf32>
    %248 = vector.shape_cast %247 : vector<32xf32> to vector<1x32xf32>
    %cst_97 = arith.constant 3.125000e-02 : f32
    %249 = vector.broadcast %cst_97 : f32 to vector<1x32xf32>
    %250 = arith.mulf %248, %249 : vector<1x32xf32>
    %cst_98 = arith.constant 9.99999974E-6 : f32
    %251 = vector.broadcast %cst_98 : f32 to vector<1x32xf32>
    %252 = arith.addf %250, %251 : vector<1x32xf32>
    %253 = math.rsqrt %252 : vector<1x32xf32>
    %254 = vector.broadcast %253 : vector<1x32xf32> to vector<32x32xf32>
    %255 = arith.mulf %245, %254 : vector<32x32xf32>
    %256 = vector.broadcast %237 : vector<1x32xf32> to vector<32x32xf32>
    %257 = arith.mulf %255, %256 : vector<32x32xf32>
    %258 = vector.broadcast %239 : vector<1x32xf32> to vector<32x32xf32>
    %259 = arith.addf %257, %258 : vector<32x32xf32>
    %cst_99 = arith.constant 0.000000e+00 : f32
    %260 = vector.broadcast %cst_99 : f32 to vector<32x32xf32>
    %261 = arith.maximumf %259, %260 : vector<32x32xf32>
    %262 = arith.addf %131, %261 : vector<32x32xf32>
    %c2 = arith.constant 2 : index
    %c0_100 = arith.constant 0 : index
    %c0_101 = arith.constant 0 : index
    %263 = vector.load %arg7[%c2, %c0_100, %c0_101] : memref<8x32x64xf32, #tpu.memory_space<vmem>>, vector<1x32x64xf32>
    %264 = vector.shape_cast %263 : vector<1x32x64xf32> to vector<32x64xf32>
    %c2_102 = arith.constant 2 : index
    %c0_103 = arith.constant 0 : index
    %c0_104 = arith.constant 0 : index
    %265 = vector.load %arg8[%c2_102, %c0_103, %c0_104] : memref<8x1x32xf32, #tpu.memory_space<vmem>>, vector<1x1x32xf32>
    %266 = vector.shape_cast %265 : vector<1x1x32xf32> to vector<1x32xf32>
    %c2_105 = arith.constant 2 : index
    %c0_106 = arith.constant 0 : index
    %c0_107 = arith.constant 0 : index
    %267 = vector.load %arg9[%c2_105, %c0_106, %c0_107] : memref<8x16x16xf32, #tpu.memory_space<vmem>>, vector<1x16x16xf32>
    %268 = vector.shape_cast %267 : vector<1x16x16xf32> to vector<16x16xf32>
    %269 = arith.mulf %0, %268 : vector<16x16xf32>
    %270 = arith.addf %269, %70 : vector<16x16xf32>
    %cst_108 = arith.constant dense<0xFF800000> : vector<16xf32>
    %271 = vector.multi_reduction <maximumf>, %270, %cst_108 [1] : vector<16x16xf32> to vector<16xf32>
    %272 = vector.shape_cast %271 : vector<16xf32> to vector<16x1xf32>
    %273 = vector.broadcast %272 : vector<16x1xf32> to vector<16x16xf32>
    %274 = arith.subf %270, %273 : vector<16x16xf32>
    %275 = math.exp %274 : vector<16x16xf32>
    %cst_109 = arith.constant dense<0.000000e+00> : vector<16xf32>
    %276 = vector.multi_reduction <add>, %275, %cst_109 [1] : vector<16x16xf32> to vector<16xf32>
    %277 = vector.shape_cast %276 : vector<16xf32> to vector<16x1xf32>
    %278 = vector.broadcast %277 : vector<16x1xf32> to vector<16x16xf32>
    %279 = arith.divf %275, %278 : vector<16x16xf32>
    %280 = arith.mulf %279, %5 : vector<16x16xf32>
    %cst_110 = arith.constant dense<0.000000e+00> : vector<16xf32>
    %281 = vector.multi_reduction <add>, %280, %cst_110 [0] : vector<16x16xf32> to vector<16xf32>
    %282 = vector.shape_cast %281 : vector<16xf32> to vector<1x16xf32>
    %283 = vector.broadcast %282 : vector<1x16xf32> to vector<32x16xf32>
    %284 = arith.mulf %46, %283 : vector<32x16xf32>
    %cst_111 = arith.constant dense<0.000000e+00> : vector<32xf32>
    %285 = vector.multi_reduction <add>, %284, %cst_111 [1] : vector<32x16xf32> to vector<32xf32>
    %286 = vector.shape_cast %285 : vector<32xf32> to vector<32x1xf32>
    %cst_112 = arith.constant 1.000000e+00 : f32
    %287 = vector.broadcast %cst_112 : f32 to vector<16x16xf32>
    %288 = arith.subf %287, %5 : vector<16x16xf32>
    %289 = arith.mulf %279, %288 : vector<16x16xf32>
    %cst_113 = arith.constant dense<0.000000e+00> : vector<32x16xf32>
    %290 = tpu.matmul %46, %289, %cst_113 {dimension_numbers = #tpu.dot_dimension_numbers<[1], [0], [0], [1], [0, 0, 1, 1], [], []>} : vector<32x16xf32>, vector<16x16xf32>, vector<32x16xf32> -> vector<32x16xf32>
    %cst_114 = arith.constant dense<0.000000e+00> : vector<32x32xf32>
    %291 = tpu.matmul %290, %52, %cst_114 {dimension_numbers = #tpu.dot_dimension_numbers<[1], [0], [0], [1], [0, 0, 1, 1], [], []>} : vector<32x16xf32>, vector<16x32xf32>, vector<32x32xf32> -> vector<32x32xf32>
    %292 = arith.mulf %291, %66 : vector<32x32xf32>
    %cst_115 = arith.constant dense<0.000000e+00> : vector<32x64xf32>
    %293 = tpu.matmul %262, %264, %cst_115 {dimension_numbers = #tpu.dot_dimension_numbers<[1], [0], [0], [1], [0, 0, 1, 1], [], []>} : vector<32x32xf32>, vector<32x64xf32>, vector<32x64xf32> -> vector<32x64xf32>
    %294 = vector.extract_strided_slice %293 {offsets = [0, 0], sizes = [32, 32], strides = [1, 1]} : vector<32x64xf32> to vector<32x32xf32>
    %295 = vector.extract_strided_slice %293 {offsets = [0, 32], sizes = [32, 32], strides = [1, 1]} : vector<32x64xf32> to vector<32x32xf32>
    %296 = vector.broadcast %286 : vector<32x1xf32> to vector<32x32xf32>
    %297 = arith.mulf %296, %294 : vector<32x32xf32>
    %cst_116 = arith.constant dense<0.000000e+00> : vector<32x32xf32>
    %298 = tpu.matmul %292, %295, %cst_116 {dimension_numbers = #tpu.dot_dimension_numbers<[1], [0], [0], [1], [0, 0, 1, 1], [], []>} : vector<32x32xf32>, vector<32x32xf32>, vector<32x32xf32> -> vector<32x32xf32>
    %299 = arith.addf %297, %298 : vector<32x32xf32>
    %300 = vector.broadcast %266 : vector<1x32xf32> to vector<32x32xf32>
    %301 = arith.addf %299, %300 : vector<32x32xf32>
    %c2_117 = arith.constant 2 : index
    %c0_118 = arith.constant 0 : index
    %c0_119 = arith.constant 0 : index
    %302 = vector.load %arg10[%c2_117, %c0_118, %c0_119] : memref<8x1x32xf32, #tpu.memory_space<vmem>>, vector<1x1x32xf32>
    %303 = vector.shape_cast %302 : vector<1x1x32xf32> to vector<1x32xf32>
    %c2_120 = arith.constant 2 : index
    %c0_121 = arith.constant 0 : index
    %c0_122 = arith.constant 0 : index
    %304 = vector.load %arg11[%c2_120, %c0_121, %c0_122] : memref<8x1x32xf32, #tpu.memory_space<vmem>>, vector<1x1x32xf32>
    %305 = vector.shape_cast %304 : vector<1x1x32xf32> to vector<1x32xf32>
    %cst_123 = arith.constant dense<0.000000e+00> : vector<32xf32>
    %306 = vector.multi_reduction <add>, %301, %cst_123 [0] : vector<32x32xf32> to vector<32xf32>
    %307 = vector.shape_cast %306 : vector<32xf32> to vector<1x32xf32>
    %cst_124 = arith.constant 3.125000e-02 : f32
    %308 = vector.broadcast %cst_124 : f32 to vector<1x32xf32>
    %309 = arith.mulf %307, %308 : vector<1x32xf32>
    %310 = vector.broadcast %309 : vector<1x32xf32> to vector<32x32xf32>
    %311 = arith.subf %301, %310 : vector<32x32xf32>
    %312 = arith.mulf %311, %311 : vector<32x32xf32>
    %cst_125 = arith.constant dense<0.000000e+00> : vector<32xf32>
    %313 = vector.multi_reduction <add>, %312, %cst_125 [0] : vector<32x32xf32> to vector<32xf32>
    %314 = vector.shape_cast %313 : vector<32xf32> to vector<1x32xf32>
    %cst_126 = arith.constant 3.125000e-02 : f32
    %315 = vector.broadcast %cst_126 : f32 to vector<1x32xf32>
    %316 = arith.mulf %314, %315 : vector<1x32xf32>
    %cst_127 = arith.constant 9.99999974E-6 : f32
    %317 = vector.broadcast %cst_127 : f32 to vector<1x32xf32>
    %318 = arith.addf %316, %317 : vector<1x32xf32>
    %319 = math.rsqrt %318 : vector<1x32xf32>
    %320 = vector.broadcast %319 : vector<1x32xf32> to vector<32x32xf32>
    %321 = arith.mulf %311, %320 : vector<32x32xf32>
    %322 = vector.broadcast %303 : vector<1x32xf32> to vector<32x32xf32>
    %323 = arith.mulf %321, %322 : vector<32x32xf32>
    %324 = vector.broadcast %305 : vector<1x32xf32> to vector<32x32xf32>
    %325 = arith.addf %323, %324 : vector<32x32xf32>
    %cst_128 = arith.constant 0.000000e+00 : f32
    %326 = vector.broadcast %cst_128 : f32 to vector<32x32xf32>
    %327 = arith.maximumf %325, %326 : vector<32x32xf32>
    %c3 = arith.constant 3 : index
    %c0_129 = arith.constant 0 : index
    %c0_130 = arith.constant 0 : index
    %328 = vector.load %arg7[%c3, %c0_129, %c0_130] : memref<8x32x64xf32, #tpu.memory_space<vmem>>, vector<1x32x64xf32>
    %329 = vector.shape_cast %328 : vector<1x32x64xf32> to vector<32x64xf32>
    %c3_131 = arith.constant 3 : index
    %c0_132 = arith.constant 0 : index
    %c0_133 = arith.constant 0 : index
    %330 = vector.load %arg8[%c3_131, %c0_132, %c0_133] : memref<8x1x32xf32, #tpu.memory_space<vmem>>, vector<1x1x32xf32>
    %331 = vector.shape_cast %330 : vector<1x1x32xf32> to vector<1x32xf32>
    %c3_134 = arith.constant 3 : index
    %c0_135 = arith.constant 0 : index
    %c0_136 = arith.constant 0 : index
    %332 = vector.load %arg9[%c3_134, %c0_135, %c0_136] : memref<8x16x16xf32, #tpu.memory_space<vmem>>, vector<1x16x16xf32>
    %333 = vector.shape_cast %332 : vector<1x16x16xf32> to vector<16x16xf32>
    %334 = arith.mulf %0, %333 : vector<16x16xf32>
    %335 = arith.addf %334, %70 : vector<16x16xf32>
    %cst_137 = arith.constant dense<0xFF800000> : vector<16xf32>
    %336 = vector.multi_reduction <maximumf>, %335, %cst_137 [1] : vector<16x16xf32> to vector<16xf32>
    %337 = vector.shape_cast %336 : vector<16xf32> to vector<16x1xf32>
    %338 = vector.broadcast %337 : vector<16x1xf32> to vector<16x16xf32>
    %339 = arith.subf %335, %338 : vector<16x16xf32>
    %340 = math.exp %339 : vector<16x16xf32>
    %cst_138 = arith.constant dense<0.000000e+00> : vector<16xf32>
    %341 = vector.multi_reduction <add>, %340, %cst_138 [1] : vector<16x16xf32> to vector<16xf32>
    %342 = vector.shape_cast %341 : vector<16xf32> to vector<16x1xf32>
    %343 = vector.broadcast %342 : vector<16x1xf32> to vector<16x16xf32>
    %344 = arith.divf %340, %343 : vector<16x16xf32>
    %345 = arith.mulf %344, %5 : vector<16x16xf32>
    %cst_139 = arith.constant dense<0.000000e+00> : vector<16xf32>
    %346 = vector.multi_reduction <add>, %345, %cst_139 [0] : vector<16x16xf32> to vector<16xf32>
    %347 = vector.shape_cast %346 : vector<16xf32> to vector<1x16xf32>
    %348 = vector.broadcast %347 : vector<1x16xf32> to vector<32x16xf32>
    %349 = arith.mulf %46, %348 : vector<32x16xf32>
    %cst_140 = arith.constant dense<0.000000e+00> : vector<32xf32>
    %350 = vector.multi_reduction <add>, %349, %cst_140 [1] : vector<32x16xf32> to vector<32xf32>
    %351 = vector.shape_cast %350 : vector<32xf32> to vector<32x1xf32>
    %cst_141 = arith.constant 1.000000e+00 : f32
    %352 = vector.broadcast %cst_141 : f32 to vector<16x16xf32>
    %353 = arith.subf %352, %5 : vector<16x16xf32>
    %354 = arith.mulf %344, %353 : vector<16x16xf32>
    %cst_142 = arith.constant dense<0.000000e+00> : vector<32x16xf32>
    %355 = tpu.matmul %46, %354, %cst_142 {dimension_numbers = #tpu.dot_dimension_numbers<[1], [0], [0], [1], [0, 0, 1, 1], [], []>} : vector<32x16xf32>, vector<16x16xf32>, vector<32x16xf32> -> vector<32x16xf32>
    %cst_143 = arith.constant dense<0.000000e+00> : vector<32x32xf32>
    %356 = tpu.matmul %355, %52, %cst_143 {dimension_numbers = #tpu.dot_dimension_numbers<[1], [0], [0], [1], [0, 0, 1, 1], [], []>} : vector<32x16xf32>, vector<16x32xf32>, vector<32x32xf32> -> vector<32x32xf32>
    %357 = arith.mulf %356, %66 : vector<32x32xf32>
    %cst_144 = arith.constant dense<0.000000e+00> : vector<32x64xf32>
    %358 = tpu.matmul %327, %329, %cst_144 {dimension_numbers = #tpu.dot_dimension_numbers<[1], [0], [0], [1], [0, 0, 1, 1], [], []>} : vector<32x32xf32>, vector<32x64xf32>, vector<32x64xf32> -> vector<32x64xf32>
    %359 = vector.extract_strided_slice %358 {offsets = [0, 0], sizes = [32, 32], strides = [1, 1]} : vector<32x64xf32> to vector<32x32xf32>
    %360 = vector.extract_strided_slice %358 {offsets = [0, 32], sizes = [32, 32], strides = [1, 1]} : vector<32x64xf32> to vector<32x32xf32>
    %361 = vector.broadcast %351 : vector<32x1xf32> to vector<32x32xf32>
    %362 = arith.mulf %361, %359 : vector<32x32xf32>
    %cst_145 = arith.constant dense<0.000000e+00> : vector<32x32xf32>
    %363 = tpu.matmul %357, %360, %cst_145 {dimension_numbers = #tpu.dot_dimension_numbers<[1], [0], [0], [1], [0, 0, 1, 1], [], []>} : vector<32x32xf32>, vector<32x32xf32>, vector<32x32xf32> -> vector<32x32xf32>
    %364 = arith.addf %362, %363 : vector<32x32xf32>
    %365 = vector.broadcast %331 : vector<1x32xf32> to vector<32x32xf32>
    %366 = arith.addf %364, %365 : vector<32x32xf32>
    %c3_146 = arith.constant 3 : index
    %c0_147 = arith.constant 0 : index
    %c0_148 = arith.constant 0 : index
    %367 = vector.load %arg10[%c3_146, %c0_147, %c0_148] : memref<8x1x32xf32, #tpu.memory_space<vmem>>, vector<1x1x32xf32>
    %368 = vector.shape_cast %367 : vector<1x1x32xf32> to vector<1x32xf32>
    %c3_149 = arith.constant 3 : index
    %c0_150 = arith.constant 0 : index
    %c0_151 = arith.constant 0 : index
    %369 = vector.load %arg11[%c3_149, %c0_150, %c0_151] : memref<8x1x32xf32, #tpu.memory_space<vmem>>, vector<1x1x32xf32>
    %370 = vector.shape_cast %369 : vector<1x1x32xf32> to vector<1x32xf32>
    %cst_152 = arith.constant dense<0.000000e+00> : vector<32xf32>
    %371 = vector.multi_reduction <add>, %366, %cst_152 [0] : vector<32x32xf32> to vector<32xf32>
    %372 = vector.shape_cast %371 : vector<32xf32> to vector<1x32xf32>
    %cst_153 = arith.constant 3.125000e-02 : f32
    %373 = vector.broadcast %cst_153 : f32 to vector<1x32xf32>
    %374 = arith.mulf %372, %373 : vector<1x32xf32>
    %375 = vector.broadcast %374 : vector<1x32xf32> to vector<32x32xf32>
    %376 = arith.subf %366, %375 : vector<32x32xf32>
    %377 = arith.mulf %376, %376 : vector<32x32xf32>
    %cst_154 = arith.constant dense<0.000000e+00> : vector<32xf32>
    %378 = vector.multi_reduction <add>, %377, %cst_154 [0] : vector<32x32xf32> to vector<32xf32>
    %379 = vector.shape_cast %378 : vector<32xf32> to vector<1x32xf32>
    %cst_155 = arith.constant 3.125000e-02 : f32
    %380 = vector.broadcast %cst_155 : f32 to vector<1x32xf32>
    %381 = arith.mulf %379, %380 : vector<1x32xf32>
    %cst_156 = arith.constant 9.99999974E-6 : f32
    %382 = vector.broadcast %cst_156 : f32 to vector<1x32xf32>
    %383 = arith.addf %381, %382 : vector<1x32xf32>
    %384 = math.rsqrt %383 : vector<1x32xf32>
    %385 = vector.broadcast %384 : vector<1x32xf32> to vector<32x32xf32>
    %386 = arith.mulf %376, %385 : vector<32x32xf32>
    %387 = vector.broadcast %368 : vector<1x32xf32> to vector<32x32xf32>
    %388 = arith.mulf %386, %387 : vector<32x32xf32>
    %389 = vector.broadcast %370 : vector<1x32xf32> to vector<32x32xf32>
    %390 = arith.addf %388, %389 : vector<32x32xf32>
    %cst_157 = arith.constant 0.000000e+00 : f32
    %391 = vector.broadcast %cst_157 : f32 to vector<32x32xf32>
    %392 = arith.maximumf %390, %391 : vector<32x32xf32>
    %393 = arith.addf %262, %392 : vector<32x32xf32>
    %c4 = arith.constant 4 : index
    %c0_158 = arith.constant 0 : index
    %c0_159 = arith.constant 0 : index
    %394 = vector.load %arg7[%c4, %c0_158, %c0_159] : memref<8x32x64xf32, #tpu.memory_space<vmem>>, vector<1x32x64xf32>
    %395 = vector.shape_cast %394 : vector<1x32x64xf32> to vector<32x64xf32>
    %c4_160 = arith.constant 4 : index
    %c0_161 = arith.constant 0 : index
    %c0_162 = arith.constant 0 : index
    %396 = vector.load %arg8[%c4_160, %c0_161, %c0_162] : memref<8x1x32xf32, #tpu.memory_space<vmem>>, vector<1x1x32xf32>
    %397 = vector.shape_cast %396 : vector<1x1x32xf32> to vector<1x32xf32>
    %c4_163 = arith.constant 4 : index
    %c0_164 = arith.constant 0 : index
    %c0_165 = arith.constant 0 : index
    %398 = vector.load %arg9[%c4_163, %c0_164, %c0_165] : memref<8x16x16xf32, #tpu.memory_space<vmem>>, vector<1x16x16xf32>
    %399 = vector.shape_cast %398 : vector<1x16x16xf32> to vector<16x16xf32>
    %400 = arith.mulf %0, %399 : vector<16x16xf32>
    %401 = arith.addf %400, %70 : vector<16x16xf32>
    %cst_166 = arith.constant dense<0xFF800000> : vector<16xf32>
    %402 = vector.multi_reduction <maximumf>, %401, %cst_166 [1] : vector<16x16xf32> to vector<16xf32>
    %403 = vector.shape_cast %402 : vector<16xf32> to vector<16x1xf32>
    %404 = vector.broadcast %403 : vector<16x1xf32> to vector<16x16xf32>
    %405 = arith.subf %401, %404 : vector<16x16xf32>
    %406 = math.exp %405 : vector<16x16xf32>
    %cst_167 = arith.constant dense<0.000000e+00> : vector<16xf32>
    %407 = vector.multi_reduction <add>, %406, %cst_167 [1] : vector<16x16xf32> to vector<16xf32>
    %408 = vector.shape_cast %407 : vector<16xf32> to vector<16x1xf32>
    %409 = vector.broadcast %408 : vector<16x1xf32> to vector<16x16xf32>
    %410 = arith.divf %406, %409 : vector<16x16xf32>
    %411 = arith.mulf %410, %5 : vector<16x16xf32>
    %cst_168 = arith.constant dense<0.000000e+00> : vector<16xf32>
    %412 = vector.multi_reduction <add>, %411, %cst_168 [0] : vector<16x16xf32> to vector<16xf32>
    %413 = vector.shape_cast %412 : vector<16xf32> to vector<1x16xf32>
    %414 = vector.broadcast %413 : vector<1x16xf32> to vector<32x16xf32>
    %415 = arith.mulf %46, %414 : vector<32x16xf32>
    %cst_169 = arith.constant dense<0.000000e+00> : vector<32xf32>
    %416 = vector.multi_reduction <add>, %415, %cst_169 [1] : vector<32x16xf32> to vector<32xf32>
    %417 = vector.shape_cast %416 : vector<32xf32> to vector<32x1xf32>
    %cst_170 = arith.constant 1.000000e+00 : f32
    %418 = vector.broadcast %cst_170 : f32 to vector<16x16xf32>
    %419 = arith.subf %418, %5 : vector<16x16xf32>
    %420 = arith.mulf %410, %419 : vector<16x16xf32>
    %cst_171 = arith.constant dense<0.000000e+00> : vector<32x16xf32>
    %421 = tpu.matmul %46, %420, %cst_171 {dimension_numbers = #tpu.dot_dimension_numbers<[1], [0], [0], [1], [0, 0, 1, 1], [], []>} : vector<32x16xf32>, vector<16x16xf32>, vector<32x16xf32> -> vector<32x16xf32>
    %cst_172 = arith.constant dense<0.000000e+00> : vector<32x32xf32>
    %422 = tpu.matmul %421, %52, %cst_172 {dimension_numbers = #tpu.dot_dimension_numbers<[1], [0], [0], [1], [0, 0, 1, 1], [], []>} : vector<32x16xf32>, vector<16x32xf32>, vector<32x32xf32> -> vector<32x32xf32>
    %423 = arith.mulf %422, %66 : vector<32x32xf32>
    %cst_173 = arith.constant dense<0.000000e+00> : vector<32x64xf32>
    %424 = tpu.matmul %393, %395, %cst_173 {dimension_numbers = #tpu.dot_dimension_numbers<[1], [0], [0], [1], [0, 0, 1, 1], [], []>} : vector<32x32xf32>, vector<32x64xf32>, vector<32x64xf32> -> vector<32x64xf32>
    %425 = vector.extract_strided_slice %424 {offsets = [0, 0], sizes = [32, 32], strides = [1, 1]} : vector<32x64xf32> to vector<32x32xf32>
    %426 = vector.extract_strided_slice %424 {offsets = [0, 32], sizes = [32, 32], strides = [1, 1]} : vector<32x64xf32> to vector<32x32xf32>
    %427 = vector.broadcast %417 : vector<32x1xf32> to vector<32x32xf32>
    %428 = arith.mulf %427, %425 : vector<32x32xf32>
    %cst_174 = arith.constant dense<0.000000e+00> : vector<32x32xf32>
    %429 = tpu.matmul %423, %426, %cst_174 {dimension_numbers = #tpu.dot_dimension_numbers<[1], [0], [0], [1], [0, 0, 1, 1], [], []>} : vector<32x32xf32>, vector<32x32xf32>, vector<32x32xf32> -> vector<32x32xf32>
    %430 = arith.addf %428, %429 : vector<32x32xf32>
    %431 = vector.broadcast %397 : vector<1x32xf32> to vector<32x32xf32>
    %432 = arith.addf %430, %431 : vector<32x32xf32>
    %c4_175 = arith.constant 4 : index
    %c0_176 = arith.constant 0 : index
    %c0_177 = arith.constant 0 : index
    %433 = vector.load %arg10[%c4_175, %c0_176, %c0_177] : memref<8x1x32xf32, #tpu.memory_space<vmem>>, vector<1x1x32xf32>
    %434 = vector.shape_cast %433 : vector<1x1x32xf32> to vector<1x32xf32>
    %c4_178 = arith.constant 4 : index
    %c0_179 = arith.constant 0 : index
    %c0_180 = arith.constant 0 : index
    %435 = vector.load %arg11[%c4_178, %c0_179, %c0_180] : memref<8x1x32xf32, #tpu.memory_space<vmem>>, vector<1x1x32xf32>
    %436 = vector.shape_cast %435 : vector<1x1x32xf32> to vector<1x32xf32>
    %cst_181 = arith.constant dense<0.000000e+00> : vector<32xf32>
    %437 = vector.multi_reduction <add>, %432, %cst_181 [0] : vector<32x32xf32> to vector<32xf32>
    %438 = vector.shape_cast %437 : vector<32xf32> to vector<1x32xf32>
    %cst_182 = arith.constant 3.125000e-02 : f32
    %439 = vector.broadcast %cst_182 : f32 to vector<1x32xf32>
    %440 = arith.mulf %438, %439 : vector<1x32xf32>
    %441 = vector.broadcast %440 : vector<1x32xf32> to vector<32x32xf32>
    %442 = arith.subf %432, %441 : vector<32x32xf32>
    %443 = arith.mulf %442, %442 : vector<32x32xf32>
    %cst_183 = arith.constant dense<0.000000e+00> : vector<32xf32>
    %444 = vector.multi_reduction <add>, %443, %cst_183 [0] : vector<32x32xf32> to vector<32xf32>
    %445 = vector.shape_cast %444 : vector<32xf32> to vector<1x32xf32>
    %cst_184 = arith.constant 3.125000e-02 : f32
    %446 = vector.broadcast %cst_184 : f32 to vector<1x32xf32>
    %447 = arith.mulf %445, %446 : vector<1x32xf32>
    %cst_185 = arith.constant 9.99999974E-6 : f32
    %448 = vector.broadcast %cst_185 : f32 to vector<1x32xf32>
    %449 = arith.addf %447, %448 : vector<1x32xf32>
    %450 = math.rsqrt %449 : vector<1x32xf32>
    %451 = vector.broadcast %450 : vector<1x32xf32> to vector<32x32xf32>
    %452 = arith.mulf %442, %451 : vector<32x32xf32>
    %453 = vector.broadcast %434 : vector<1x32xf32> to vector<32x32xf32>
    %454 = arith.mulf %452, %453 : vector<32x32xf32>
    %455 = vector.broadcast %436 : vector<1x32xf32> to vector<32x32xf32>
    %456 = arith.addf %454, %455 : vector<32x32xf32>
    %cst_186 = arith.constant 0.000000e+00 : f32
    %457 = vector.broadcast %cst_186 : f32 to vector<32x32xf32>
    %458 = arith.maximumf %456, %457 : vector<32x32xf32>
    %c5 = arith.constant 5 : index
    %c0_187 = arith.constant 0 : index
    %c0_188 = arith.constant 0 : index
    %459 = vector.load %arg7[%c5, %c0_187, %c0_188] : memref<8x32x64xf32, #tpu.memory_space<vmem>>, vector<1x32x64xf32>
    %460 = vector.shape_cast %459 : vector<1x32x64xf32> to vector<32x64xf32>
    %c5_189 = arith.constant 5 : index
    %c0_190 = arith.constant 0 : index
    %c0_191 = arith.constant 0 : index
    %461 = vector.load %arg8[%c5_189, %c0_190, %c0_191] : memref<8x1x32xf32, #tpu.memory_space<vmem>>, vector<1x1x32xf32>
    %462 = vector.shape_cast %461 : vector<1x1x32xf32> to vector<1x32xf32>
    %c5_192 = arith.constant 5 : index
    %c0_193 = arith.constant 0 : index
    %c0_194 = arith.constant 0 : index
    %463 = vector.load %arg9[%c5_192, %c0_193, %c0_194] : memref<8x16x16xf32, #tpu.memory_space<vmem>>, vector<1x16x16xf32>
    %464 = vector.shape_cast %463 : vector<1x16x16xf32> to vector<16x16xf32>
    %465 = arith.mulf %0, %464 : vector<16x16xf32>
    %466 = arith.addf %465, %70 : vector<16x16xf32>
    %cst_195 = arith.constant dense<0xFF800000> : vector<16xf32>
    %467 = vector.multi_reduction <maximumf>, %466, %cst_195 [1] : vector<16x16xf32> to vector<16xf32>
    %468 = vector.shape_cast %467 : vector<16xf32> to vector<16x1xf32>
    %469 = vector.broadcast %468 : vector<16x1xf32> to vector<16x16xf32>
    %470 = arith.subf %466, %469 : vector<16x16xf32>
    %471 = math.exp %470 : vector<16x16xf32>
    %cst_196 = arith.constant dense<0.000000e+00> : vector<16xf32>
    %472 = vector.multi_reduction <add>, %471, %cst_196 [1] : vector<16x16xf32> to vector<16xf32>
    %473 = vector.shape_cast %472 : vector<16xf32> to vector<16x1xf32>
    %474 = vector.broadcast %473 : vector<16x1xf32> to vector<16x16xf32>
    %475 = arith.divf %471, %474 : vector<16x16xf32>
    %476 = arith.mulf %475, %5 : vector<16x16xf32>
    %cst_197 = arith.constant dense<0.000000e+00> : vector<16xf32>
    %477 = vector.multi_reduction <add>, %476, %cst_197 [0] : vector<16x16xf32> to vector<16xf32>
    %478 = vector.shape_cast %477 : vector<16xf32> to vector<1x16xf32>
    %479 = vector.broadcast %478 : vector<1x16xf32> to vector<32x16xf32>
    %480 = arith.mulf %46, %479 : vector<32x16xf32>
    %cst_198 = arith.constant dense<0.000000e+00> : vector<32xf32>
    %481 = vector.multi_reduction <add>, %480, %cst_198 [1] : vector<32x16xf32> to vector<32xf32>
    %482 = vector.shape_cast %481 : vector<32xf32> to vector<32x1xf32>
    %cst_199 = arith.constant 1.000000e+00 : f32
    %483 = vector.broadcast %cst_199 : f32 to vector<16x16xf32>
    %484 = arith.subf %483, %5 : vector<16x16xf32>
    %485 = arith.mulf %475, %484 : vector<16x16xf32>
    %cst_200 = arith.constant dense<0.000000e+00> : vector<32x16xf32>
    %486 = tpu.matmul %46, %485, %cst_200 {dimension_numbers = #tpu.dot_dimension_numbers<[1], [0], [0], [1], [0, 0, 1, 1], [], []>} : vector<32x16xf32>, vector<16x16xf32>, vector<32x16xf32> -> vector<32x16xf32>
    %cst_201 = arith.constant dense<0.000000e+00> : vector<32x32xf32>
    %487 = tpu.matmul %486, %52, %cst_201 {dimension_numbers = #tpu.dot_dimension_numbers<[1], [0], [0], [1], [0, 0, 1, 1], [], []>} : vector<32x16xf32>, vector<16x32xf32>, vector<32x32xf32> -> vector<32x32xf32>
    %488 = arith.mulf %487, %66 : vector<32x32xf32>
    %cst_202 = arith.constant dense<0.000000e+00> : vector<32x64xf32>
    %489 = tpu.matmul %458, %460, %cst_202 {dimension_numbers = #tpu.dot_dimension_numbers<[1], [0], [0], [1], [0, 0, 1, 1], [], []>} : vector<32x32xf32>, vector<32x64xf32>, vector<32x64xf32> -> vector<32x64xf32>
    %490 = vector.extract_strided_slice %489 {offsets = [0, 0], sizes = [32, 32], strides = [1, 1]} : vector<32x64xf32> to vector<32x32xf32>
    %491 = vector.extract_strided_slice %489 {offsets = [0, 32], sizes = [32, 32], strides = [1, 1]} : vector<32x64xf32> to vector<32x32xf32>
    %492 = vector.broadcast %482 : vector<32x1xf32> to vector<32x32xf32>
    %493 = arith.mulf %492, %490 : vector<32x32xf32>
    %cst_203 = arith.constant dense<0.000000e+00> : vector<32x32xf32>
    %494 = tpu.matmul %488, %491, %cst_203 {dimension_numbers = #tpu.dot_dimension_numbers<[1], [0], [0], [1], [0, 0, 1, 1], [], []>} : vector<32x32xf32>, vector<32x32xf32>, vector<32x32xf32> -> vector<32x32xf32>
    %495 = arith.addf %493, %494 : vector<32x32xf32>
    %496 = vector.broadcast %462 : vector<1x32xf32> to vector<32x32xf32>
    %497 = arith.addf %495, %496 : vector<32x32xf32>
    %c5_204 = arith.constant 5 : index
    %c0_205 = arith.constant 0 : index
    %c0_206 = arith.constant 0 : index
    %498 = vector.load %arg10[%c5_204, %c0_205, %c0_206] : memref<8x1x32xf32, #tpu.memory_space<vmem>>, vector<1x1x32xf32>
    %499 = vector.shape_cast %498 : vector<1x1x32xf32> to vector<1x32xf32>
    %c5_207 = arith.constant 5 : index
    %c0_208 = arith.constant 0 : index
    %c0_209 = arith.constant 0 : index
    %500 = vector.load %arg11[%c5_207, %c0_208, %c0_209] : memref<8x1x32xf32, #tpu.memory_space<vmem>>, vector<1x1x32xf32>
    %501 = vector.shape_cast %500 : vector<1x1x32xf32> to vector<1x32xf32>
    %cst_210 = arith.constant dense<0.000000e+00> : vector<32xf32>
    %502 = vector.multi_reduction <add>, %497, %cst_210 [0] : vector<32x32xf32> to vector<32xf32>
    %503 = vector.shape_cast %502 : vector<32xf32> to vector<1x32xf32>
    %cst_211 = arith.constant 3.125000e-02 : f32
    %504 = vector.broadcast %cst_211 : f32 to vector<1x32xf32>
    %505 = arith.mulf %503, %504 : vector<1x32xf32>
    %506 = vector.broadcast %505 : vector<1x32xf32> to vector<32x32xf32>
    %507 = arith.subf %497, %506 : vector<32x32xf32>
    %508 = arith.mulf %507, %507 : vector<32x32xf32>
    %cst_212 = arith.constant dense<0.000000e+00> : vector<32xf32>
    %509 = vector.multi_reduction <add>, %508, %cst_212 [0] : vector<32x32xf32> to vector<32xf32>
    %510 = vector.shape_cast %509 : vector<32xf32> to vector<1x32xf32>
    %cst_213 = arith.constant 3.125000e-02 : f32
    %511 = vector.broadcast %cst_213 : f32 to vector<1x32xf32>
    %512 = arith.mulf %510, %511 : vector<1x32xf32>
    %cst_214 = arith.constant 9.99999974E-6 : f32
    %513 = vector.broadcast %cst_214 : f32 to vector<1x32xf32>
    %514 = arith.addf %512, %513 : vector<1x32xf32>
    %515 = math.rsqrt %514 : vector<1x32xf32>
    %516 = vector.broadcast %515 : vector<1x32xf32> to vector<32x32xf32>
    %517 = arith.mulf %507, %516 : vector<32x32xf32>
    %518 = vector.broadcast %499 : vector<1x32xf32> to vector<32x32xf32>
    %519 = arith.mulf %517, %518 : vector<32x32xf32>
    %520 = vector.broadcast %501 : vector<1x32xf32> to vector<32x32xf32>
    %521 = arith.addf %519, %520 : vector<32x32xf32>
    %cst_215 = arith.constant 0.000000e+00 : f32
    %522 = vector.broadcast %cst_215 : f32 to vector<32x32xf32>
    %523 = arith.maximumf %521, %522 : vector<32x32xf32>
    %524 = arith.addf %393, %523 : vector<32x32xf32>
    %c6 = arith.constant 6 : index
    %c0_216 = arith.constant 0 : index
    %c0_217 = arith.constant 0 : index
    %525 = vector.load %arg7[%c6, %c0_216, %c0_217] : memref<8x32x64xf32, #tpu.memory_space<vmem>>, vector<1x32x64xf32>
    %526 = vector.shape_cast %525 : vector<1x32x64xf32> to vector<32x64xf32>
    %c6_218 = arith.constant 6 : index
    %c0_219 = arith.constant 0 : index
    %c0_220 = arith.constant 0 : index
    %527 = vector.load %arg8[%c6_218, %c0_219, %c0_220] : memref<8x1x32xf32, #tpu.memory_space<vmem>>, vector<1x1x32xf32>
    %528 = vector.shape_cast %527 : vector<1x1x32xf32> to vector<1x32xf32>
    %c6_221 = arith.constant 6 : index
    %c0_222 = arith.constant 0 : index
    %c0_223 = arith.constant 0 : index
    %529 = vector.load %arg9[%c6_221, %c0_222, %c0_223] : memref<8x16x16xf32, #tpu.memory_space<vmem>>, vector<1x16x16xf32>
    %530 = vector.shape_cast %529 : vector<1x16x16xf32> to vector<16x16xf32>
    %531 = arith.mulf %0, %530 : vector<16x16xf32>
    %532 = arith.addf %531, %70 : vector<16x16xf32>
    %cst_224 = arith.constant dense<0xFF800000> : vector<16xf32>
    %533 = vector.multi_reduction <maximumf>, %532, %cst_224 [1] : vector<16x16xf32> to vector<16xf32>
    %534 = vector.shape_cast %533 : vector<16xf32> to vector<16x1xf32>
    %535 = vector.broadcast %534 : vector<16x1xf32> to vector<16x16xf32>
    %536 = arith.subf %532, %535 : vector<16x16xf32>
    %537 = math.exp %536 : vector<16x16xf32>
    %cst_225 = arith.constant dense<0.000000e+00> : vector<16xf32>
    %538 = vector.multi_reduction <add>, %537, %cst_225 [1] : vector<16x16xf32> to vector<16xf32>
    %539 = vector.shape_cast %538 : vector<16xf32> to vector<16x1xf32>
    %540 = vector.broadcast %539 : vector<16x1xf32> to vector<16x16xf32>
    %541 = arith.divf %537, %540 : vector<16x16xf32>
    %542 = arith.mulf %541, %5 : vector<16x16xf32>
    %cst_226 = arith.constant dense<0.000000e+00> : vector<16xf32>
    %543 = vector.multi_reduction <add>, %542, %cst_226 [0] : vector<16x16xf32> to vector<16xf32>
    %544 = vector.shape_cast %543 : vector<16xf32> to vector<1x16xf32>
    %545 = vector.broadcast %544 : vector<1x16xf32> to vector<32x16xf32>
    %546 = arith.mulf %46, %545 : vector<32x16xf32>
    %cst_227 = arith.constant dense<0.000000e+00> : vector<32xf32>
    %547 = vector.multi_reduction <add>, %546, %cst_227 [1] : vector<32x16xf32> to vector<32xf32>
    %548 = vector.shape_cast %547 : vector<32xf32> to vector<32x1xf32>
    %cst_228 = arith.constant 1.000000e+00 : f32
    %549 = vector.broadcast %cst_228 : f32 to vector<16x16xf32>
    %550 = arith.subf %549, %5 : vector<16x16xf32>
    %551 = arith.mulf %541, %550 : vector<16x16xf32>
    %cst_229 = arith.constant dense<0.000000e+00> : vector<32x16xf32>
    %552 = tpu.matmul %46, %551, %cst_229 {dimension_numbers = #tpu.dot_dimension_numbers<[1], [0], [0], [1], [0, 0, 1, 1], [], []>} : vector<32x16xf32>, vector<16x16xf32>, vector<32x16xf32> -> vector<32x16xf32>
    %cst_230 = arith.constant dense<0.000000e+00> : vector<32x32xf32>
    %553 = tpu.matmul %552, %52, %cst_230 {dimension_numbers = #tpu.dot_dimension_numbers<[1], [0], [0], [1], [0, 0, 1, 1], [], []>} : vector<32x16xf32>, vector<16x32xf32>, vector<32x32xf32> -> vector<32x32xf32>
    %554 = arith.mulf %553, %66 : vector<32x32xf32>
    %cst_231 = arith.constant dense<0.000000e+00> : vector<32x64xf32>
    %555 = tpu.matmul %524, %526, %cst_231 {dimension_numbers = #tpu.dot_dimension_numbers<[1], [0], [0], [1], [0, 0, 1, 1], [], []>} : vector<32x32xf32>, vector<32x64xf32>, vector<32x64xf32> -> vector<32x64xf32>
    %556 = vector.extract_strided_slice %555 {offsets = [0, 0], sizes = [32, 32], strides = [1, 1]} : vector<32x64xf32> to vector<32x32xf32>
    %557 = vector.extract_strided_slice %555 {offsets = [0, 32], sizes = [32, 32], strides = [1, 1]} : vector<32x64xf32> to vector<32x32xf32>
    %558 = vector.broadcast %548 : vector<32x1xf32> to vector<32x32xf32>
    %559 = arith.mulf %558, %556 : vector<32x32xf32>
    %cst_232 = arith.constant dense<0.000000e+00> : vector<32x32xf32>
    %560 = tpu.matmul %554, %557, %cst_232 {dimension_numbers = #tpu.dot_dimension_numbers<[1], [0], [0], [1], [0, 0, 1, 1], [], []>} : vector<32x32xf32>, vector<32x32xf32>, vector<32x32xf32> -> vector<32x32xf32>
    %561 = arith.addf %559, %560 : vector<32x32xf32>
    %562 = vector.broadcast %528 : vector<1x32xf32> to vector<32x32xf32>
    %563 = arith.addf %561, %562 : vector<32x32xf32>
    %c6_233 = arith.constant 6 : index
    %c0_234 = arith.constant 0 : index
    %c0_235 = arith.constant 0 : index
    %564 = vector.load %arg10[%c6_233, %c0_234, %c0_235] : memref<8x1x32xf32, #tpu.memory_space<vmem>>, vector<1x1x32xf32>
    %565 = vector.shape_cast %564 : vector<1x1x32xf32> to vector<1x32xf32>
    %c6_236 = arith.constant 6 : index
    %c0_237 = arith.constant 0 : index
    %c0_238 = arith.constant 0 : index
    %566 = vector.load %arg11[%c6_236, %c0_237, %c0_238] : memref<8x1x32xf32, #tpu.memory_space<vmem>>, vector<1x1x32xf32>
    %567 = vector.shape_cast %566 : vector<1x1x32xf32> to vector<1x32xf32>
    %cst_239 = arith.constant dense<0.000000e+00> : vector<32xf32>
    %568 = vector.multi_reduction <add>, %563, %cst_239 [0] : vector<32x32xf32> to vector<32xf32>
    %569 = vector.shape_cast %568 : vector<32xf32> to vector<1x32xf32>
    %cst_240 = arith.constant 3.125000e-02 : f32
    %570 = vector.broadcast %cst_240 : f32 to vector<1x32xf32>
    %571 = arith.mulf %569, %570 : vector<1x32xf32>
    %572 = vector.broadcast %571 : vector<1x32xf32> to vector<32x32xf32>
    %573 = arith.subf %563, %572 : vector<32x32xf32>
    %574 = arith.mulf %573, %573 : vector<32x32xf32>
    %cst_241 = arith.constant dense<0.000000e+00> : vector<32xf32>
    %575 = vector.multi_reduction <add>, %574, %cst_241 [0] : vector<32x32xf32> to vector<32xf32>
    %576 = vector.shape_cast %575 : vector<32xf32> to vector<1x32xf32>
    %cst_242 = arith.constant 3.125000e-02 : f32
    %577 = vector.broadcast %cst_242 : f32 to vector<1x32xf32>
    %578 = arith.mulf %576, %577 : vector<1x32xf32>
    %cst_243 = arith.constant 9.99999974E-6 : f32
    %579 = vector.broadcast %cst_243 : f32 to vector<1x32xf32>
    %580 = arith.addf %578, %579 : vector<1x32xf32>
    %581 = math.rsqrt %580 : vector<1x32xf32>
    %582 = vector.broadcast %581 : vector<1x32xf32> to vector<32x32xf32>
    %583 = arith.mulf %573, %582 : vector<32x32xf32>
    %584 = vector.broadcast %565 : vector<1x32xf32> to vector<32x32xf32>
    %585 = arith.mulf %583, %584 : vector<32x32xf32>
    %586 = vector.broadcast %567 : vector<1x32xf32> to vector<32x32xf32>
    %587 = arith.addf %585, %586 : vector<32x32xf32>
    %cst_244 = arith.constant 0.000000e+00 : f32
    %588 = vector.broadcast %cst_244 : f32 to vector<32x32xf32>
    %589 = arith.maximumf %587, %588 : vector<32x32xf32>
    %c7 = arith.constant 7 : index
    %c0_245 = arith.constant 0 : index
    %c0_246 = arith.constant 0 : index
    %590 = vector.load %arg7[%c7, %c0_245, %c0_246] : memref<8x32x64xf32, #tpu.memory_space<vmem>>, vector<1x32x64xf32>
    %591 = vector.shape_cast %590 : vector<1x32x64xf32> to vector<32x64xf32>
    %c7_247 = arith.constant 7 : index
    %c0_248 = arith.constant 0 : index
    %c0_249 = arith.constant 0 : index
    %592 = vector.load %arg8[%c7_247, %c0_248, %c0_249] : memref<8x1x32xf32, #tpu.memory_space<vmem>>, vector<1x1x32xf32>
    %593 = vector.shape_cast %592 : vector<1x1x32xf32> to vector<1x32xf32>
    %c7_250 = arith.constant 7 : index
    %c0_251 = arith.constant 0 : index
    %c0_252 = arith.constant 0 : index
    %594 = vector.load %arg9[%c7_250, %c0_251, %c0_252] : memref<8x16x16xf32, #tpu.memory_space<vmem>>, vector<1x16x16xf32>
    %595 = vector.shape_cast %594 : vector<1x16x16xf32> to vector<16x16xf32>
    %596 = arith.mulf %0, %595 : vector<16x16xf32>
    %597 = arith.addf %596, %70 : vector<16x16xf32>
    %cst_253 = arith.constant dense<0xFF800000> : vector<16xf32>
    %598 = vector.multi_reduction <maximumf>, %597, %cst_253 [1] : vector<16x16xf32> to vector<16xf32>
    %599 = vector.shape_cast %598 : vector<16xf32> to vector<16x1xf32>
    %600 = vector.broadcast %599 : vector<16x1xf32> to vector<16x16xf32>
    %601 = arith.subf %597, %600 : vector<16x16xf32>
    %602 = math.exp %601 : vector<16x16xf32>
    %cst_254 = arith.constant dense<0.000000e+00> : vector<16xf32>
    %603 = vector.multi_reduction <add>, %602, %cst_254 [1] : vector<16x16xf32> to vector<16xf32>
    %604 = vector.shape_cast %603 : vector<16xf32> to vector<16x1xf32>
    %605 = vector.broadcast %604 : vector<16x1xf32> to vector<16x16xf32>
    %606 = arith.divf %602, %605 : vector<16x16xf32>
    %607 = arith.mulf %606, %5 : vector<16x16xf32>
    %cst_255 = arith.constant dense<0.000000e+00> : vector<16xf32>
    %608 = vector.multi_reduction <add>, %607, %cst_255 [0] : vector<16x16xf32> to vector<16xf32>
    %609 = vector.shape_cast %608 : vector<16xf32> to vector<1x16xf32>
    %610 = vector.broadcast %609 : vector<1x16xf32> to vector<32x16xf32>
    %611 = arith.mulf %46, %610 : vector<32x16xf32>
    %cst_256 = arith.constant dense<0.000000e+00> : vector<32xf32>
    %612 = vector.multi_reduction <add>, %611, %cst_256 [1] : vector<32x16xf32> to vector<32xf32>
    %613 = vector.shape_cast %612 : vector<32xf32> to vector<32x1xf32>
    %cst_257 = arith.constant 1.000000e+00 : f32
    %614 = vector.broadcast %cst_257 : f32 to vector<16x16xf32>
    %615 = arith.subf %614, %5 : vector<16x16xf32>
    %616 = arith.mulf %606, %615 : vector<16x16xf32>
    %cst_258 = arith.constant dense<0.000000e+00> : vector<32x16xf32>
    %617 = tpu.matmul %46, %616, %cst_258 {dimension_numbers = #tpu.dot_dimension_numbers<[1], [0], [0], [1], [0, 0, 1, 1], [], []>} : vector<32x16xf32>, vector<16x16xf32>, vector<32x16xf32> -> vector<32x16xf32>
    %cst_259 = arith.constant dense<0.000000e+00> : vector<32x32xf32>
    %618 = tpu.matmul %617, %52, %cst_259 {dimension_numbers = #tpu.dot_dimension_numbers<[1], [0], [0], [1], [0, 0, 1, 1], [], []>} : vector<32x16xf32>, vector<16x32xf32>, vector<32x32xf32> -> vector<32x32xf32>
    %619 = arith.mulf %618, %66 : vector<32x32xf32>
    %cst_260 = arith.constant dense<0.000000e+00> : vector<32x64xf32>
    %620 = tpu.matmul %589, %591, %cst_260 {dimension_numbers = #tpu.dot_dimension_numbers<[1], [0], [0], [1], [0, 0, 1, 1], [], []>} : vector<32x32xf32>, vector<32x64xf32>, vector<32x64xf32> -> vector<32x64xf32>
    %621 = vector.extract_strided_slice %620 {offsets = [0, 0], sizes = [32, 32], strides = [1, 1]} : vector<32x64xf32> to vector<32x32xf32>
    %622 = vector.extract_strided_slice %620 {offsets = [0, 32], sizes = [32, 32], strides = [1, 1]} : vector<32x64xf32> to vector<32x32xf32>
    %623 = vector.broadcast %613 : vector<32x1xf32> to vector<32x32xf32>
    %624 = arith.mulf %623, %621 : vector<32x32xf32>
    %cst_261 = arith.constant dense<0.000000e+00> : vector<32x32xf32>
    %625 = tpu.matmul %619, %622, %cst_261 {dimension_numbers = #tpu.dot_dimension_numbers<[1], [0], [0], [1], [0, 0, 1, 1], [], []>} : vector<32x32xf32>, vector<32x32xf32>, vector<32x32xf32> -> vector<32x32xf32>
    %626 = arith.addf %624, %625 : vector<32x32xf32>
    %627 = vector.broadcast %593 : vector<1x32xf32> to vector<32x32xf32>
    %628 = arith.addf %626, %627 : vector<32x32xf32>
    %c7_262 = arith.constant 7 : index
    %c0_263 = arith.constant 0 : index
    %c0_264 = arith.constant 0 : index
    %629 = vector.load %arg10[%c7_262, %c0_263, %c0_264] : memref<8x1x32xf32, #tpu.memory_space<vmem>>, vector<1x1x32xf32>
    %630 = vector.shape_cast %629 : vector<1x1x32xf32> to vector<1x32xf32>
    %c7_265 = arith.constant 7 : index
    %c0_266 = arith.constant 0 : index
    %c0_267 = arith.constant 0 : index
    %631 = vector.load %arg11[%c7_265, %c0_266, %c0_267] : memref<8x1x32xf32, #tpu.memory_space<vmem>>, vector<1x1x32xf32>
    %632 = vector.shape_cast %631 : vector<1x1x32xf32> to vector<1x32xf32>
    %cst_268 = arith.constant dense<0.000000e+00> : vector<32xf32>
    %633 = vector.multi_reduction <add>, %628, %cst_268 [0] : vector<32x32xf32> to vector<32xf32>
    %634 = vector.shape_cast %633 : vector<32xf32> to vector<1x32xf32>
    %cst_269 = arith.constant 3.125000e-02 : f32
    %635 = vector.broadcast %cst_269 : f32 to vector<1x32xf32>
    %636 = arith.mulf %634, %635 : vector<1x32xf32>
    %637 = vector.broadcast %636 : vector<1x32xf32> to vector<32x32xf32>
    %638 = arith.subf %628, %637 : vector<32x32xf32>
    %639 = arith.mulf %638, %638 : vector<32x32xf32>
    %cst_270 = arith.constant dense<0.000000e+00> : vector<32xf32>
    %640 = vector.multi_reduction <add>, %639, %cst_270 [0] : vector<32x32xf32> to vector<32xf32>
    %641 = vector.shape_cast %640 : vector<32xf32> to vector<1x32xf32>
    %cst_271 = arith.constant 3.125000e-02 : f32
    %642 = vector.broadcast %cst_271 : f32 to vector<1x32xf32>
    %643 = arith.mulf %641, %642 : vector<1x32xf32>
    %cst_272 = arith.constant 9.99999974E-6 : f32
    %644 = vector.broadcast %cst_272 : f32 to vector<1x32xf32>
    %645 = arith.addf %643, %644 : vector<1x32xf32>
    %646 = math.rsqrt %645 : vector<1x32xf32>
    %647 = vector.broadcast %646 : vector<1x32xf32> to vector<32x32xf32>
    %648 = arith.mulf %638, %647 : vector<32x32xf32>
    %649 = vector.broadcast %630 : vector<1x32xf32> to vector<32x32xf32>
    %650 = arith.mulf %648, %649 : vector<32x32xf32>
    %651 = vector.broadcast %632 : vector<1x32xf32> to vector<32x32xf32>
    %652 = arith.addf %650, %651 : vector<32x32xf32>
    %cst_273 = arith.constant 0.000000e+00 : f32
    %653 = vector.broadcast %cst_273 : f32 to vector<32x32xf32>
    %654 = arith.maximumf %652, %653 : vector<32x32xf32>
    %655 = arith.addf %524, %654 : vector<32x32xf32>
    %c0_274 = arith.constant 0 : index
    %c0_275 = arith.constant 0 : index
    %656 = vector.load %arg12[%c0_274, %c0_275] : memref<32x6xf32, #tpu.memory_space<vmem>>, vector<32x6xf32>
    %c0_276 = arith.constant 0 : index
    %c0_277 = arith.constant 0 : index
    %657 = vector.load %arg13[%c0_276, %c0_277] : memref<1x3xf32, #tpu.memory_space<vmem>>, vector<1x3xf32>
    %c0_278 = arith.constant 0 : index
    %c0_279 = arith.constant 0 : index
    %658 = vector.load %arg14[%c0_278, %c0_279] : memref<16x16xf32, #tpu.memory_space<vmem>>, vector<16x16xf32>
    %659 = arith.mulf %0, %658 : vector<16x16xf32>
    %660 = arith.addf %659, %70 : vector<16x16xf32>
    %cst_280 = arith.constant dense<0xFF800000> : vector<16xf32>
    %661 = vector.multi_reduction <maximumf>, %660, %cst_280 [1] : vector<16x16xf32> to vector<16xf32>
    %662 = vector.shape_cast %661 : vector<16xf32> to vector<16x1xf32>
    %663 = vector.broadcast %662 : vector<16x1xf32> to vector<16x16xf32>
    %664 = arith.subf %660, %663 : vector<16x16xf32>
    %665 = math.exp %664 : vector<16x16xf32>
    %cst_281 = arith.constant dense<0.000000e+00> : vector<16xf32>
    %666 = vector.multi_reduction <add>, %665, %cst_281 [1] : vector<16x16xf32> to vector<16xf32>
    %667 = vector.shape_cast %666 : vector<16xf32> to vector<16x1xf32>
    %668 = vector.broadcast %667 : vector<16x1xf32> to vector<16x16xf32>
    %669 = arith.divf %665, %668 : vector<16x16xf32>
    %670 = arith.mulf %669, %5 : vector<16x16xf32>
    %cst_282 = arith.constant dense<0.000000e+00> : vector<16xf32>
    %671 = vector.multi_reduction <add>, %670, %cst_282 [0] : vector<16x16xf32> to vector<16xf32>
    %672 = vector.shape_cast %671 : vector<16xf32> to vector<1x16xf32>
    %673 = vector.broadcast %672 : vector<1x16xf32> to vector<32x16xf32>
    %674 = arith.mulf %46, %673 : vector<32x16xf32>
    %cst_283 = arith.constant dense<0.000000e+00> : vector<32xf32>
    %675 = vector.multi_reduction <add>, %674, %cst_283 [1] : vector<32x16xf32> to vector<32xf32>
    %676 = vector.shape_cast %675 : vector<32xf32> to vector<32x1xf32>
    %cst_284 = arith.constant 1.000000e+00 : f32
    %677 = vector.broadcast %cst_284 : f32 to vector<16x16xf32>
    %678 = arith.subf %677, %5 : vector<16x16xf32>
    %679 = arith.mulf %669, %678 : vector<16x16xf32>
    %cst_285 = arith.constant dense<0.000000e+00> : vector<32x16xf32>
    %680 = tpu.matmul %46, %679, %cst_285 {dimension_numbers = #tpu.dot_dimension_numbers<[1], [0], [0], [1], [0, 0, 1, 1], [], []>} : vector<32x16xf32>, vector<16x16xf32>, vector<32x16xf32> -> vector<32x16xf32>
    %cst_286 = arith.constant dense<0.000000e+00> : vector<32x32xf32>
    %681 = tpu.matmul %680, %52, %cst_286 {dimension_numbers = #tpu.dot_dimension_numbers<[1], [0], [0], [1], [0, 0, 1, 1], [], []>} : vector<32x16xf32>, vector<16x32xf32>, vector<32x32xf32> -> vector<32x32xf32>
    %682 = arith.mulf %681, %66 : vector<32x32xf32>
    %cst_287 = arith.constant dense<0.000000e+00> : vector<32x6xf32>
    %683 = tpu.matmul %655, %656, %cst_287 {dimension_numbers = #tpu.dot_dimension_numbers<[1], [0], [0], [1], [0, 0, 1, 1], [], []>} : vector<32x32xf32>, vector<32x6xf32>, vector<32x6xf32> -> vector<32x6xf32>
    %684 = vector.extract_strided_slice %683 {offsets = [0, 0], sizes = [32, 3], strides = [1, 1]} : vector<32x6xf32> to vector<32x3xf32>
    %685 = vector.extract_strided_slice %683 {offsets = [0, 3], sizes = [32, 3], strides = [1, 1]} : vector<32x6xf32> to vector<32x3xf32>
    %686 = vector.broadcast %676 : vector<32x1xf32> to vector<32x3xf32>
    %687 = arith.mulf %686, %684 : vector<32x3xf32>
    %cst_288 = arith.constant dense<0.000000e+00> : vector<32x3xf32>
    %688 = tpu.matmul %682, %685, %cst_288 {dimension_numbers = #tpu.dot_dimension_numbers<[1], [0], [0], [1], [0, 0, 1, 1], [], []>} : vector<32x32xf32>, vector<32x3xf32>, vector<32x3xf32> -> vector<32x3xf32>
    %689 = arith.addf %687, %688 : vector<32x3xf32>
    %690 = vector.broadcast %657 : vector<1x3xf32> to vector<32x3xf32>
    %691 = arith.addf %689, %690 : vector<32x3xf32>
    %c0_289 = arith.constant 0 : index
    %c0_290 = arith.constant 0 : index
    %692 = vector.load %arg15[%c0_289, %c0_290] : memref<32x3xf32, #tpu.memory_space<vmem>>, vector<32x3xf32>
    tpu.vector_store %arg15[%c0_289, %c0_290], %691 {strides = array<i32>} : memref<32x3xf32, #tpu.memory_space<vmem>>, vector<32x3xf32>,
    return
  }
}

</mosaic_0001>

<llo_original>
// kernel: semgcn_forward.1
$region0: #{semgcn_forward.1}
  #allocation0 [shape = 'u32[]', space=smem, size = 0x4, offset = 0x4, fixed_abs, tag = 'smem constant byte address 0x4 - core index']
  #allocation1 [shape = 'u32[144,128]{1,0:T(1,128)}', space=vmem, size = 0x12000, scoped, tag = 'internal scratch']
  %s0 = inlined_call_operand.vmem [shape: f32[32,5], index: 0, kind: input, shape index: {}]
  %s1 = inlined_call_operand.vmem [shape: f32[16,16], index: 1, kind: input, shape index: {}]
  %s2 = inlined_call_operand.vmem [shape: f32[5,64], index: 2, kind: input, shape index: {}]
  %s3 = inlined_call_operand.vmem [shape: f32[1,32], index: 3, kind: input, shape index: {}]
  %s4 = inlined_call_operand.vmem [shape: f32[16,16], index: 4, kind: input, shape index: {}]
  %s5 = inlined_call_operand.vmem [shape: f32[1,32], index: 5, kind: input, shape index: {}]
  %s6 = inlined_call_operand.vmem [shape: f32[1,32], index: 6, kind: input, shape index: {}]
  %s7 = inlined_call_operand.vmem [shape: f32[8,32,64], index: 7, kind: input, shape index: {}]
  %s8 = inlined_call_operand.vmem [shape: f32[8,1,32], index: 8, kind: input, shape index: {}]
  %s9 = inlined_call_operand.vmem [shape: f32[8,16,16], index: 9, kind: input, shape index: {}]
  %s10 = inlined_call_operand.vmem [shape: f32[8,1,32], index: 10, kind: input, shape index: {}]
  %s11 = inlined_call_operand.vmem [shape: f32[8,1,32], index: 11, kind: input, shape index: {}]
  %s12 = inlined_call_operand.vmem [shape: f32[32,6], index: 12, kind: input, shape index: {}]
  %s13 = inlined_call_operand.vmem [shape: f32[1,3], index: 13, kind: input, shape index: {}]
  %s14 = inlined_call_operand.vmem [shape: f32[16,16], index: 14, kind: input, shape index: {}]
  %s15 = inlined_call_operand.vmem [shape: f32[32,3], index: 15, kind: output, shape index: {}]
  %s16 = sld [smem:[#allocation0]]
  $region70: #{semgcn_forward.1} parent=0
    _
  %s18 = ssub.s32 1, %s16
  %s19 = scalar_select 0, %s18, %s16
  // Predicated region
  $region2: #{semgcn_forward.1} parent=0 // pred_check
    _
  $region3: #{semgcn_forward.1} parent=0 // pred_check_branch
    %21 = sbr.rel (0) target = $region5
  $region4: #{semgcn_forward.1} parent=0 // pred_region
    _
  $region5: #{semgcn_forward.1} parent=0 // pred_fallthru
    _
  // Predicated region
  $region6: #{semgcn_forward.1} parent=0 // pred_check
    _
  $region7: #{semgcn_forward.1} parent=0 // pred_check_branch
    %23 = sbr.rel (0) target = $region9
  $region8: #{semgcn_forward.1} parent=0 // pred_region
    _
  $region9: #{semgcn_forward.1} parent=0 // pred_fallthru
    _
  // Predicated region
  $region10: #{semgcn_forward.1} parent=0 // pred_check
    _
  $region11: #{semgcn_forward.1} parent=0 // pred_check_branch
    %25 = sbr.rel (0) target = $region13
  $region12: #{semgcn_forward.1} parent=0 // pred_region
    _
  $region13: #{semgcn_forward.1} parent=0 // pred_fallthru
    _
  // Predicated region
  $region14: #{semgcn_forward.1} parent=0 // pred_check
    _
  $region15: #{semgcn_forward.1} parent=0 // pred_check_branch
    %27 = sbr.rel (0) target = $region17
  $region16: #{semgcn_forward.1} parent=0 // pred_region
    _
  $region17: #{semgcn_forward.1} parent=0 // pred_fallthru
    _
  // Predicated region
  $region18: #{semgcn_forward.1} parent=0 // pred_check
    _
  $region19: #{semgcn_forward.1} parent=0 // pred_check_branch
    %29 = sbr.rel (0) target = $region21
  $region20: #{semgcn_forward.1} parent=0 // pred_region
    _
  $region21: #{semgcn_forward.1} parent=0 // pred_fallthru
    _
  // Predicated region
  $region22: #{semgcn_forward.1} parent=0 // pred_check
    _
  $region23: #{semgcn_forward.1} parent=0 // pred_check_branch
    %31 = sbr.rel (0) target = $region25
  $region24: #{semgcn_forward.1} parent=0 // pred_region
    _
  $region25: #{semgcn_forward.1} parent=0 // pred_fallthru
    _
  // Predicated region
  $region26: #{semgcn_forward.1} parent=0 // pred_check
    _
  $region27: #{semgcn_forward.1} parent=0 // pred_check_branch
    %33 = sbr.rel (0) target = $region29
  $region28: #{semgcn_forward.1} parent=0 // pred_region
    _
  $region29: #{semgcn_forward.1} parent=0 // pred_fallthru
    _
  // Predicated region
  $region30: #{semgcn_forward.1} parent=0 // pred_check
    _
  $region31: #{semgcn_forward.1} parent=0 // pred_check_branch
    %35 = sbr.rel (0) target = $region33
  $region32: #{semgcn_forward.1} parent=0 // pred_region
    _
  $region33: #{semgcn_forward.1} parent=0 // pred_fallthru
    _
  // Predicated region
  $region34: #{semgcn_forward.1} parent=0 // pred_check
    _
  $region35: #{semgcn_forward.1} parent=0 // pred_check_branch
    %37 = sbr.rel (0) target = $region37
  $region36: #{semgcn_forward.1} parent=0 // pred_region
    _
  $region37: #{semgcn_forward.1} parent=0 // pred_fallthru
    _
  // Predicated region
  $region38: #{semgcn_forward.1} parent=0 // pred_check
    _
  $region39: #{semgcn_forward.1} parent=0 // pred_check_branch
    %39 = sbr.rel (0) target = $region41
  $region40: #{semgcn_forward.1} parent=0 // pred_region
    _
  $region41: #{semgcn_forward.1} parent=0 // pred_fallthru
    _
  // Predicated region
  $region42: #{semgcn_forward.1} parent=0 // pred_check
    _
  $region43: #{semgcn_forward.1} parent=0 // pred_check_branch
    %41 = sbr.rel (0) target = $region45
  $region44: #{semgcn_forward.1} parent=0 // pred_region
    _
  $region45: #{semgcn_forward.1} parent=0 // pred_fallthru
    _
  // Predicated region
  $region46: #{semgcn_forward.1} parent=0 // pred_check
    _
  $region47: #{semgcn_forward.1} parent=0 // pred_check_branch
    %43 = sbr.rel (0) target = $region49
  $region48: #{semgcn_forward.1} parent=0 // pred_region
    _
  $region49: #{semgcn_forward.1} parent=0 // pred_fallthru
    _
  // Predicated region
  $region50: #{semgcn_forward.1} parent=0 // pred_check
    _
  $region51: #{semgcn_forward.1} parent=0 // pred_check_branch
    %45 = sbr.rel (0) target = $region53
  $region52: #{semgcn_forward.1} parent=0 // pred_region
    _
  $region53: #{semgcn_forward.1} parent=0 // pred_fallthru
    _
  // Predicated region
  $region54: #{semgcn_forward.1} parent=0 // pred_check
    _
  $region55: #{semgcn_forward.1} parent=0 // pred_check_branch
    %47 = sbr.rel (0) target = $region57
  $region56: #{semgcn_forward.1} parent=0 // pred_region
    _
  $region57: #{semgcn_forward.1} parent=0 // pred_fallthru
    _
  // Predicated region
  $region58: #{semgcn_forward.1} parent=0 // pred_check
    _
  $region59: #{semgcn_forward.1} parent=0 // pred_check_branch
    %49 = sbr.rel (0) target = $region61
  $region60: #{semgcn_forward.1} parent=0 // pred_region
    _
  $region61: #{semgcn_forward.1} parent=0 // pred_fallthru
    _
  %v50 = vld [vmem:[%s1] sm:$0xff]
  %v51 = vld [vmem:[%s1 + $0x8] sm:$0xff]
  %v52 = vlaneseq
  %v53 = vshrl.u32 %v52, 7
  %v54 = vadd.s32 %v53, 8
  %v55 = vlaneseq
  %v56 = vand.u32 %v55, 127
  %vm57 = vcmp.eq.s32.totalorder %v53, %v56
  %vm58 = vcmp.eq.s32.totalorder %v54, %v56
  %v59 = vsel %vm57, 1, 0
  %v60 = vsel %vm58, 1, 0
  %v61 = vcvt.s32.f32 %v59
  %v62 = vcvt.s32.f32 %v60
  %v63 = vadd.s32 %v53, 16
  %v64 = vadd.s32 %v53, 24
  %vm65 = vcmp.eq.s32.totalorder %v63, %v56
  %vm66 = vcmp.eq.s32.totalorder %v64, %v56
  %v67 = vsel %vm65, 1, 0
  %v68 = vsel %vm66, 1, 0
  %v69 = vcvt.s32.f32 %v67
  %v70 = vcvt.s32.f32 %v68
  %v71 = vadd.f32 %v61, 0.0
  %v72 = vadd.f32 %v62, 0.0
  %v73 = vadd.f32 %v69, 0.0
  %v74 = vadd.f32 %v70, 0.0
  %vm75 = vcmp.ge.s32.totalorder %v53, 0
  %vm76 = vcmp.ge.s32.totalorder %v54, 0
  %vm77 = vcmp.ge.s32.totalorder %v63, 0
  %vm78 = vcmp.ge.s32.totalorder %v64, 0
  %vm79 = vcmp.lt.s32.totalorder %v53, 16
  %vm80 = vcmp.lt.s32.totalorder %v54, 16
  %vm81 = vcmp.lt.s32.totalorder %v63, 16
  %vm82 = vcmp.lt.s32.totalorder %v64, 16
  %vm83 = vmand %vm75, %vm79
  %vm84 = vmand %vm76, %vm80
  %vm85 = vmand %vm77, %vm81
  %vm86 = vmand %vm78, %vm82
  %vm87 = vcmp.ge.s32.totalorder %v56, 0
  %vm88 = vcmp.lt.s32.totalorder %v56, 16
  %vm89 = vmand %vm87, %vm88
  %vm90 = vmand %vm83, %vm89
  %vm91 = vmand %vm84, %vm89
  %vm92 = vmand %vm85, %vm89
  %vm93 = vmand %vm86, %vm89
  %v94 = vsel %vm90, 1, 0
  %v95 = vsel %vm91, 1, 0
  %v96 = vsel %vm92, 1, 0
  %v97 = vsel %vm93, 1, 0
  %v98 = vcvt.s32.f32 %v94
  %v99 = vcvt.s32.f32 %v95
  %v100 = vcvt.s32.f32 %v96
  %v101 = vcvt.s32.f32 %v97
  %v102 = vadd.f32 %v98, 0.0
  %v103 = vadd.f32 %v99, 0.0
  %v104 = vadd.f32 %v100, 0.0
  %v105 = vadd.f32 %v101, 0.0
  %v106 = vadd.s32 %v56, 16
  %vm107 = vcmp.eq.s32.totalorder %v53, %v106
  %vm108 = vcmp.eq.s32.totalorder %v54, %v106
  %vm109 = vcmp.eq.s32.totalorder %v63, %v106
  %vm110 = vcmp.eq.s32.totalorder %v64, %v106
  %v111 = vsel %vm107, 1, 0
  %v112 = vsel %vm108, 1, 0
  %v113 = vsel %vm109, 1, 0
  %v114 = vsel %vm110, 1, 0
  %v115 = vcvt.s32.f32 %v111
  %v116 = vcvt.s32.f32 %v112
  %v117 = vcvt.s32.f32 %v113
  %v118 = vcvt.s32.f32 %v114
  %v119 = vadd.f32 %v71, %v115
  %v120 = vadd.f32 %v72, %v116
  %v121 = vadd.f32 %v73, %v117
  %v122 = vadd.f32 %v74, %v118
  %v123 = vadd.s32 %v54, 16
  %vm124 = vcmp.eq.s32.totalorder %v123, %v56
  %v125 = vsel %vm124, 1, 0
  %v126 = vcvt.s32.f32 %v125
  %v127 = vadd.f32 %v71, %v69
  %v128 = vadd.f32 %v72, %v126
  %vm129 = vcmp.ge.s32.totalorder %v53, 16
  %vm130 = vcmp.ge.s32.totalorder %v54, 16
  %vm131 = vcmp.ge.s32.totalorder %v63, 16
  %vm132 = vcmp.ge.s32.totalorder %v64, 16
  %vm133 = vcmp.lt.s32.totalorder %v53, 32
  %vm134 = vcmp.lt.s32.totalorder %v54, 32
  %vm135 = vcmp.lt.s32.totalorder %v63, 32
  %vm136 = vcmp.lt.s32.totalorder %v64, 32
  %vm137 = vmand %vm129, %vm133
  %vm138 = vmand %vm130, %vm134
  %vm139 = vmand %vm131, %vm135
  %vm140 = vmand %vm132, %vm136
  %vm141 = vcmp.ge.s32.totalorder %v56, 16
  %vm142 = vcmp.lt.s32.totalorder %v56, 32
  %vm143 = vmand %vm141, %vm142
  %vm144 = vmand %vm137, %vm143
  %vm145 = vmand %vm138, %vm143
  %vm146 = vmand %vm139, %vm143
  %vm147 = vmand %vm140, %vm143
  %v148 = vsel %vm144, 1, 0
  %v149 = vsel %vm145, 1, 0
  %v150 = vsel %vm146, 1, 0
  %v151 = vsel %vm147, 1, 0
  %v152 = vcvt.s32.f32 %v148
  %v153 = vcvt.s32.f32 %v149
  %v154 = vcvt.s32.f32 %v150
  %v155 = vcvt.s32.f32 %v151
  %v156 = vadd.f32 %v102, %v152
  %v157 = vadd.f32 %v103, %v153
  %v158 = vadd.f32 %v104, %v154
  %v159 = vadd.f32 %v105, %v155
  %v160 = vsub.f32 1.0, %v50
  %v161 = vsub.f32 1.0, %v51
  %v162 = vmul.f32 %v160, -9e+15
  %v163 = vmul.f32 %v161, -9e+15
  %v164 = vld [vmem:[%s0] sm:$0xff]
  %v165 = vld [vmem:[%s0 + $0x8] sm:$0xff]
  %v166 = vld [vmem:[%s0 + $0x10] sm:$0xff]
  %v167 = vld [vmem:[%s0 + $0x18] sm:$0xff]
  %v168 = vld [vmem:[%s2] sm:$0x1f]
  %v169 = vld [vmem:[%s3] sm:$0x1]
  %v170 = vld [vmem:[%s4] sm:$0xff]
  %v171 = vld [vmem:[%s4 + $0x8] sm:$0xff]
  %v172 = vmul.f32 %v50, %v170
  %v173 = vmul.f32 %v51, %v171
  %v174 = vadd.f32 %v172, %v162
  %v175 = vadd.f32 %v173, %v163
  %vm176 = vcmask 130048
  %v177 = vsel %vm176, %v174, -inf
  %178 = vmax.xlane.f32.xlu0 %v177
  %v179 = vpop.xlane.xlu0 %178
  %v180 = vsel %vm176, %v175, -inf
  %181 = vmax.xlane.f32.xlu0 %v180
  %v182 = vpop.xlane.xlu0 %181
  %v183 = vsub.f32 %v174, %v179
  %v184 = vsub.f32 %v175, %v182
  %v185 = vmul.f32 %v183, 1.442695
  %v186 = vpow.pop %v185
  %v187 = vmul.f32 %v184, 1.442695
  %v188 = vpow.pop %v187
  %v189 = vsel %vm176, %v186, 0.0
  %190 = vadd.xlane.f32.xlu0 %v189
  %v191 = vpop.xlane.xlu0 %190
  %v192 = vsel %vm176, %v188, 0.0
  %193 = vadd.xlane.f32.xlu0 %v192
  %v194 = vpop.xlane.xlu0 %193
  %v195 = vrcp.pop %v191
  %v196 = vmul.f32 %v186, %v195
  %v197 = vrcp.pop %v194
  %v198 = vmul.f32 %v188, %v197
  %v199 = vmul.f32 %v196, %v61
  %v200 = vmul.f32 %v198, %v62
  %v201 = vsel %vm176, %v199, 0.0
  %v202 = vsel %vm176, %v200, 0.0
  %v203 = vadd.f32 %v201, %v202
  %v204 = vrot.slane %v203, 4
  %v205 = vadd.f32 %v203, %v204
  %v206 = vrot.slane %v205, 2
  %v207 = vadd.f32 %v205, %v206
  %v208 = vrot.slane %v207, 1
  %v209 = vadd.f32 %v207, %v208
  %v210 = vmul.f32 %v119, %v209
  %v211 = vmul.f32 %v120, %v209
  %v212 = vmul.f32 %v121, %v209
  %v213 = vmul.f32 %v122, %v209
  %v214 = vsel %vm176, %v210, 0.0
  %215 = vadd.xlane.f32.xlu0 %v214
  %v216 = vpop.xlane.xlu0 %215
  %v217 = vsel %vm176, %v211, 0.0
  %218 = vadd.xlane.f32.xlu0 %v217
  %v219 = vpop.xlane.xlu0 %218
  %v220 = vsel %vm176, %v212, 0.0
  %221 = vadd.xlane.f32.xlu0 %v220
  %v222 = vpop.xlane.xlu0 %221
  %v223 = vsel %vm176, %v213, 0.0
  %224 = vadd.xlane.f32.xlu0 %v223
  %v225 = vpop.xlane.xlu0 %224
  %v226 = vsub.f32 1.0, %v61
  %v227 = vsub.f32 1.0, %v62
  %v228 = vmul.f32 %v196, %v226
  %v229 = vmul.f32 %v198, %v227
  %v231 = vsel %vm176, %v119, 0
  %v234 = vsel %vm176, %v120, 0
  %v237 = vsel %vm176, %v121, 0
  %v240 = vsel %vm176, %v122, 0
  %242 = vmatprep.subr.mxu0 0.0
  %243 = vmatpush1.msra.mxu0 0.0
  %244 = vmatprep.subr.mxu0 0.0
  %245 = vmatpush1.msra.mxu0 0.0
  %246 = vmatprep.subr.mxu0 0.0
  %247 = vmatpush1.msra.mxu0 0.0
  %248 = vmatprep.subr.mxu0 0.0
  %249 = vmatpush1.msra.mxu0 0.0
  %250 = vmatprep.subr.mxu0 0.0
  %251 = vmatpush1.msra.mxu0 0.0
  %252 = vmatprep.subr.mxu0 0.0
  %253 = vmatpush1.msra.mxu0 0.0
  %254 = vmatprep.subr.mxu0 0.0
  %255 = vmatpush1.msra.mxu0 0.0
  %256 = vmatprep.subr.mxu0 0.0
  %257 = vmatpush1.msra.mxu0 0.0
  %258 = vmatprep.subr.mxu0 0.0
  %259 = vmatpush1.msra.mxu0 0.0
  %260 = vmatprep.subr.mxu0 0.0
  %261 = vmatpush1.msra.mxu0 0.0
  %262 = vmatprep.subr.mxu0 0.0
  %263 = vmatpush1.msra.mxu0 0.0
  %264 = vmatprep.subr.mxu0 0.0
  %265 = vmatpush1.msra.mxu0 0.0
  %266 = vmatprep.subr.mxu0 0.0
  %267 = vmatpush1.msra.mxu0 0.0
  %268 = vmatprep.subr.mxu0 0.0
  %269 = vmatpush1.msra.mxu0 0.0
  %270 = vmatprep.subr.mxu0 0.0
  %271 = vmatpush1.msra.mxu0 %v229
  %272 = vmatprep.subr.mxu0 0.0
  %273 = vmatpush1.msra.mxu0 %v228
  %274 = vmatprep.subr.mxu0 0.0
  %275 = vmatpush2.msra.mxu0 0.0
  %276 = vmatprep.subr.mxu0 0.0
  %277 = vmatpush2.msra.mxu0 0.0
  %278 = vmatprep.subr.mxu0 0.0
  %279 = vmatpush2.msra.mxu0 0.0
  %280 = vmatprep.subr.mxu0 0.0
  %281 = vmatpush2.msra.mxu0 0.0
  %282 = vmatprep.subr.mxu0 0.0
  %283 = vmatpush2.msra.mxu0 0.0
  %284 = vmatprep.subr.mxu0 0.0
  %285 = vmatpush2.msra.mxu0 0.0
  %286 = vmatprep.subr.mxu0 0.0
  %287 = vmatpush2.msra.mxu0 0.0
  %288 = vmatprep.subr.mxu0 0.0
  %289 = vmatpush2.msra.mxu0 0.0
  %290 = vmatprep.subr.mxu0 0.0
  %291 = vmatpush2.msra.mxu0 0.0
  %292 = vmatprep.subr.mxu0 0.0
  %293 = vmatpush2.msra.mxu0 0.0
  %294 = vmatprep.subr.mxu0 0.0
  %295 = vmatpush2.msra.mxu0 0.0
  %296 = vmatprep.subr.mxu0 0.0
  %297 = vmatpush2.msra.mxu0 0.0
  %298 = vmatprep.subr.mxu0 0.0
  %299 = vmatpush2.msra.mxu0 0.0
  %300 = vmatprep.subr.mxu0 0.0
  %301 = vmatpush2.msra.mxu0 0.0
  %302 = vmatprep.subr.mxu0 0.0
  %303 = vmatpush2.msra.mxu0 0.0
  %304 = vmatprep.subr.mxu0 0.0
  %305 = vmatpush2.msra.mxu0 0.0
  %306 = vmatprep.mubr.f32.mxu0 0.0
  %307 = vmatmul.mubr.f32.gmra.mxu0 %v231
  %v308 = vpop.f32.mrf.mxu0
  %v309 = vadd.f32 0.0, %v308
  %v310 = vpop.f32.mrf.mxu0
  %311 = vmatprep.mubr.f32.mxu0 0.0
  %312 = vmatmul.mubr.f32.gmra.mxu0 %v234
  %v313 = vpop.f32.mrf.mxu0
  %v314 = vadd.f32 0.0, %v313
  %v315 = vpop.f32.mrf.mxu0
  %316 = vmatprep.mubr.f32.mxu0 0.0
  %317 = vmatmul.mubr.f32.gmra.mxu0 %v237
  %v318 = vpop.f32.mrf.mxu0
  %v319 = vadd.f32 0.0, %v318
  %v320 = vpop.f32.mrf.mxu0
  %321 = vmatprep.mubr.f32.mxu0 0.0
  %322 = vmatmul.mubr.f32.gmra.mxu0 %v240
  %v323 = vpop.f32.mrf.mxu0
  %v324 = vadd.f32 0.0, %v323
  %v325 = vpop.f32.mrf.mxu0
  %326 = vdwg.mxu0
  %v328 = vsel %vm176, %v309, 0
  %v331 = vsel %vm176, %v314, 0
  %v334 = vsel %vm176, %v319, 0
  %v337 = vsel %vm176, %v324, 0
  %339 = vmatprep.subr.mxu0 0.0
  %340 = vmatpush1.msra.mxu0 0.0
  %341 = vmatprep.subr.mxu0 0.0
  %342 = vmatpush1.msra.mxu0 0.0
  %343 = vmatprep.subr.mxu0 0.0
  %344 = vmatpush1.msra.mxu0 0.0
  %345 = vmatprep.subr.mxu0 0.0
  %346 = vmatpush1.msra.mxu0 0.0
  %347 = vmatprep.subr.mxu0 0.0
  %348 = vmatpush1.msra.mxu0 0.0
  %349 = vmatprep.subr.mxu0 0.0
  %350 = vmatpush1.msra.mxu0 0.0
  %351 = vmatprep.subr.mxu0 0.0
  %352 = vmatpush1.msra.mxu0 0.0
  %353 = vmatprep.subr.mxu0 0.0
  %354 = vmatpush1.msra.mxu0 0.0
  %355 = vmatprep.subr.mxu0 0.0
  %356 = vmatpush1.msra.mxu0 0.0
  %357 = vmatprep.subr.mxu0 0.0
  %358 = vmatpush1.msra.mxu0 0.0
  %359 = vmatprep.subr.mxu0 0.0
  %360 = vmatpush1.msra.mxu0 0.0
  %361 = vmatprep.subr.mxu0 0.0
  %362 = vmatpush1.msra.mxu0 0.0
  %363 = vmatprep.subr.mxu0 0.0
  %364 = vmatpush1.msra.mxu0 0.0
  %365 = vmatprep.subr.mxu0 0.0
  %366 = vmatpush1.msra.mxu0 0.0
  %367 = vmatprep.subr.mxu0 0.0
  %368 = vmatpush1.msra.mxu0 %v128
  %369 = vmatprep.subr.mxu0 0.0
  %370 = vmatpush1.msra.mxu0 %v127
  %371 = vmatprep.subr.mxu0 0.0
  %372 = vmatpush2.msra.mxu0 0.0
  %373 = vmatprep.subr.mxu0 0.0
  %374 = vmatpush2.msra.mxu0 0.0
  %375 = vmatprep.subr.mxu0 0.0
  %376 = vmatpush2.msra.mxu0 0.0
  %377 = vmatprep.subr.mxu0 0.0
  %378 = vmatpush2.msra.mxu0 0.0
  %379 = vmatprep.subr.mxu0 0.0
  %380 = vmatpush2.msra.mxu0 0.0
  %381 = vmatprep.subr.mxu0 0.0
  %382 = vmatpush2.msra.mxu0 0.0
  %383 = vmatprep.subr.mxu0 0.0
  %384 = vmatpush2.msra.mxu0 0.0
  %385 = vmatprep.subr.mxu0 0.0
  %386 = vmatpush2.msra.mxu0 0.0
  %387 = vmatprep.subr.mxu0 0.0
  %388 = vmatpush2.msra.mxu0 0.0
  %389 = vmatprep.subr.mxu0 0.0
  %390 = vmatpush2.msra.mxu0 0.0
  %391 = vmatprep.subr.mxu0 0.0
  %392 = vmatpush2.msra.mxu0 0.0
  %393 = vmatprep.subr.mxu0 0.0
  %394 = vmatpush2.msra.mxu0 0.0
  %395 = vmatprep.subr.mxu0 0.0
  %396 = vmatpush2.msra.mxu0 0.0
  %397 = vmatprep.subr.mxu0 0.0
  %398 = vmatpush2.msra.mxu0 0.0
  %399 = vmatprep.subr.mxu0 0.0
  %400 = vmatpush2.msra.mxu0 0.0
  %401 = vmatprep.subr.mxu0 0.0
  %402 = vmatpush2.msra.mxu0 0.0
  %403 = vmatprep.mubr.f32.mxu0 0.0
  %404 = vmatmul.mubr.f32.gmra.mxu0 %v328
  %v405 = vpop.f32.mrf.mxu0
  %v406 = vadd.f32 0.0, %v405
  %v407 = vpop.f32.mrf.mxu0
  %408 = vmatprep.mubr.f32.mxu0 0.0
  %409 = vmatmul.mubr.f32.gmra.mxu0 %v331
  %v410 = vpop.f32.mrf.mxu0
  %v411 = vadd.f32 0.0, %v410
  %v412 = vpop.f32.mrf.mxu0
  %413 = vmatprep.mubr.f32.mxu0 0.0
  %414 = vmatmul.mubr.f32.gmra.mxu0 %v334
  %v415 = vpop.f32.mrf.mxu0
  %v416 = vadd.f32 0.0, %v415
  %v417 = vpop.f32.mrf.mxu0
  %418 = vmatprep.mubr.f32.mxu0 0.0
  %419 = vmatmul.mubr.f32.gmra.mxu0 %v337
  %v420 = vpop.f32.mrf.mxu0
  %v421 = vadd.f32 0.0, %v420
  %v422 = vpop.f32.mrf.mxu0
  %423 = vdwg.mxu0
  %v424 = vmul.f32 %v406, %v156
  %v425 = vmul.f32 %v411, %v157
  %v426 = vmul.f32 %v416, %v158
  %v427 = vmul.f32 %v421, %v159
  %vm428 = vcmask 39936
  %v430 = vsel %vm428, %v164, 0
  %v433 = vsel %vm428, %v165, 0
  %v436 = vsel %vm428, %v166, 0
  %v439 = vsel %vm428, %v167, 0
  %vm441 = vcmask 1044480
  %v443 = vsel %vm441, %v168, 0
  %445 = vmatprep.subr.mxu0 0.0
  %446 = vmatpush1.msra.mxu0 0.0
  %447 = vmatprep.subr.mxu0 0.0
  %448 = vmatpush1.msra.mxu0 0.0
  %449 = vmatprep.subr.mxu0 0.0
  %450 = vmatpush1.msra.mxu0 0.0
  %451 = vmatprep.subr.mxu0 0.0
  %452 = vmatpush1.msra.mxu0 0.0
  %453 = vmatprep.subr.mxu0 0.0
  %454 = vmatpush1.msra.mxu0 0.0
  %455 = vmatprep.subr.mxu0 0.0
  %456 = vmatpush1.msra.mxu0 0.0
  %457 = vmatprep.subr.mxu0 0.0
  %458 = vmatpush1.msra.mxu0 0.0
  %459 = vmatprep.subr.mxu0 0.0
  %460 = vmatpush1.msra.mxu0 0.0
  %461 = vmatprep.subr.mxu0 0.0
  %462 = vmatpush1.msra.mxu0 0.0
  %463 = vmatprep.subr.mxu0 0.0
  %464 = vmatpush1.msra.mxu0 0.0
  %465 = vmatprep.subr.mxu0 0.0
  %466 = vmatpush1.msra.mxu0 0.0
  %467 = vmatprep.subr.mxu0 0.0
  %468 = vmatpush1.msra.mxu0 0.0
  %469 = vmatprep.subr.mxu0 0.0
  %470 = vmatpush1.msra.mxu0 0.0
  %471 = vmatprep.subr.mxu0 0.0
  %472 = vmatpush1.msra.mxu0 0.0
  %473 = vmatprep.subr.mxu0 0.0
  %474 = vmatpush1.msra.mxu0 0.0
  %475 = vmatprep.subr.mxu0 0.0
  %476 = vmatpush1.msra.mxu0 %v443
  %477 = vmatprep.subr.mxu0 0.0
  %478 = vmatpush2.msra.mxu0 0.0
  %479 = vmatprep.subr.mxu0 0.0
  %480 = vmatpush2.msra.mxu0 0.0
  %481 = vmatprep.subr.mxu0 0.0
  %482 = vmatpush2.msra.mxu0 0.0
  %483 = vmatprep.subr.mxu0 0.0
  %484 = vmatpush2.msra.mxu0 0.0
  %485 = vmatprep.subr.mxu0 0.0
  %486 = vmatpush2.msra.mxu0 0.0
  %487 = vmatprep.subr.mxu0 0.0
  %488 = vmatpush2.msra.mxu0 0.0
  %489 = vmatprep.subr.mxu0 0.0
  %490 = vmatpush2.msra.mxu0 0.0
  %491 = vmatprep.subr.mxu0 0.0
  %492 = vmatpush2.msra.mxu0 0.0
  %493 = vmatprep.subr.mxu0 0.0
  %494 = vmatpush2.msra.mxu0 0.0
  %495 = vmatprep.subr.mxu0 0.0
  %496 = vmatpush2.msra.mxu0 0.0
  %497 = vmatprep.subr.mxu0 0.0
  %498 = vmatpush2.msra.mxu0 0.0
  %499 = vmatprep.subr.mxu0 0.0
  %500 = vmatpush2.msra.mxu0 0.0
  %501 = vmatprep.subr.mxu0 0.0
  %502 = vmatpush2.msra.mxu0 0.0
  %503 = vmatprep.subr.mxu0 0.0
  %504 = vmatpush2.msra.mxu0 0.0
  %505 = vmatprep.subr.mxu0 0.0
  %506 = vmatpush2.msra.mxu0 0.0
  %507 = vmatprep.subr.mxu0 0.0
  %508 = vmatpush2.msra.mxu0 0.0
  %509 = vmatprep.mubr.f32.mxu0 0.0
  %510 = vmatmul.mubr.f32.gmra.mxu0 %v430
  %v511 = vpop.f32.mrf.mxu0
  %v512 = vadd.f32 0.0, %v511
  %v513 = vpop.f32.mrf.mxu0
  %514 = vmatprep.mubr.f32.mxu0 0.0
  %515 = vmatmul.mubr.f32.gmra.mxu0 %v433
  %v516 = vpop.f32.mrf.mxu0
  %v517 = vadd.f32 0.0, %v516
  %v518 = vpop.f32.mrf.mxu0
  %519 = vmatprep.mubr.f32.mxu0 0.0
  %520 = vmatmul.mubr.f32.gmra.mxu0 %v436
  %v521 = vpop.f32.mrf.mxu0
  %v522 = vadd.f32 0.0, %v521
  %v523 = vpop.f32.mrf.mxu0
  %524 = vmatprep.mubr.f32.mxu0 0.0
  %525 = vmatmul.mubr.f32.gmra.mxu0 %v439
  %v526 = vpop.f32.mrf.mxu0
  %v527 = vadd.f32 0.0, %v526
  %v528 = vpop.f32.mrf.mxu0
  %529 = vdwg.mxu0
  %v530 = vmul.f32 %v216, %v512
  %v531 = vmul.f32 %v219, %v517
  %v532 = vmul.f32 %v222, %v522
  %v533 = vmul.f32 %v225, %v527
  %538 = vrot.lane.b32.xlu0 %v512, 96
  %v539 = vpop.permute.xlu0 %538
  %540 = vrot.lane.b32.xlu0 %v517, 96
  %v541 = vpop.permute.xlu0 %540
  %542 = vrot.lane.b32.xlu0 %v522, 96
  %v543 = vpop.permute.xlu0 %542
  %544 = vrot.lane.b32.xlu0 %v527, 96
  %v545 = vpop.permute.xlu0 %544
  %vm550 = vcmask 261120
  %v552 = vsel %vm550, %v424, 0
  %v555 = vsel %vm550, %v425, 0
  %v558 = vsel %vm550, %v426, 0
  %v561 = vsel %vm550, %v427, 0
  %563 = vmatprep.subr.mxu0 0.0
  %564 = vmatpush1.msra.mxu0 0.0
  %565 = vmatprep.subr.mxu0 0.0
  %566 = vmatpush1.msra.mxu0 0.0
  %567 = vmatprep.subr.mxu0 0.0
  %568 = vmatpush1.msra.mxu0 0.0
  %569 = vmatprep.subr.mxu0 0.0
  %570 = vmatpush1.msra.mxu0 0.0
  %571 = vmatprep.subr.mxu0 0.0
  %572 = vmatpush1.msra.mxu0 0.0
  %573 = vmatprep.subr.mxu0 0.0
  %574 = vmatpush1.msra.mxu0 0.0
  %575 = vmatprep.subr.mxu0 0.0
  %576 = vmatpush1.msra.mxu0 0.0
  %577 = vmatprep.subr.mxu0 0.0
  %578 = vmatpush1.msra.mxu0 0.0
  %579 = vmatprep.subr.mxu0 0.0
  %580 = vmatpush1.msra.mxu0 0.0
  %581 = vmatprep.subr.mxu0 0.0
  %582 = vmatpush1.msra.mxu0 0.0
  %583 = vmatprep.subr.mxu0 0.0
  %584 = vmatpush1.msra.mxu0 0.0
  %585 = vmatprep.subr.mxu0 0.0
  %586 = vmatpush1.msra.mxu0 0.0
  %587 = vmatprep.subr.mxu0 0.0
  %588 = vmatpush1.msra.mxu0 %v545
  %589 = vmatprep.subr.mxu0 0.0
  %590 = vmatpush1.msra.mxu0 %v543
  %591 = vmatprep.subr.mxu0 0.0
  %592 = vmatpush1.msra.mxu0 %v541
  %593 = vmatprep.subr.mxu0 0.0
  %594 = vmatpush1.msra.mxu0 %v539
  %595 = vmatprep.subr.mxu0 0.0
  %596 = vmatpush2.msra.mxu0 0.0
  %597 = vmatprep.subr.mxu0 0.0
  %598 = vmatpush2.msra.mxu0 0.0
  %599 = vmatprep.subr.mxu0 0.0
  %600 = vmatpush2.msra.mxu0 0.0
  %601 = vmatprep.subr.mxu0 0.0
  %602 = vmatpush2.msra.mxu0 0.0
  %603 = vmatprep.subr.mxu0 0.0
  %604 = vmatpush2.msra.mxu0 0.0
  %605 = vmatprep.subr.mxu0 0.0
  %606 = vmatpush2.msra.mxu0 0.0
  %607 = vmatprep.subr.mxu0 0.0
  %608 = vmatpush2.msra.mxu0 0.0
  %609 = vmatprep.subr.mxu0 0.0
  %610 = vmatpush2.msra.mxu0 0.0
  %611 = vmatprep.subr.mxu0 0.0
  %612 = vmatpush2.msra.mxu0 0.0
  %613 = vmatprep.subr.mxu0 0.0
  %614 = vmatpush2.msra.mxu0 0.0
  %615 = vmatprep.subr.mxu0 0.0
  %616 = vmatpush2.msra.mxu0 0.0
  %617 = vmatprep.subr.mxu0 0.0
  %618 = vmatpush2.msra.mxu0 0.0
  %619 = vmatprep.subr.mxu0 0.0
  %620 = vmatpush2.msra.mxu0 0.0
  %621 = vmatprep.subr.mxu0 0.0
  %622 = vmatpush2.msra.mxu0 0.0
  %623 = vmatprep.subr.mxu0 0.0
  %624 = vmatpush2.msra.mxu0 0.0
  %625 = vmatprep.subr.mxu0 0.0
  %626 = vmatpush2.msra.mxu0 0.0
  %627 = vmatprep.mubr.f32.mxu0 0.0
  %628 = vmatmul.mubr.f32.gmra.mxu0 %v552
  %v629 = vpop.f32.mrf.mxu0
  %v630 = vadd.f32 0.0, %v629
  %v631 = vpop.f32.mrf.mxu0
  %632 = vmatprep.mubr.f32.mxu0 0.0
  %633 = vmatmul.mubr.f32.gmra.mxu0 %v555
  %v634 = vpop.f32.mrf.mxu0
  %v635 = vadd.f32 0.0, %v634
  %v636 = vpop.f32.mrf.mxu0
  %637 = vmatprep.mubr.f32.mxu0 0.0
  %638 = vmatmul.mubr.f32.gmra.mxu0 %v558
  %v639 = vpop.f32.mrf.mxu0
  %v640 = vadd.f32 0.0, %v639
  %v641 = vpop.f32.mrf.mxu0
  %642 = vmatprep.mubr.f32.mxu0 0.0
  %643 = vmatmul.mubr.f32.gmra.mxu0 %v561
  %v644 = vpop.f32.mrf.mxu0
  %v645 = vadd.f32 0.0, %v644
  %v646 = vpop.f32.mrf.mxu0
  %647 = vdwg.mxu0
  %v648 = vadd.f32 %v530, %v630
  %v649 = vadd.f32 %v531, %v635
  %v650 = vadd.f32 %v532, %v640
  %v651 = vadd.f32 %v533, %v645
  %v653 = vlaneseq
  %v654 = vshrl.u32 %v653, 7
  %v655 = vsub.s32 0, %v654
  %v656 = vrot.slane %v169, %v655
  %v658 = vadd.f32 %v648, %v656
  %v659 = vadd.f32 %v649, %v656
  %v660 = vadd.f32 %v650, %v656
  %v661 = vadd.f32 %v651, %v656
  %v662 = vld [vmem:[%s5] sm:$0x1]
  %v663 = vld [vmem:[%s6] sm:$0x1]
  %v664 = vsel %vm550, %v658, 0.0
  %v665 = vsel %vm550, %v659, 0.0
  %v666 = vadd.f32 %v664, %v665
  %v667 = vsel %vm550, %v660, 0.0
  %v668 = vadd.f32 %v666, %v667
  %v669 = vsel %vm550, %v661, 0.0
  %v670 = vadd.f32 %v668, %v669
  %v671 = vrot.slane %v670, 4
  %v672 = vadd.f32 %v670, %v671
  %v673 = vrot.slane %v672, 2
  %v674 = vadd.f32 %v672, %v673
  %v675 = vrot.slane %v674, 1
  %v676 = vadd.f32 %v674, %v675
  %v677 = vmul.f32 %v676, 0.03125
  %v678 = vsub.f32 %v658, %v677
  %v679 = vsub.f32 %v659, %v677
  %v680 = vsub.f32 %v660, %v677
  %v681 = vsub.f32 %v661, %v677
  %v682 = vmul.f32 %v678, %v678
  %v683 = vmul.f32 %v679, %v679
  %v684 = vmul.f32 %v680, %v680
  %v685 = vmul.f32 %v681, %v681
  %v686 = vsel %vm550, %v682, 0.0
  %v687 = vsel %vm550, %v683, 0.0
  %v688 = vadd.f32 %v686, %v687
  %v689 = vsel %vm550, %v684, 0.0
  %v690 = vadd.f32 %v688, %v689
  %v691 = vsel %vm550, %v685, 0.0
  %v692 = vadd.f32 %v690, %v691
  %v693 = vrot.slane %v692, 4
  %v694 = vadd.f32 %v692, %v693
  %v695 = vrot.slane %v694, 2
  %v696 = vadd.f32 %v694, %v695
  %v697 = vrot.slane %v696, 1
  %v698 = vadd.f32 %v696, %v697
  %v699 = vmul.f32 %v698, 0.03125
  %v700 = vadd.f32 %v699, 1e-05
  %v701 = vrsqrt.pop %v700
  %v702 = vmul.f32 %v678, %v701
  %v703 = vmul.f32 %v679, %v701
  %v704 = vmul.f32 %v680, %v701
  %v705 = vmul.f32 %v681, %v701
  %v707 = vlaneseq
  %v708 = vshrl.u32 %v707, 7
  %v709 = vsub.s32 0, %v708
  %v710 = vrot.slane %v662, %v709
  %v712 = vmul.f32 %v702, %v710
  %v713 = vmul.f32 %v703, %v710
  %v714 = vmul.f32 %v704, %v710
  %v715 = vmul.f32 %v705, %v710
  %v717 = vlaneseq
  %v718 = vshrl.u32 %v717, 7
  %v719 = vsub.s32 0, %v718
  %v720 = vrot.slane %v663, %v719
  %v722 = vadd.f32 %v712, %v720
  %v723 = vadd.f32 %v713, %v720
  %v724 = vadd.f32 %v714, %v720
  %v725 = vadd.f32 %v715, %v720
  %v726 = vmax.f32 %v722, 0.0
  %v727 = vmax.f32 %v723, 0.0
  %v728 = vmax.f32 %v724, 0.0
  %v729 = vmax.f32 %v725, 0.0
  %v730 = vld [vmem:[%s7] sm:$0xff]
  %v731 = vld [vmem:[%s7 + $0x8] sm:$0xff]
  %v732 = vld [vmem:[%s7 + $0x10] sm:$0xff]
  %v733 = vld [vmem:[%s7 + $0x18] sm:$0xff]
  %v734 = vld [vmem:[%s8] sm:$0x1]
  %v735 = vld [vmem:[%s9] sm:$0xff]
  %v736 = vld [vmem:[%s9 + $0x8] sm:$0xff]
  %v737 = vmul.f32 %v50, %v735
  %v738 = vmul.f32 %v51, %v736
  %v739 = vadd.f32 %v737, %v162
  %v740 = vadd.f32 %v738, %v163
  %v741 = vsel %vm176, %v739, -inf
  %742 = vmax.xlane.f32.xlu0 %v741
  %v743 = vpop.xlane.xlu0 %742
  %v744 = vsel %vm176, %v740, -inf
  %745 = vmax.xlane.f32.xlu0 %v744
  %v746 = vpop.xlane.xlu0 %745
  %v747 = vsub.f32 %v739, %v743
  %v748 = vsub.f32 %v740, %v746
  %v749 = vmul.f32 %v747, 1.442695
  %v750 = vpow.pop %v749
  %v751 = vmul.f32 %v748, 1.442695
  %v752 = vpow.pop %v751
  %v753 = vsel %vm176, %v750, 0.0
  %754 = vadd.xlane.f32.xlu0 %v753
  %v755 = vpop.xlane.xlu0 %754
  %v756 = vsel %vm176, %v752, 0.0
  %757 = vadd.xlane.f32.xlu0 %v756
  %v758 = vpop.xlane.xlu0 %757
  %v759 = vrcp.pop %v755
  %v760 = vmul.f32 %v750, %v759
  %v761 = vrcp.pop %v758
  %v762 = vmul.f32 %v752, %v761
  %v763 = vmul.f32 %v760, %v61
  %v764 = vmul.f32 %v762, %v62
  %v765 = vsel %vm176, %v763, 0.0
  %v766 = vsel %vm176, %v764, 0.0
  %v767 = vadd.f32 %v765, %v766
  %v768 = vrot.slane %v767, 4
  %v769 = vadd.f32 %v767, %v768
  %v770 = vrot.slane %v769, 2
  %v771 = vadd.f32 %v769, %v770
  %v772 = vrot.slane %v771, 1
  %v773 = vadd.f32 %v771, %v772
  %v774 = vmul.f32 %v119, %v773
  %v775 = vmul.f32 %v120, %v773
  %v776 = vmul.f32 %v121, %v773
  %v777 = vmul.f32 %v122, %v773
  %v778 = vsel %vm176, %v774, 0.0
  %779 = vadd.xlane.f32.xlu0 %v778
  %v780 = vpop.xlane.xlu0 %779
  %v781 = vsel %vm176, %v775, 0.0
  %782 = vadd.xlane.f32.xlu0 %v781
  %v783 = vpop.xlane.xlu0 %782
  %v784 = vsel %vm176, %v776, 0.0
  %785 = vadd.xlane.f32.xlu0 %v784
  %v786 = vpop.xlane.xlu0 %785
  %v787 = vsel %vm176, %v777, 0.0
  %788 = vadd.xlane.f32.xlu0 %v787
  %v789 = vpop.xlane.xlu0 %788
  %v790 = vmul.f32 %v760, %v226
  %v791 = vmul.f32 %v762, %v227
  %792 = vmatprep.subr.mxu0 0.0
  %793 = vmatpush1.msra.mxu0 0.0
  %794 = vmatprep.subr.mxu0 0.0
  %795 = vmatpush1.msra.mxu0 0.0
  %796 = vmatprep.subr.mxu0 0.0
  %797 = vmatpush1.msra.mxu0 0.0
  %798 = vmatprep.subr.mxu0 0.0
  %799 = vmatpush1.msra.mxu0 0.0
  %800 = vmatprep.subr.mxu0 0.0
  %801 = vmatpush1.msra.mxu0 0.0
  %802 = vmatprep.subr.mxu0 0.0
  %803 = vmatpush1.msra.mxu0 0.0
  %804 = vmatprep.subr.mxu0 0.0
  %805 = vmatpush1.msra.mxu0 0.0
  %806 = vmatprep.subr.mxu0 0.0
  %807 = vmatpush1.msra.mxu0 0.0
  %808 = vmatprep.subr.mxu0 0.0
  %809 = vmatpush1.msra.mxu0 0.0
  %810 = vmatprep.subr.mxu0 0.0
  %811 = vmatpush1.msra.mxu0 0.0
  %812 = vmatprep.subr.mxu0 0.0
  %813 = vmatpush1.msra.mxu0 0.0
  %814 = vmatprep.subr.mxu0 0.0
  %815 = vmatpush1.msra.mxu0 0.0
  %816 = vmatprep.subr.mxu0 0.0
  %817 = vmatpush1.msra.mxu0 0.0
  %818 = vmatprep.subr.mxu0 0.0
  %819 = vmatpush1.msra.mxu0 0.0
  %820 = vmatprep.subr.mxu0 0.0
  %821 = vmatpush1.msra.mxu0 %v791
  %822 = vmatprep.subr.mxu0 0.0
  %823 = vmatpush1.msra.mxu0 %v790
  %824 = vmatprep.subr.mxu0 0.0
  %825 = vmatpush2.msra.mxu0 0.0
  %826 = vmatprep.subr.mxu0 0.0
  %827 = vmatpush2.msra.mxu0 0.0
  %828 = vmatprep.subr.mxu0 0.0
  %829 = vmatpush2.msra.mxu0 0.0
  %830 = vmatprep.subr.mxu0 0.0
  %831 = vmatpush2.msra.mxu0 0.0
  %832 = vmatprep.subr.mxu0 0.0
  %833 = vmatpush2.msra.mxu0 0.0
  %834 = vmatprep.subr.mxu0 0.0
  %835 = vmatpush2.msra.mxu0 0.0
  %836 = vmatprep.subr.mxu0 0.0
  %837 = vmatpush2.msra.mxu0 0.0
  %838 = vmatprep.subr.mxu0 0.0
  %839 = vmatpush2.msra.mxu0 0.0
  %840 = vmatprep.subr.mxu0 0.0
  %841 = vmatpush2.msra.mxu0 0.0
  %842 = vmatprep.subr.mxu0 0.0
  %843 = vmatpush2.msra.mxu0 0.0
  %844 = vmatprep.subr.mxu0 0.0
  %845 = vmatpush2.msra.mxu0 0.0
  %846 = vmatprep.subr.mxu0 0.0
  %847 = vmatpush2.msra.mxu0 0.0
  %848 = vmatprep.subr.mxu0 0.0
  %849 = vmatpush2.msra.mxu0 0.0
  %850 = vmatprep.subr.mxu0 0.0
  %851 = vmatpush2.msra.mxu0 0.0
  %852 = vmatprep.subr.mxu0 0.0
  %853 = vmatpush2.msra.mxu0 0.0
  %854 = vmatprep.subr.mxu0 0.0
  %855 = vmatpush2.msra.mxu0 0.0
  %856 = vmatprep.mubr.f32.mxu0 0.0
  %857 = vmatmul.mubr.f32.gmra.mxu0 %v231
  %v858 = vpop.f32.mrf.mxu0
  %v859 = vadd.f32 0.0, %v858
  %v860 = vpop.f32.mrf.mxu0
  %861 = vmatprep.mubr.f32.mxu0 0.0
  %862 = vmatmul.mubr.f32.gmra.mxu0 %v234
  %v863 = vpop.f32.mrf.mxu0
  %v864 = vadd.f32 0.0, %v863
  %v865 = vpop.f32.mrf.mxu0
  %866 = vmatprep.mubr.f32.mxu0 0.0
  %867 = vmatmul.mubr.f32.gmra.mxu0 %v237
  %v868 = vpop.f32.mrf.mxu0
  %v869 = vadd.f32 0.0, %v868
  %v870 = vpop.f32.mrf.mxu0
  %871 = vmatprep.mubr.f32.mxu0 0.0
  %872 = vmatmul.mubr.f32.gmra.mxu0 %v240
  %v873 = vpop.f32.mrf.mxu0
  %v874 = vadd.f32 0.0, %v873
  %v875 = vpop.f32.mrf.mxu0
  %876 = vdwg.mxu0
  %v878 = vsel %vm176, %v859, 0
  %v881 = vsel %vm176, %v864, 0
  %v884 = vsel %vm176, %v869, 0
  %v887 = vsel %vm176, %v874, 0
  %889 = vmatprep.subr.mxu0 0.0
  %890 = vmatpush1.msra.mxu0 0.0
  %891 = vmatprep.subr.mxu0 0.0
  %892 = vmatpush1.msra.mxu0 0.0
  %893 = vmatprep.subr.mxu0 0.0
  %894 = vmatpush1.msra.mxu0 0.0
  %895 = vmatprep.subr.mxu0 0.0
  %896 = vmatpush1.msra.mxu0 0.0
  %897 = vmatprep.subr.mxu0 0.0
  %898 = vmatpush1.msra.mxu0 0.0
  %899 = vmatprep.subr.mxu0 0.0
  %900 = vmatpush1.msra.mxu0 0.0
  %901 = vmatprep.subr.mxu0 0.0
  %902 = vmatpush1.msra.mxu0 0.0
  %903 = vmatprep.subr.mxu0 0.0
  %904 = vmatpush1.msra.mxu0 0.0
  %905 = vmatprep.subr.mxu0 0.0
  %906 = vmatpush1.msra.mxu0 0.0
  %907 = vmatprep.subr.mxu0 0.0
  %908 = vmatpush1.msra.mxu0 0.0
  %909 = vmatprep.subr.mxu0 0.0
  %910 = vmatpush1.msra.mxu0 0.0
  %911 = vmatprep.subr.mxu0 0.0
  %912 = vmatpush1.msra.mxu0 0.0
  %913 = vmatprep.subr.mxu0 0.0
  %914 = vmatpush1.msra.mxu0 0.0
  %915 = vmatprep.subr.mxu0 0.0
  %916 = vmatpush1.msra.mxu0 0.0
  %917 = vmatprep.subr.mxu0 0.0
  %918 = vmatpush1.msra.mxu0 %v128
  %919 = vmatprep.subr.mxu0 0.0
  %920 = vmatpush1.msra.mxu0 %v127
  %921 = vmatprep.subr.mxu0 0.0
  %922 = vmatpush2.msra.mxu0 0.0
  %923 = vmatprep.subr.mxu0 0.0
  %924 = vmatpush2.msra.mxu0 0.0
  %925 = vmatprep.subr.mxu0 0.0
  %926 = vmatpush2.msra.mxu0 0.0
  %927 = vmatprep.subr.mxu0 0.0
  %928 = vmatpush2.msra.mxu0 0.0
  %929 = vmatprep.subr.mxu0 0.0
  %930 = vmatpush2.msra.mxu0 0.0
  %931 = vmatprep.subr.mxu0 0.0
  %932 = vmatpush2.msra.mxu0 0.0
  %933 = vmatprep.subr.mxu0 0.0
  %934 = vmatpush2.msra.mxu0 0.0
  %935 = vmatprep.subr.mxu0 0.0
  %936 = vmatpush2.msra.mxu0 0.0
  %937 = vmatprep.subr.mxu0 0.0
  %938 = vmatpush2.msra.mxu0 0.0
  %939 = vmatprep.subr.mxu0 0.0
  %940 = vmatpush2.msra.mxu0 0.0
  %941 = vmatprep.subr.mxu0 0.0
  %942 = vmatpush2.msra.mxu0 0.0
  %943 = vmatprep.subr.mxu0 0.0
  %944 = vmatpush2.msra.mxu0 0.0
  %945 = vmatprep.subr.mxu0 0.0
  %946 = vmatpush2.msra.mxu0 0.0
  %947 = vmatprep.subr.mxu0 0.0
  %948 = vmatpush2.msra.mxu0 0.0
  %949 = vmatprep.subr.mxu0 0.0
  %950 = vmatpush2.msra.mxu0 0.0
  %951 = vmatprep.subr.mxu0 0.0
  %952 = vmatpush2.msra.mxu0 0.0
  %953 = vmatprep.mubr.f32.mxu0 0.0
  %954 = vmatmul.mubr.f32.gmra.mxu0 %v878
  %v955 = vpop.f32.mrf.mxu0
  %v956 = vadd.f32 0.0, %v955
  %v957 = vpop.f32.mrf.mxu0
  %958 = vmatprep.mubr.f32.mxu0 0.0
  %959 = vmatmul.mubr.f32.gmra.mxu0 %v881
  %v960 = vpop.f32.mrf.mxu0
  %v961 = vadd.f32 0.0, %v960
  %v962 = vpop.f32.mrf.mxu0
  %963 = vmatprep.mubr.f32.mxu0 0.0
  %964 = vmatmul.mubr.f32.gmra.mxu0 %v884
  %v965 = vpop.f32.mrf.mxu0
  %v966 = vadd.f32 0.0, %v965
  %v967 = vpop.f32.mrf.mxu0
  %968 = vmatprep.mubr.f32.mxu0 0.0
  %969 = vmatmul.mubr.f32.gmra.mxu0 %v887
  %v970 = vpop.f32.mrf.mxu0
  %v971 = vadd.f32 0.0, %v970
  %v972 = vpop.f32.mrf.mxu0
  %973 = vdwg.mxu0
  %v974 = vmul.f32 %v956, %v156
  %v975 = vmul.f32 %v961, %v157
  %v976 = vmul.f32 %v966, %v158
  %v977 = vmul.f32 %v971, %v159
  %v979 = vsel %vm550, %v726, 0
  %v982 = vsel %vm550, %v727, 0
  %v985 = vsel %vm550, %v728, 0
  %v988 = vsel %vm550, %v729, 0
  %990 = vmatprep.subr.mxu0 0.0
  %991 = vmatpush1.msra.mxu0 0.0
  %992 = vmatprep.subr.mxu0 0.0
  %993 = vmatpush1.msra.mxu0 0.0
  %994 = vmatprep.subr.mxu0 0.0
  %995 = vmatpush1.msra.mxu0 0.0
  %996 = vmatprep.subr.mxu0 0.0
  %997 = vmatpush1.msra.mxu0 0.0
  %998 = vmatprep.subr.mxu0 0.0
  %999 = vmatpush1.msra.mxu0 0.0
  %1000 = vmatprep.subr.mxu0 0.0
  %1001 = vmatpush1.msra.mxu0 0.0
  %1002 = vmatprep.subr.mxu0 0.0
  %1003 = vmatpush1.msra.mxu0 0.0
  %1004 = vmatprep.subr.mxu0 0.0
  %1005 = vmatpush1.msra.mxu0 0.0
  %1006 = vmatprep.subr.mxu0 0.0
  %1007 = vmatpush1.msra.mxu0 0.0
  %1008 = vmatprep.subr.mxu0 0.0
  %1009 = vmatpush1.msra.mxu0 0.0
  %1010 = vmatprep.subr.mxu0 0.0
  %1011 = vmatpush1.msra.mxu0 0.0
  %1012 = vmatprep.subr.mxu0 0.0
  %1013 = vmatpush1.msra.mxu0 0.0
  %1014 = vmatprep.subr.mxu0 0.0
  %1015 = vmatpush1.msra.mxu0 %v733
  %1016 = vmatprep.subr.mxu0 0.0
  %1017 = vmatpush1.msra.mxu0 %v732
  %1018 = vmatprep.subr.mxu0 0.0
  %1019 = vmatpush1.msra.mxu0 %v731
  %1020 = vmatprep.subr.mxu0 0.0
  %1021 = vmatpush1.msra.mxu0 %v730
  %1022 = vmatprep.subr.mxu0 0.0
  %1023 = vmatpush2.msra.mxu0 0.0
  %1024 = vmatprep.subr.mxu0 0.0
  %1025 = vmatpush2.msra.mxu0 0.0
  %1026 = vmatprep.subr.mxu0 0.0
  %1027 = vmatpush2.msra.mxu0 0.0
  %1028 = vmatprep.subr.mxu0 0.0
  %1029 = vmatpush2.msra.mxu0 0.0
  %1030 = vmatprep.subr.mxu0 0.0
  %1031 = vmatpush2.msra.mxu0 0.0
  %1032 = vmatprep.subr.mxu0 0.0
  %1033 = vmatpush2.msra.mxu0 0.0
  %1034 = vmatprep.subr.mxu0 0.0
  %1035 = vmatpush2.msra.mxu0 0.0
  %1036 = vmatprep.subr.mxu0 0.0
  %1037 = vmatpush2.msra.mxu0 0.0
  %1038 = vmatprep.subr.mxu0 0.0
  %1039 = vmatpush2.msra.mxu0 0.0
  %1040 = vmatprep.subr.mxu0 0.0
  %1041 = vmatpush2.msra.mxu0 0.0
  %1042 = vmatprep.subr.mxu0 0.0
  %1043 = vmatpush2.msra.mxu0 0.0
  %1044 = vmatprep.subr.mxu0 0.0
  %1045 = vmatpush2.msra.mxu0 0.0
  %1046 = vmatprep.subr.mxu0 0.0
  %1047 = vmatpush2.msra.mxu0 0.0
  %1048 = vmatprep.subr.mxu0 0.0
  %1049 = vmatpush2.msra.mxu0 0.0
  %1050 = vmatprep.subr.mxu0 0.0
  %1051 = vmatpush2.msra.mxu0 0.0
  %1052 = vmatprep.subr.mxu0 0.0
  %1053 = vmatpush2.msra.mxu0 0.0
  %1054 = vmatprep.mubr.f32.mxu0 0.0
  %1055 = vmatmul.mubr.f32.gmra.mxu0 %v979
  %v1056 = vpop.f32.mrf.mxu0
  %v1057 = vadd.f32 0.0, %v1056
  %v1058 = vpop.f32.mrf.mxu0
  %1059 = vmatprep.mubr.f32.mxu0 0.0
  %1060 = vmatmul.mubr.f32.gmra.mxu0 %v982
  %v1061 = vpop.f32.mrf.mxu0
  %v1062 = vadd.f32 0.0, %v1061
  %v1063 = vpop.f32.mrf.mxu0
  %1064 = vmatprep.mubr.f32.mxu0 0.0
  %1065 = vmatmul.mubr.f32.gmra.mxu0 %v985
  %v1066 = vpop.f32.mrf.mxu0
  %v1067 = vadd.f32 0.0, %v1066
  %v1068 = vpop.f32.mrf.mxu0
  %1069 = vmatprep.mubr.f32.mxu0 0.0
  %1070 = vmatmul.mubr.f32.gmra.mxu0 %v988
  %v1071 = vpop.f32.mrf.mxu0
  %v1072 = vadd.f32 0.0, %v1071
  %v1073 = vpop.f32.mrf.mxu0
  %1074 = vdwg.mxu0
  %v1075 = vmul.f32 %v780, %v1057
  %v1076 = vmul.f32 %v783, %v1062
  %v1077 = vmul.f32 %v786, %v1067
  %v1078 = vmul.f32 %v789, %v1072
  %1083 = vrot.lane.b32.xlu0 %v1057, 96
  %v1084 = vpop.permute.xlu0 %1083
  %1085 = vrot.lane.b32.xlu0 %v1062, 96
  %v1086 = vpop.permute.xlu0 %1085
  %1087 = vrot.lane.b32.xlu0 %v1067, 96
  %v1088 = vpop.permute.xlu0 %1087
  %1089 = vrot.lane.b32.xlu0 %v1072, 96
  %v1090 = vpop.permute.xlu0 %1089
  %v1096 = vsel %vm550, %v974, 0
  %v1099 = vsel %vm550, %v975, 0
  %v1102 = vsel %vm550, %v976, 0
  %v1105 = vsel %vm550, %v977, 0
  %1107 = vmatprep.subr.mxu0 0.0
  %1108 = vmatpush1.msra.mxu0 0.0
  %1109 = vmatprep.subr.mxu0 0.0
  %1110 = vmatpush1.msra.mxu0 0.0
  %1111 = vmatprep.subr.mxu0 0.0
  %1112 = vmatpush1.msra.mxu0 0.0
  %1113 = vmatprep.subr.mxu0 0.0
  %1114 = vmatpush1.msra.mxu0 0.0
  %1115 = vmatprep.subr.mxu0 0.0
  %1116 = vmatpush1.msra.mxu0 0.0
  %1117 = vmatprep.subr.mxu0 0.0
  %1118 = vmatpush1.msra.mxu0 0.0
  %1119 = vmatprep.subr.mxu0 0.0
  %1120 = vmatpush1.msra.mxu0 0.0
  %1121 = vmatprep.subr.mxu0 0.0
  %1122 = vmatpush1.msra.mxu0 0.0
  %1123 = vmatprep.subr.mxu0 0.0
  %1124 = vmatpush1.msra.mxu0 0.0
  %1125 = vmatprep.subr.mxu0 0.0
  %1126 = vmatpush1.msra.mxu0 0.0
  %1127 = vmatprep.subr.mxu0 0.0
  %1128 = vmatpush1.msra.mxu0 0.0
  %1129 = vmatprep.subr.mxu0 0.0
  %1130 = vmatpush1.msra.mxu0 0.0
  %1131 = vmatprep.subr.mxu0 0.0
  %1132 = vmatpush1.msra.mxu0 %v1090
  %1133 = vmatprep.subr.mxu0 0.0
  %1134 = vmatpush1.msra.mxu0 %v1088
  %1135 = vmatprep.subr.mxu0 0.0
  %1136 = vmatpush1.msra.mxu0 %v1086
  %1137 = vmatprep.subr.mxu0 0.0
  %1138 = vmatpush1.msra.mxu0 %v1084
  %1139 = vmatprep.subr.mxu0 0.0
  %1140 = vmatpush2.msra.mxu0 0.0
  %1141 = vmatprep.subr.mxu0 0.0
  %1142 = vmatpush2.msra.mxu0 0.0
  %1143 = vmatprep.subr.mxu0 0.0
  %1144 = vmatpush2.msra.mxu0 0.0
  %1145 = vmatprep.subr.mxu0 0.0
  %1146 = vmatpush2.msra.mxu0 0.0
  %1147 = vmatprep.subr.mxu0 0.0
  %1148 = vmatpush2.msra.mxu0 0.0
  %1149 = vmatprep.subr.mxu0 0.0
  %1150 = vmatpush2.msra.mxu0 0.0
  %1151 = vmatprep.subr.mxu0 0.0
  %1152 = vmatpush2.msra.mxu0 0.0
  %1153 = vmatprep.subr.mxu0 0.0
  %1154 = vmatpush2.msra.mxu0 0.0
  %1155 = vmatprep.subr.mxu0 0.0
  %1156 = vmatpush2.msra.mxu0 0.0
  %1157 = vmatprep.subr.mxu0 0.0
  %1158 = vmatpush2.msra.mxu0 0.0
  %1159 = vmatprep.subr.mxu0 0.0
  %1160 = vmatpush2.msra.mxu0 0.0
  %1161 = vmatprep.subr.mxu0 0.0
  %1162 = vmatpush2.msra.mxu0 0.0
  %1163 = vmatprep.subr.mxu0 0.0
  %1164 = vmatpush2.msra.mxu0 0.0
  %1165 = vmatprep.subr.mxu0 0.0
  %1166 = vmatpush2.msra.mxu0 0.0
  %1167 = vmatprep.subr.mxu0 0.0
  %1168 = vmatpush2.msra.mxu0 0.0
  %1169 = vmatprep.subr.mxu0 0.0
  %1170 = vmatpush2.msra.mxu0 0.0
  %1171 = vmatprep.mubr.f32.mxu0 0.0
  %1172 = vmatmul.mubr.f32.gmra.mxu0 %v1096
  %v1173 = vpop.f32.mrf.mxu0
  %v1174 = vadd.f32 0.0, %v1173
  %v1175 = vpop.f32.mrf.mxu0
  %1176 = vmatprep.mubr.f32.mxu0 0.0
  %1177 = vmatmul.mubr.f32.gmra.mxu0 %v1099
  %v1178 = vpop.f32.mrf.mxu0
  %v1179 = vadd.f32 0.0, %v1178
  %v1180 = vpop.f32.mrf.mxu0
  %1181 = vmatprep.mubr.f32.mxu0 0.0
  %1182 = vmatmul.mubr.f32.gmra.mxu0 %v1102
  %v1183 = vpop.f32.mrf.mxu0
  %v1184 = vadd.f32 0.0, %v1183
  %v1185 = vpop.f32.mrf.mxu0
  %1186 = vmatprep.mubr.f32.mxu0 0.0
  %1187 = vmatmul.mubr.f32.gmra.mxu0 %v1105
  %v1188 = vpop.f32.mrf.mxu0
  %v1189 = vadd.f32 0.0, %v1188
  %v1190 = vpop.f32.mrf.mxu0
  %1191 = vdwg.mxu0
  %v1192 = vadd.f32 %v1075, %v1174
  %v1193 = vadd.f32 %v1076, %v1179
  %v1194 = vadd.f32 %v1077, %v1184
  %v1195 = vadd.f32 %v1078, %v1189
  %v1197 = vlaneseq
  %v1198 = vshrl.u32 %v1197, 7
  %v1199 = vsub.s32 0, %v1198
  %v1200 = vrot.slane %v734, %v1199
  %v1202 = vadd.f32 %v1192, %v1200
  %v1203 = vadd.f32 %v1193, %v1200
  %v1204 = vadd.f32 %v1194, %v1200
  %v1205 = vadd.f32 %v1195, %v1200
  %v1206 = vld [vmem:[%s10] sm:$0x1]
  %v1207 = vld [vmem:[%s11] sm:$0x1]
  %v1208 = vsel %vm550, %v1202, 0.0
  %v1209 = vsel %vm550, %v1203, 0.0
  %v1210 = vadd.f32 %v1208, %v1209
  %v1211 = vsel %vm550, %v1204, 0.0
  %v1212 = vadd.f32 %v1210, %v1211
  %v1213 = vsel %vm550, %v1205, 0.0
  %v1214 = vadd.f32 %v1212, %v1213
  %v1215 = vrot.slane %v1214, 4
  %v1216 = vadd.f32 %v1214, %v1215
  %v1217 = vrot.slane %v1216, 2
  %v1218 = vadd.f32 %v1216, %v1217
  %v1219 = vrot.slane %v1218, 1
  %v1220 = vadd.f32 %v1218, %v1219
  %v1221 = vmul.f32 %v1220, 0.03125
  %v1222 = vsub.f32 %v1202, %v1221
  %v1223 = vsub.f32 %v1203, %v1221
  %v1224 = vsub.f32 %v1204, %v1221
  %v1225 = vsub.f32 %v1205, %v1221
  %v1226 = vmul.f32 %v1222, %v1222
  %v1227 = vmul.f32 %v1223, %v1223
  %v1228 = vmul.f32 %v1224, %v1224
  %v1229 = vmul.f32 %v1225, %v1225
  %v1230 = vsel %vm550, %v1226, 0.0
  %v1231 = vsel %vm550, %v1227, 0.0
  %v1232 = vadd.f32 %v1230, %v1231
  %v1233 = vsel %vm550, %v1228, 0.0
  %v1234 = vadd.f32 %v1232, %v1233
  %v1235 = vsel %vm550, %v1229, 0.0
  %v1236 = vadd.f32 %v1234, %v1235
  %v1237 = vrot.slane %v1236, 4
  %v1238 = vadd.f32 %v1236, %v1237
  %v1239 = vrot.slane %v1238, 2
  %v1240 = vadd.f32 %v1238, %v1239
  %v1241 = vrot.slane %v1240, 1
  %v1242 = vadd.f32 %v1240, %v1241
  %v1243 = vmul.f32 %v1242, 0.03125
  %v1244 = vadd.f32 %v1243, 1e-05
  %v1245 = vrsqrt.pop %v1244
  %v1246 = vmul.f32 %v1222, %v1245
  %v1247 = vmul.f32 %v1223, %v1245
  %v1248 = vmul.f32 %v1224, %v1245
  %v1249 = vmul.f32 %v1225, %v1245
  %v1251 = vlaneseq
  %v1252 = vshrl.u32 %v1251, 7
  %v1253 = vsub.s32 0, %v1252
  %v1254 = vrot.slane %v1206, %v1253
  %v1256 = vmul.f32 %v1246, %v1254
  %v1257 = vmul.f32 %v1247, %v1254
  %v1258 = vmul.f32 %v1248, %v1254
  %v1259 = vmul.f32 %v1249, %v1254
  %v1261 = vlaneseq
  %v1262 = vshrl.u32 %v1261, 7
  %v1263 = vsub.s32 0, %v1262
  %v1264 = vrot.slane %v1207, %v1263
  %v1266 = vadd.f32 %v1256, %v1264
  %v1267 = vadd.f32 %v1257, %v1264
  %v1268 = vadd.f32 %v1258, %v1264
  %v1269 = vadd.f32 %v1259, %v1264
  %v1270 = vmax.f32 %v1266, 0.0
  %v1271 = vmax.f32 %v1267, 0.0
  %v1272 = vmax.f32 %v1268, 0.0
  %v1273 = vmax.f32 %v1269, 0.0
  %s1274 = scalar_lea.vmem %s7, 32
  %v1275 = vld [vmem:[%s1274] sm:$0xff]
  %v1276 = vld [vmem:[%s1274 + $0x8] sm:$0xff]
  %v1277 = vld [vmem:[%s1274 + $0x10] sm:$0xff]
  %v1278 = vld [vmem:[%s1274 + $0x18] sm:$0xff]
  %s1279 = scalar_lea.vmem %s8, 1
  %v1280 = vld [vmem:[%s1279] sm:$0x1]
  %s1281 = scalar_lea.vmem %s9, 16
  %v1282 = vld [vmem:[%s1281] sm:$0xff]
  %v1283 = vld [vmem:[%s1281 + $0x8] sm:$0xff]
  %v1284 = vmul.f32 %v50, %v1282
  %v1285 = vmul.f32 %v51, %v1283
  %v1286 = vadd.f32 %v1284, %v162
  %v1287 = vadd.f32 %v1285, %v163
  %v1288 = vsel %vm176, %v1286, -inf
  %1289 = vmax.xlane.f32.xlu0 %v1288
  %v1290 = vpop.xlane.xlu0 %1289
  %v1291 = vsel %vm176, %v1287, -inf
  %1292 = vmax.xlane.f32.xlu0 %v1291
  %v1293 = vpop.xlane.xlu0 %1292
  %v1294 = vsub.f32 %v1286, %v1290
  %v1295 = vsub.f32 %v1287, %v1293
  %v1296 = vmul.f32 %v1294, 1.442695
  %v1297 = vpow.pop %v1296
  %v1298 = vmul.f32 %v1295, 1.442695
  %v1299 = vpow.pop %v1298
  %v1300 = vsel %vm176, %v1297, 0.0
  %1301 = vadd.xlane.f32.xlu0 %v1300
  %v1302 = vpop.xlane.xlu0 %1301
  %v1303 = vsel %vm176, %v1299, 0.0
  %1304 = vadd.xlane.f32.xlu0 %v1303
  %v1305 = vpop.xlane.xlu0 %1304
  %v1306 = vrcp.pop %v1302
  %v1307 = vmul.f32 %v1297, %v1306
  %v1308 = vrcp.pop %v1305
  %v1309 = vmul.f32 %v1299, %v1308
  %v1310 = vmul.f32 %v1307, %v61
  %v1311 = vmul.f32 %v1309, %v62
  %v1312 = vsel %vm176, %v1310, 0.0
  %v1313 = vsel %vm176, %v1311, 0.0
  %v1314 = vadd.f32 %v1312, %v1313
  %v1315 = vrot.slane %v1314, 4
  %v1316 = vadd.f32 %v1314, %v1315
  %v1317 = vrot.slane %v1316, 2
  %v1318 = vadd.f32 %v1316, %v1317
  %v1319 = vrot.slane %v1318, 1
  %v1320 = vadd.f32 %v1318, %v1319
  %v1321 = vmul.f32 %v119, %v1320
  %v1322 = vmul.f32 %v120, %v1320
  %v1323 = vmul.f32 %v121, %v1320
  %v1324 = vmul.f32 %v122, %v1320
  %v1325 = vsel %vm176, %v1321, 0.0
  %1326 = vadd.xlane.f32.xlu0 %v1325
  %v1327 = vpop.xlane.xlu0 %1326
  %v1328 = vsel %vm176, %v1322, 0.0
  %1329 = vadd.xlane.f32.xlu0 %v1328
  %v1330 = vpop.xlane.xlu0 %1329
  %v1331 = vsel %vm176, %v1323, 0.0
  %1332 = vadd.xlane.f32.xlu0 %v1331
  %v1333 = vpop.xlane.xlu0 %1332
  %v1334 = vsel %vm176, %v1324, 0.0
  %1335 = vadd.xlane.f32.xlu0 %v1334
  %v1336 = vpop.xlane.xlu0 %1335
  %v1337 = vmul.f32 %v1307, %v226
  %v1338 = vmul.f32 %v1309, %v227
  %1339 = vmatprep.subr.mxu0 0.0
  %1340 = vmatpush1.msra.mxu0 0.0
  %1341 = vmatprep.subr.mxu0 0.0
  %1342 = vmatpush1.msra.mxu0 0.0
  %1343 = vmatprep.subr.mxu0 0.0
  %1344 = vmatpush1.msra.mxu0 0.0
  %1345 = vmatprep.subr.mxu0 0.0
  %1346 = vmatpush1.msra.mxu0 0.0
  %1347 = vmatprep.subr.mxu0 0.0
  %1348 = vmatpush1.msra.mxu0 0.0
  %1349 = vmatprep.subr.mxu0 0.0
  %1350 = vmatpush1.msra.mxu0 0.0
  %1351 = vmatprep.subr.mxu0 0.0
  %1352 = vmatpush1.msra.mxu0 0.0
  %1353 = vmatprep.subr.mxu0 0.0
  %1354 = vmatpush1.msra.mxu0 0.0
  %1355 = vmatprep.subr.mxu0 0.0
  %1356 = vmatpush1.msra.mxu0 0.0
  %1357 = vmatprep.subr.mxu0 0.0
  %1358 = vmatpush1.msra.mxu0 0.0
  %1359 = vmatprep.subr.mxu0 0.0
  %1360 = vmatpush1.msra.mxu0 0.0
  %1361 = vmatprep.subr.mxu0 0.0
  %1362 = vmatpush1.msra.mxu0 0.0
  %1363 = vmatprep.subr.mxu0 0.0
  %1364 = vmatpush1.msra.mxu0 0.0
  %1365 = vmatprep.subr.mxu0 0.0
  %1366 = vmatpush1.msra.mxu0 0.0
  %1367 = vmatprep.subr.mxu0 0.0
  %1368 = vmatpush1.msra.mxu0 %v1338
  %1369 = vmatprep.subr.mxu0 0.0
  %1370 = vmatpush1.msra.mxu0 %v1337
  %1371 = vmatprep.subr.mxu0 0.0
  %1372 = vmatpush2.msra.mxu0 0.0
  %1373 = vmatprep.subr.mxu0 0.0
  %1374 = vmatpush2.msra.mxu0 0.0
  %1375 = vmatprep.subr.mxu0 0.0
  %1376 = vmatpush2.msra.mxu0 0.0
  %1377 = vmatprep.subr.mxu0 0.0
  %1378 = vmatpush2.msra.mxu0 0.0
  %1379 = vmatprep.subr.mxu0 0.0
  %1380 = vmatpush2.msra.mxu0 0.0
  %1381 = vmatprep.subr.mxu0 0.0
  %1382 = vmatpush2.msra.mxu0 0.0
  %1383 = vmatprep.subr.mxu0 0.0
  %1384 = vmatpush2.msra.mxu0 0.0
  %1385 = vmatprep.subr.mxu0 0.0
  %1386 = vmatpush2.msra.mxu0 0.0
  %1387 = vmatprep.subr.mxu0 0.0
  %1388 = vmatpush2.msra.mxu0 0.0
  %1389 = vmatprep.subr.mxu0 0.0
  %1390 = vmatpush2.msra.mxu0 0.0
  %1391 = vmatprep.subr.mxu0 0.0
  %1392 = vmatpush2.msra.mxu0 0.0
  %1393 = vmatprep.subr.mxu0 0.0
  %1394 = vmatpush2.msra.mxu0 0.0
  %1395 = vmatprep.subr.mxu0 0.0
  %1396 = vmatpush2.msra.mxu0 0.0
  %1397 = vmatprep.subr.mxu0 0.0
  %1398 = vmatpush2.msra.mxu0 0.0
  %1399 = vmatprep.subr.mxu0 0.0
  %1400 = vmatpush2.msra.mxu0 0.0
  %1401 = vmatprep.subr.mxu0 0.0
  %1402 = vmatpush2.msra.mxu0 0.0
  %1403 = vmatprep.mubr.f32.mxu0 0.0
  %1404 = vmatmul.mubr.f32.gmra.mxu0 %v231
  %v1405 = vpop.f32.mrf.mxu0
  %v1406 = vadd.f32 0.0, %v1405
  %v1407 = vpop.f32.mrf.mxu0
  %1408 = vmatprep.mubr.f32.mxu0 0.0
  %1409 = vmatmul.mubr.f32.gmra.mxu0 %v234
  %v1410 = vpop.f32.mrf.mxu0
  %v1411 = vadd.f32 0.0, %v1410
  %v1412 = vpop.f32.mrf.mxu0
  %1413 = vmatprep.mubr.f32.mxu0 0.0
  %1414 = vmatmul.mubr.f32.gmra.mxu0 %v237
  %v1415 = vpop.f32.mrf.mxu0
  %v1416 = vadd.f32 0.0, %v1415
  %v1417 = vpop.f32.mrf.mxu0
  %1418 = vmatprep.mubr.f32.mxu0 0.0
  %1419 = vmatmul.mubr.f32.gmra.mxu0 %v240
  %v1420 = vpop.f32.mrf.mxu0
  %v1421 = vadd.f32 0.0, %v1420
  %v1422 = vpop.f32.mrf.mxu0
  %1423 = vdwg.mxu0
  %v1425 = vsel %vm176, %v1406, 0
  %v1428 = vsel %vm176, %v1411, 0
  %v1431 = vsel %vm176, %v1416, 0
  %v1434 = vsel %vm176, %v1421, 0
  %1436 = vmatprep.subr.mxu0 0.0
  %1437 = vmatpush1.msra.mxu0 0.0
  %1438 = vmatprep.subr.mxu0 0.0
  %1439 = vmatpush1.msra.mxu0 0.0
  %1440 = vmatprep.subr.mxu0 0.0
  %1441 = vmatpush1.msra.mxu0 0.0
  %1442 = vmatprep.subr.mxu0 0.0
  %1443 = vmatpush1.msra.mxu0 0.0
  %1444 = vmatprep.subr.mxu0 0.0
  %1445 = vmatpush1.msra.mxu0 0.0
  %1446 = vmatprep.subr.mxu0 0.0
  %1447 = vmatpush1.msra.mxu0 0.0
  %1448 = vmatprep.subr.mxu0 0.0
  %1449 = vmatpush1.msra.mxu0 0.0
  %1450 = vmatprep.subr.mxu0 0.0
  %1451 = vmatpush1.msra.mxu0 0.0
  %1452 = vmatprep.subr.mxu0 0.0
  %1453 = vmatpush1.msra.mxu0 0.0
  %1454 = vmatprep.subr.mxu0 0.0
  %1455 = vmatpush1.msra.mxu0 0.0
  %1456 = vmatprep.subr.mxu0 0.0
  %1457 = vmatpush1.msra.mxu0 0.0
  %1458 = vmatprep.subr.mxu0 0.0
  %1459 = vmatpush1.msra.mxu0 0.0
  %1460 = vmatprep.subr.mxu0 0.0
  %1461 = vmatpush1.msra.mxu0 0.0
  %1462 = vmatprep.subr.mxu0 0.0
  %1463 = vmatpush1.msra.mxu0 0.0
  %1464 = vmatprep.subr.mxu0 0.0
  %1465 = vmatpush1.msra.mxu0 %v128
  %1466 = vmatprep.subr.mxu0 0.0
  %1467 = vmatpush1.msra.mxu0 %v127
  %1468 = vmatprep.subr.mxu0 0.0
  %1469 = vmatpush2.msra.mxu0 0.0
  %1470 = vmatprep.subr.mxu0 0.0
  %1471 = vmatpush2.msra.mxu0 0.0
  %1472 = vmatprep.subr.mxu0 0.0
  %1473 = vmatpush2.msra.mxu0 0.0
  %1474 = vmatprep.subr.mxu0 0.0
  %1475 = vmatpush2.msra.mxu0 0.0
  %1476 = vmatprep.subr.mxu0 0.0
  %1477 = vmatpush2.msra.mxu0 0.0
  %1478 = vmatprep.subr.mxu0 0.0
  %1479 = vmatpush2.msra.mxu0 0.0
  %1480 = vmatprep.subr.mxu0 0.0
  %1481 = vmatpush2.msra.mxu0 0.0
  %1482 = vmatprep.subr.mxu0 0.0
  %1483 = vmatpush2.msra.mxu0 0.0
  %1484 = vmatprep.subr.mxu0 0.0
  %1485 = vmatpush2.msra.mxu0 0.0
  %1486 = vmatprep.subr.mxu0 0.0
  %1487 = vmatpush2.msra.mxu0 0.0
  %1488 = vmatprep.subr.mxu0 0.0
  %1489 = vmatpush2.msra.mxu0 0.0
  %1490 = vmatprep.subr.mxu0 0.0
  %1491 = vmatpush2.msra.mxu0 0.0
  %1492 = vmatprep.subr.mxu0 0.0
  %1493 = vmatpush2.msra.mxu0 0.0
  %1494 = vmatprep.subr.mxu0 0.0
  %1495 = vmatpush2.msra.mxu0 0.0
  %1496 = vmatprep.subr.mxu0 0.0
  %1497 = vmatpush2.msra.mxu0 0.0
  %1498 = vmatprep.subr.mxu0 0.0
  %1499 = vmatpush2.msra.mxu0 0.0
  %1500 = vmatprep.mubr.f32.mxu0 0.0
  %1501 = vmatmul.mubr.f32.gmra.mxu0 %v1425
  %v1502 = vpop.f32.mrf.mxu0
  %v1503 = vadd.f32 0.0, %v1502
  %v1504 = vpop.f32.mrf.mxu0
  %1505 = vmatprep.mubr.f32.mxu0 0.0
  %1506 = vmatmul.mubr.f32.gmra.mxu0 %v1428
  %v1507 = vpop.f32.mrf.mxu0
  %v1508 = vadd.f32 0.0, %v1507
  %v1509 = vpop.f32.mrf.mxu0
  %1510 = vmatprep.mubr.f32.mxu0 0.0
  %1511 = vmatmul.mubr.f32.gmra.mxu0 %v1431
  %v1512 = vpop.f32.mrf.mxu0
  %v1513 = vadd.f32 0.0, %v1512
  %v1514 = vpop.f32.mrf.mxu0
  %1515 = vmatprep.mubr.f32.mxu0 0.0
  %1516 = vmatmul.mubr.f32.gmra.mxu0 %v1434
  %v1517 = vpop.f32.mrf.mxu0
  %v1518 = vadd.f32 0.0, %v1517
  %v1519 = vpop.f32.mrf.mxu0
  %1520 = vdwg.mxu0
  %v1521 = vmul.f32 %v1503, %v156
  %v1522 = vmul.f32 %v1508, %v157
  %v1523 = vmul.f32 %v1513, %v158
  %v1524 = vmul.f32 %v1518, %v159
  %v1526 = vsel %vm550, %v1270, 0
  %v1529 = vsel %vm550, %v1271, 0
  %v1532 = vsel %vm550, %v1272, 0
  %v1535 = vsel %vm550, %v1273, 0
  %1537 = vmatprep.subr.mxu0 0.0
  %1538 = vmatpush1.msra.mxu0 0.0
  %1539 = vmatprep.subr.mxu0 0.0
  %1540 = vmatpush1.msra.mxu0 0.0
  %1541 = vmatprep.subr.mxu0 0.0
  %1542 = vmatpush1.msra.mxu0 0.0
  %1543 = vmatprep.subr.mxu0 0.0
  %1544 = vmatpush1.msra.mxu0 0.0
  %1545 = vmatprep.subr.mxu0 0.0
  %1546 = vmatpush1.msra.mxu0 0.0
  %1547 = vmatprep.subr.mxu0 0.0
  %1548 = vmatpush1.msra.mxu0 0.0
  %1549 = vmatprep.subr.mxu0 0.0
  %1550 = vmatpush1.msra.mxu0 0.0
  %1551 = vmatprep.subr.mxu0 0.0
  %1552 = vmatpush1.msra.mxu0 0.0
  %1553 = vmatprep.subr.mxu0 0.0
  %1554 = vmatpush1.msra.mxu0 0.0
  %1555 = vmatprep.subr.mxu0 0.0
  %1556 = vmatpush1.msra.mxu0 0.0
  %1557 = vmatprep.subr.mxu0 0.0
  %1558 = vmatpush1.msra.mxu0 0.0
  %1559 = vmatprep.subr.mxu0 0.0
  %1560 = vmatpush1.msra.mxu0 0.0
  %1561 = vmatprep.subr.mxu0 0.0
  %1562 = vmatpush1.msra.mxu0 %v1278
  %1563 = vmatprep.subr.mxu0 0.0
  %1564 = vmatpush1.msra.mxu0 %v1277
  %1565 = vmatprep.subr.mxu0 0.0
  %1566 = vmatpush1.msra.mxu0 %v1276
  %1567 = vmatprep.subr.mxu0 0.0
  %1568 = vmatpush1.msra.mxu0 %v1275
  %1569 = vmatprep.subr.mxu0 0.0
  %1570 = vmatpush2.msra.mxu0 0.0
  %1571 = vmatprep.subr.mxu0 0.0
  %1572 = vmatpush2.msra.mxu0 0.0
  %1573 = vmatprep.subr.mxu0 0.0
  %1574 = vmatpush2.msra.mxu0 0.0
  %1575 = vmatprep.subr.mxu0 0.0
  %1576 = vmatpush2.msra.mxu0 0.0
  %1577 = vmatprep.subr.mxu0 0.0
  %1578 = vmatpush2.msra.mxu0 0.0
  %1579 = vmatprep.subr.mxu0 0.0
  %1580 = vmatpush2.msra.mxu0 0.0
  %1581 = vmatprep.subr.mxu0 0.0
  %1582 = vmatpush2.msra.mxu0 0.0
  %1583 = vmatprep.subr.mxu0 0.0
  %1584 = vmatpush2.msra.mxu0 0.0
  %1585 = vmatprep.subr.mxu0 0.0
  %1586 = vmatpush2.msra.mxu0 0.0
  %1587 = vmatprep.subr.mxu0 0.0
  %1588 = vmatpush2.msra.mxu0 0.0
  %1589 = vmatprep.subr.mxu0 0.0
  %1590 = vmatpush2.msra.mxu0 0.0
  %1591 = vmatprep.subr.mxu0 0.0
  %1592 = vmatpush2.msra.mxu0 0.0
  %1593 = vmatprep.subr.mxu0 0.0
  %1594 = vmatpush2.msra.mxu0 0.0
  %1595 = vmatprep.subr.mxu0 0.0
  %1596 = vmatpush2.msra.mxu0 0.0
  %1597 = vmatprep.subr.mxu0 0.0
  %1598 = vmatpush2.msra.mxu0 0.0
  %1599 = vmatprep.subr.mxu0 0.0
  %1600 = vmatpush2.msra.mxu0 0.0
  %1601 = vmatprep.mubr.f32.mxu0 0.0
  %1602 = vmatmul.mubr.f32.gmra.mxu0 %v1526
  %v1603 = vpop.f32.mrf.mxu0
  %v1604 = vadd.f32 0.0, %v1603
  %v1605 = vpop.f32.mrf.mxu0
  %1606 = vmatprep.mubr.f32.mxu0 0.0
  %1607 = vmatmul.mubr.f32.gmra.mxu0 %v1529
  %v1608 = vpop.f32.mrf.mxu0
  %v1609 = vadd.f32 0.0, %v1608
  %v1610 = vpop.f32.mrf.mxu0
  %1611 = vmatprep.mubr.f32.mxu0 0.0
  %1612 = vmatmul.mubr.f32.gmra.mxu0 %v1532
  %v1613 = vpop.f32.mrf.mxu0
  %v1614 = vadd.f32 0.0, %v1613
  %v1615 = vpop.f32.mrf.mxu0
  %1616 = vmatprep.mubr.f32.mxu0 0.0
  %1617 = vmatmul.mubr.f32.gmra.mxu0 %v1535
  %v1618 = vpop.f32.mrf.mxu0
  %v1619 = vadd.f32 0.0, %v1618
  %v1620 = vpop.f32.mrf.mxu0
  %1621 = vdwg.mxu0
  %v1622 = vmul.f32 %v1327, %v1604
  %v1623 = vmul.f32 %v1330, %v1609
  %v1624 = vmul.f32 %v1333, %v1614
  %v1625 = vmul.f32 %v1336, %v1619
  %1630 = vrot.lane.b32.xlu0 %v1604, 96
  %v1631 = vpop.permute.xlu0 %1630
  %1632 = vrot.lane.b32.xlu0 %v1609, 96
  %v1633 = vpop.permute.xlu0 %1632
  %1634 = vrot.lane.b32.xlu0 %v1614, 96
  %v1635 = vpop.permute.xlu0 %1634
  %1636 = vrot.lane.b32.xlu0 %v1619, 96
  %v1637 = vpop.permute.xlu0 %1636
  %v1643 = vsel %vm550, %v1521, 0
  %v1646 = vsel %vm550, %v1522, 0
  %v1649 = vsel %vm550, %v1523, 0
  %v1652 = vsel %vm550, %v1524, 0
  %1654 = vmatprep.subr.mxu0 0.0
  %1655 = vmatpush1.msra.mxu0 0.0
  %1656 = vmatprep.subr.mxu0 0.0
  %1657 = vmatpush1.msra.mxu0 0.0
  %1658 = vmatprep.subr.mxu0 0.0
  %1659 = vmatpush1.msra.mxu0 0.0
  %1660 = vmatprep.subr.mxu0 0.0
  %1661 = vmatpush1.msra.mxu0 0.0
  %1662 = vmatprep.subr.mxu0 0.0
  %1663 = vmatpush1.msra.mxu0 0.0
  %1664 = vmatprep.subr.mxu0 0.0
  %1665 = vmatpush1.msra.mxu0 0.0
  %1666 = vmatprep.subr.mxu0 0.0
  %1667 = vmatpush1.msra.mxu0 0.0
  %1668 = vmatprep.subr.mxu0 0.0
  %1669 = vmatpush1.msra.mxu0 0.0
  %1670 = vmatprep.subr.mxu0 0.0
  %1671 = vmatpush1.msra.mxu0 0.0
  %1672 = vmatprep.subr.mxu0 0.0
  %1673 = vmatpush1.msra.mxu0 0.0
  %1674 = vmatprep.subr.mxu0 0.0
  %1675 = vmatpush1.msra.mxu0 0.0
  %1676 = vmatprep.subr.mxu0 0.0
  %1677 = vmatpush1.msra.mxu0 0.0
  %1678 = vmatprep.subr.mxu0 0.0
  %1679 = vmatpush1.msra.mxu0 %v1637
  %1680 = vmatprep.subr.mxu0 0.0
  %1681 = vmatpush1.msra.mxu0 %v1635
  %1682 = vmatprep.subr.mxu0 0.0
  %1683 = vmatpush1.msra.mxu0 %v1633
  %1684 = vmatprep.subr.mxu0 0.0
  %1685 = vmatpush1.msra.mxu0 %v1631
  %1686 = vmatprep.subr.mxu0 0.0
  %1687 = vmatpush2.msra.mxu0 0.0
  %1688 = vmatprep.subr.mxu0 0.0
  %1689 = vmatpush2.msra.mxu0 0.0
  %1690 = vmatprep.subr.mxu0 0.0
  %1691 = vmatpush2.msra.mxu0 0.0
  %1692 = vmatprep.subr.mxu0 0.0
  %1693 = vmatpush2.msra.mxu0 0.0
  %1694 = vmatprep.subr.mxu0 0.0
  %1695 = vmatpush2.msra.mxu0 0.0
  %1696 = vmatprep.subr.mxu0 0.0
  %1697 = vmatpush2.msra.mxu0 0.0
  %1698 = vmatprep.subr.mxu0 0.0
  %1699 = vmatpush2.msra.mxu0 0.0
  %1700 = vmatprep.subr.mxu0 0.0
  %1701 = vmatpush2.msra.mxu0 0.0
  %1702 = vmatprep.subr.mxu0 0.0
  %1703 = vmatpush2.msra.mxu0 0.0
  %1704 = vmatprep.subr.mxu0 0.0
  %1705 = vmatpush2.msra.mxu0 0.0
  %1706 = vmatprep.subr.mxu0 0.0
  %1707 = vmatpush2.msra.mxu0 0.0
  %1708 = vmatprep.subr.mxu0 0.0
  %1709 = vmatpush2.msra.mxu0 0.0
  %1710 = vmatprep.subr.mxu0 0.0
  %1711 = vmatpush2.msra.mxu0 0.0
  %1712 = vmatprep.subr.mxu0 0.0
  %1713 = vmatpush2.msra.mxu0 0.0
  %1714 = vmatprep.subr.mxu0 0.0
  %1715 = vmatpush2.msra.mxu0 0.0
  %1716 = vmatprep.subr.mxu0 0.0
  %1717 = vmatpush2.msra.mxu0 0.0
  %1718 = vmatprep.mubr.f32.mxu0 0.0
  %1719 = vmatmul.mubr.f32.gmra.mxu0 %v1643
  %v1720 = vpop.f32.mrf.mxu0
  %v1721 = vadd.f32 0.0, %v1720
  %v1722 = vpop.f32.mrf.mxu0
  %1723 = vmatprep.mubr.f32.mxu0 0.0
  %1724 = vmatmul.mubr.f32.gmra.mxu0 %v1646
  %v1725 = vpop.f32.mrf.mxu0
  %v1726 = vadd.f32 0.0, %v1725
  %v1727 = vpop.f32.mrf.mxu0
  %1728 = vmatprep.mubr.f32.mxu0 0.0
  %1729 = vmatmul.mubr.f32.gmra.mxu0 %v1649
  %v1730 = vpop.f32.mrf.mxu0
  %v1731 = vadd.f32 0.0, %v1730
  %v1732 = vpop.f32.mrf.mxu0
  %1733 = vmatprep.mubr.f32.mxu0 0.0
  %1734 = vmatmul.mubr.f32.gmra.mxu0 %v1652
  %v1735 = vpop.f32.mrf.mxu0
  %v1736 = vadd.f32 0.0, %v1735
  %v1737 = vpop.f32.mrf.mxu0
  %1738 = vdwg.mxu0
  %v1739 = vadd.f32 %v1622, %v1721
  %v1740 = vadd.f32 %v1623, %v1726
  %v1741 = vadd.f32 %v1624, %v1731
  %v1742 = vadd.f32 %v1625, %v1736
  %v1744 = vlaneseq
  %v1745 = vshrl.u32 %v1744, 7
  %v1746 = vsub.s32 0, %v1745
  %v1747 = vrot.slane %v1280, %v1746
  %v1749 = vadd.f32 %v1739, %v1747
  %v1750 = vadd.f32 %v1740, %v1747
  %v1751 = vadd.f32 %v1741, %v1747
  %v1752 = vadd.f32 %v1742, %v1747
  %s1753 = scalar_lea.vmem %s10, 1
  %v1754 = vld [vmem:[%s1753] sm:$0x1]
  %s1755 = scalar_lea.vmem %s11, 1
  %v1756 = vld [vmem:[%s1755] sm:$0x1]
  %v1757 = vsel %vm550, %v1749, 0.0
  %v1758 = vsel %vm550, %v1750, 0.0
  %v1759 = vadd.f32 %v1757, %v1758
  %v1760 = vsel %vm550, %v1751, 0.0
  %v1761 = vadd.f32 %v1759, %v1760
  %v1762 = vsel %vm550, %v1752, 0.0
  %v1763 = vadd.f32 %v1761, %v1762
  %v1764 = vrot.slane %v1763, 4
  %v1765 = vadd.f32 %v1763, %v1764
  %v1766 = vrot.slane %v1765, 2
  %v1767 = vadd.f32 %v1765, %v1766
  %v1768 = vrot.slane %v1767, 1
  %v1769 = vadd.f32 %v1767, %v1768
  %v1770 = vmul.f32 %v1769, 0.03125
  %v1771 = vsub.f32 %v1749, %v1770
  %v1772 = vsub.f32 %v1750, %v1770
  %v1773 = vsub.f32 %v1751, %v1770
  %v1774 = vsub.f32 %v1752, %v1770
  %v1775 = vmul.f32 %v1771, %v1771
  %v1776 = vmul.f32 %v1772, %v1772
  %v1777 = vmul.f32 %v1773, %v1773
  %v1778 = vmul.f32 %v1774, %v1774
  %v1779 = vsel %vm550, %v1775, 0.0
  %v1780 = vsel %vm550, %v1776, 0.0
  %v1781 = vadd.f32 %v1779, %v1780
  %v1782 = vsel %vm550, %v1777, 0.0
  %v1783 = vadd.f32 %v1781, %v1782
  %v1784 = vsel %vm550, %v1778, 0.0
  %v1785 = vadd.f32 %v1783, %v1784
  %v1786 = vrot.slane %v1785, 4
  %v1787 = vadd.f32 %v1785, %v1786
  %v1788 = vrot.slane %v1787, 2
  %v1789 = vadd.f32 %v1787, %v1788
  %v1790 = vrot.slane %v1789, 1
  %v1791 = vadd.f32 %v1789, %v1790
  %v1792 = vmul.f32 %v1791, 0.03125
  %v1793 = vadd.f32 %v1792, 1e-05
  %v1794 = vrsqrt.pop %v1793
  %v1795 = vmul.f32 %v1771, %v1794
  %v1796 = vmul.f32 %v1772, %v1794
  %v1797 = vmul.f32 %v1773, %v1794
  %v1798 = vmul.f32 %v1774, %v1794
  %v1800 = vlaneseq
  %v1801 = vshrl.u32 %v1800, 7
  %v1802 = vsub.s32 0, %v1801
  %v1803 = vrot.slane %v1754, %v1802
  %v1805 = vmul.f32 %v1795, %v1803
  %v1806 = vmul.f32 %v1796, %v1803
  %v1807 = vmul.f32 %v1797, %v1803
  %v1808 = vmul.f32 %v1798, %v1803
  %v1810 = vlaneseq
  %v1811 = vshrl.u32 %v1810, 7
  %v1812 = vsub.s32 0, %v1811
  %v1813 = vrot.slane %v1756, %v1812
  %v1815 = vadd.f32 %v1805, %v1813
  %v1816 = vadd.f32 %v1806, %v1813
  %v1817 = vadd.f32 %v1807, %v1813
  %v1818 = vadd.f32 %v1808, %v1813
  %v1819 = vmax.f32 %v1815, 0.0
  %v1820 = vmax.f32 %v1816, 0.0
  %v1821 = vmax.f32 %v1817, 0.0
  %v1822 = vmax.f32 %v1818, 0.0
  %v1823 = vadd.f32 %v726, %v1819
  %v1824 = vadd.f32 %v727, %v1820
  %v1825 = vadd.f32 %v728, %v1821
  %v1826 = vadd.f32 %v729, %v1822
  %s1827 = scalar_lea.vmem %s7, 64
  %v1828 = vld [vmem:[%s1827] sm:$0xff]
  %v1829 = vld [vmem:[%s1827 + $0x8] sm:$0xff]
  %v1830 = vld [vmem:[%s1827 + $0x10] sm:$0xff]
  %v1831 = vld [vmem:[%s1827 + $0x18] sm:$0xff]
  %s1832 = scalar_lea.vmem %s8, 2
  %v1833 = vld [vmem:[%s1832] sm:$0x1]
  %s1834 = scalar_lea.vmem %s9, 32
  %v1835 = vld [vmem:[%s1834] sm:$0xff]
  %v1836 = vld [vmem:[%s1834 + $0x8] sm:$0xff]
  %v1837 = vmul.f32 %v50, %v1835
  %v1838 = vmul.f32 %v51, %v1836
  %v1839 = vadd.f32 %v1837, %v162
  %v1840 = vadd.f32 %v1838, %v163
  %v1841 = vsel %vm176, %v1839, -inf
  %1842 = vmax.xlane.f32.xlu0 %v1841
  %v1843 = vpop.xlane.xlu0 %1842
  %v1844 = vsel %vm176, %v1840, -inf
  %1845 = vmax.xlane.f32.xlu0 %v1844
  %v1846 = vpop.xlane.xlu0 %1845
  %v1847 = vsub.f32 %v1839, %v1843
  %v1848 = vsub.f32 %v1840, %v1846
  %v1849 = vmul.f32 %v1847, 1.442695
  %v1850 = vpow.pop %v1849
  %v1851 = vmul.f32 %v1848, 1.442695
  %v1852 = vpow.pop %v1851
  %v1853 = vsel %vm176, %v1850, 0.0
  %1854 = vadd.xlane.f32.xlu0 %v1853
  %v1855 = vpop.xlane.xlu0 %1854
  %v1856 = vsel %vm176, %v1852, 0.0
  %1857 = vadd.xlane.f32.xlu0 %v1856
  %v1858 = vpop.xlane.xlu0 %1857
  %v1859 = vrcp.pop %v1855
  %v1860 = vmul.f32 %v1850, %v1859
  %v1861 = vrcp.pop %v1858
  %v1862 = vmul.f32 %v1852, %v1861
  %v1863 = vmul.f32 %v1860, %v61
  %v1864 = vmul.f32 %v1862, %v62
  %v1865 = vsel %vm176, %v1863, 0.0
  %v1866 = vsel %vm176, %v1864, 0.0
  %v1867 = vadd.f32 %v1865, %v1866
  %v1868 = vrot.slane %v1867, 4
  %v1869 = vadd.f32 %v1867, %v1868
  %v1870 = vrot.slane %v1869, 2
  %v1871 = vadd.f32 %v1869, %v1870
  %v1872 = vrot.slane %v1871, 1
  %v1873 = vadd.f32 %v1871, %v1872
  %v1874 = vmul.f32 %v119, %v1873
  %v1875 = vmul.f32 %v120, %v1873
  %v1876 = vmul.f32 %v121, %v1873
  %v1877 = vmul.f32 %v122, %v1873
  %v1878 = vsel %vm176, %v1874, 0.0
  %1879 = vadd.xlane.f32.xlu0 %v1878
  %v1880 = vpop.xlane.xlu0 %1879
  %v1881 = vsel %vm176, %v1875, 0.0
  %1882 = vadd.xlane.f32.xlu0 %v1881
  %v1883 = vpop.xlane.xlu0 %1882
  %v1884 = vsel %vm176, %v1876, 0.0
  %1885 = vadd.xlane.f32.xlu0 %v1884
  %v1886 = vpop.xlane.xlu0 %1885
  %v1887 = vsel %vm176, %v1877, 0.0
  %1888 = vadd.xlane.f32.xlu0 %v1887
  %v1889 = vpop.xlane.xlu0 %1888
  %v1890 = vmul.f32 %v1860, %v226
  %v1891 = vmul.f32 %v1862, %v227
  %1892 = vmatprep.subr.mxu0 0.0
  %1893 = vmatpush1.msra.mxu0 0.0
  %1894 = vmatprep.subr.mxu0 0.0
  %1895 = vmatpush1.msra.mxu0 0.0
  %1896 = vmatprep.subr.mxu0 0.0
  %1897 = vmatpush1.msra.mxu0 0.0
  %1898 = vmatprep.subr.mxu0 0.0
  %1899 = vmatpush1.msra.mxu0 0.0
  %1900 = vmatprep.subr.mxu0 0.0
  %1901 = vmatpush1.msra.mxu0 0.0
  %1902 = vmatprep.subr.mxu0 0.0
  %1903 = vmatpush1.msra.mxu0 0.0
  %1904 = vmatprep.subr.mxu0 0.0
  %1905 = vmatpush1.msra.mxu0 0.0
  %1906 = vmatprep.subr.mxu0 0.0
  %1907 = vmatpush1.msra.mxu0 0.0
  %1908 = vmatprep.subr.mxu0 0.0
  %1909 = vmatpush1.msra.mxu0 0.0
  %1910 = vmatprep.subr.mxu0 0.0
  %1911 = vmatpush1.msra.mxu0 0.0
  %1912 = vmatprep.subr.mxu0 0.0
  %1913 = vmatpush1.msra.mxu0 0.0
  %1914 = vmatprep.subr.mxu0 0.0
  %1915 = vmatpush1.msra.mxu0 0.0
  %1916 = vmatprep.subr.mxu0 0.0
  %1917 = vmatpush1.msra.mxu0 0.0
  %1918 = vmatprep.subr.mxu0 0.0
  %1919 = vmatpush1.msra.mxu0 0.0
  %1920 = vmatprep.subr.mxu0 0.0
  %1921 = vmatpush1.msra.mxu0 %v1891
  %1922 = vmatprep.subr.mxu0 0.0
  %1923 = vmatpush1.msra.mxu0 %v1890
  %1924 = vmatprep.subr.mxu0 0.0
  %1925 = vmatpush2.msra.mxu0 0.0
  %1926 = vmatprep.subr.mxu0 0.0
  %1927 = vmatpush2.msra.mxu0 0.0
  %1928 = vmatprep.subr.mxu0 0.0
  %1929 = vmatpush2.msra.mxu0 0.0
  %1930 = vmatprep.subr.mxu0 0.0
  %1931 = vmatpush2.msra.mxu0 0.0
  %1932 = vmatprep.subr.mxu0 0.0
  %1933 = vmatpush2.msra.mxu0 0.0
  %1934 = vmatprep.subr.mxu0 0.0
  %1935 = vmatpush2.msra.mxu0 0.0
  %1936 = vmatprep.subr.mxu0 0.0
  %1937 = vmatpush2.msra.mxu0 0.0
  %1938 = vmatprep.subr.mxu0 0.0
  %1939 = vmatpush2.msra.mxu0 0.0
  %1940 = vmatprep.subr.mxu0 0.0
  %1941 = vmatpush2.msra.mxu0 0.0
  %1942 = vmatprep.subr.mxu0 0.0
  %1943 = vmatpush2.msra.mxu0 0.0
  %1944 = vmatprep.subr.mxu0 0.0
  %1945 = vmatpush2.msra.mxu0 0.0
  %1946 = vmatprep.subr.mxu0 0.0
  %1947 = vmatpush2.msra.mxu0 0.0
  %1948 = vmatprep.subr.mxu0 0.0
  %1949 = vmatpush2.msra.mxu0 0.0
  %1950 = vmatprep.subr.mxu0 0.0
  %1951 = vmatpush2.msra.mxu0 0.0
  %1952 = vmatprep.subr.mxu0 0.0
  %1953 = vmatpush2.msra.mxu0 0.0
  %1954 = vmatprep.subr.mxu0 0.0
  %1955 = vmatpush2.msra.mxu0 0.0
  %1956 = vmatprep.mubr.f32.mxu0 0.0
  %1957 = vmatmul.mubr.f32.gmra.mxu0 %v231
  %v1958 = vpop.f32.mrf.mxu0
  %v1959 = vadd.f32 0.0, %v1958
  %v1960 = vpop.f32.mrf.mxu0
  %1961 = vmatprep.mubr.f32.mxu0 0.0
  %1962 = vmatmul.mubr.f32.gmra.mxu0 %v234
  %v1963 = vpop.f32.mrf.mxu0
  %v1964 = vadd.f32 0.0, %v1963
  %v1965 = vpop.f32.mrf.mxu0
  %1966 = vmatprep.mubr.f32.mxu0 0.0
  %1967 = vmatmul.mubr.f32.gmra.mxu0 %v237
  %v1968 = vpop.f32.mrf.mxu0
  %v1969 = vadd.f32 0.0, %v1968
  %v1970 = vpop.f32.mrf.mxu0
  %1971 = vmatprep.mubr.f32.mxu0 0.0
  %1972 = vmatmul.mubr.f32.gmra.mxu0 %v240
  %v1973 = vpop.f32.mrf.mxu0
  %v1974 = vadd.f32 0.0, %v1973
  %v1975 = vpop.f32.mrf.mxu0
  %1976 = vdwg.mxu0
  %v1978 = vsel %vm176, %v1959, 0
  %v1981 = vsel %vm176, %v1964, 0
  %v1984 = vsel %vm176, %v1969, 0
  %v1987 = vsel %vm176, %v1974, 0
  %1989 = vmatprep.subr.mxu0 0.0
  %1990 = vmatpush1.msra.mxu0 0.0
  %1991 = vmatprep.subr.mxu0 0.0
  %1992 = vmatpush1.msra.mxu0 0.0
  %1993 = vmatprep.subr.mxu0 0.0
  %1994 = vmatpush1.msra.mxu0 0.0
  %1995 = vmatprep.subr.mxu0 0.0
  %1996 = vmatpush1.msra.mxu0 0.0
  %1997 = vmatprep.subr.mxu0 0.0
  %1998 = vmatpush1.msra.mxu0 0.0
  %1999 = vmatprep.subr.mxu0 0.0
  %2000 = vmatpush1.msra.mxu0 0.0
  %2001 = vmatprep.subr.mxu0 0.0
  %2002 = vmatpush1.msra.mxu0 0.0
  %2003 = vmatprep.subr.mxu0 0.0
  %2004 = vmatpush1.msra.mxu0 0.0
  %2005 = vmatprep.subr.mxu0 0.0
  %2006 = vmatpush1.msra.mxu0 0.0
  %2007 = vmatprep.subr.mxu0 0.0
  %2008 = vmatpush1.msra.mxu0 0.0
  %2009 = vmatprep.subr.mxu0 0.0
  %2010 = vmatpush1.msra.mxu0 0.0
  %2011 = vmatprep.subr.mxu0 0.0
  %2012 = vmatpush1.msra.mxu0 0.0
  %2013 = vmatprep.subr.mxu0 0.0
  %2014 = vmatpush1.msra.mxu0 0.0
  %2015 = vmatprep.subr.mxu0 0.0
  %2016 = vmatpush1.msra.mxu0 0.0
  %2017 = vmatprep.subr.mxu0 0.0
  %2018 = vmatpush1.msra.mxu0 %v128
  %2019 = vmatprep.subr.mxu0 0.0
  %2020 = vmatpush1.msra.mxu0 %v127
  %2021 = vmatprep.subr.mxu0 0.0
  %2022 = vmatpush2.msra.mxu0 0.0
  %2023 = vmatprep.subr.mxu0 0.0
  %2024 = vmatpush2.msra.mxu0 0.0
  %2025 = vmatprep.subr.mxu0 0.0
  %2026 = vmatpush2.msra.mxu0 0.0
  %2027 = vmatprep.subr.mxu0 0.0
  %2028 = vmatpush2.msra.mxu0 0.0
  %2029 = vmatprep.subr.mxu0 0.0
  %2030 = vmatpush2.msra.mxu0 0.0
  %2031 = vmatprep.subr.mxu0 0.0
  %2032 = vmatpush2.msra.mxu0 0.0
  %2033 = vmatprep.subr.mxu0 0.0
  %2034 = vmatpush2.msra.mxu0 0.0
  %2035 = vmatprep.subr.mxu0 0.0
  %2036 = vmatpush2.msra.mxu0 0.0
  %2037 = vmatprep.subr.mxu0 0.0
  %2038 = vmatpush2.msra.mxu0 0.0
  %2039 = vmatprep.subr.mxu0 0.0
  %2040 = vmatpush2.msra.mxu0 0.0
  %2041 = vmatprep.subr.mxu0 0.0
  %2042 = vmatpush2.msra.mxu0 0.0
  %2043 = vmatprep.subr.mxu0 0.0
  %2044 = vmatpush2.msra.mxu0 0.0
  %2045 = vmatprep.subr.mxu0 0.0
  %2046 = vmatpush2.msra.mxu0 0.0
  %2047 = vmatprep.subr.mxu0 0.0
  %2048 = vmatpush2.msra.mxu0 0.0
  %2049 = vmatprep.subr.mxu0 0.0
  %2050 = vmatpush2.msra.mxu0 0.0
  %2051 = vmatprep.subr.mxu0 0.0
  %2052 = vmatpush2.msra.mxu0 0.0
  %2053 = vmatprep.mubr.f32.mxu0 0.0
  %2054 = vmatmul.mubr.f32.gmra.mxu0 %v1978
  %v2055 = vpop.f32.mrf.mxu0
  %v2056 = vadd.f32 0.0, %v2055
  %v2057 = vpop.f32.mrf.mxu0
  %2058 = vmatprep.mubr.f32.mxu0 0.0
  %2059 = vmatmul.mubr.f32.gmra.mxu0 %v1981
  %v2060 = vpop.f32.mrf.mxu0
  %v2061 = vadd.f32 0.0, %v2060
  %v2062 = vpop.f32.mrf.mxu0
  %2063 = vmatprep.mubr.f32.mxu0 0.0
  %2064 = vmatmul.mubr.f32.gmra.mxu0 %v1984
  %v2065 = vpop.f32.mrf.mxu0
  %v2066 = vadd.f32 0.0, %v2065
  %v2067 = vpop.f32.mrf.mxu0
  %2068 = vmatprep.mubr.f32.mxu0 0.0
  %2069 = vmatmul.mubr.f32.gmra.mxu0 %v1987
  %v2070 = vpop.f32.mrf.mxu0
  %v2071 = vadd.f32 0.0, %v2070
  %v2072 = vpop.f32.mrf.mxu0
  %2073 = vdwg.mxu0
  %v2074 = vmul.f32 %v2056, %v156
  %v2075 = vmul.f32 %v2061, %v157
  %v2076 = vmul.f32 %v2066, %v158
  %v2077 = vmul.f32 %v2071, %v159
  %v2079 = vsel %vm550, %v1823, 0
  %v2082 = vsel %vm550, %v1824, 0
  %v2085 = vsel %vm550, %v1825, 0
  %v2088 = vsel %vm550, %v1826, 0
  %2090 = vmatprep.subr.mxu0 0.0
  %2091 = vmatpush1.msra.mxu0 0.0
  %2092 = vmatprep.subr.mxu0 0.0
  %2093 = vmatpush1.msra.mxu0 0.0
  %2094 = vmatprep.subr.mxu0 0.0
  %2095 = vmatpush1.msra.mxu0 0.0
  %2096 = vmatprep.subr.mxu0 0.0
  %2097 = vmatpush1.msra.mxu0 0.0
  %2098 = vmatprep.subr.mxu0 0.0
  %2099 = vmatpush1.msra.mxu0 0.0
  %2100 = vmatprep.subr.mxu0 0.0
  %2101 = vmatpush1.msra.mxu0 0.0
  %2102 = vmatprep.subr.mxu0 0.0
  %2103 = vmatpush1.msra.mxu0 0.0
  %2104 = vmatprep.subr.mxu0 0.0
  %2105 = vmatpush1.msra.mxu0 0.0
  %2106 = vmatprep.subr.mxu0 0.0
  %2107 = vmatpush1.msra.mxu0 0.0
  %2108 = vmatprep.subr.mxu0 0.0
  %2109 = vmatpush1.msra.mxu0 0.0
  %2110 = vmatprep.subr.mxu0 0.0
  %2111 = vmatpush1.msra.mxu0 0.0
  %2112 = vmatprep.subr.mxu0 0.0
  %2113 = vmatpush1.msra.mxu0 0.0
  %2114 = vmatprep.subr.mxu0 0.0
  %2115 = vmatpush1.msra.mxu0 %v1831
  %2116 = vmatprep.subr.mxu0 0.0
  %2117 = vmatpush1.msra.mxu0 %v1830
  %2118 = vmatprep.subr.mxu0 0.0
  %2119 = vmatpush1.msra.mxu0 %v1829
  %2120 = vmatprep.subr.mxu0 0.0
  %2121 = vmatpush1.msra.mxu0 %v1828
  %2122 = vmatprep.subr.mxu0 0.0
  %2123 = vmatpush2.msra.mxu0 0.0
  %2124 = vmatprep.subr.mxu0 0.0
  %2125 = vmatpush2.msra.mxu0 0.0
  %2126 = vmatprep.subr.mxu0 0.0
  %2127 = vmatpush2.msra.mxu0 0.0
  %2128 = vmatprep.subr.mxu0 0.0
  %2129 = vmatpush2.msra.mxu0 0.0
  %2130 = vmatprep.subr.mxu0 0.0
  %2131 = vmatpush2.msra.mxu0 0.0
  %2132 = vmatprep.subr.mxu0 0.0
  %2133 = vmatpush2.msra.mxu0 0.0
  %2134 = vmatprep.subr.mxu0 0.0
  %2135 = vmatpush2.msra.mxu0 0.0
  %2136 = vmatprep.subr.mxu0 0.0
  %2137 = vmatpush2.msra.mxu0 0.0
  %2138 = vmatprep.subr.mxu0 0.0
  %2139 = vmatpush2.msra.mxu0 0.0
  %2140 = vmatprep.subr.mxu0 0.0
  %2141 = vmatpush2.msra.mxu0 0.0
  %2142 = vmatprep.subr.mxu0 0.0
  %2143 = vmatpush2.msra.mxu0 0.0
  %2144 = vmatprep.subr.mxu0 0.0
  %2145 = vmatpush2.msra.mxu0 0.0
  %2146 = vmatprep.subr.mxu0 0.0
  %2147 = vmatpush2.msra.mxu0 0.0
  %2148 = vmatprep.subr.mxu0 0.0
  %2149 = vmatpush2.msra.mxu0 0.0
  %2150 = vmatprep.subr.mxu0 0.0
  %2151 = vmatpush2.msra.mxu0 0.0
  %2152 = vmatprep.subr.mxu0 0.0
  %2153 = vmatpush2.msra.mxu0 0.0
  %2154 = vmatprep.mubr.f32.mxu0 0.0
  %2155 = vmatmul.mubr.f32.gmra.mxu0 %v2079
  %v2156 = vpop.f32.mrf.mxu0
  %v2157 = vadd.f32 0.0, %v2156
  %v2158 = vpop.f32.mrf.mxu0
  %2159 = vmatprep.mubr.f32.mxu0 0.0
  %2160 = vmatmul.mubr.f32.gmra.mxu0 %v2082
  %v2161 = vpop.f32.mrf.mxu0
  %v2162 = vadd.f32 0.0, %v2161
  %v2163 = vpop.f32.mrf.mxu0
  %2164 = vmatprep.mubr.f32.mxu0 0.0
  %2165 = vmatmul.mubr.f32.gmra.mxu0 %v2085
  %v2166 = vpop.f32.mrf.mxu0
  %v2167 = vadd.f32 0.0, %v2166
  %v2168 = vpop.f32.mrf.mxu0
  %2169 = vmatprep.mubr.f32.mxu0 0.0
  %2170 = vmatmul.mubr.f32.gmra.mxu0 %v2088
  %v2171 = vpop.f32.mrf.mxu0
  %v2172 = vadd.f32 0.0, %v2171
  %v2173 = vpop.f32.mrf.mxu0
  %2174 = vdwg.mxu0
  %v2175 = vmul.f32 %v1880, %v2157
  %v2176 = vmul.f32 %v1883, %v2162
  %v2177 = vmul.f32 %v1886, %v2167
  %v2178 = vmul.f32 %v1889, %v2172
  %2183 = vrot.lane.b32.xlu0 %v2157, 96
  %v2184 = vpop.permute.xlu0 %2183
  %2185 = vrot.lane.b32.xlu0 %v2162, 96
  %v2186 = vpop.permute.xlu0 %2185
  %2187 = vrot.lane.b32.xlu0 %v2167, 96
  %v2188 = vpop.permute.xlu0 %2187
  %2189 = vrot.lane.b32.xlu0 %v2172, 96
  %v2190 = vpop.permute.xlu0 %2189
  %v2196 = vsel %vm550, %v2074, 0
  %v2199 = vsel %vm550, %v2075, 0
  %v2202 = vsel %vm550, %v2076, 0
  %v2205 = vsel %vm550, %v2077, 0
  %2207 = vmatprep.subr.mxu0 0.0
  %2208 = vmatpush1.msra.mxu0 0.0
  %2209 = vmatprep.subr.mxu0 0.0
  %2210 = vmatpush1.msra.mxu0 0.0
  %2211 = vmatprep.subr.mxu0 0.0
  %2212 = vmatpush1.msra.mxu0 0.0
  %2213 = vmatprep.subr.mxu0 0.0
  %2214 = vmatpush1.msra.mxu0 0.0
  %2215 = vmatprep.subr.mxu0 0.0
  %2216 = vmatpush1.msra.mxu0 0.0
  %2217 = vmatprep.subr.mxu0 0.0
  %2218 = vmatpush1.msra.mxu0 0.0
  %2219 = vmatprep.subr.mxu0 0.0
  %2220 = vmatpush1.msra.mxu0 0.0
  %2221 = vmatprep.subr.mxu0 0.0
  %2222 = vmatpush1.msra.mxu0 0.0
  %2223 = vmatprep.subr.mxu0 0.0
  %2224 = vmatpush1.msra.mxu0 0.0
  %2225 = vmatprep.subr.mxu0 0.0
  %2226 = vmatpush1.msra.mxu0 0.0
  %2227 = vmatprep.subr.mxu0 0.0
  %2228 = vmatpush1.msra.mxu0 0.0
  %2229 = vmatprep.subr.mxu0 0.0
  %2230 = vmatpush1.msra.mxu0 0.0
  %2231 = vmatprep.subr.mxu0 0.0
  %2232 = vmatpush1.msra.mxu0 %v2190
  %2233 = vmatprep.subr.mxu0 0.0
  %2234 = vmatpush1.msra.mxu0 %v2188
  %2235 = vmatprep.subr.mxu0 0.0
  %2236 = vmatpush1.msra.mxu0 %v2186
  %2237 = vmatprep.subr.mxu0 0.0
  %2238 = vmatpush1.msra.mxu0 %v2184
  %2239 = vmatprep.subr.mxu0 0.0
  %2240 = vmatpush2.msra.mxu0 0.0
  %2241 = vmatprep.subr.mxu0 0.0
  %2242 = vmatpush2.msra.mxu0 0.0
  %2243 = vmatprep.subr.mxu0 0.0
  %2244 = vmatpush2.msra.mxu0 0.0
  %2245 = vmatprep.subr.mxu0 0.0
  %2246 = vmatpush2.msra.mxu0 0.0
  %2247 = vmatprep.subr.mxu0 0.0
  %2248 = vmatpush2.msra.mxu0 0.0
  %2249 = vmatprep.subr.mxu0 0.0
  %2250 = vmatpush2.msra.mxu0 0.0
  %2251 = vmatprep.subr.mxu0 0.0
  %2252 = vmatpush2.msra.mxu0 0.0
  %2253 = vmatprep.subr.mxu0 0.0
  %2254 = vmatpush2.msra.mxu0 0.0
  %2255 = vmatprep.subr.mxu0 0.0
  %2256 = vmatpush2.msra.mxu0 0.0
  %2257 = vmatprep.subr.mxu0 0.0
  %2258 = vmatpush2.msra.mxu0 0.0
  %2259 = vmatprep.subr.mxu0 0.0
  %2260 = vmatpush2.msra.mxu0 0.0
  %2261 = vmatprep.subr.mxu0 0.0
  %2262 = vmatpush2.msra.mxu0 0.0
  %2263 = vmatprep.subr.mxu0 0.0
  %2264 = vmatpush2.msra.mxu0 0.0
  %2265 = vmatprep.subr.mxu0 0.0
  %2266 = vmatpush2.msra.mxu0 0.0
  %2267 = vmatprep.subr.mxu0 0.0
  %2268 = vmatpush2.msra.mxu0 0.0
  %2269 = vmatprep.subr.mxu0 0.0
  %2270 = vmatpush2.msra.mxu0 0.0
  %2271 = vmatprep.mubr.f32.mxu0 0.0
  %2272 = vmatmul.mubr.f32.gmra.mxu0 %v2196
  %v2273 = vpop.f32.mrf.mxu0
  %v2274 = vadd.f32 0.0, %v2273
  %v2275 = vpop.f32.mrf.mxu0
  %2276 = vmatprep.mubr.f32.mxu0 0.0
  %2277 = vmatmul.mubr.f32.gmra.mxu0 %v2199
  %v2278 = vpop.f32.mrf.mxu0
  %v2279 = vadd.f32 0.0, %v2278
  %v2280 = vpop.f32.mrf.mxu0
  %2281 = vmatprep.mubr.f32.mxu0 0.0
  %2282 = vmatmul.mubr.f32.gmra.mxu0 %v2202
  %v2283 = vpop.f32.mrf.mxu0
  %v2284 = vadd.f32 0.0, %v2283
  %v2285 = vpop.f32.mrf.mxu0
  %2286 = vmatprep.mubr.f32.mxu0 0.0
  %2287 = vmatmul.mubr.f32.gmra.mxu0 %v2205
  %v2288 = vpop.f32.mrf.mxu0
  %v2289 = vadd.f32 0.0, %v2288
  %v2290 = vpop.f32.mrf.mxu0
  %2291 = vdwg.mxu0
  %v2292 = vadd.f32 %v2175, %v2274
  %v2293 = vadd.f32 %v2176, %v2279
  %v2294 = vadd.f32 %v2177, %v2284
  %v2295 = vadd.f32 %v2178, %v2289
  %v2297 = vlaneseq
  %v2298 = vshrl.u32 %v2297, 7
  %v2299 = vsub.s32 0, %v2298
  %v2300 = vrot.slane %v1833, %v2299
  %v2302 = vadd.f32 %v2292, %v2300
  %v2303 = vadd.f32 %v2293, %v2300
  %v2304 = vadd.f32 %v2294, %v2300
  %v2305 = vadd.f32 %v2295, %v2300
  %s2306 = scalar_lea.vmem %s10, 2
  %v2307 = vld [vmem:[%s2306] sm:$0x1]
  %s2308 = scalar_lea.vmem %s11, 2
  %v2309 = vld [vmem:[%s2308] sm:$0x1]
  %v2310 = vsel %vm550, %v2302, 0.0
  %v2311 = vsel %vm550, %v2303, 0.0
  %v2312 = vadd.f32 %v2310, %v2311
  %v2313 = vsel %vm550, %v2304, 0.0
  %v2314 = vadd.f32 %v2312, %v2313
  %v2315 = vsel %vm550, %v2305, 0.0
  %v2316 = vadd.f32 %v2314, %v2315
  %v2317 = vrot.slane %v2316, 4
  %v2318 = vadd.f32 %v2316, %v2317
  %v2319 = vrot.slane %v2318, 2
  %v2320 = vadd.f32 %v2318, %v2319
  %v2321 = vrot.slane %v2320, 1
  %v2322 = vadd.f32 %v2320, %v2321
  %v2323 = vmul.f32 %v2322, 0.03125
  %v2324 = vsub.f32 %v2302, %v2323
  %v2325 = vsub.f32 %v2303, %v2323
  %v2326 = vsub.f32 %v2304, %v2323
  %v2327 = vsub.f32 %v2305, %v2323
  %v2328 = vmul.f32 %v2324, %v2324
  %v2329 = vmul.f32 %v2325, %v2325
  %v2330 = vmul.f32 %v2326, %v2326
  %v2331 = vmul.f32 %v2327, %v2327
  %v2332 = vsel %vm550, %v2328, 0.0
  %v2333 = vsel %vm550, %v2329, 0.0
  %v2334 = vadd.f32 %v2332, %v2333
  %v2335 = vsel %vm550, %v2330, 0.0
  %v2336 = vadd.f32 %v2334, %v2335
  %v2337 = vsel %vm550, %v2331, 0.0
  %v2338 = vadd.f32 %v2336, %v2337
  %v2339 = vrot.slane %v2338, 4
  %v2340 = vadd.f32 %v2338, %v2339
  %v2341 = vrot.slane %v2340, 2
  %v2342 = vadd.f32 %v2340, %v2341
  %v2343 = vrot.slane %v2342, 1
  %v2344 = vadd.f32 %v2342, %v2343
  %v2345 = vmul.f32 %v2344, 0.03125
  %v2346 = vadd.f32 %v2345, 1e-05
  %v2347 = vrsqrt.pop %v2346
  %v2348 = vmul.f32 %v2324, %v2347
  %v2349 = vmul.f32 %v2325, %v2347
  %v2350 = vmul.f32 %v2326, %v2347
  %v2351 = vmul.f32 %v2327, %v2347
  %v2353 = vlaneseq
  %v2354 = vshrl.u32 %v2353, 7
  %v2355 = vsub.s32 0, %v2354
  %v2356 = vrot.slane %v2307, %v2355
  %v2358 = vmul.f32 %v2348, %v2356
  %v2359 = vmul.f32 %v2349, %v2356
  %v2360 = vmul.f32 %v2350, %v2356
  %v2361 = vmul.f32 %v2351, %v2356
  %v2363 = vlaneseq
  %v2364 = vshrl.u32 %v2363, 7
  %v2365 = vsub.s32 0, %v2364
  %v2366 = vrot.slane %v2309, %v2365
  %v2368 = vadd.f32 %v2358, %v2366
  %v2369 = vadd.f32 %v2359, %v2366
  %v2370 = vadd.f32 %v2360, %v2366
  %v2371 = vadd.f32 %v2361, %v2366
  %v2372 = vmax.f32 %v2368, 0.0
  %v2373 = vmax.f32 %v2369, 0.0
  %v2374 = vmax.f32 %v2370, 0.0
  %v2375 = vmax.f32 %v2371, 0.0
  %s2376 = scalar_lea.vmem %s7, 96
  %v2377 = vld [vmem:[%s2376] sm:$0xff]
  %v2378 = vld [vmem:[%s2376 + $0x8] sm:$0xff]
  %v2379 = vld [vmem:[%s2376 + $0x10] sm:$0xff]
  %v2380 = vld [vmem:[%s2376 + $0x18] sm:$0xff]
  %s2381 = scalar_lea.vmem %s8, 3
  %v2382 = vld [vmem:[%s2381] sm:$0x1]
  %s2383 = scalar_lea.vmem %s9, 48
  %v2384 = vld [vmem:[%s2383] sm:$0xff]
  %v2385 = vld [vmem:[%s2383 + $0x8] sm:$0xff]
  %v2386 = vmul.f32 %v50, %v2384
  %v2387 = vmul.f32 %v51, %v2385
  %v2388 = vadd.f32 %v2386, %v162
  %v2389 = vadd.f32 %v2387, %v163
  %v2390 = vsel %vm176, %v2388, -inf
  %2391 = vmax.xlane.f32.xlu0 %v2390
  %v2392 = vpop.xlane.xlu0 %2391
  %v2393 = vsel %vm176, %v2389, -inf
  %2394 = vmax.xlane.f32.xlu0 %v2393
  %v2395 = vpop.xlane.xlu0 %2394
  %v2396 = vsub.f32 %v2388, %v2392
  %v2397 = vsub.f32 %v2389, %v2395
  %v2398 = vmul.f32 %v2396, 1.442695
  %v2399 = vpow.pop %v2398
  %v2400 = vmul.f32 %v2397, 1.442695
  %v2401 = vpow.pop %v2400
  %v2402 = vsel %vm176, %v2399, 0.0
  %2403 = vadd.xlane.f32.xlu0 %v2402
  %v2404 = vpop.xlane.xlu0 %2403
  %v2405 = vsel %vm176, %v2401, 0.0
  %2406 = vadd.xlane.f32.xlu0 %v2405
  %v2407 = vpop.xlane.xlu0 %2406
  %v2408 = vrcp.pop %v2404
  %v2409 = vmul.f32 %v2399, %v2408
  %v2410 = vrcp.pop %v2407
  %v2411 = vmul.f32 %v2401, %v2410
  %v2412 = vmul.f32 %v2409, %v61
  %v2413 = vmul.f32 %v2411, %v62
  %v2414 = vsel %vm176, %v2412, 0.0
  %v2415 = vsel %vm176, %v2413, 0.0
  %v2416 = vadd.f32 %v2414, %v2415
  %v2417 = vrot.slane %v2416, 4
  %v2418 = vadd.f32 %v2416, %v2417
  %v2419 = vrot.slane %v2418, 2
  %v2420 = vadd.f32 %v2418, %v2419
  %v2421 = vrot.slane %v2420, 1
  %v2422 = vadd.f32 %v2420, %v2421
  %v2423 = vmul.f32 %v119, %v2422
  %v2424 = vmul.f32 %v120, %v2422
  %v2425 = vmul.f32 %v121, %v2422
  %v2426 = vmul.f32 %v122, %v2422
  %v2427 = vsel %vm176, %v2423, 0.0
  %2428 = vadd.xlane.f32.xlu0 %v2427
  %v2429 = vpop.xlane.xlu0 %2428
  %v2430 = vsel %vm176, %v2424, 0.0
  %2431 = vadd.xlane.f32.xlu0 %v2430
  %v2432 = vpop.xlane.xlu0 %2431
  %v2433 = vsel %vm176, %v2425, 0.0
  %2434 = vadd.xlane.f32.xlu0 %v2433
  %v2435 = vpop.xlane.xlu0 %2434
  %v2436 = vsel %vm176, %v2426, 0.0
  %2437 = vadd.xlane.f32.xlu0 %v2436
  %v2438 = vpop.xlane.xlu0 %2437
  %v2439 = vmul.f32 %v2409, %v226
  %v2440 = vmul.f32 %v2411, %v227
  %2441 = vmatprep.subr.mxu0 0.0
  %2442 = vmatpush1.msra.mxu0 0.0
  %2443 = vmatprep.subr.mxu0 0.0
  %2444 = vmatpush1.msra.mxu0 0.0
  %2445 = vmatprep.subr.mxu0 0.0
  %2446 = vmatpush1.msra.mxu0 0.0
  %2447 = vmatprep.subr.mxu0 0.0
  %2448 = vmatpush1.msra.mxu0 0.0
  %2449 = vmatprep.subr.mxu0 0.0
  %2450 = vmatpush1.msra.mxu0 0.0
  %2451 = vmatprep.subr.mxu0 0.0
  %2452 = vmatpush1.msra.mxu0 0.0
  %2453 = vmatprep.subr.mxu0 0.0
  %2454 = vmatpush1.msra.mxu0 0.0
  %2455 = vmatprep.subr.mxu0 0.0
  %2456 = vmatpush1.msra.mxu0 0.0
  %2457 = vmatprep.subr.mxu0 0.0
  %2458 = vmatpush1.msra.mxu0 0.0
  %2459 = vmatprep.subr.mxu0 0.0
  %2460 = vmatpush1.msra.mxu0 0.0
  %2461 = vmatprep.subr.mxu0 0.0
  %2462 = vmatpush1.msra.mxu0 0.0
  %2463 = vmatprep.subr.mxu0 0.0
  %2464 = vmatpush1.msra.mxu0 0.0
  %2465 = vmatprep.subr.mxu0 0.0
  %2466 = vmatpush1.msra.mxu0 0.0
  %2467 = vmatprep.subr.mxu0 0.0
  %2468 = vmatpush1.msra.mxu0 0.0
  %2469 = vmatprep.subr.mxu0 0.0
  %2470 = vmatpush1.msra.mxu0 %v2440
  %2471 = vmatprep.subr.mxu0 0.0
  %2472 = vmatpush1.msra.mxu0 %v2439
  %2473 = vmatprep.subr.mxu0 0.0
  %2474 = vmatpush2.msra.mxu0 0.0
  %2475 = vmatprep.subr.mxu0 0.0
  %2476 = vmatpush2.msra.mxu0 0.0
  %2477 = vmatprep.subr.mxu0 0.0
  %2478 = vmatpush2.msra.mxu0 0.0
  %2479 = vmatprep.subr.mxu0 0.0
  %2480 = vmatpush2.msra.mxu0 0.0
  %2481 = vmatprep.subr.mxu0 0.0
  %2482 = vmatpush2.msra.mxu0 0.0
  %2483 = vmatprep.subr.mxu0 0.0
  %2484 = vmatpush2.msra.mxu0 0.0
  %2485 = vmatprep.subr.mxu0 0.0
  %2486 = vmatpush2.msra.mxu0 0.0
  %2487 = vmatprep.subr.mxu0 0.0
  %2488 = vmatpush2.msra.mxu0 0.0
  %2489 = vmatprep.subr.mxu0 0.0
  %2490 = vmatpush2.msra.mxu0 0.0
  %2491 = vmatprep.subr.mxu0 0.0
  %2492 = vmatpush2.msra.mxu0 0.0
  %2493 = vmatprep.subr.mxu0 0.0
  %2494 = vmatpush2.msra.mxu0 0.0
  %2495 = vmatprep.subr.mxu0 0.0
  %2496 = vmatpush2.msra.mxu0 0.0
  %2497 = vmatprep.subr.mxu0 0.0
  %2498 = vmatpush2.msra.mxu0 0.0
  %2499 = vmatprep.subr.mxu0 0.0
  %2500 = vmatpush2.msra.mxu0 0.0
  %2501 = vmatprep.subr.mxu0 0.0
  %2502 = vmatpush2.msra.mxu0 0.0
  %2503 = vmatprep.subr.mxu0 0.0
  %2504 = vmatpush2.msra.mxu0 0.0
  %2505 = vmatprep.mubr.f32.mxu0 0.0
  %2506 = vmatmul.mubr.f32.gmra.mxu0 %v231
  %v2507 = vpop.f32.mrf.mxu0
  %v2508 = vadd.f32 0.0, %v2507
  %v2509 = vpop.f32.mrf.mxu0
  %2510 = vmatprep.mubr.f32.mxu0 0.0
  %2511 = vmatmul.mubr.f32.gmra.mxu0 %v234
  %v2512 = vpop.f32.mrf.mxu0
  %v2513 = vadd.f32 0.0, %v2512
  %v2514 = vpop.f32.mrf.mxu0
  %2515 = vmatprep.mubr.f32.mxu0 0.0
  %2516 = vmatmul.mubr.f32.gmra.mxu0 %v237
  %v2517 = vpop.f32.mrf.mxu0
  %v2518 = vadd.f32 0.0, %v2517
  %v2519 = vpop.f32.mrf.mxu0
  %2520 = vmatprep.mubr.f32.mxu0 0.0
  %2521 = vmatmul.mubr.f32.gmra.mxu0 %v240
  %v2522 = vpop.f32.mrf.mxu0
  %v2523 = vadd.f32 0.0, %v2522
  %v2524 = vpop.f32.mrf.mxu0
  %2525 = vdwg.mxu0
  %v2527 = vsel %vm176, %v2508, 0
  %v2530 = vsel %vm176, %v2513, 0
  %v2533 = vsel %vm176, %v2518, 0
  %v2536 = vsel %vm176, %v2523, 0
  %2538 = vmatprep.subr.mxu0 0.0
  %2539 = vmatpush1.msra.mxu0 0.0
  %2540 = vmatprep.subr.mxu0 0.0
  %2541 = vmatpush1.msra.mxu0 0.0
  %2542 = vmatprep.subr.mxu0 0.0
  %2543 = vmatpush1.msra.mxu0 0.0
  %2544 = vmatprep.subr.mxu0 0.0
  %2545 = vmatpush1.msra.mxu0 0.0
  %2546 = vmatprep.subr.mxu0 0.0
  %2547 = vmatpush1.msra.mxu0 0.0
  %2548 = vmatprep.subr.mxu0 0.0
  %2549 = vmatpush1.msra.mxu0 0.0
  %2550 = vmatprep.subr.mxu0 0.0
  %2551 = vmatpush1.msra.mxu0 0.0
  %2552 = vmatprep.subr.mxu0 0.0
  %2553 = vmatpush1.msra.mxu0 0.0
  %2554 = vmatprep.subr.mxu0 0.0
  %2555 = vmatpush1.msra.mxu0 0.0
  %2556 = vmatprep.subr.mxu0 0.0
  %2557 = vmatpush1.msra.mxu0 0.0
  %2558 = vmatprep.subr.mxu0 0.0
  %2559 = vmatpush1.msra.mxu0 0.0
  %2560 = vmatprep.subr.mxu0 0.0
  %2561 = vmatpush1.msra.mxu0 0.0
  %2562 = vmatprep.subr.mxu0 0.0
  %2563 = vmatpush1.msra.mxu0 0.0
  %2564 = vmatprep.subr.mxu0 0.0
  %2565 = vmatpush1.msra.mxu0 0.0
  %2566 = vmatprep.subr.mxu0 0.0
  %2567 = vmatpush1.msra.mxu0 %v128
  %2568 = vmatprep.subr.mxu0 0.0
  %2569 = vmatpush1.msra.mxu0 %v127
  %2570 = vmatprep.subr.mxu0 0.0
  %2571 = vmatpush2.msra.mxu0 0.0
  %2572 = vmatprep.subr.mxu0 0.0
  %2573 = vmatpush2.msra.mxu0 0.0
  %2574 = vmatprep.subr.mxu0 0.0
  %2575 = vmatpush2.msra.mxu0 0.0
  %2576 = vmatprep.subr.mxu0 0.0
  %2577 = vmatpush2.msra.mxu0 0.0
  %2578 = vmatprep.subr.mxu0 0.0
  %2579 = vmatpush2.msra.mxu0 0.0
  %2580 = vmatprep.subr.mxu0 0.0
  %2581 = vmatpush2.msra.mxu0 0.0
  %2582 = vmatprep.subr.mxu0 0.0
  %2583 = vmatpush2.msra.mxu0 0.0
  %2584 = vmatprep.subr.mxu0 0.0
  %2585 = vmatpush2.msra.mxu0 0.0
  %2586 = vmatprep.subr.mxu0 0.0
  %2587 = vmatpush2.msra.mxu0 0.0
  %2588 = vmatprep.subr.mxu0 0.0
  %2589 = vmatpush2.msra.mxu0 0.0
  %2590 = vmatprep.subr.mxu0 0.0
  %2591 = vmatpush2.msra.mxu0 0.0
  %2592 = vmatprep.subr.mxu0 0.0
  %2593 = vmatpush2.msra.mxu0 0.0
  %2594 = vmatprep.subr.mxu0 0.0
  %2595 = vmatpush2.msra.mxu0 0.0
  %2596 = vmatprep.subr.mxu0 0.0
  %2597 = vmatpush2.msra.mxu0 0.0
  %2598 = vmatprep.subr.mxu0 0.0
  %2599 = vmatpush2.msra.mxu0 0.0
  %2600 = vmatprep.subr.mxu0 0.0
  %2601 = vmatpush2.msra.mxu0 0.0
  %2602 = vmatprep.mubr.f32.mxu0 0.0
  %2603 = vmatmul.mubr.f32.gmra.mxu0 %v2527
  %v2604 = vpop.f32.mrf.mxu0
  %v2605 = vadd.f32 0.0, %v2604
  %v2606 = vpop.f32.mrf.mxu0
  %2607 = vmatprep.mubr.f32.mxu0 0.0
  %2608 = vmatmul.mubr.f32.gmra.mxu0 %v2530
  %v2609 = vpop.f32.mrf.mxu0
  %v2610 = vadd.f32 0.0, %v2609
  %v2611 = vpop.f32.mrf.mxu0
  %2612 = vmatprep.mubr.f32.mxu0 0.0
  %2613 = vmatmul.mubr.f32.gmra.mxu0 %v2533
  %v2614 = vpop.f32.mrf.mxu0
  %v2615 = vadd.f32 0.0, %v2614
  %v2616 = vpop.f32.mrf.mxu0
  %2617 = vmatprep.mubr.f32.mxu0 0.0
  %2618 = vmatmul.mubr.f32.gmra.mxu0 %v2536
  %v2619 = vpop.f32.mrf.mxu0
  %v2620 = vadd.f32 0.0, %v2619
  %v2621 = vpop.f32.mrf.mxu0
  %2622 = vdwg.mxu0
  %v2623 = vmul.f32 %v2605, %v156
  %v2624 = vmul.f32 %v2610, %v157
  %v2625 = vmul.f32 %v2615, %v158
  %v2626 = vmul.f32 %v2620, %v159
  %v2628 = vsel %vm550, %v2372, 0
  %v2631 = vsel %vm550, %v2373, 0
  %v2634 = vsel %vm550, %v2374, 0
  %v2637 = vsel %vm550, %v2375, 0
  %2639 = vmatprep.subr.mxu0 0.0
  %2640 = vmatpush1.msra.mxu0 0.0
  %2641 = vmatprep.subr.mxu0 0.0
  %2642 = vmatpush1.msra.mxu0 0.0
  %2643 = vmatprep.subr.mxu0 0.0
  %2644 = vmatpush1.msra.mxu0 0.0
  %2645 = vmatprep.subr.mxu0 0.0
  %2646 = vmatpush1.msra.mxu0 0.0
  %2647 = vmatprep.subr.mxu0 0.0
  %2648 = vmatpush1.msra.mxu0 0.0
  %2649 = vmatprep.subr.mxu0 0.0
  %2650 = vmatpush1.msra.mxu0 0.0
  %2651 = vmatprep.subr.mxu0 0.0
  %2652 = vmatpush1.msra.mxu0 0.0
  %2653 = vmatprep.subr.mxu0 0.0
  %2654 = vmatpush1.msra.mxu0 0.0
  %2655 = vmatprep.subr.mxu0 0.0
  %2656 = vmatpush1.msra.mxu0 0.0
  %2657 = vmatprep.subr.mxu0 0.0
  %2658 = vmatpush1.msra.mxu0 0.0
  %2659 = vmatprep.subr.mxu0 0.0
  %2660 = vmatpush1.msra.mxu0 0.0
  %2661 = vmatprep.subr.mxu0 0.0
  %2662 = vmatpush1.msra.mxu0 0.0
  %2663 = vmatprep.subr.mxu0 0.0
  %2664 = vmatpush1.msra.mxu0 %v2380
  %2665 = vmatprep.subr.mxu0 0.0
  %2666 = vmatpush1.msra.mxu0 %v2379
  %2667 = vmatprep.subr.mxu0 0.0
  %2668 = vmatpush1.msra.mxu0 %v2378
  %2669 = vmatprep.subr.mxu0 0.0
  %2670 = vmatpush1.msra.mxu0 %v2377
  %2671 = vmatprep.subr.mxu0 0.0
  %2672 = vmatpush2.msra.mxu0 0.0
  %2673 = vmatprep.subr.mxu0 0.0
  %2674 = vmatpush2.msra.mxu0 0.0
  %2675 = vmatprep.subr.mxu0 0.0
  %2676 = vmatpush2.msra.mxu0 0.0
  %2677 = vmatprep.subr.mxu0 0.0
  %2678 = vmatpush2.msra.mxu0 0.0
  %2679 = vmatprep.subr.mxu0 0.0
  %2680 = vmatpush2.msra.mxu0 0.0
  %2681 = vmatprep.subr.mxu0 0.0
  %2682 = vmatpush2.msra.mxu0 0.0
  %2683 = vmatprep.subr.mxu0 0.0
  %2684 = vmatpush2.msra.mxu0 0.0
  %2685 = vmatprep.subr.mxu0 0.0
  %2686 = vmatpush2.msra.mxu0 0.0
  %2687 = vmatprep.subr.mxu0 0.0
  %2688 = vmatpush2.msra.mxu0 0.0
  %2689 = vmatprep.subr.mxu0 0.0
  %2690 = vmatpush2.msra.mxu0 0.0
  %2691 = vmatprep.subr.mxu0 0.0
  %2692 = vmatpush2.msra.mxu0 0.0
  %2693 = vmatprep.subr.mxu0 0.0
  %2694 = vmatpush2.msra.mxu0 0.0
  %2695 = vmatprep.subr.mxu0 0.0
  %2696 = vmatpush2.msra.mxu0 0.0
  %2697 = vmatprep.subr.mxu0 0.0
  %2698 = vmatpush2.msra.mxu0 0.0
  %2699 = vmatprep.subr.mxu0 0.0
  %2700 = vmatpush2.msra.mxu0 0.0
  %2701 = vmatprep.subr.mxu0 0.0
  %2702 = vmatpush2.msra.mxu0 0.0
  %2703 = vmatprep.mubr.f32.mxu0 0.0
  %2704 = vmatmul.mubr.f32.gmra.mxu0 %v2628
  %v2705 = vpop.f32.mrf.mxu0
  %v2706 = vadd.f32 0.0, %v2705
  %v2707 = vpop.f32.mrf.mxu0
  %2708 = vmatprep.mubr.f32.mxu0 0.0
  %2709 = vmatmul.mubr.f32.gmra.mxu0 %v2631
  %v2710 = vpop.f32.mrf.mxu0
  %v2711 = vadd.f32 0.0, %v2710
  %v2712 = vpop.f32.mrf.mxu0
  %2713 = vmatprep.mubr.f32.mxu0 0.0
  %2714 = vmatmul.mubr.f32.gmra.mxu0 %v2634
  %v2715 = vpop.f32.mrf.mxu0
  %v2716 = vadd.f32 0.0, %v2715
  %v2717 = vpop.f32.mrf.mxu0
  %2718 = vmatprep.mubr.f32.mxu0 0.0
  %2719 = vmatmul.mubr.f32.gmra.mxu0 %v2637
  %v2720 = vpop.f32.mrf.mxu0
  %v2721 = vadd.f32 0.0, %v2720
  %v2722 = vpop.f32.mrf.mxu0
  %2723 = vdwg.mxu0
  %v2724 = vmul.f32 %v2429, %v2706
  %v2725 = vmul.f32 %v2432, %v2711
  %v2726 = vmul.f32 %v2435, %v2716
  %v2727 = vmul.f32 %v2438, %v2721
  %2732 = vrot.lane.b32.xlu0 %v2706, 96
  %v2733 = vpop.permute.xlu0 %2732
  %2734 = vrot.lane.b32.xlu0 %v2711, 96
  %v2735 = vpop.permute.xlu0 %2734
  %2736 = vrot.lane.b32.xlu0 %v2716, 96
  %v2737 = vpop.permute.xlu0 %2736
  %2738 = vrot.lane.b32.xlu0 %v2721, 96
  %v2739 = vpop.permute.xlu0 %2738
  %v2745 = vsel %vm550, %v2623, 0
  %v2748 = vsel %vm550, %v2624, 0
  %v2751 = vsel %vm550, %v2625, 0
  %v2754 = vsel %vm550, %v2626, 0
  %2756 = vmatprep.subr.mxu0 0.0
  %2757 = vmatpush1.msra.mxu0 0.0
  %2758 = vmatprep.subr.mxu0 0.0
  %2759 = vmatpush1.msra.mxu0 0.0
  %2760 = vmatprep.subr.mxu0 0.0
  %2761 = vmatpush1.msra.mxu0 0.0
  %2762 = vmatprep.subr.mxu0 0.0
  %2763 = vmatpush1.msra.mxu0 0.0
  %2764 = vmatprep.subr.mxu0 0.0
  %2765 = vmatpush1.msra.mxu0 0.0
  %2766 = vmatprep.subr.mxu0 0.0
  %2767 = vmatpush1.msra.mxu0 0.0
  %2768 = vmatprep.subr.mxu0 0.0
  %2769 = vmatpush1.msra.mxu0 0.0
  %2770 = vmatprep.subr.mxu0 0.0
  %2771 = vmatpush1.msra.mxu0 0.0
  %2772 = vmatprep.subr.mxu0 0.0
  %2773 = vmatpush1.msra.mxu0 0.0
  %2774 = vmatprep.subr.mxu0 0.0
  %2775 = vmatpush1.msra.mxu0 0.0
  %2776 = vmatprep.subr.mxu0 0.0
  %2777 = vmatpush1.msra.mxu0 0.0
  %2778 = vmatprep.subr.mxu0 0.0
  %2779 = vmatpush1.msra.mxu0 0.0
  %2780 = vmatprep.subr.mxu0 0.0
  %2781 = vmatpush1.msra.mxu0 %v2739
  %2782 = vmatprep.subr.mxu0 0.0
  %2783 = vmatpush1.msra.mxu0 %v2737
  %2784 = vmatprep.subr.mxu0 0.0
  %2785 = vmatpush1.msra.mxu0 %v2735
  %2786 = vmatprep.subr.mxu0 0.0
  %2787 = vmatpush1.msra.mxu0 %v2733
  %2788 = vmatprep.subr.mxu0 0.0
  %2789 = vmatpush2.msra.mxu0 0.0
  %2790 = vmatprep.subr.mxu0 0.0
  %2791 = vmatpush2.msra.mxu0 0.0
  %2792 = vmatprep.subr.mxu0 0.0
  %2793 = vmatpush2.msra.mxu0 0.0
  %2794 = vmatprep.subr.mxu0 0.0
  %2795 = vmatpush2.msra.mxu0 0.0
  %2796 = vmatprep.subr.mxu0 0.0
  %2797 = vmatpush2.msra.mxu0 0.0
  %2798 = vmatprep.subr.mxu0 0.0
  %2799 = vmatpush2.msra.mxu0 0.0
  %2800 = vmatprep.subr.mxu0 0.0
  %2801 = vmatpush2.msra.mxu0 0.0
  %2802 = vmatprep.subr.mxu0 0.0
  %2803 = vmatpush2.msra.mxu0 0.0
  %2804 = vmatprep.subr.mxu0 0.0
  %2805 = vmatpush2.msra.mxu0 0.0
  %2806 = vmatprep.subr.mxu0 0.0
  %2807 = vmatpush2.msra.mxu0 0.0
  %2808 = vmatprep.subr.mxu0 0.0
  %2809 = vmatpush2.msra.mxu0 0.0
  %2810 = vmatprep.subr.mxu0 0.0
  %2811 = vmatpush2.msra.mxu0 0.0
  %2812 = vmatprep.subr.mxu0 0.0
  %2813 = vmatpush2.msra.mxu0 0.0
  %2814 = vmatprep.subr.mxu0 0.0
  %2815 = vmatpush2.msra.mxu0 0.0
  %2816 = vmatprep.subr.mxu0 0.0
  %2817 = vmatpush2.msra.mxu0 0.0
  %2818 = vmatprep.subr.mxu0 0.0
  %2819 = vmatpush2.msra.mxu0 0.0
  %2820 = vmatprep.mubr.f32.mxu0 0.0
  %2821 = vmatmul.mubr.f32.gmra.mxu0 %v2745
  %v2822 = vpop.f32.mrf.mxu0
  %v2823 = vadd.f32 0.0, %v2822
  %v2824 = vpop.f32.mrf.mxu0
  %2825 = vmatprep.mubr.f32.mxu0 0.0
  %2826 = vmatmul.mubr.f32.gmra.mxu0 %v2748
  %v2827 = vpop.f32.mrf.mxu0
  %v2828 = vadd.f32 0.0, %v2827
  %v2829 = vpop.f32.mrf.mxu0
  %2830 = vmatprep.mubr.f32.mxu0 0.0
  %2831 = vmatmul.mubr.f32.gmra.mxu0 %v2751
  %v2832 = vpop.f32.mrf.mxu0
  %v2833 = vadd.f32 0.0, %v2832
  %v2834 = vpop.f32.mrf.mxu0
  %2835 = vmatprep.mubr.f32.mxu0 0.0
  %2836 = vmatmul.mubr.f32.gmra.mxu0 %v2754
  %v2837 = vpop.f32.mrf.mxu0
  %v2838 = vadd.f32 0.0, %v2837
  %v2839 = vpop.f32.mrf.mxu0
  %2840 = vdwg.mxu0
  %v2841 = vadd.f32 %v2724, %v2823
  %v2842 = vadd.f32 %v2725, %v2828
  %v2843 = vadd.f32 %v2726, %v2833
  %v2844 = vadd.f32 %v2727, %v2838
  %v2846 = vlaneseq
  %v2847 = vshrl.u32 %v2846, 7
  %v2848 = vsub.s32 0, %v2847
  %v2849 = vrot.slane %v2382, %v2848
  %v2851 = vadd.f32 %v2841, %v2849
  %v2852 = vadd.f32 %v2842, %v2849
  %v2853 = vadd.f32 %v2843, %v2849
  %v2854 = vadd.f32 %v2844, %v2849
  %s2855 = scalar_lea.vmem %s10, 3
  %v2856 = vld [vmem:[%s2855] sm:$0x1]
  %s2857 = scalar_lea.vmem %s11, 3
  %v2858 = vld [vmem:[%s2857] sm:$0x1]
  %v2859 = vsel %vm550, %v2851, 0.0
  %v2860 = vsel %vm550, %v2852, 0.0
  %v2861 = vadd.f32 %v2859, %v2860
  %v2862 = vsel %vm550, %v2853, 0.0
  %v2863 = vadd.f32 %v2861, %v2862
  %v2864 = vsel %vm550, %v2854, 0.0
  %v2865 = vadd.f32 %v2863, %v2864
  %v2866 = vrot.slane %v2865, 4
  %v2867 = vadd.f32 %v2865, %v2866
  %v2868 = vrot.slane %v2867, 2
  %v2869 = vadd.f32 %v2867, %v2868
  %v2870 = vrot.slane %v2869, 1
  %v2871 = vadd.f32 %v2869, %v2870
  %v2872 = vmul.f32 %v2871, 0.03125
  %v2873 = vsub.f32 %v2851, %v2872
  %v2874 = vsub.f32 %v2852, %v2872
  %v2875 = vsub.f32 %v2853, %v2872
  %v2876 = vsub.f32 %v2854, %v2872
  %v2877 = vmul.f32 %v2873, %v2873
  %v2878 = vmul.f32 %v2874, %v2874
  %v2879 = vmul.f32 %v2875, %v2875
  %v2880 = vmul.f32 %v2876, %v2876
  %v2881 = vsel %vm550, %v2877, 0.0
  %v2882 = vsel %vm550, %v2878, 0.0
  %v2883 = vadd.f32 %v2881, %v2882
  %v2884 = vsel %vm550, %v2879, 0.0
  %v2885 = vadd.f32 %v2883, %v2884
  %v2886 = vsel %vm550, %v2880, 0.0
  %v2887 = vadd.f32 %v2885, %v2886
  %v2888 = vrot.slane %v2887, 4
  %v2889 = vadd.f32 %v2887, %v2888
  %v2890 = vrot.slane %v2889, 2
  %v2891 = vadd.f32 %v2889, %v2890
  %v2892 = vrot.slane %v2891, 1
  %v2893 = vadd.f32 %v2891, %v2892
  %v2894 = vmul.f32 %v2893, 0.03125
  %v2895 = vadd.f32 %v2894, 1e-05
  %v2896 = vrsqrt.pop %v2895
  %v2897 = vmul.f32 %v2873, %v2896
  %v2898 = vmul.f32 %v2874, %v2896
  %v2899 = vmul.f32 %v2875, %v2896
  %v2900 = vmul.f32 %v2876, %v2896
  %v2902 = vlaneseq
  %v2903 = vshrl.u32 %v2902, 7
  %v2904 = vsub.s32 0, %v2903
  %v2905 = vrot.slane %v2856, %v2904
  %v2907 = vmul.f32 %v2897, %v2905
  %v2908 = vmul.f32 %v2898, %v2905
  %v2909 = vmul.f32 %v2899, %v2905
  %v2910 = vmul.f32 %v2900, %v2905
  %v2912 = vlaneseq
  %v2913 = vshrl.u32 %v2912, 7
  %v2914 = vsub.s32 0, %v2913
  %v2915 = vrot.slane %v2858, %v2914
  %v2917 = vadd.f32 %v2907, %v2915
  %v2918 = vadd.f32 %v2908, %v2915
  %v2919 = vadd.f32 %v2909, %v2915
  %v2920 = vadd.f32 %v2910, %v2915
  %v2921 = vmax.f32 %v2917, 0.0
  %v2922 = vmax.f32 %v2918, 0.0
  %v2923 = vmax.f32 %v2919, 0.0
  %v2924 = vmax.f32 %v2920, 0.0
  %v2925 = vadd.f32 %v1823, %v2921
  %v2926 = vadd.f32 %v1824, %v2922
  %v2927 = vadd.f32 %v1825, %v2923
  %v2928 = vadd.f32 %v1826, %v2924
  %s2929 = scalar_lea.vmem %s7, 128
  %v2930 = vld [vmem:[%s2929] sm:$0xff]
  %v2931 = vld [vmem:[%s2929 + $0x8] sm:$0xff]
  %v2932 = vld [vmem:[%s2929 + $0x10] sm:$0xff]
  %v2933 = vld [vmem:[%s2929 + $0x18] sm:$0xff]
  %s2934 = scalar_lea.vmem %s8, 4
  %v2935 = vld [vmem:[%s2934] sm:$0x1]
  %s2936 = scalar_lea.vmem %s9, 64
  %v2937 = vld [vmem:[%s2936] sm:$0xff]
  %v2938 = vld [vmem:[%s2936 + $0x8] sm:$0xff]
  %v2939 = vmul.f32 %v50, %v2937
  %v2940 = vmul.f32 %v51, %v2938
  %v2941 = vadd.f32 %v2939, %v162
  %v2942 = vadd.f32 %v2940, %v163
  %v2943 = vsel %vm176, %v2941, -inf
  %2944 = vmax.xlane.f32.xlu0 %v2943
  %v2945 = vpop.xlane.xlu0 %2944
  %v2946 = vsel %vm176, %v2942, -inf
  %2947 = vmax.xlane.f32.xlu0 %v2946
  %v2948 = vpop.xlane.xlu0 %2947
  %v2949 = vsub.f32 %v2941, %v2945
  %v2950 = vsub.f32 %v2942, %v2948
  %v2951 = vmul.f32 %v2949, 1.442695
  %v2952 = vpow.pop %v2951
  %v2953 = vmul.f32 %v2950, 1.442695
  %v2954 = vpow.pop %v2953
  %v2955 = vsel %vm176, %v2952, 0.0
  %2956 = vadd.xlane.f32.xlu0 %v2955
  %v2957 = vpop.xlane.xlu0 %2956
  %v2958 = vsel %vm176, %v2954, 0.0
  %2959 = vadd.xlane.f32.xlu0 %v2958
  %v2960 = vpop.xlane.xlu0 %2959
  %v2961 = vrcp.pop %v2957
  %v2962 = vmul.f32 %v2952, %v2961
  %v2963 = vrcp.pop %v2960
  %v2964 = vmul.f32 %v2954, %v2963
  %v2965 = vmul.f32 %v2962, %v61
  %v2966 = vmul.f32 %v2964, %v62
  %v2967 = vsel %vm176, %v2965, 0.0
  %v2968 = vsel %vm176, %v2966, 0.0
  %v2969 = vadd.f32 %v2967, %v2968
  %v2970 = vrot.slane %v2969, 4
  %v2971 = vadd.f32 %v2969, %v2970
  %v2972 = vrot.slane %v2971, 2
  %v2973 = vadd.f32 %v2971, %v2972
  %v2974 = vrot.slane %v2973, 1
  %v2975 = vadd.f32 %v2973, %v2974
  %v2976 = vmul.f32 %v119, %v2975
  %v2977 = vmul.f32 %v120, %v2975
  %v2978 = vmul.f32 %v121, %v2975
  %v2979 = vmul.f32 %v122, %v2975
  %v2980 = vsel %vm176, %v2976, 0.0
  %2981 = vadd.xlane.f32.xlu0 %v2980
  %v2982 = vpop.xlane.xlu0 %2981
  %v2983 = vsel %vm176, %v2977, 0.0
  %2984 = vadd.xlane.f32.xlu0 %v2983
  %v2985 = vpop.xlane.xlu0 %2984
  %v2986 = vsel %vm176, %v2978, 0.0
  %2987 = vadd.xlane.f32.xlu0 %v2986
  %v2988 = vpop.xlane.xlu0 %2987
  %v2989 = vsel %vm176, %v2979, 0.0
  %2990 = vadd.xlane.f32.xlu0 %v2989
  %v2991 = vpop.xlane.xlu0 %2990
  %v2992 = vmul.f32 %v2962, %v226
  %v2993 = vmul.f32 %v2964, %v227
  %2994 = vmatprep.subr.mxu0 0.0
  %2995 = vmatpush1.msra.mxu0 0.0
  %2996 = vmatprep.subr.mxu0 0.0
  %2997 = vmatpush1.msra.mxu0 0.0
  %2998 = vmatprep.subr.mxu0 0.0
  %2999 = vmatpush1.msra.mxu0 0.0
  %3000 = vmatprep.subr.mxu0 0.0
  %3001 = vmatpush1.msra.mxu0 0.0
  %3002 = vmatprep.subr.mxu0 0.0
  %3003 = vmatpush1.msra.mxu0 0.0
  %3004 = vmatprep.subr.mxu0 0.0
  %3005 = vmatpush1.msra.mxu0 0.0
  %3006 = vmatprep.subr.mxu0 0.0
  %3007 = vmatpush1.msra.mxu0 0.0
  %3008 = vmatprep.subr.mxu0 0.0
  %3009 = vmatpush1.msra.mxu0 0.0
  %3010 = vmatprep.subr.mxu0 0.0
  %3011 = vmatpush1.msra.mxu0 0.0
  %3012 = vmatprep.subr.mxu0 0.0
  %3013 = vmatpush1.msra.mxu0 0.0
  %3014 = vmatprep.subr.mxu0 0.0
  %3015 = vmatpush1.msra.mxu0 0.0
  %3016 = vmatprep.subr.mxu0 0.0
  %3017 = vmatpush1.msra.mxu0 0.0
  %3018 = vmatprep.subr.mxu0 0.0
  %3019 = vmatpush1.msra.mxu0 0.0
  %3020 = vmatprep.subr.mxu0 0.0
  %3021 = vmatpush1.msra.mxu0 0.0
  %3022 = vmatprep.subr.mxu0 0.0
  %3023 = vmatpush1.msra.mxu0 %v2993
  %3024 = vmatprep.subr.mxu0 0.0
  %3025 = vmatpush1.msra.mxu0 %v2992
  %3026 = vmatprep.subr.mxu0 0.0
  %3027 = vmatpush2.msra.mxu0 0.0
  %3028 = vmatprep.subr.mxu0 0.0
  %3029 = vmatpush2.msra.mxu0 0.0
  %3030 = vmatprep.subr.mxu0 0.0
  %3031 = vmatpush2.msra.mxu0 0.0
  %3032 = vmatprep.subr.mxu0 0.0
  %3033 = vmatpush2.msra.mxu0 0.0
  %3034 = vmatprep.subr.mxu0 0.0
  %3035 = vmatpush2.msra.mxu0 0.0
  %3036 = vmatprep.subr.mxu0 0.0
  %3037 = vmatpush2.msra.mxu0 0.0
  %3038 = vmatprep.subr.mxu0 0.0
  %3039 = vmatpush2.msra.mxu0 0.0
  %3040 = vmatprep.subr.mxu0 0.0
  %3041 = vmatpush2.msra.mxu0 0.0
  %3042 = vmatprep.subr.mxu0 0.0
  %3043 = vmatpush2.msra.mxu0 0.0
  %3044 = vmatprep.subr.mxu0 0.0
  %3045 = vmatpush2.msra.mxu0 0.0
  %3046 = vmatprep.subr.mxu0 0.0
  %3047 = vmatpush2.msra.mxu0 0.0
  %3048 = vmatprep.subr.mxu0 0.0
  %3049 = vmatpush2.msra.mxu0 0.0
  %3050 = vmatprep.subr.mxu0 0.0
  %3051 = vmatpush2.msra.mxu0 0.0
  %3052 = vmatprep.subr.mxu0 0.0
  %3053 = vmatpush2.msra.mxu0 0.0
  %3054 = vmatprep.subr.mxu0 0.0
  %3055 = vmatpush2.msra.mxu0 0.0
  %3056 = vmatprep.subr.mxu0 0.0
  %3057 = vmatpush2.msra.mxu0 0.0
  %3058 = vmatprep.mubr.f32.mxu0 0.0
  %3059 = vmatmul.mubr.f32.gmra.mxu0 %v231
  %v3060 = vpop.f32.mrf.mxu0
  %v3061 = vadd.f32 0.0, %v3060
  %v3062 = vpop.f32.mrf.mxu0
  %3063 = vmatprep.mubr.f32.mxu0 0.0
  %3064 = vmatmul.mubr.f32.gmra.mxu0 %v234
  %v3065 = vpop.f32.mrf.mxu0
  %v3066 = vadd.f32 0.0, %v3065
  %v3067 = vpop.f32.mrf.mxu0
  %3068 = vmatprep.mubr.f32.mxu0 0.0
  %3069 = vmatmul.mubr.f32.gmra.mxu0 %v237
  %v3070 = vpop.f32.mrf.mxu0
  %v3071 = vadd.f32 0.0, %v3070
  %v3072 = vpop.f32.mrf.mxu0
  %3073 = vmatprep.mubr.f32.mxu0 0.0
  %3074 = vmatmul.mubr.f32.gmra.mxu0 %v240
  %v3075 = vpop.f32.mrf.mxu0
  %v3076 = vadd.f32 0.0, %v3075
  %v3077 = vpop.f32.mrf.mxu0
  %3078 = vdwg.mxu0
  %v3080 = vsel %vm176, %v3061, 0
  %v3083 = vsel %vm176, %v3066, 0
  %v3086 = vsel %vm176, %v3071, 0
  %v3089 = vsel %vm176, %v3076, 0
  %3091 = vmatprep.subr.mxu0 0.0
  %3092 = vmatpush1.msra.mxu0 0.0
  %3093 = vmatprep.subr.mxu0 0.0
  %3094 = vmatpush1.msra.mxu0 0.0
  %3095 = vmatprep.subr.mxu0 0.0
  %3096 = vmatpush1.msra.mxu0 0.0
  %3097 = vmatprep.subr.mxu0 0.0
  %3098 = vmatpush1.msra.mxu0 0.0
  %3099 = vmatprep.subr.mxu0 0.0
  %3100 = vmatpush1.msra.mxu0 0.0
  %3101 = vmatprep.subr.mxu0 0.0
  %3102 = vmatpush1.msra.mxu0 0.0
  %3103 = vmatprep.subr.mxu0 0.0
  %3104 = vmatpush1.msra.mxu0 0.0
  %3105 = vmatprep.subr.mxu0 0.0
  %3106 = vmatpush1.msra.mxu0 0.0
  %3107 = vmatprep.subr.mxu0 0.0
  %3108 = vmatpush1.msra.mxu0 0.0
  %3109 = vmatprep.subr.mxu0 0.0
  %3110 = vmatpush1.msra.mxu0 0.0
  %3111 = vmatprep.subr.mxu0 0.0
  %3112 = vmatpush1.msra.mxu0 0.0
  %3113 = vmatprep.subr.mxu0 0.0
  %3114 = vmatpush1.msra.mxu0 0.0
  %3115 = vmatprep.subr.mxu0 0.0
  %3116 = vmatpush1.msra.mxu0 0.0
  %3117 = vmatprep.subr.mxu0 0.0
  %3118 = vmatpush1.msra.mxu0 0.0
  %3119 = vmatprep.subr.mxu0 0.0
  %3120 = vmatpush1.msra.mxu0 %v128
  %3121 = vmatprep.subr.mxu0 0.0
  %3122 = vmatpush1.msra.mxu0 %v127
  %3123 = vmatprep.subr.mxu0 0.0
  %3124 = vmatpush2.msra.mxu0 0.0
  %3125 = vmatprep.subr.mxu0 0.0
  %3126 = vmatpush2.msra.mxu0 0.0
  %3127 = vmatprep.subr.mxu0 0.0
  %3128 = vmatpush2.msra.mxu0 0.0
  %3129 = vmatprep.subr.mxu0 0.0
  %3130 = vmatpush2.msra.mxu0 0.0
  %3131 = vmatprep.subr.mxu0 0.0
  %3132 = vmatpush2.msra.mxu0 0.0
  %3133 = vmatprep.subr.mxu0 0.0
  %3134 = vmatpush2.msra.mxu0 0.0
  %3135 = vmatprep.subr.mxu0 0.0
  %3136 = vmatpush2.msra.mxu0 0.0
  %3137 = vmatprep.subr.mxu0 0.0
  %3138 = vmatpush2.msra.mxu0 0.0
  %3139 = vmatprep.subr.mxu0 0.0
  %3140 = vmatpush2.msra.mxu0 0.0
  %3141 = vmatprep.subr.mxu0 0.0
  %3142 = vmatpush2.msra.mxu0 0.0
  %3143 = vmatprep.subr.mxu0 0.0
  %3144 = vmatpush2.msra.mxu0 0.0
  %3145 = vmatprep.subr.mxu0 0.0
  %3146 = vmatpush2.msra.mxu0 0.0
  %3147 = vmatprep.subr.mxu0 0.0
  %3148 = vmatpush2.msra.mxu0 0.0
  %3149 = vmatprep.subr.mxu0 0.0
  %3150 = vmatpush2.msra.mxu0 0.0
  %3151 = vmatprep.subr.mxu0 0.0
  %3152 = vmatpush2.msra.mxu0 0.0
  %3153 = vmatprep.subr.mxu0 0.0
  %3154 = vmatpush2.msra.mxu0 0.0
  %3155 = vmatprep.mubr.f32.mxu0 0.0
  %3156 = vmatmul.mubr.f32.gmra.mxu0 %v3080
  %v3157 = vpop.f32.mrf.mxu0
  %v3158 = vadd.f32 0.0, %v3157
  %v3159 = vpop.f32.mrf.mxu0
  %3160 = vmatprep.mubr.f32.mxu0 0.0
  %3161 = vmatmul.mubr.f32.gmra.mxu0 %v3083
  %v3162 = vpop.f32.mrf.mxu0
  %v3163 = vadd.f32 0.0, %v3162
  %v3164 = vpop.f32.mrf.mxu0
  %3165 = vmatprep.mubr.f32.mxu0 0.0
  %3166 = vmatmul.mubr.f32.gmra.mxu0 %v3086
  %v3167 = vpop.f32.mrf.mxu0
  %v3168 = vadd.f32 0.0, %v3167
  %v3169 = vpop.f32.mrf.mxu0
  %3170 = vmatprep.mubr.f32.mxu0 0.0
  %3171 = vmatmul.mubr.f32.gmra.mxu0 %v3089
  %v3172 = vpop.f32.mrf.mxu0
  %v3173 = vadd.f32 0.0, %v3172
  %v3174 = vpop.f32.mrf.mxu0
  %3175 = vdwg.mxu0
  %v3176 = vmul.f32 %v3158, %v156
  %v3177 = vmul.f32 %v3163, %v157
  %v3178 = vmul.f32 %v3168, %v158
  %v3179 = vmul.f32 %v3173, %v159
  %v3181 = vsel %vm550, %v2925, 0
  %v3184 = vsel %vm550, %v2926, 0
  %v3187 = vsel %vm550, %v2927, 0
  %v3190 = vsel %vm550, %v2928, 0
  %3192 = vmatprep.subr.mxu0 0.0
  %3193 = vmatpush1.msra.mxu0 0.0
  %3194 = vmatprep.subr.mxu0 0.0
  %3195 = vmatpush1.msra.mxu0 0.0
  %3196 = vmatprep.subr.mxu0 0.0
  %3197 = vmatpush1.msra.mxu0 0.0
  %3198 = vmatprep.subr.mxu0 0.0
  %3199 = vmatpush1.msra.mxu0 0.0
  %3200 = vmatprep.subr.mxu0 0.0
  %3201 = vmatpush1.msra.mxu0 0.0
  %3202 = vmatprep.subr.mxu0 0.0
  %3203 = vmatpush1.msra.mxu0 0.0
  %3204 = vmatprep.subr.mxu0 0.0
  %3205 = vmatpush1.msra.mxu0 0.0
  %3206 = vmatprep.subr.mxu0 0.0
  %3207 = vmatpush1.msra.mxu0 0.0
  %3208 = vmatprep.subr.mxu0 0.0
  %3209 = vmatpush1.msra.mxu0 0.0
  %3210 = vmatprep.subr.mxu0 0.0
  %3211 = vmatpush1.msra.mxu0 0.0
  %3212 = vmatprep.subr.mxu0 0.0
  %3213 = vmatpush1.msra.mxu0 0.0
  %3214 = vmatprep.subr.mxu0 0.0
  %3215 = vmatpush1.msra.mxu0 0.0
  %3216 = vmatprep.subr.mxu0 0.0
  %3217 = vmatpush1.msra.mxu0 %v2933
  %3218 = vmatprep.subr.mxu0 0.0
  %3219 = vmatpush1.msra.mxu0 %v2932
  %3220 = vmatprep.subr.mxu0 0.0
  %3221 = vmatpush1.msra.mxu0 %v2931
  %3222 = vmatprep.subr.mxu0 0.0
  %3223 = vmatpush1.msra.mxu0 %v2930
  %3224 = vmatprep.subr.mxu0 0.0
  %3225 = vmatpush2.msra.mxu0 0.0
  %3226 = vmatprep.subr.mxu0 0.0
  %3227 = vmatpush2.msra.mxu0 0.0
  %3228 = vmatprep.subr.mxu0 0.0
  %3229 = vmatpush2.msra.mxu0 0.0
  %3230 = vmatprep.subr.mxu0 0.0
  %3231 = vmatpush2.msra.mxu0 0.0
  %3232 = vmatprep.subr.mxu0 0.0
  %3233 = vmatpush2.msra.mxu0 0.0
  %3234 = vmatprep.subr.mxu0 0.0
  %3235 = vmatpush2.msra.mxu0 0.0
  %3236 = vmatprep.subr.mxu0 0.0
  %3237 = vmatpush2.msra.mxu0 0.0
  %3238 = vmatprep.subr.mxu0 0.0
  %3239 = vmatpush2.msra.mxu0 0.0
  %3240 = vmatprep.subr.mxu0 0.0
  %3241 = vmatpush2.msra.mxu0 0.0
  %3242 = vmatprep.subr.mxu0 0.0
  %3243 = vmatpush2.msra.mxu0 0.0
  %3244 = vmatprep.subr.mxu0 0.0
  %3245 = vmatpush2.msra.mxu0 0.0
  %3246 = vmatprep.subr.mxu0 0.0
  %3247 = vmatpush2.msra.mxu0 0.0
  %3248 = vmatprep.subr.mxu0 0.0
  %3249 = vmatpush2.msra.mxu0 0.0
  %3250 = vmatprep.subr.mxu0 0.0
  %3251 = vmatpush2.msra.mxu0 0.0
  %3252 = vmatprep.subr.mxu0 0.0
  %3253 = vmatpush2.msra.mxu0 0.0
  %3254 = vmatprep.subr.mxu0 0.0
  %3255 = vmatpush2.msra.mxu0 0.0
  %3256 = vmatprep.mubr.f32.mxu0 0.0
  %3257 = vmatmul.mubr.f32.gmra.mxu0 %v3181
  %v3258 = vpop.f32.mrf.mxu0
  %v3259 = vadd.f32 0.0, %v3258
  %v3260 = vpop.f32.mrf.mxu0
  %3261 = vmatprep.mubr.f32.mxu0 0.0
  %3262 = vmatmul.mubr.f32.gmra.mxu0 %v3184
  %v3263 = vpop.f32.mrf.mxu0
  %v3264 = vadd.f32 0.0, %v3263
  %v3265 = vpop.f32.mrf.mxu0
  %3266 = vmatprep.mubr.f32.mxu0 0.0
  %3267 = vmatmul.mubr.f32.gmra.mxu0 %v3187
  %v3268 = vpop.f32.mrf.mxu0
  %v3269 = vadd.f32 0.0, %v3268
  %v3270 = vpop.f32.mrf.mxu0
  %3271 = vmatprep.mubr.f32.mxu0 0.0
  %3272 = vmatmul.mubr.f32.gmra.mxu0 %v3190
  %v3273 = vpop.f32.mrf.mxu0
  %v3274 = vadd.f32 0.0, %v3273
  %v3275 = vpop.f32.mrf.mxu0
  %3276 = vdwg.mxu0
  %v3277 = vmul.f32 %v2982, %v3259
  %v3278 = vmul.f32 %v2985, %v3264
  %v3279 = vmul.f32 %v2988, %v3269
  %v3280 = vmul.f32 %v2991, %v3274
  %3285 = vrot.lane.b32.xlu0 %v3259, 96
  %v3286 = vpop.permute.xlu0 %3285
  %3287 = vrot.lane.b32.xlu0 %v3264, 96
  %v3288 = vpop.permute.xlu0 %3287
  %3289 = vrot.lane.b32.xlu0 %v3269, 96
  %v3290 = vpop.permute.xlu0 %3289
  %3291 = vrot.lane.b32.xlu0 %v3274, 96
  %v3292 = vpop.permute.xlu0 %3291
  %v3298 = vsel %vm550, %v3176, 0
  %v3301 = vsel %vm550, %v3177, 0
  %v3304 = vsel %vm550, %v3178, 0
  %v3307 = vsel %vm550, %v3179, 0
  %3309 = vmatprep.subr.mxu0 0.0
  %3310 = vmatpush1.msra.mxu0 0.0
  %3311 = vmatprep.subr.mxu0 0.0
  %3312 = vmatpush1.msra.mxu0 0.0
  %3313 = vmatprep.subr.mxu0 0.0
  %3314 = vmatpush1.msra.mxu0 0.0
  %3315 = vmatprep.subr.mxu0 0.0
  %3316 = vmatpush1.msra.mxu0 0.0
  %3317 = vmatprep.subr.mxu0 0.0
  %3318 = vmatpush1.msra.mxu0 0.0
  %3319 = vmatprep.subr.mxu0 0.0
  %3320 = vmatpush1.msra.mxu0 0.0
  %3321 = vmatprep.subr.mxu0 0.0
  %3322 = vmatpush1.msra.mxu0 0.0
  %3323 = vmatprep.subr.mxu0 0.0
  %3324 = vmatpush1.msra.mxu0 0.0
  %3325 = vmatprep.subr.mxu0 0.0
  %3326 = vmatpush1.msra.mxu0 0.0
  %3327 = vmatprep.subr.mxu0 0.0
  %3328 = vmatpush1.msra.mxu0 0.0
  %3329 = vmatprep.subr.mxu0 0.0
  %3330 = vmatpush1.msra.mxu0 0.0
  %3331 = vmatprep.subr.mxu0 0.0
  %3332 = vmatpush1.msra.mxu0 0.0
  %3333 = vmatprep.subr.mxu0 0.0
  %3334 = vmatpush1.msra.mxu0 %v3292
  %3335 = vmatprep.subr.mxu0 0.0
  %3336 = vmatpush1.msra.mxu0 %v3290
  %3337 = vmatprep.subr.mxu0 0.0
  %3338 = vmatpush1.msra.mxu0 %v3288
  %3339 = vmatprep.subr.mxu0 0.0
  %3340 = vmatpush1.msra.mxu0 %v3286
  %3341 = vmatprep.subr.mxu0 0.0
  %3342 = vmatpush2.msra.mxu0 0.0
  %3343 = vmatprep.subr.mxu0 0.0
  %3344 = vmatpush2.msra.mxu0 0.0
  %3345 = vmatprep.subr.mxu0 0.0
  %3346 = vmatpush2.msra.mxu0 0.0
  %3347 = vmatprep.subr.mxu0 0.0
  %3348 = vmatpush2.msra.mxu0 0.0
  %3349 = vmatprep.subr.mxu0 0.0
  %3350 = vmatpush2.msra.mxu0 0.0
  %3351 = vmatprep.subr.mxu0 0.0
  %3352 = vmatpush2.msra.mxu0 0.0
  %3353 = vmatprep.subr.mxu0 0.0
  %3354 = vmatpush2.msra.mxu0 0.0
  %3355 = vmatprep.subr.mxu0 0.0
  %3356 = vmatpush2.msra.mxu0 0.0
  %3357 = vmatprep.subr.mxu0 0.0
  %3358 = vmatpush2.msra.mxu0 0.0
  %3359 = vmatprep.subr.mxu0 0.0
  %3360 = vmatpush2.msra.mxu0 0.0
  %3361 = vmatprep.subr.mxu0 0.0
  %3362 = vmatpush2.msra.mxu0 0.0
  %3363 = vmatprep.subr.mxu0 0.0
  %3364 = vmatpush2.msra.mxu0 0.0
  %3365 = vmatprep.subr.mxu0 0.0
  %3366 = vmatpush2.msra.mxu0 0.0
  %3367 = vmatprep.subr.mxu0 0.0
  %3368 = vmatpush2.msra.mxu0 0.0
  %3369 = vmatprep.subr.mxu0 0.0
  %3370 = vmatpush2.msra.mxu0 0.0
  %3371 = vmatprep.subr.mxu0 0.0
  %3372 = vmatpush2.msra.mxu0 0.0
  %3373 = vmatprep.mubr.f32.mxu0 0.0
  %3374 = vmatmul.mubr.f32.gmra.mxu0 %v3298
  %v3375 = vpop.f32.mrf.mxu0
  %v3376 = vadd.f32 0.0, %v3375
  %v3377 = vpop.f32.mrf.mxu0
  %3378 = vmatprep.mubr.f32.mxu0 0.0
  %3379 = vmatmul.mubr.f32.gmra.mxu0 %v3301
  %v3380 = vpop.f32.mrf.mxu0
  %v3381 = vadd.f32 0.0, %v3380
  %v3382 = vpop.f32.mrf.mxu0
  %3383 = vmatprep.mubr.f32.mxu0 0.0
  %3384 = vmatmul.mubr.f32.gmra.mxu0 %v3304
  %v3385 = vpop.f32.mrf.mxu0
  %v3386 = vadd.f32 0.0, %v3385
  %v3387 = vpop.f32.mrf.mxu0
  %3388 = vmatprep.mubr.f32.mxu0 0.0
  %3389 = vmatmul.mubr.f32.gmra.mxu0 %v3307
  %v3390 = vpop.f32.mrf.mxu0
  %v3391 = vadd.f32 0.0, %v3390
  %v3392 = vpop.f32.mrf.mxu0
  %3393 = vdwg.mxu0
  %v3394 = vadd.f32 %v3277, %v3376
  %v3395 = vadd.f32 %v3278, %v3381
  %v3396 = vadd.f32 %v3279, %v3386
  %v3397 = vadd.f32 %v3280, %v3391
  %v3399 = vlaneseq
  %v3400 = vshrl.u32 %v3399, 7
  %v3401 = vsub.s32 0, %v3400
  %v3402 = vrot.slane %v2935, %v3401
  %v3404 = vadd.f32 %v3394, %v3402
  %v3405 = vadd.f32 %v3395, %v3402
  %v3406 = vadd.f32 %v3396, %v3402
  %v3407 = vadd.f32 %v3397, %v3402
  %s3408 = scalar_lea.vmem %s10, 4
  %v3409 = vld [vmem:[%s3408] sm:$0x1]
  %s3410 = scalar_lea.vmem %s11, 4
  %v3411 = vld [vmem:[%s3410] sm:$0x1]
  %v3412 = vsel %vm550, %v3404, 0.0
  %v3413 = vsel %vm550, %v3405, 0.0
  %v3414 = vadd.f32 %v3412, %v3413
  %v3415 = vsel %vm550, %v3406, 0.0
  %v3416 = vadd.f32 %v3414, %v3415
  %v3417 = vsel %vm550, %v3407, 0.0
  %v3418 = vadd.f32 %v3416, %v3417
  %v3419 = vrot.slane %v3418, 4
  %v3420 = vadd.f32 %v3418, %v3419
  %v3421 = vrot.slane %v3420, 2
  %v3422 = vadd.f32 %v3420, %v3421
  %v3423 = vrot.slane %v3422, 1
  %v3424 = vadd.f32 %v3422, %v3423
  %v3425 = vmul.f32 %v3424, 0.03125
  %v3426 = vsub.f32 %v3404, %v3425
  %v3427 = vsub.f32 %v3405, %v3425
  %v3428 = vsub.f32 %v3406, %v3425
  %v3429 = vsub.f32 %v3407, %v3425
  %v3430 = vmul.f32 %v3426, %v3426
  %v3431 = vmul.f32 %v3427, %v3427
  %v3432 = vmul.f32 %v3428, %v3428
  %v3433 = vmul.f32 %v3429, %v3429
  %v3434 = vsel %vm550, %v3430, 0.0
  %v3435 = vsel %vm550, %v3431, 0.0
  %v3436 = vadd.f32 %v3434, %v3435
  %v3437 = vsel %vm550, %v3432, 0.0
  %v3438 = vadd.f32 %v3436, %v3437
  %v3439 = vsel %vm550, %v3433, 0.0
  %v3440 = vadd.f32 %v3438, %v3439
  %v3441 = vrot.slane %v3440, 4
  %v3442 = vadd.f32 %v3440, %v3441
  %v3443 = vrot.slane %v3442, 2
  %v3444 = vadd.f32 %v3442, %v3443
  %v3445 = vrot.slane %v3444, 1
  %v3446 = vadd.f32 %v3444, %v3445
  %v3447 = vmul.f32 %v3446, 0.03125
  %v3448 = vadd.f32 %v3447, 1e-05
  %v3449 = vrsqrt.pop %v3448
  %v3450 = vmul.f32 %v3426, %v3449
  %v3451 = vmul.f32 %v3427, %v3449
  %v3452 = vmul.f32 %v3428, %v3449
  %v3453 = vmul.f32 %v3429, %v3449
  %v3455 = vlaneseq
  %v3456 = vshrl.u32 %v3455, 7
  %v3457 = vsub.s32 0, %v3456
  %v3458 = vrot.slane %v3409, %v3457
  %v3460 = vmul.f32 %v3450, %v3458
  %v3461 = vmul.f32 %v3451, %v3458
  %v3462 = vmul.f32 %v3452, %v3458
  %v3463 = vmul.f32 %v3453, %v3458
  %v3465 = vlaneseq
  %v3466 = vshrl.u32 %v3465, 7
  %v3467 = vsub.s32 0, %v3466
  %v3468 = vrot.slane %v3411, %v3467
  %v3470 = vadd.f32 %v3460, %v3468
  %v3471 = vadd.f32 %v3461, %v3468
  %v3472 = vadd.f32 %v3462, %v3468
  %v3473 = vadd.f32 %v3463, %v3468
  %v3474 = vmax.f32 %v3470, 0.0
  %v3475 = vmax.f32 %v3471, 0.0
  %v3476 = vmax.f32 %v3472, 0.0
  %v3477 = vmax.f32 %v3473, 0.0
  %s3478 = scalar_lea.vmem %s7, 160
  %v3479 = vld [vmem:[%s3478] sm:$0xff]
  %v3480 = vld [vmem:[%s3478 + $0x8] sm:$0xff]
  %v3481 = vld [vmem:[%s3478 + $0x10] sm:$0xff]
  %v3482 = vld [vmem:[%s3478 + $0x18] sm:$0xff]
  %s3483 = scalar_lea.vmem %s8, 5
  %v3484 = vld [vmem:[%s3483] sm:$0x1]
  %s3485 = scalar_lea.vmem %s9, 80
  %v3486 = vld [vmem:[%s3485] sm:$0xff]
  %v3487 = vld [vmem:[%s3485 + $0x8] sm:$0xff]
  %v3488 = vmul.f32 %v50, %v3486
  %v3489 = vmul.f32 %v51, %v3487
  %v3490 = vadd.f32 %v3488, %v162
  %v3491 = vadd.f32 %v3489, %v163
  %v3492 = vsel %vm176, %v3490, -inf
  %3493 = vmax.xlane.f32.xlu0 %v3492
  %v3494 = vpop.xlane.xlu0 %3493
  %v3495 = vsel %vm176, %v3491, -inf
  %3496 = vmax.xlane.f32.xlu0 %v3495
  %v3497 = vpop.xlane.xlu0 %3496
  %v3498 = vsub.f32 %v3490, %v3494
  %v3499 = vsub.f32 %v3491, %v3497
  %v3500 = vmul.f32 %v3498, 1.442695
  %v3501 = vpow.pop %v3500
  %v3502 = vmul.f32 %v3499, 1.442695
  %v3503 = vpow.pop %v3502
  %v3504 = vsel %vm176, %v3501, 0.0
  %3505 = vadd.xlane.f32.xlu0 %v3504
  %v3506 = vpop.xlane.xlu0 %3505
  %v3507 = vsel %vm176, %v3503, 0.0
  %3508 = vadd.xlane.f32.xlu0 %v3507
  %v3509 = vpop.xlane.xlu0 %3508
  %v3510 = vrcp.pop %v3506
  %v3511 = vmul.f32 %v3501, %v3510
  %v3512 = vrcp.pop %v3509
  %v3513 = vmul.f32 %v3503, %v3512
  %v3514 = vmul.f32 %v3511, %v61
  %v3515 = vmul.f32 %v3513, %v62
  %v3516 = vsel %vm176, %v3514, 0.0
  %v3517 = vsel %vm176, %v3515, 0.0
  %v3518 = vadd.f32 %v3516, %v3517
  %v3519 = vrot.slane %v3518, 4
  %v3520 = vadd.f32 %v3518, %v3519
  %v3521 = vrot.slane %v3520, 2
  %v3522 = vadd.f32 %v3520, %v3521
  %v3523 = vrot.slane %v3522, 1
  %v3524 = vadd.f32 %v3522, %v3523
  %v3525 = vmul.f32 %v119, %v3524
  %v3526 = vmul.f32 %v120, %v3524
  %v3527 = vmul.f32 %v121, %v3524
  %v3528 = vmul.f32 %v122, %v3524
  %v3529 = vsel %vm176, %v3525, 0.0
  %3530 = vadd.xlane.f32.xlu0 %v3529
  %v3531 = vpop.xlane.xlu0 %3530
  %v3532 = vsel %vm176, %v3526, 0.0
  %3533 = vadd.xlane.f32.xlu0 %v3532
  %v3534 = vpop.xlane.xlu0 %3533
  %v3535 = vsel %vm176, %v3527, 0.0
  %3536 = vadd.xlane.f32.xlu0 %v3535
  %v3537 = vpop.xlane.xlu0 %3536
  %v3538 = vsel %vm176, %v3528, 0.0
  %3539 = vadd.xlane.f32.xlu0 %v3538
  %v3540 = vpop.xlane.xlu0 %3539
  %v3541 = vmul.f32 %v3511, %v226
  %v3542 = vmul.f32 %v3513, %v227
  %3543 = vmatprep.subr.mxu0 0.0
  %3544 = vmatpush1.msra.mxu0 0.0
  %3545 = vmatprep.subr.mxu0 0.0
  %3546 = vmatpush1.msra.mxu0 0.0
  %3547 = vmatprep.subr.mxu0 0.0
  %3548 = vmatpush1.msra.mxu0 0.0
  %3549 = vmatprep.subr.mxu0 0.0
  %3550 = vmatpush1.msra.mxu0 0.0
  %3551 = vmatprep.subr.mxu0 0.0
  %3552 = vmatpush1.msra.mxu0 0.0
  %3553 = vmatprep.subr.mxu0 0.0
  %3554 = vmatpush1.msra.mxu0 0.0
  %3555 = vmatprep.subr.mxu0 0.0
  %3556 = vmatpush1.msra.mxu0 0.0
  %3557 = vmatprep.subr.mxu0 0.0
  %3558 = vmatpush1.msra.mxu0 0.0
  %3559 = vmatprep.subr.mxu0 0.0
  %3560 = vmatpush1.msra.mxu0 0.0
  %3561 = vmatprep.subr.mxu0 0.0
  %3562 = vmatpush1.msra.mxu0 0.0
  %3563 = vmatprep.subr.mxu0 0.0
  %3564 = vmatpush1.msra.mxu0 0.0
  %3565 = vmatprep.subr.mxu0 0.0
  %3566 = vmatpush1.msra.mxu0 0.0
  %3567 = vmatprep.subr.mxu0 0.0
  %3568 = vmatpush1.msra.mxu0 0.0
  %3569 = vmatprep.subr.mxu0 0.0
  %3570 = vmatpush1.msra.mxu0 0.0
  %3571 = vmatprep.subr.mxu0 0.0
  %3572 = vmatpush1.msra.mxu0 %v3542
  %3573 = vmatprep.subr.mxu0 0.0
  %3574 = vmatpush1.msra.mxu0 %v3541
  %3575 = vmatprep.subr.mxu0 0.0
  %3576 = vmatpush2.msra.mxu0 0.0
  %3577 = vmatprep.subr.mxu0 0.0
  %3578 = vmatpush2.msra.mxu0 0.0
  %3579 = vmatprep.subr.mxu0 0.0
  %3580 = vmatpush2.msra.mxu0 0.0
  %3581 = vmatprep.subr.mxu0 0.0
  %3582 = vmatpush2.msra.mxu0 0.0
  %3583 = vmatprep.subr.mxu0 0.0
  %3584 = vmatpush2.msra.mxu0 0.0
  %3585 = vmatprep.subr.mxu0 0.0
  %3586 = vmatpush2.msra.mxu0 0.0
  %3587 = vmatprep.subr.mxu0 0.0
  %3588 = vmatpush2.msra.mxu0 0.0
  %3589 = vmatprep.subr.mxu0 0.0
  %3590 = vmatpush2.msra.mxu0 0.0
  %3591 = vmatprep.subr.mxu0 0.0
  %3592 = vmatpush2.msra.mxu0 0.0
  %3593 = vmatprep.subr.mxu0 0.0
  %3594 = vmatpush2.msra.mxu0 0.0
  %3595 = vmatprep.subr.mxu0 0.0
  %3596 = vmatpush2.msra.mxu0 0.0
  %3597 = vmatprep.subr.mxu0 0.0
  %3598 = vmatpush2.msra.mxu0 0.0
  %3599 = vmatprep.subr.mxu0 0.0
  %3600 = vmatpush2.msra.mxu0 0.0
  %3601 = vmatprep.subr.mxu0 0.0
  %3602 = vmatpush2.msra.mxu0 0.0
  %3603 = vmatprep.subr.mxu0 0.0
  %3604 = vmatpush2.msra.mxu0 0.0
  %3605 = vmatprep.subr.mxu0 0.0
  %3606 = vmatpush2.msra.mxu0 0.0
  %3607 = vmatprep.mubr.f32.mxu0 0.0
  %3608 = vmatmul.mubr.f32.gmra.mxu0 %v231
  %v3609 = vpop.f32.mrf.mxu0
  %v3610 = vadd.f32 0.0, %v3609
  %v3611 = vpop.f32.mrf.mxu0
  %3612 = vmatprep.mubr.f32.mxu0 0.0
  %3613 = vmatmul.mubr.f32.gmra.mxu0 %v234
  %v3614 = vpop.f32.mrf.mxu0
  %v3615 = vadd.f32 0.0, %v3614
  %v3616 = vpop.f32.mrf.mxu0
  %3617 = vmatprep.mubr.f32.mxu0 0.0
  %3618 = vmatmul.mubr.f32.gmra.mxu0 %v237
  %v3619 = vpop.f32.mrf.mxu0
  %v3620 = vadd.f32 0.0, %v3619
  %v3621 = vpop.f32.mrf.mxu0
  %3622 = vmatprep.mubr.f32.mxu0 0.0
  %3623 = vmatmul.mubr.f32.gmra.mxu0 %v240
  %v3624 = vpop.f32.mrf.mxu0
  %v3625 = vadd.f32 0.0, %v3624
  %v3626 = vpop.f32.mrf.mxu0
  %3627 = vdwg.mxu0
  %v3629 = vsel %vm176, %v3610, 0
  %v3632 = vsel %vm176, %v3615, 0
  %v3635 = vsel %vm176, %v3620, 0
  %v3638 = vsel %vm176, %v3625, 0
  %3640 = vmatprep.subr.mxu0 0.0
  %3641 = vmatpush1.msra.mxu0 0.0
  %3642 = vmatprep.subr.mxu0 0.0
  %3643 = vmatpush1.msra.mxu0 0.0
  %3644 = vmatprep.subr.mxu0 0.0
  %3645 = vmatpush1.msra.mxu0 0.0
  %3646 = vmatprep.subr.mxu0 0.0
  %3647 = vmatpush1.msra.mxu0 0.0
  %3648 = vmatprep.subr.mxu0 0.0
  %3649 = vmatpush1.msra.mxu0 0.0
  %3650 = vmatprep.subr.mxu0 0.0
  %3651 = vmatpush1.msra.mxu0 0.0
  %3652 = vmatprep.subr.mxu0 0.0
  %3653 = vmatpush1.msra.mxu0 0.0
  %3654 = vmatprep.subr.mxu0 0.0
  %3655 = vmatpush1.msra.mxu0 0.0
  %3656 = vmatprep.subr.mxu0 0.0
  %3657 = vmatpush1.msra.mxu0 0.0
  %3658 = vmatprep.subr.mxu0 0.0
  %3659 = vmatpush1.msra.mxu0 0.0
  %3660 = vmatprep.subr.mxu0 0.0
  %3661 = vmatpush1.msra.mxu0 0.0
  %3662 = vmatprep.subr.mxu0 0.0
  %3663 = vmatpush1.msra.mxu0 0.0
  %3664 = vmatprep.subr.mxu0 0.0
  %3665 = vmatpush1.msra.mxu0 0.0
  %3666 = vmatprep.subr.mxu0 0.0
  %3667 = vmatpush1.msra.mxu0 0.0
  %3668 = vmatprep.subr.mxu0 0.0
  %3669 = vmatpush1.msra.mxu0 %v128
  %3670 = vmatprep.subr.mxu0 0.0
  %3671 = vmatpush1.msra.mxu0 %v127
  %3672 = vmatprep.subr.mxu0 0.0
  %3673 = vmatpush2.msra.mxu0 0.0
  %3674 = vmatprep.subr.mxu0 0.0
  %3675 = vmatpush2.msra.mxu0 0.0
  %3676 = vmatprep.subr.mxu0 0.0
  %3677 = vmatpush2.msra.mxu0 0.0
  %3678 = vmatprep.subr.mxu0 0.0
  %3679 = vmatpush2.msra.mxu0 0.0
  %3680 = vmatprep.subr.mxu0 0.0
  %3681 = vmatpush2.msra.mxu0 0.0
  %3682 = vmatprep.subr.mxu0 0.0
  %3683 = vmatpush2.msra.mxu0 0.0
  %3684 = vmatprep.subr.mxu0 0.0
  %3685 = vmatpush2.msra.mxu0 0.0
  %3686 = vmatprep.subr.mxu0 0.0
  %3687 = vmatpush2.msra.mxu0 0.0
  %3688 = vmatprep.subr.mxu0 0.0
  %3689 = vmatpush2.msra.mxu0 0.0
  %3690 = vmatprep.subr.mxu0 0.0
  %3691 = vmatpush2.msra.mxu0 0.0
  %3692 = vmatprep.subr.mxu0 0.0
  %3693 = vmatpush2.msra.mxu0 0.0
  %3694 = vmatprep.subr.mxu0 0.0
  %3695 = vmatpush2.msra.mxu0 0.0
  %3696 = vmatprep.subr.mxu0 0.0
  %3697 = vmatpush2.msra.mxu0 0.0
  %3698 = vmatprep.subr.mxu0 0.0
  %3699 = vmatpush2.msra.mxu0 0.0
  %3700 = vmatprep.subr.mxu0 0.0
  %3701 = vmatpush2.msra.mxu0 0.0
  %3702 = vmatprep.subr.mxu0 0.0
  %3703 = vmatpush2.msra.mxu0 0.0
  %3704 = vmatprep.mubr.f32.mxu0 0.0
  %3705 = vmatmul.mubr.f32.gmra.mxu0 %v3629
  %v3706 = vpop.f32.mrf.mxu0
  %v3707 = vadd.f32 0.0, %v3706
  %v3708 = vpop.f32.mrf.mxu0
  %3709 = vmatprep.mubr.f32.mxu0 0.0
  %3710 = vmatmul.mubr.f32.gmra.mxu0 %v3632
  %v3711 = vpop.f32.mrf.mxu0
  %v3712 = vadd.f32 0.0, %v3711
  %v3713 = vpop.f32.mrf.mxu0
  %3714 = vmatprep.mubr.f32.mxu0 0.0
  %3715 = vmatmul.mubr.f32.gmra.mxu0 %v3635
  %v3716 = vpop.f32.mrf.mxu0
  %v3717 = vadd.f32 0.0, %v3716
  %v3718 = vpop.f32.mrf.mxu0
  %3719 = vmatprep.mubr.f32.mxu0 0.0
  %3720 = vmatmul.mubr.f32.gmra.mxu0 %v3638
  %v3721 = vpop.f32.mrf.mxu0
  %v3722 = vadd.f32 0.0, %v3721
  %v3723 = vpop.f32.mrf.mxu0
  %3724 = vdwg.mxu0
  %v3725 = vmul.f32 %v3707, %v156
  %v3726 = vmul.f32 %v3712, %v157
  %v3727 = vmul.f32 %v3717, %v158
  %v3728 = vmul.f32 %v3722, %v159
  %v3730 = vsel %vm550, %v3474, 0
  %v3733 = vsel %vm550, %v3475, 0
  %v3736 = vsel %vm550, %v3476, 0
  %v3739 = vsel %vm550, %v3477, 0
  %3741 = vmatprep.subr.mxu0 0.0
  %3742 = vmatpush1.msra.mxu0 0.0
  %3743 = vmatprep.subr.mxu0 0.0
  %3744 = vmatpush1.msra.mxu0 0.0
  %3745 = vmatprep.subr.mxu0 0.0
  %3746 = vmatpush1.msra.mxu0 0.0
  %3747 = vmatprep.subr.mxu0 0.0
  %3748 = vmatpush1.msra.mxu0 0.0
  %3749 = vmatprep.subr.mxu0 0.0
  %3750 = vmatpush1.msra.mxu0 0.0
  %3751 = vmatprep.subr.mxu0 0.0
  %3752 = vmatpush1.msra.mxu0 0.0
  %3753 = vmatprep.subr.mxu0 0.0
  %3754 = vmatpush1.msra.mxu0 0.0
  %3755 = vmatprep.subr.mxu0 0.0
  %3756 = vmatpush1.msra.mxu0 0.0
  %3757 = vmatprep.subr.mxu0 0.0
  %3758 = vmatpush1.msra.mxu0 0.0
  %3759 = vmatprep.subr.mxu0 0.0
  %3760 = vmatpush1.msra.mxu0 0.0
  %3761 = vmatprep.subr.mxu0 0.0
  %3762 = vmatpush1.msra.mxu0 0.0
  %3763 = vmatprep.subr.mxu0 0.0
  %3764 = vmatpush1.msra.mxu0 0.0
  %3765 = vmatprep.subr.mxu0 0.0
  %3766 = vmatpush1.msra.mxu0 %v3482
  %3767 = vmatprep.subr.mxu0 0.0
  %3768 = vmatpush1.msra.mxu0 %v3481
  %3769 = vmatprep.subr.mxu0 0.0
  %3770 = vmatpush1.msra.mxu0 %v3480
  %3771 = vmatprep.subr.mxu0 0.0
  %3772 = vmatpush1.msra.mxu0 %v3479
  %3773 = vmatprep.subr.mxu0 0.0
  %3774 = vmatpush2.msra.mxu0 0.0
  %3775 = vmatprep.subr.mxu0 0.0
  %3776 = vmatpush2.msra.mxu0 0.0
  %3777 = vmatprep.subr.mxu0 0.0
  %3778 = vmatpush2.msra.mxu0 0.0
  %3779 = vmatprep.subr.mxu0 0.0
  %3780 = vmatpush2.msra.mxu0 0.0
  %3781 = vmatprep.subr.mxu0 0.0
  %3782 = vmatpush2.msra.mxu0 0.0
  %3783 = vmatprep.subr.mxu0 0.0
  %3784 = vmatpush2.msra.mxu0 0.0
  %3785 = vmatprep.subr.mxu0 0.0
  %3786 = vmatpush2.msra.mxu0 0.0
  %3787 = vmatprep.subr.mxu0 0.0
  %3788 = vmatpush2.msra.mxu0 0.0
  %3789 = vmatprep.subr.mxu0 0.0
  %3790 = vmatpush2.msra.mxu0 0.0
  %3791 = vmatprep.subr.mxu0 0.0
  %3792 = vmatpush2.msra.mxu0 0.0
  %3793 = vmatprep.subr.mxu0 0.0
  %3794 = vmatpush2.msra.mxu0 0.0
  %3795 = vmatprep.subr.mxu0 0.0
  %3796 = vmatpush2.msra.mxu0 0.0
  %3797 = vmatprep.subr.mxu0 0.0
  %3798 = vmatpush2.msra.mxu0 0.0
  %3799 = vmatprep.subr.mxu0 0.0
  %3800 = vmatpush2.msra.mxu0 0.0
  %3801 = vmatprep.subr.mxu0 0.0
  %3802 = vmatpush2.msra.mxu0 0.0
  %3803 = vmatprep.subr.mxu0 0.0
  %3804 = vmatpush2.msra.mxu0 0.0
  %3805 = vmatprep.mubr.f32.mxu0 0.0
  %3806 = vmatmul.mubr.f32.gmra.mxu0 %v3730
  %v3807 = vpop.f32.mrf.mxu0
  %v3808 = vadd.f32 0.0, %v3807
  %v3809 = vpop.f32.mrf.mxu0
  %3810 = vmatprep.mubr.f32.mxu0 0.0
  %3811 = vmatmul.mubr.f32.gmra.mxu0 %v3733
  %v3812 = vpop.f32.mrf.mxu0
  %v3813 = vadd.f32 0.0, %v3812
  %v3814 = vpop.f32.mrf.mxu0
  %3815 = vmatprep.mubr.f32.mxu0 0.0
  %3816 = vmatmul.mubr.f32.gmra.mxu0 %v3736
  %v3817 = vpop.f32.mrf.mxu0
  %v3818 = vadd.f32 0.0, %v3817
  %v3819 = vpop.f32.mrf.mxu0
  %3820 = vmatprep.mubr.f32.mxu0 0.0
  %3821 = vmatmul.mubr.f32.gmra.mxu0 %v3739
  %v3822 = vpop.f32.mrf.mxu0
  %v3823 = vadd.f32 0.0, %v3822
  %v3824 = vpop.f32.mrf.mxu0
  %3825 = vdwg.mxu0
  %v3826 = vmul.f32 %v3531, %v3808
  %v3827 = vmul.f32 %v3534, %v3813
  %v3828 = vmul.f32 %v3537, %v3818
  %v3829 = vmul.f32 %v3540, %v3823
  %3834 = vrot.lane.b32.xlu0 %v3808, 96
  %v3835 = vpop.permute.xlu0 %3834
  %3836 = vrot.lane.b32.xlu0 %v3813, 96
  %v3837 = vpop.permute.xlu0 %3836
  %3838 = vrot.lane.b32.xlu0 %v3818, 96
  %v3839 = vpop.permute.xlu0 %3838
  %3840 = vrot.lane.b32.xlu0 %v3823, 96
  %v3841 = vpop.permute.xlu0 %3840
  %v3847 = vsel %vm550, %v3725, 0
  %v3850 = vsel %vm550, %v3726, 0
  %v3853 = vsel %vm550, %v3727, 0
  %v3856 = vsel %vm550, %v3728, 0
  %3858 = vmatprep.subr.mxu0 0.0
  %3859 = vmatpush1.msra.mxu0 0.0
  %3860 = vmatprep.subr.mxu0 0.0
  %3861 = vmatpush1.msra.mxu0 0.0
  %3862 = vmatprep.subr.mxu0 0.0
  %3863 = vmatpush1.msra.mxu0 0.0
  %3864 = vmatprep.subr.mxu0 0.0
  %3865 = vmatpush1.msra.mxu0 0.0
  %3866 = vmatprep.subr.mxu0 0.0
  %3867 = vmatpush1.msra.mxu0 0.0
  %3868 = vmatprep.subr.mxu0 0.0
  %3869 = vmatpush1.msra.mxu0 0.0
  %3870 = vmatprep.subr.mxu0 0.0
  %3871 = vmatpush1.msra.mxu0 0.0
  %3872 = vmatprep.subr.mxu0 0.0
  %3873 = vmatpush1.msra.mxu0 0.0
  %3874 = vmatprep.subr.mxu0 0.0
  %3875 = vmatpush1.msra.mxu0 0.0
  %3876 = vmatprep.subr.mxu0 0.0
  %3877 = vmatpush1.msra.mxu0 0.0
  %3878 = vmatprep.subr.mxu0 0.0
  %3879 = vmatpush1.msra.mxu0 0.0
  %3880 = vmatprep.subr.mxu0 0.0
  %3881 = vmatpush1.msra.mxu0 0.0
  %3882 = vmatprep.subr.mxu0 0.0
  %3883 = vmatpush1.msra.mxu0 %v3841
  %3884 = vmatprep.subr.mxu0 0.0
  %3885 = vmatpush1.msra.mxu0 %v3839
  %3886 = vmatprep.subr.mxu0 0.0
  %3887 = vmatpush1.msra.mxu0 %v3837
  %3888 = vmatprep.subr.mxu0 0.0
  %3889 = vmatpush1.msra.mxu0 %v3835
  %3890 = vmatprep.subr.mxu0 0.0
  %3891 = vmatpush2.msra.mxu0 0.0
  %3892 = vmatprep.subr.mxu0 0.0
  %3893 = vmatpush2.msra.mxu0 0.0
  %3894 = vmatprep.subr.mxu0 0.0
  %3895 = vmatpush2.msra.mxu0 0.0
  %3896 = vmatprep.subr.mxu0 0.0
  %3897 = vmatpush2.msra.mxu0 0.0
  %3898 = vmatprep.subr.mxu0 0.0
  %3899 = vmatpush2.msra.mxu0 0.0
  %3900 = vmatprep.subr.mxu0 0.0
  %3901 = vmatpush2.msra.mxu0 0.0
  %3902 = vmatprep.subr.mxu0 0.0
  %3903 = vmatpush2.msra.mxu0 0.0
  %3904 = vmatprep.subr.mxu0 0.0
  %3905 = vmatpush2.msra.mxu0 0.0
  %3906 = vmatprep.subr.mxu0 0.0
  %3907 = vmatpush2.msra.mxu0 0.0
  %3908 = vmatprep.subr.mxu0 0.0
  %3909 = vmatpush2.msra.mxu0 0.0
  %3910 = vmatprep.subr.mxu0 0.0
  %3911 = vmatpush2.msra.mxu0 0.0
  %3912 = vmatprep.subr.mxu0 0.0
  %3913 = vmatpush2.msra.mxu0 0.0
  %3914 = vmatprep.subr.mxu0 0.0
  %3915 = vmatpush2.msra.mxu0 0.0
  %3916 = vmatprep.subr.mxu0 0.0
  %3917 = vmatpush2.msra.mxu0 0.0
  %3918 = vmatprep.subr.mxu0 0.0
  %3919 = vmatpush2.msra.mxu0 0.0
  %3920 = vmatprep.subr.mxu0 0.0
  %3921 = vmatpush2.msra.mxu0 0.0
  %3922 = vmatprep.mubr.f32.mxu0 0.0
  %3923 = vmatmul.mubr.f32.gmra.mxu0 %v3847
  %v3924 = vpop.f32.mrf.mxu0
  %v3925 = vadd.f32 0.0, %v3924
  %v3926 = vpop.f32.mrf.mxu0
  %3927 = vmatprep.mubr.f32.mxu0 0.0
  %3928 = vmatmul.mubr.f32.gmra.mxu0 %v3850
  %v3929 = vpop.f32.mrf.mxu0
  %v3930 = vadd.f32 0.0, %v3929
  %v3931 = vpop.f32.mrf.mxu0
  %3932 = vmatprep.mubr.f32.mxu0 0.0
  %3933 = vmatmul.mubr.f32.gmra.mxu0 %v3853
  %v3934 = vpop.f32.mrf.mxu0
  %v3935 = vadd.f32 0.0, %v3934
  %v3936 = vpop.f32.mrf.mxu0
  %3937 = vmatprep.mubr.f32.mxu0 0.0
  %3938 = vmatmul.mubr.f32.gmra.mxu0 %v3856
  %v3939 = vpop.f32.mrf.mxu0
  %v3940 = vadd.f32 0.0, %v3939
  %v3941 = vpop.f32.mrf.mxu0
  %3942 = vdwg.mxu0
  %v3943 = vadd.f32 %v3826, %v3925
  %v3944 = vadd.f32 %v3827, %v3930
  %v3945 = vadd.f32 %v3828, %v3935
  %v3946 = vadd.f32 %v3829, %v3940
  %v3948 = vlaneseq
  %v3949 = vshrl.u32 %v3948, 7
  %v3950 = vsub.s32 0, %v3949
  %v3951 = vrot.slane %v3484, %v3950
  %v3953 = vadd.f32 %v3943, %v3951
  %v3954 = vadd.f32 %v3944, %v3951
  %v3955 = vadd.f32 %v3945, %v3951
  %v3956 = vadd.f32 %v3946, %v3951
  %s3957 = scalar_lea.vmem %s10, 5
  %v3958 = vld [vmem:[%s3957] sm:$0x1]
  %s3959 = scalar_lea.vmem %s11, 5
  %v3960 = vld [vmem:[%s3959] sm:$0x1]
  %v3961 = vsel %vm550, %v3953, 0.0
  %v3962 = vsel %vm550, %v3954, 0.0
  %v3963 = vadd.f32 %v3961, %v3962
  %v3964 = vsel %vm550, %v3955, 0.0
  %v3965 = vadd.f32 %v3963, %v3964
  %v3966 = vsel %vm550, %v3956, 0.0
  %v3967 = vadd.f32 %v3965, %v3966
  %v3968 = vrot.slane %v3967, 4
  %v3969 = vadd.f32 %v3967, %v3968
  %v3970 = vrot.slane %v3969, 2
  %v3971 = vadd.f32 %v3969, %v3970
  %v3972 = vrot.slane %v3971, 1
  %v3973 = vadd.f32 %v3971, %v3972
  %v3974 = vmul.f32 %v3973, 0.03125
  %v3975 = vsub.f32 %v3953, %v3974
  %v3976 = vsub.f32 %v3954, %v3974
  %v3977 = vsub.f32 %v3955, %v3974
  %v3978 = vsub.f32 %v3956, %v3974
  %v3979 = vmul.f32 %v3975, %v3975
  %v3980 = vmul.f32 %v3976, %v3976
  %v3981 = vmul.f32 %v3977, %v3977
  %v3982 = vmul.f32 %v3978, %v3978
  %v3983 = vsel %vm550, %v3979, 0.0
  %v3984 = vsel %vm550, %v3980, 0.0
  %v3985 = vadd.f32 %v3983, %v3984
  %v3986 = vsel %vm550, %v3981, 0.0
  %v3987 = vadd.f32 %v3985, %v3986
  %v3988 = vsel %vm550, %v3982, 0.0
  %v3989 = vadd.f32 %v3987, %v3988
  %v3990 = vrot.slane %v3989, 4
  %v3991 = vadd.f32 %v3989, %v3990
  %v3992 = vrot.slane %v3991, 2
  %v3993 = vadd.f32 %v3991, %v3992
  %v3994 = vrot.slane %v3993, 1
  %v3995 = vadd.f32 %v3993, %v3994
  %v3996 = vmul.f32 %v3995, 0.03125
  %v3997 = vadd.f32 %v3996, 1e-05
  %v3998 = vrsqrt.pop %v3997
  %v3999 = vmul.f32 %v3975, %v3998
  %v4000 = vmul.f32 %v3976, %v3998
  %v4001 = vmul.f32 %v3977, %v3998
  %v4002 = vmul.f32 %v3978, %v3998
  %v4004 = vlaneseq
  %v4005 = vshrl.u32 %v4004, 7
  %v4006 = vsub.s32 0, %v4005
  %v4007 = vrot.slane %v3958, %v4006
  %v4009 = vmul.f32 %v3999, %v4007
  %v4010 = vmul.f32 %v4000, %v4007
  %v4011 = vmul.f32 %v4001, %v4007
  %v4012 = vmul.f32 %v4002, %v4007
  %v4014 = vlaneseq
  %v4015 = vshrl.u32 %v4014, 7
  %v4016 = vsub.s32 0, %v4015
  %v4017 = vrot.slane %v3960, %v4016
  %v4019 = vadd.f32 %v4009, %v4017
  %v4020 = vadd.f32 %v4010, %v4017
  %v4021 = vadd.f32 %v4011, %v4017
  %v4022 = vadd.f32 %v4012, %v4017
  %v4023 = vmax.f32 %v4019, 0.0
  %v4024 = vmax.f32 %v4020, 0.0
  %v4025 = vmax.f32 %v4021, 0.0
  %v4026 = vmax.f32 %v4022, 0.0
  %v4027 = vadd.f32 %v2925, %v4023
  %v4028 = vadd.f32 %v2926, %v4024
  %v4029 = vadd.f32 %v2927, %v4025
  %v4030 = vadd.f32 %v2928, %v4026
  %s4031 = scalar_lea.vmem %s7, 192
  %v4032 = vld [vmem:[%s4031] sm:$0xff]
  %v4033 = vld [vmem:[%s4031 + $0x8] sm:$0xff]
  %v4034 = vld [vmem:[%s4031 + $0x10] sm:$0xff]
  %v4035 = vld [vmem:[%s4031 + $0x18] sm:$0xff]
  %s4036 = scalar_lea.vmem %s8, 6
  %v4037 = vld [vmem:[%s4036] sm:$0x1]
  %s4038 = scalar_lea.vmem %s9, 96
  %v4039 = vld [vmem:[%s4038] sm:$0xff]
  %v4040 = vld [vmem:[%s4038 + $0x8] sm:$0xff]
  %v4041 = vmul.f32 %v50, %v4039
  %v4042 = vmul.f32 %v51, %v4040
  %v4043 = vadd.f32 %v4041, %v162
  %v4044 = vadd.f32 %v4042, %v163
  %v4045 = vsel %vm176, %v4043, -inf
  %4046 = vmax.xlane.f32.xlu0 %v4045
  %v4047 = vpop.xlane.xlu0 %4046
  %v4048 = vsel %vm176, %v4044, -inf
  %4049 = vmax.xlane.f32.xlu0 %v4048
  %v4050 = vpop.xlane.xlu0 %4049
  %v4051 = vsub.f32 %v4043, %v4047
  %v4052 = vsub.f32 %v4044, %v4050
  %v4053 = vmul.f32 %v4051, 1.442695
  %v4054 = vpow.pop %v4053
  %v4055 = vmul.f32 %v4052, 1.442695
  %v4056 = vpow.pop %v4055
  %v4057 = vsel %vm176, %v4054, 0.0
  %4058 = vadd.xlane.f32.xlu0 %v4057
  %v4059 = vpop.xlane.xlu0 %4058
  %v4060 = vsel %vm176, %v4056, 0.0
  %4061 = vadd.xlane.f32.xlu0 %v4060
  %v4062 = vpop.xlane.xlu0 %4061
  %v4063 = vrcp.pop %v4059
  %v4064 = vmul.f32 %v4054, %v4063
  %v4065 = vrcp.pop %v4062
  %v4066 = vmul.f32 %v4056, %v4065
  %v4067 = vmul.f32 %v4064, %v61
  %v4068 = vmul.f32 %v4066, %v62
  %v4069 = vsel %vm176, %v4067, 0.0
  %v4070 = vsel %vm176, %v4068, 0.0
  %v4071 = vadd.f32 %v4069, %v4070
  %v4072 = vrot.slane %v4071, 4
  %v4073 = vadd.f32 %v4071, %v4072
  %v4074 = vrot.slane %v4073, 2
  %v4075 = vadd.f32 %v4073, %v4074
  %v4076 = vrot.slane %v4075, 1
  %v4077 = vadd.f32 %v4075, %v4076
  %v4078 = vmul.f32 %v119, %v4077
  %v4079 = vmul.f32 %v120, %v4077
  %v4080 = vmul.f32 %v121, %v4077
  %v4081 = vmul.f32 %v122, %v4077
  %v4082 = vsel %vm176, %v4078, 0.0
  %4083 = vadd.xlane.f32.xlu0 %v4082
  %v4084 = vpop.xlane.xlu0 %4083
  %v4085 = vsel %vm176, %v4079, 0.0
  %4086 = vadd.xlane.f32.xlu0 %v4085
  %v4087 = vpop.xlane.xlu0 %4086
  %v4088 = vsel %vm176, %v4080, 0.0
  %4089 = vadd.xlane.f32.xlu0 %v4088
  %v4090 = vpop.xlane.xlu0 %4089
  %v4091 = vsel %vm176, %v4081, 0.0
  %4092 = vadd.xlane.f32.xlu0 %v4091
  %v4093 = vpop.xlane.xlu0 %4092
  %v4094 = vmul.f32 %v4064, %v226
  %v4095 = vmul.f32 %v4066, %v227
  %4096 = vmatprep.subr.mxu0 0.0
  %4097 = vmatpush1.msra.mxu0 0.0
  %4098 = vmatprep.subr.mxu0 0.0
  %4099 = vmatpush1.msra.mxu0 0.0
  %4100 = vmatprep.subr.mxu0 0.0
  %4101 = vmatpush1.msra.mxu0 0.0
  %4102 = vmatprep.subr.mxu0 0.0
  %4103 = vmatpush1.msra.mxu0 0.0
  %4104 = vmatprep.subr.mxu0 0.0
  %4105 = vmatpush1.msra.mxu0 0.0
  %4106 = vmatprep.subr.mxu0 0.0
  %4107 = vmatpush1.msra.mxu0 0.0
  %4108 = vmatprep.subr.mxu0 0.0
  %4109 = vmatpush1.msra.mxu0 0.0
  %4110 = vmatprep.subr.mxu0 0.0
  %4111 = vmatpush1.msra.mxu0 0.0
  %4112 = vmatprep.subr.mxu0 0.0
  %4113 = vmatpush1.msra.mxu0 0.0
  %4114 = vmatprep.subr.mxu0 0.0
  %4115 = vmatpush1.msra.mxu0 0.0
  %4116 = vmatprep.subr.mxu0 0.0
  %4117 = vmatpush1.msra.mxu0 0.0
  %4118 = vmatprep.subr.mxu0 0.0
  %4119 = vmatpush1.msra.mxu0 0.0
  %4120 = vmatprep.subr.mxu0 0.0
  %4121 = vmatpush1.msra.mxu0 0.0
  %4122 = vmatprep.subr.mxu0 0.0
  %4123 = vmatpush1.msra.mxu0 0.0
  %4124 = vmatprep.subr.mxu0 0.0
  %4125 = vmatpush1.msra.mxu0 %v4095
  %4126 = vmatprep.subr.mxu0 0.0
  %4127 = vmatpush1.msra.mxu0 %v4094
  %4128 = vmatprep.subr.mxu0 0.0
  %4129 = vmatpush2.msra.mxu0 0.0
  %4130 = vmatprep.subr.mxu0 0.0
  %4131 = vmatpush2.msra.mxu0 0.0
  %4132 = vmatprep.subr.mxu0 0.0
  %4133 = vmatpush2.msra.mxu0 0.0
  %4134 = vmatprep.subr.mxu0 0.0
  %4135 = vmatpush2.msra.mxu0 0.0
  %4136 = vmatprep.subr.mxu0 0.0
  %4137 = vmatpush2.msra.mxu0 0.0
  %4138 = vmatprep.subr.mxu0 0.0
  %4139 = vmatpush2.msra.mxu0 0.0
  %4140 = vmatprep.subr.mxu0 0.0
  %4141 = vmatpush2.msra.mxu0 0.0
  %4142 = vmatprep.subr.mxu0 0.0
  %4143 = vmatpush2.msra.mxu0 0.0
  %4144 = vmatprep.subr.mxu0 0.0
  %4145 = vmatpush2.msra.mxu0 0.0
  %4146 = vmatprep.subr.mxu0 0.0
  %4147 = vmatpush2.msra.mxu0 0.0
  %4148 = vmatprep.subr.mxu0 0.0
  %4149 = vmatpush2.msra.mxu0 0.0
  %4150 = vmatprep.subr.mxu0 0.0
  %4151 = vmatpush2.msra.mxu0 0.0
  %4152 = vmatprep.subr.mxu0 0.0
  %4153 = vmatpush2.msra.mxu0 0.0
  %4154 = vmatprep.subr.mxu0 0.0
  %4155 = vmatpush2.msra.mxu0 0.0
  %4156 = vmatprep.subr.mxu0 0.0
  %4157 = vmatpush2.msra.mxu0 0.0
  %4158 = vmatprep.subr.mxu0 0.0
  %4159 = vmatpush2.msra.mxu0 0.0
  %4160 = vmatprep.mubr.f32.mxu0 0.0
  %4161 = vmatmul.mubr.f32.gmra.mxu0 %v231
  %v4162 = vpop.f32.mrf.mxu0
  %v4163 = vadd.f32 0.0, %v4162
  %v4164 = vpop.f32.mrf.mxu0
  %4165 = vmatprep.mubr.f32.mxu0 0.0
  %4166 = vmatmul.mubr.f32.gmra.mxu0 %v234
  %v4167 = vpop.f32.mrf.mxu0
  %v4168 = vadd.f32 0.0, %v4167
  %v4169 = vpop.f32.mrf.mxu0
  %4170 = vmatprep.mubr.f32.mxu0 0.0
  %4171 = vmatmul.mubr.f32.gmra.mxu0 %v237
  %v4172 = vpop.f32.mrf.mxu0
  %v4173 = vadd.f32 0.0, %v4172
  %v4174 = vpop.f32.mrf.mxu0
  %4175 = vmatprep.mubr.f32.mxu0 0.0
  %4176 = vmatmul.mubr.f32.gmra.mxu0 %v240
  %v4177 = vpop.f32.mrf.mxu0
  %v4178 = vadd.f32 0.0, %v4177
  %v4179 = vpop.f32.mrf.mxu0
  %4180 = vdwg.mxu0
  %v4182 = vsel %vm176, %v4163, 0
  %v4185 = vsel %vm176, %v4168, 0
  %v4188 = vsel %vm176, %v4173, 0
  %v4191 = vsel %vm176, %v4178, 0
  %4193 = vmatprep.subr.mxu0 0.0
  %4194 = vmatpush1.msra.mxu0 0.0
  %4195 = vmatprep.subr.mxu0 0.0
  %4196 = vmatpush1.msra.mxu0 0.0
  %4197 = vmatprep.subr.mxu0 0.0
  %4198 = vmatpush1.msra.mxu0 0.0
  %4199 = vmatprep.subr.mxu0 0.0
  %4200 = vmatpush1.msra.mxu0 0.0
  %4201 = vmatprep.subr.mxu0 0.0
  %4202 = vmatpush1.msra.mxu0 0.0
  %4203 = vmatprep.subr.mxu0 0.0
  %4204 = vmatpush1.msra.mxu0 0.0
  %4205 = vmatprep.subr.mxu0 0.0
  %4206 = vmatpush1.msra.mxu0 0.0
  %4207 = vmatprep.subr.mxu0 0.0
  %4208 = vmatpush1.msra.mxu0 0.0
  %4209 = vmatprep.subr.mxu0 0.0
  %4210 = vmatpush1.msra.mxu0 0.0
  %4211 = vmatprep.subr.mxu0 0.0
  %4212 = vmatpush1.msra.mxu0 0.0
  %4213 = vmatprep.subr.mxu0 0.0
  %4214 = vmatpush1.msra.mxu0 0.0
  %4215 = vmatprep.subr.mxu0 0.0
  %4216 = vmatpush1.msra.mxu0 0.0
  %4217 = vmatprep.subr.mxu0 0.0
  %4218 = vmatpush1.msra.mxu0 0.0
  %4219 = vmatprep.subr.mxu0 0.0
  %4220 = vmatpush1.msra.mxu0 0.0
  %4221 = vmatprep.subr.mxu0 0.0
  %4222 = vmatpush1.msra.mxu0 %v128
  %4223 = vmatprep.subr.mxu0 0.0
  %4224 = vmatpush1.msra.mxu0 %v127
  %4225 = vmatprep.subr.mxu0 0.0
  %4226 = vmatpush2.msra.mxu0 0.0
  %4227 = vmatprep.subr.mxu0 0.0
  %4228 = vmatpush2.msra.mxu0 0.0
  %4229 = vmatprep.subr.mxu0 0.0
  %4230 = vmatpush2.msra.mxu0 0.0
  %4231 = vmatprep.subr.mxu0 0.0
  %4232 = vmatpush2.msra.mxu0 0.0
  %4233 = vmatprep.subr.mxu0 0.0
  %4234 = vmatpush2.msra.mxu0 0.0
  %4235 = vmatprep.subr.mxu0 0.0
  %4236 = vmatpush2.msra.mxu0 0.0
  %4237 = vmatprep.subr.mxu0 0.0
  %4238 = vmatpush2.msra.mxu0 0.0
  %4239 = vmatprep.subr.mxu0 0.0
  %4240 = vmatpush2.msra.mxu0 0.0
  %4241 = vmatprep.subr.mxu0 0.0
  %4242 = vmatpush2.msra.mxu0 0.0
  %4243 = vmatprep.subr.mxu0 0.0
  %4244 = vmatpush2.msra.mxu0 0.0
  %4245 = vmatprep.subr.mxu0 0.0
  %4246 = vmatpush2.msra.mxu0 0.0
  %4247 = vmatprep.subr.mxu0 0.0
  %4248 = vmatpush2.msra.mxu0 0.0
  %4249 = vmatprep.subr.mxu0 0.0
  %4250 = vmatpush2.msra.mxu0 0.0
  %4251 = vmatprep.subr.mxu0 0.0
  %4252 = vmatpush2.msra.mxu0 0.0
  %4253 = vmatprep.subr.mxu0 0.0
  %4254 = vmatpush2.msra.mxu0 0.0
  %4255 = vmatprep.subr.mxu0 0.0
  %4256 = vmatpush2.msra.mxu0 0.0
  %4257 = vmatprep.mubr.f32.mxu0 0.0
  %4258 = vmatmul.mubr.f32.gmra.mxu0 %v4182
  %v4259 = vpop.f32.mrf.mxu0
  %v4260 = vadd.f32 0.0, %v4259
  %v4261 = vpop.f32.mrf.mxu0
  %4262 = vmatprep.mubr.f32.mxu0 0.0
  %4263 = vmatmul.mubr.f32.gmra.mxu0 %v4185
  %v4264 = vpop.f32.mrf.mxu0
  %v4265 = vadd.f32 0.0, %v4264
  %v4266 = vpop.f32.mrf.mxu0
  %4267 = vmatprep.mubr.f32.mxu0 0.0
  %4268 = vmatmul.mubr.f32.gmra.mxu0 %v4188
  %v4269 = vpop.f32.mrf.mxu0
  %v4270 = vadd.f32 0.0, %v4269
  %v4271 = vpop.f32.mrf.mxu0
  %4272 = vmatprep.mubr.f32.mxu0 0.0
  %4273 = vmatmul.mubr.f32.gmra.mxu0 %v4191
  %v4274 = vpop.f32.mrf.mxu0
  %v4275 = vadd.f32 0.0, %v4274
  %v4276 = vpop.f32.mrf.mxu0
  %4277 = vdwg.mxu0
  %v4278 = vmul.f32 %v4260, %v156
  %v4279 = vmul.f32 %v4265, %v157
  %v4280 = vmul.f32 %v4270, %v158
  %v4281 = vmul.f32 %v4275, %v159
  %v4283 = vsel %vm550, %v4027, 0
  %v4286 = vsel %vm550, %v4028, 0
  %v4289 = vsel %vm550, %v4029, 0
  %v4292 = vsel %vm550, %v4030, 0
  %4294 = vmatprep.subr.mxu0 0.0
  %4295 = vmatpush1.msra.mxu0 0.0
  %4296 = vmatprep.subr.mxu0 0.0
  %4297 = vmatpush1.msra.mxu0 0.0
  %4298 = vmatprep.subr.mxu0 0.0
  %4299 = vmatpush1.msra.mxu0 0.0
  %4300 = vmatprep.subr.mxu0 0.0
  %4301 = vmatpush1.msra.mxu0 0.0
  %4302 = vmatprep.subr.mxu0 0.0
  %4303 = vmatpush1.msra.mxu0 0.0
  %4304 = vmatprep.subr.mxu0 0.0
  %4305 = vmatpush1.msra.mxu0 0.0
  %4306 = vmatprep.subr.mxu0 0.0
  %4307 = vmatpush1.msra.mxu0 0.0
  %4308 = vmatprep.subr.mxu0 0.0
  %4309 = vmatpush1.msra.mxu0 0.0
  %4310 = vmatprep.subr.mxu0 0.0
  %4311 = vmatpush1.msra.mxu0 0.0
  %4312 = vmatprep.subr.mxu0 0.0
  %4313 = vmatpush1.msra.mxu0 0.0
  %4314 = vmatprep.subr.mxu0 0.0
  %4315 = vmatpush1.msra.mxu0 0.0
  %4316 = vmatprep.subr.mxu0 0.0
  %4317 = vmatpush1.msra.mxu0 0.0
  %4318 = vmatprep.subr.mxu0 0.0
  %4319 = vmatpush1.msra.mxu0 %v4035
  %4320 = vmatprep.subr.mxu0 0.0
  %4321 = vmatpush1.msra.mxu0 %v4034
  %4322 = vmatprep.subr.mxu0 0.0
  %4323 = vmatpush1.msra.mxu0 %v4033
  %4324 = vmatprep.subr.mxu0 0.0
  %4325 = vmatpush1.msra.mxu0 %v4032
  %4326 = vmatprep.subr.mxu0 0.0
  %4327 = vmatpush2.msra.mxu0 0.0
  %4328 = vmatprep.subr.mxu0 0.0
  %4329 = vmatpush2.msra.mxu0 0.0
  %4330 = vmatprep.subr.mxu0 0.0
  %4331 = vmatpush2.msra.mxu0 0.0
  %4332 = vmatprep.subr.mxu0 0.0
  %4333 = vmatpush2.msra.mxu0 0.0
  %4334 = vmatprep.subr.mxu0 0.0
  %4335 = vmatpush2.msra.mxu0 0.0
  %4336 = vmatprep.subr.mxu0 0.0
  %4337 = vmatpush2.msra.mxu0 0.0
  %4338 = vmatprep.subr.mxu0 0.0
  %4339 = vmatpush2.msra.mxu0 0.0
  %4340 = vmatprep.subr.mxu0 0.0
  %4341 = vmatpush2.msra.mxu0 0.0
  %4342 = vmatprep.subr.mxu0 0.0
  %4343 = vmatpush2.msra.mxu0 0.0
  %4344 = vmatprep.subr.mxu0 0.0
  %4345 = vmatpush2.msra.mxu0 0.0
  %4346 = vmatprep.subr.mxu0 0.0
  %4347 = vmatpush2.msra.mxu0 0.0
  %4348 = vmatprep.subr.mxu0 0.0
  %4349 = vmatpush2.msra.mxu0 0.0
  %4350 = vmatprep.subr.mxu0 0.0
  %4351 = vmatpush2.msra.mxu0 0.0
  %4352 = vmatprep.subr.mxu0 0.0
  %4353 = vmatpush2.msra.mxu0 0.0
  %4354 = vmatprep.subr.mxu0 0.0
  %4355 = vmatpush2.msra.mxu0 0.0
  %4356 = vmatprep.subr.mxu0 0.0
  %4357 = vmatpush2.msra.mxu0 0.0
  %4358 = vmatprep.mubr.f32.mxu0 0.0
  %4359 = vmatmul.mubr.f32.gmra.mxu0 %v4283
  %v4360 = vpop.f32.mrf.mxu0
  %v4361 = vadd.f32 0.0, %v4360
  %v4362 = vpop.f32.mrf.mxu0
  %4363 = vmatprep.mubr.f32.mxu0 0.0
  %4364 = vmatmul.mubr.f32.gmra.mxu0 %v4286
  %v4365 = vpop.f32.mrf.mxu0
  %v4366 = vadd.f32 0.0, %v4365
  %v4367 = vpop.f32.mrf.mxu0
  %4368 = vmatprep.mubr.f32.mxu0 0.0
  %4369 = vmatmul.mubr.f32.gmra.mxu0 %v4289
  %v4370 = vpop.f32.mrf.mxu0
  %v4371 = vadd.f32 0.0, %v4370
  %v4372 = vpop.f32.mrf.mxu0
  %4373 = vmatprep.mubr.f32.mxu0 0.0
  %4374 = vmatmul.mubr.f32.gmra.mxu0 %v4292
  %v4375 = vpop.f32.mrf.mxu0
  %v4376 = vadd.f32 0.0, %v4375
  %v4377 = vpop.f32.mrf.mxu0
  %4378 = vdwg.mxu0
  %v4379 = vmul.f32 %v4084, %v4361
  %v4380 = vmul.f32 %v4087, %v4366
  %v4381 = vmul.f32 %v4090, %v4371
  %v4382 = vmul.f32 %v4093, %v4376
  %4387 = vrot.lane.b32.xlu0 %v4361, 96
  %v4388 = vpop.permute.xlu0 %4387
  %4389 = vrot.lane.b32.xlu0 %v4366, 96
  %v4390 = vpop.permute.xlu0 %4389
  %4391 = vrot.lane.b32.xlu0 %v4371, 96
  %v4392 = vpop.permute.xlu0 %4391
  %4393 = vrot.lane.b32.xlu0 %v4376, 96
  %v4394 = vpop.permute.xlu0 %4393
  %v4400 = vsel %vm550, %v4278, 0
  %v4403 = vsel %vm550, %v4279, 0
  %v4406 = vsel %vm550, %v4280, 0
  %v4409 = vsel %vm550, %v4281, 0
  %4411 = vmatprep.subr.mxu0 0.0
  %4412 = vmatpush1.msra.mxu0 0.0
  %4413 = vmatprep.subr.mxu0 0.0
  %4414 = vmatpush1.msra.mxu0 0.0
  %4415 = vmatprep.subr.mxu0 0.0
  %4416 = vmatpush1.msra.mxu0 0.0
  %4417 = vmatprep.subr.mxu0 0.0
  %4418 = vmatpush1.msra.mxu0 0.0
  %4419 = vmatprep.subr.mxu0 0.0
  %4420 = vmatpush1.msra.mxu0 0.0
  %4421 = vmatprep.subr.mxu0 0.0
  %4422 = vmatpush1.msra.mxu0 0.0
  %4423 = vmatprep.subr.mxu0 0.0
  %4424 = vmatpush1.msra.mxu0 0.0
  %4425 = vmatprep.subr.mxu0 0.0
  %4426 = vmatpush1.msra.mxu0 0.0
  %4427 = vmatprep.subr.mxu0 0.0
  %4428 = vmatpush1.msra.mxu0 0.0
  %4429 = vmatprep.subr.mxu0 0.0
  %4430 = vmatpush1.msra.mxu0 0.0
  %4431 = vmatprep.subr.mxu0 0.0
  %4432 = vmatpush1.msra.mxu0 0.0
  %4433 = vmatprep.subr.mxu0 0.0
  %4434 = vmatpush1.msra.mxu0 0.0
  %4435 = vmatprep.subr.mxu0 0.0
  %4436 = vmatpush1.msra.mxu0 %v4394
  %4437 = vmatprep.subr.mxu0 0.0
  %4438 = vmatpush1.msra.mxu0 %v4392
  %4439 = vmatprep.subr.mxu0 0.0
  %4440 = vmatpush1.msra.mxu0 %v4390
  %4441 = vmatprep.subr.mxu0 0.0
  %4442 = vmatpush1.msra.mxu0 %v4388
  %4443 = vmatprep.subr.mxu0 0.0
  %4444 = vmatpush2.msra.mxu0 0.0
  %4445 = vmatprep.subr.mxu0 0.0
  %4446 = vmatpush2.msra.mxu0 0.0
  %4447 = vmatprep.subr.mxu0 0.0
  %4448 = vmatpush2.msra.mxu0 0.0
  %4449 = vmatprep.subr.mxu0 0.0
  %4450 = vmatpush2.msra.mxu0 0.0
  %4451 = vmatprep.subr.mxu0 0.0
  %4452 = vmatpush2.msra.mxu0 0.0
  %4453 = vmatprep.subr.mxu0 0.0
  %4454 = vmatpush2.msra.mxu0 0.0
  %4455 = vmatprep.subr.mxu0 0.0
  %4456 = vmatpush2.msra.mxu0 0.0
  %4457 = vmatprep.subr.mxu0 0.0
  %4458 = vmatpush2.msra.mxu0 0.0
  %4459 = vmatprep.subr.mxu0 0.0
  %4460 = vmatpush2.msra.mxu0 0.0
  %4461 = vmatprep.subr.mxu0 0.0
  %4462 = vmatpush2.msra.mxu0 0.0
  %4463 = vmatprep.subr.mxu0 0.0
  %4464 = vmatpush2.msra.mxu0 0.0
  %4465 = vmatprep.subr.mxu0 0.0
  %4466 = vmatpush2.msra.mxu0 0.0
  %4467 = vmatprep.subr.mxu0 0.0
  %4468 = vmatpush2.msra.mxu0 0.0
  %4469 = vmatprep.subr.mxu0 0.0
  %4470 = vmatpush2.msra.mxu0 0.0
  %4471 = vmatprep.subr.mxu0 0.0
  %4472 = vmatpush2.msra.mxu0 0.0
  %4473 = vmatprep.subr.mxu0 0.0
  %4474 = vmatpush2.msra.mxu0 0.0
  %4475 = vmatprep.mubr.f32.mxu0 0.0
  %4476 = vmatmul.mubr.f32.gmra.mxu0 %v4400
  %v4477 = vpop.f32.mrf.mxu0
  %v4478 = vadd.f32 0.0, %v4477
  %v4479 = vpop.f32.mrf.mxu0
  %4480 = vmatprep.mubr.f32.mxu0 0.0
  %4481 = vmatmul.mubr.f32.gmra.mxu0 %v4403
  %v4482 = vpop.f32.mrf.mxu0
  %v4483 = vadd.f32 0.0, %v4482
  %v4484 = vpop.f32.mrf.mxu0
  %4485 = vmatprep.mubr.f32.mxu0 0.0
  %4486 = vmatmul.mubr.f32.gmra.mxu0 %v4406
  %v4487 = vpop.f32.mrf.mxu0
  %v4488 = vadd.f32 0.0, %v4487
  %v4489 = vpop.f32.mrf.mxu0
  %4490 = vmatprep.mubr.f32.mxu0 0.0
  %4491 = vmatmul.mubr.f32.gmra.mxu0 %v4409
  %v4492 = vpop.f32.mrf.mxu0
  %v4493 = vadd.f32 0.0, %v4492
  %v4494 = vpop.f32.mrf.mxu0
  %4495 = vdwg.mxu0
  %v4496 = vadd.f32 %v4379, %v4478
  %v4497 = vadd.f32 %v4380, %v4483
  %v4498 = vadd.f32 %v4381, %v4488
  %v4499 = vadd.f32 %v4382, %v4493
  %v4501 = vlaneseq
  %v4502 = vshrl.u32 %v4501, 7
  %v4503 = vsub.s32 0, %v4502
  %v4504 = vrot.slane %v4037, %v4503
  %v4506 = vadd.f32 %v4496, %v4504
  %v4507 = vadd.f32 %v4497, %v4504
  %v4508 = vadd.f32 %v4498, %v4504
  %v4509 = vadd.f32 %v4499, %v4504
  %s4510 = scalar_lea.vmem %s10, 6
  %v4511 = vld [vmem:[%s4510] sm:$0x1]
  %s4512 = scalar_lea.vmem %s11, 6
  %v4513 = vld [vmem:[%s4512] sm:$0x1]
  %v4514 = vsel %vm550, %v4506, 0.0
  %v4515 = vsel %vm550, %v4507, 0.0
  %v4516 = vadd.f32 %v4514, %v4515
  %v4517 = vsel %vm550, %v4508, 0.0
  %v4518 = vadd.f32 %v4516, %v4517
  %v4519 = vsel %vm550, %v4509, 0.0
  %v4520 = vadd.f32 %v4518, %v4519
  %v4521 = vrot.slane %v4520, 4
  %v4522 = vadd.f32 %v4520, %v4521
  %v4523 = vrot.slane %v4522, 2
  %v4524 = vadd.f32 %v4522, %v4523
  %v4525 = vrot.slane %v4524, 1
  %v4526 = vadd.f32 %v4524, %v4525
  %v4527 = vmul.f32 %v4526, 0.03125
  %v4528 = vsub.f32 %v4506, %v4527
  %v4529 = vsub.f32 %v4507, %v4527
  %v4530 = vsub.f32 %v4508, %v4527
  %v4531 = vsub.f32 %v4509, %v4527
  %v4532 = vmul.f32 %v4528, %v4528
  %v4533 = vmul.f32 %v4529, %v4529
  %v4534 = vmul.f32 %v4530, %v4530
  %v4535 = vmul.f32 %v4531, %v4531
  %v4536 = vsel %vm550, %v4532, 0.0
  %v4537 = vsel %vm550, %v4533, 0.0
  %v4538 = vadd.f32 %v4536, %v4537
  %v4539 = vsel %vm550, %v4534, 0.0
  %v4540 = vadd.f32 %v4538, %v4539
  %v4541 = vsel %vm550, %v4535, 0.0
  %v4542 = vadd.f32 %v4540, %v4541
  %v4543 = vrot.slane %v4542, 4
  %v4544 = vadd.f32 %v4542, %v4543
  %v4545 = vrot.slane %v4544, 2
  %v4546 = vadd.f32 %v4544, %v4545
  %v4547 = vrot.slane %v4546, 1
  %v4548 = vadd.f32 %v4546, %v4547
  %v4549 = vmul.f32 %v4548, 0.03125
  %v4550 = vadd.f32 %v4549, 1e-05
  %v4551 = vrsqrt.pop %v4550
  %v4552 = vmul.f32 %v4528, %v4551
  %v4553 = vmul.f32 %v4529, %v4551
  %v4554 = vmul.f32 %v4530, %v4551
  %v4555 = vmul.f32 %v4531, %v4551
  %v4557 = vlaneseq
  %v4558 = vshrl.u32 %v4557, 7
  %v4559 = vsub.s32 0, %v4558
  %v4560 = vrot.slane %v4511, %v4559
  %v4562 = vmul.f32 %v4552, %v4560
  %v4563 = vmul.f32 %v4553, %v4560
  %v4564 = vmul.f32 %v4554, %v4560
  %v4565 = vmul.f32 %v4555, %v4560
  %v4567 = vlaneseq
  %v4568 = vshrl.u32 %v4567, 7
  %v4569 = vsub.s32 0, %v4568
  %v4570 = vrot.slane %v4513, %v4569
  %v4572 = vadd.f32 %v4562, %v4570
  %v4573 = vadd.f32 %v4563, %v4570
  %v4574 = vadd.f32 %v4564, %v4570
  %v4575 = vadd.f32 %v4565, %v4570
  %v4576 = vmax.f32 %v4572, 0.0
  %v4577 = vmax.f32 %v4573, 0.0
  %v4578 = vmax.f32 %v4574, 0.0
  %v4579 = vmax.f32 %v4575, 0.0
  %s4580 = scalar_lea.vmem %s7, 224
  %v4581 = vld [vmem:[%s4580] sm:$0xff]
  %v4582 = vld [vmem:[%s4580 + $0x8] sm:$0xff]
  %v4583 = vld [vmem:[%s4580 + $0x10] sm:$0xff]
  %v4584 = vld [vmem:[%s4580 + $0x18] sm:$0xff]
  %s4585 = scalar_lea.vmem %s8, 7
  %v4586 = vld [vmem:[%s4585] sm:$0x1]
  %s4587 = scalar_lea.vmem %s9, 112
  %v4588 = vld [vmem:[%s4587] sm:$0xff]
  %v4589 = vld [vmem:[%s4587 + $0x8] sm:$0xff]
  %v4590 = vmul.f32 %v50, %v4588
  %v4591 = vmul.f32 %v51, %v4589
  %v4592 = vadd.f32 %v4590, %v162
  %v4593 = vadd.f32 %v4591, %v163
  %v4594 = vsel %vm176, %v4592, -inf
  %4595 = vmax.xlane.f32.xlu0 %v4594
  %v4596 = vpop.xlane.xlu0 %4595
  %v4597 = vsel %vm176, %v4593, -inf
  %4598 = vmax.xlane.f32.xlu0 %v4597
  %v4599 = vpop.xlane.xlu0 %4598
  %v4600 = vsub.f32 %v4592, %v4596
  %v4601 = vsub.f32 %v4593, %v4599
  %v4602 = vmul.f32 %v4600, 1.442695
  %v4603 = vpow.pop %v4602
  %v4604 = vmul.f32 %v4601, 1.442695
  %v4605 = vpow.pop %v4604
  %v4606 = vsel %vm176, %v4603, 0.0
  %4607 = vadd.xlane.f32.xlu0 %v4606
  %v4608 = vpop.xlane.xlu0 %4607
  %v4609 = vsel %vm176, %v4605, 0.0
  %4610 = vadd.xlane.f32.xlu0 %v4609
  %v4611 = vpop.xlane.xlu0 %4610
  %v4612 = vrcp.pop %v4608
  %v4613 = vmul.f32 %v4603, %v4612
  %v4614 = vrcp.pop %v4611
  %v4615 = vmul.f32 %v4605, %v4614
  %v4616 = vmul.f32 %v4613, %v61
  %v4617 = vmul.f32 %v4615, %v62
  %v4618 = vsel %vm176, %v4616, 0.0
  %v4619 = vsel %vm176, %v4617, 0.0
  %v4620 = vadd.f32 %v4618, %v4619
  %v4621 = vrot.slane %v4620, 4
  %v4622 = vadd.f32 %v4620, %v4621
  %v4623 = vrot.slane %v4622, 2
  %v4624 = vadd.f32 %v4622, %v4623
  %v4625 = vrot.slane %v4624, 1
  %v4626 = vadd.f32 %v4624, %v4625
  %v4627 = vmul.f32 %v119, %v4626
  %v4628 = vmul.f32 %v120, %v4626
  %v4629 = vmul.f32 %v121, %v4626
  %v4630 = vmul.f32 %v122, %v4626
  %v4631 = vsel %vm176, %v4627, 0.0
  %4632 = vadd.xlane.f32.xlu0 %v4631
  %v4633 = vpop.xlane.xlu0 %4632
  %v4634 = vsel %vm176, %v4628, 0.0
  %4635 = vadd.xlane.f32.xlu0 %v4634
  %v4636 = vpop.xlane.xlu0 %4635
  %v4637 = vsel %vm176, %v4629, 0.0
  %4638 = vadd.xlane.f32.xlu0 %v4637
  %v4639 = vpop.xlane.xlu0 %4638
  %v4640 = vsel %vm176, %v4630, 0.0
  %4641 = vadd.xlane.f32.xlu0 %v4640
  %v4642 = vpop.xlane.xlu0 %4641
  %v4643 = vmul.f32 %v4613, %v226
  %v4644 = vmul.f32 %v4615, %v227
  %4645 = vmatprep.subr.mxu0 0.0
  %4646 = vmatpush1.msra.mxu0 0.0
  %4647 = vmatprep.subr.mxu0 0.0
  %4648 = vmatpush1.msra.mxu0 0.0
  %4649 = vmatprep.subr.mxu0 0.0
  %4650 = vmatpush1.msra.mxu0 0.0
  %4651 = vmatprep.subr.mxu0 0.0
  %4652 = vmatpush1.msra.mxu0 0.0
  %4653 = vmatprep.subr.mxu0 0.0
  %4654 = vmatpush1.msra.mxu0 0.0
  %4655 = vmatprep.subr.mxu0 0.0
  %4656 = vmatpush1.msra.mxu0 0.0
  %4657 = vmatprep.subr.mxu0 0.0
  %4658 = vmatpush1.msra.mxu0 0.0
  %4659 = vmatprep.subr.mxu0 0.0
  %4660 = vmatpush1.msra.mxu0 0.0
  %4661 = vmatprep.subr.mxu0 0.0
  %4662 = vmatpush1.msra.mxu0 0.0
  %4663 = vmatprep.subr.mxu0 0.0
  %4664 = vmatpush1.msra.mxu0 0.0
  %4665 = vmatprep.subr.mxu0 0.0
  %4666 = vmatpush1.msra.mxu0 0.0
  %4667 = vmatprep.subr.mxu0 0.0
  %4668 = vmatpush1.msra.mxu0 0.0
  %4669 = vmatprep.subr.mxu0 0.0
  %4670 = vmatpush1.msra.mxu0 0.0
  %4671 = vmatprep.subr.mxu0 0.0
  %4672 = vmatpush1.msra.mxu0 0.0
  %4673 = vmatprep.subr.mxu0 0.0
  %4674 = vmatpush1.msra.mxu0 %v4644
  %4675 = vmatprep.subr.mxu0 0.0
  %4676 = vmatpush1.msra.mxu0 %v4643
  %4677 = vmatprep.subr.mxu0 0.0
  %4678 = vmatpush2.msra.mxu0 0.0
  %4679 = vmatprep.subr.mxu0 0.0
  %4680 = vmatpush2.msra.mxu0 0.0
  %4681 = vmatprep.subr.mxu0 0.0
  %4682 = vmatpush2.msra.mxu0 0.0
  %4683 = vmatprep.subr.mxu0 0.0
  %4684 = vmatpush2.msra.mxu0 0.0
  %4685 = vmatprep.subr.mxu0 0.0
  %4686 = vmatpush2.msra.mxu0 0.0
  %4687 = vmatprep.subr.mxu0 0.0
  %4688 = vmatpush2.msra.mxu0 0.0
  %4689 = vmatprep.subr.mxu0 0.0
  %4690 = vmatpush2.msra.mxu0 0.0
  %4691 = vmatprep.subr.mxu0 0.0
  %4692 = vmatpush2.msra.mxu0 0.0
  %4693 = vmatprep.subr.mxu0 0.0
  %4694 = vmatpush2.msra.mxu0 0.0
  %4695 = vmatprep.subr.mxu0 0.0
  %4696 = vmatpush2.msra.mxu0 0.0
  %4697 = vmatprep.subr.mxu0 0.0
  %4698 = vmatpush2.msra.mxu0 0.0
  %4699 = vmatprep.subr.mxu0 0.0
  %4700 = vmatpush2.msra.mxu0 0.0
  %4701 = vmatprep.subr.mxu0 0.0
  %4702 = vmatpush2.msra.mxu0 0.0
  %4703 = vmatprep.subr.mxu0 0.0
  %4704 = vmatpush2.msra.mxu0 0.0
  %4705 = vmatprep.subr.mxu0 0.0
  %4706 = vmatpush2.msra.mxu0 0.0
  %4707 = vmatprep.subr.mxu0 0.0
  %4708 = vmatpush2.msra.mxu0 0.0
  %4709 = vmatprep.mubr.f32.mxu0 0.0
  %4710 = vmatmul.mubr.f32.gmra.mxu0 %v231
  %v4711 = vpop.f32.mrf.mxu0
  %v4712 = vadd.f32 0.0, %v4711
  %v4713 = vpop.f32.mrf.mxu0
  %4714 = vmatprep.mubr.f32.mxu0 0.0
  %4715 = vmatmul.mubr.f32.gmra.mxu0 %v234
  %v4716 = vpop.f32.mrf.mxu0
  %v4717 = vadd.f32 0.0, %v4716
  %v4718 = vpop.f32.mrf.mxu0
  %4719 = vmatprep.mubr.f32.mxu0 0.0
  %4720 = vmatmul.mubr.f32.gmra.mxu0 %v237
  %v4721 = vpop.f32.mrf.mxu0
  %v4722 = vadd.f32 0.0, %v4721
  %v4723 = vpop.f32.mrf.mxu0
  %4724 = vmatprep.mubr.f32.mxu0 0.0
  %4725 = vmatmul.mubr.f32.gmra.mxu0 %v240
  %v4726 = vpop.f32.mrf.mxu0
  %v4727 = vadd.f32 0.0, %v4726
  %v4728 = vpop.f32.mrf.mxu0
  %4729 = vdwg.mxu0
  %v4731 = vsel %vm176, %v4712, 0
  %v4734 = vsel %vm176, %v4717, 0
  %v4737 = vsel %vm176, %v4722, 0
  %v4740 = vsel %vm176, %v4727, 0
  %4742 = vmatprep.subr.mxu0 0.0
  %4743 = vmatpush1.msra.mxu0 0.0
  %4744 = vmatprep.subr.mxu0 0.0
  %4745 = vmatpush1.msra.mxu0 0.0
  %4746 = vmatprep.subr.mxu0 0.0
  %4747 = vmatpush1.msra.mxu0 0.0
  %4748 = vmatprep.subr.mxu0 0.0
  %4749 = vmatpush1.msra.mxu0 0.0
  %4750 = vmatprep.subr.mxu0 0.0
  %4751 = vmatpush1.msra.mxu0 0.0
  %4752 = vmatprep.subr.mxu0 0.0
  %4753 = vmatpush1.msra.mxu0 0.0
  %4754 = vmatprep.subr.mxu0 0.0
  %4755 = vmatpush1.msra.mxu0 0.0
  %4756 = vmatprep.subr.mxu0 0.0
  %4757 = vmatpush1.msra.mxu0 0.0
  %4758 = vmatprep.subr.mxu0 0.0
  %4759 = vmatpush1.msra.mxu0 0.0
  %4760 = vmatprep.subr.mxu0 0.0
  %4761 = vmatpush1.msra.mxu0 0.0
  %4762 = vmatprep.subr.mxu0 0.0
  %4763 = vmatpush1.msra.mxu0 0.0
  %4764 = vmatprep.subr.mxu0 0.0
  %4765 = vmatpush1.msra.mxu0 0.0
  %4766 = vmatprep.subr.mxu0 0.0
  %4767 = vmatpush1.msra.mxu0 0.0
  %4768 = vmatprep.subr.mxu0 0.0
  %4769 = vmatpush1.msra.mxu0 0.0
  %4770 = vmatprep.subr.mxu0 0.0
  %4771 = vmatpush1.msra.mxu0 %v128
  %4772 = vmatprep.subr.mxu0 0.0
  %4773 = vmatpush1.msra.mxu0 %v127
  %4774 = vmatprep.subr.mxu0 0.0
  %4775 = vmatpush2.msra.mxu0 0.0
  %4776 = vmatprep.subr.mxu0 0.0
  %4777 = vmatpush2.msra.mxu0 0.0
  %4778 = vmatprep.subr.mxu0 0.0
  %4779 = vmatpush2.msra.mxu0 0.0
  %4780 = vmatprep.subr.mxu0 0.0
  %4781 = vmatpush2.msra.mxu0 0.0
  %4782 = vmatprep.subr.mxu0 0.0
  %4783 = vmatpush2.msra.mxu0 0.0
  %4784 = vmatprep.subr.mxu0 0.0
  %4785 = vmatpush2.msra.mxu0 0.0
  %4786 = vmatprep.subr.mxu0 0.0
  %4787 = vmatpush2.msra.mxu0 0.0
  %4788 = vmatprep.subr.mxu0 0.0
  %4789 = vmatpush2.msra.mxu0 0.0
  %4790 = vmatprep.subr.mxu0 0.0
  %4791 = vmatpush2.msra.mxu0 0.0
  %4792 = vmatprep.subr.mxu0 0.0
  %4793 = vmatpush2.msra.mxu0 0.0
  %4794 = vmatprep.subr.mxu0 0.0
  %4795 = vmatpush2.msra.mxu0 0.0
  %4796 = vmatprep.subr.mxu0 0.0
  %4797 = vmatpush2.msra.mxu0 0.0
  %4798 = vmatprep.subr.mxu0 0.0
  %4799 = vmatpush2.msra.mxu0 0.0
  %4800 = vmatprep.subr.mxu0 0.0
  %4801 = vmatpush2.msra.mxu0 0.0
  %4802 = vmatprep.subr.mxu0 0.0
  %4803 = vmatpush2.msra.mxu0 0.0
  %4804 = vmatprep.subr.mxu0 0.0
  %4805 = vmatpush2.msra.mxu0 0.0
  %4806 = vmatprep.mubr.f32.mxu0 0.0
  %4807 = vmatmul.mubr.f32.gmra.mxu0 %v4731
  %v4808 = vpop.f32.mrf.mxu0
  %v4809 = vadd.f32 0.0, %v4808
  %v4810 = vpop.f32.mrf.mxu0
  %4811 = vmatprep.mubr.f32.mxu0 0.0
  %4812 = vmatmul.mubr.f32.gmra.mxu0 %v4734
  %v4813 = vpop.f32.mrf.mxu0
  %v4814 = vadd.f32 0.0, %v4813
  %v4815 = vpop.f32.mrf.mxu0
  %4816 = vmatprep.mubr.f32.mxu0 0.0
  %4817 = vmatmul.mubr.f32.gmra.mxu0 %v4737
  %v4818 = vpop.f32.mrf.mxu0
  %v4819 = vadd.f32 0.0, %v4818
  %v4820 = vpop.f32.mrf.mxu0
  %4821 = vmatprep.mubr.f32.mxu0 0.0
  %4822 = vmatmul.mubr.f32.gmra.mxu0 %v4740
  %v4823 = vpop.f32.mrf.mxu0
  %v4824 = vadd.f32 0.0, %v4823
  %v4825 = vpop.f32.mrf.mxu0
  %4826 = vdwg.mxu0
  %v4827 = vmul.f32 %v4809, %v156
  %v4828 = vmul.f32 %v4814, %v157
  %v4829 = vmul.f32 %v4819, %v158
  %v4830 = vmul.f32 %v4824, %v159
  %v4832 = vsel %vm550, %v4576, 0
  %v4835 = vsel %vm550, %v4577, 0
  %v4838 = vsel %vm550, %v4578, 0
  %v4841 = vsel %vm550, %v4579, 0
  %4843 = vmatprep.subr.mxu0 0.0
  %4844 = vmatpush1.msra.mxu0 0.0
  %4845 = vmatprep.subr.mxu0 0.0
  %4846 = vmatpush1.msra.mxu0 0.0
  %4847 = vmatprep.subr.mxu0 0.0
  %4848 = vmatpush1.msra.mxu0 0.0
  %4849 = vmatprep.subr.mxu0 0.0
  %4850 = vmatpush1.msra.mxu0 0.0
  %4851 = vmatprep.subr.mxu0 0.0
  %4852 = vmatpush1.msra.mxu0 0.0
  %4853 = vmatprep.subr.mxu0 0.0
  %4854 = vmatpush1.msra.mxu0 0.0
  %4855 = vmatprep.subr.mxu0 0.0
  %4856 = vmatpush1.msra.mxu0 0.0
  %4857 = vmatprep.subr.mxu0 0.0
  %4858 = vmatpush1.msra.mxu0 0.0
  %4859 = vmatprep.subr.mxu0 0.0
  %4860 = vmatpush1.msra.mxu0 0.0
  %4861 = vmatprep.subr.mxu0 0.0
  %4862 = vmatpush1.msra.mxu0 0.0
  %4863 = vmatprep.subr.mxu0 0.0
  %4864 = vmatpush1.msra.mxu0 0.0
  %4865 = vmatprep.subr.mxu0 0.0
  %4866 = vmatpush1.msra.mxu0 0.0
  %4867 = vmatprep.subr.mxu0 0.0
  %4868 = vmatpush1.msra.mxu0 %v4584
  %4869 = vmatprep.subr.mxu0 0.0
  %4870 = vmatpush1.msra.mxu0 %v4583
  %4871 = vmatprep.subr.mxu0 0.0
  %4872 = vmatpush1.msra.mxu0 %v4582
  %4873 = vmatprep.subr.mxu0 0.0
  %4874 = vmatpush1.msra.mxu0 %v4581
  %4875 = vmatprep.subr.mxu0 0.0
  %4876 = vmatpush2.msra.mxu0 0.0
  %4877 = vmatprep.subr.mxu0 0.0
  %4878 = vmatpush2.msra.mxu0 0.0
  %4879 = vmatprep.subr.mxu0 0.0
  %4880 = vmatpush2.msra.mxu0 0.0
  %4881 = vmatprep.subr.mxu0 0.0
  %4882 = vmatpush2.msra.mxu0 0.0
  %4883 = vmatprep.subr.mxu0 0.0
  %4884 = vmatpush2.msra.mxu0 0.0
  %4885 = vmatprep.subr.mxu0 0.0
  %4886 = vmatpush2.msra.mxu0 0.0
  %4887 = vmatprep.subr.mxu0 0.0
  %4888 = vmatpush2.msra.mxu0 0.0
  %4889 = vmatprep.subr.mxu0 0.0
  %4890 = vmatpush2.msra.mxu0 0.0
  %4891 = vmatprep.subr.mxu0 0.0
  %4892 = vmatpush2.msra.mxu0 0.0
  %4893 = vmatprep.subr.mxu0 0.0
  %4894 = vmatpush2.msra.mxu0 0.0
  %4895 = vmatprep.subr.mxu0 0.0
  %4896 = vmatpush2.msra.mxu0 0.0
  %4897 = vmatprep.subr.mxu0 0.0
  %4898 = vmatpush2.msra.mxu0 0.0
  %4899 = vmatprep.subr.mxu0 0.0
  %4900 = vmatpush2.msra.mxu0 0.0
  %4901 = vmatprep.subr.mxu0 0.0
  %4902 = vmatpush2.msra.mxu0 0.0
  %4903 = vmatprep.subr.mxu0 0.0
  %4904 = vmatpush2.msra.mxu0 0.0
  %4905 = vmatprep.subr.mxu0 0.0
  %4906 = vmatpush2.msra.mxu0 0.0
  %4907 = vmatprep.mubr.f32.mxu0 0.0
  %4908 = vmatmul.mubr.f32.gmra.mxu0 %v4832
  %v4909 = vpop.f32.mrf.mxu0
  %v4910 = vadd.f32 0.0, %v4909
  %v4911 = vpop.f32.mrf.mxu0
  %4912 = vmatprep.mubr.f32.mxu0 0.0
  %4913 = vmatmul.mubr.f32.gmra.mxu0 %v4835
  %v4914 = vpop.f32.mrf.mxu0
  %v4915 = vadd.f32 0.0, %v4914
  %v4916 = vpop.f32.mrf.mxu0
  %4917 = vmatprep.mubr.f32.mxu0 0.0
  %4918 = vmatmul.mubr.f32.gmra.mxu0 %v4838
  %v4919 = vpop.f32.mrf.mxu0
  %v4920 = vadd.f32 0.0, %v4919
  %v4921 = vpop.f32.mrf.mxu0
  %4922 = vmatprep.mubr.f32.mxu0 0.0
  %4923 = vmatmul.mubr.f32.gmra.mxu0 %v4841
  %v4924 = vpop.f32.mrf.mxu0
  %v4925 = vadd.f32 0.0, %v4924
  %v4926 = vpop.f32.mrf.mxu0
  %4927 = vdwg.mxu0
  %v4928 = vmul.f32 %v4633, %v4910
  %v4929 = vmul.f32 %v4636, %v4915
  %v4930 = vmul.f32 %v4639, %v4920
  %v4931 = vmul.f32 %v4642, %v4925
  %4936 = vrot.lane.b32.xlu0 %v4910, 96
  %v4937 = vpop.permute.xlu0 %4936
  %4938 = vrot.lane.b32.xlu0 %v4915, 96
  %v4939 = vpop.permute.xlu0 %4938
  %4940 = vrot.lane.b32.xlu0 %v4920, 96
  %v4941 = vpop.permute.xlu0 %4940
  %4942 = vrot.lane.b32.xlu0 %v4925, 96
  %v4943 = vpop.permute.xlu0 %4942
  %v4949 = vsel %vm550, %v4827, 0
  %v4952 = vsel %vm550, %v4828, 0
  %v4955 = vsel %vm550, %v4829, 0
  %v4958 = vsel %vm550, %v4830, 0
  %4960 = vmatprep.subr.mxu0 0.0
  %4961 = vmatpush1.msra.mxu0 0.0
  %4962 = vmatprep.subr.mxu0 0.0
  %4963 = vmatpush1.msra.mxu0 0.0
  %4964 = vmatprep.subr.mxu0 0.0
  %4965 = vmatpush1.msra.mxu0 0.0
  %4966 = vmatprep.subr.mxu0 0.0
  %4967 = vmatpush1.msra.mxu0 0.0
  %4968 = vmatprep.subr.mxu0 0.0
  %4969 = vmatpush1.msra.mxu0 0.0
  %4970 = vmatprep.subr.mxu0 0.0
  %4971 = vmatpush1.msra.mxu0 0.0
  %4972 = vmatprep.subr.mxu0 0.0
  %4973 = vmatpush1.msra.mxu0 0.0
  %4974 = vmatprep.subr.mxu0 0.0
  %4975 = vmatpush1.msra.mxu0 0.0
  %4976 = vmatprep.subr.mxu0 0.0
  %4977 = vmatpush1.msra.mxu0 0.0
  %4978 = vmatprep.subr.mxu0 0.0
  %4979 = vmatpush1.msra.mxu0 0.0
  %4980 = vmatprep.subr.mxu0 0.0
  %4981 = vmatpush1.msra.mxu0 0.0
  %4982 = vmatprep.subr.mxu0 0.0
  %4983 = vmatpush1.msra.mxu0 0.0
  %4984 = vmatprep.subr.mxu0 0.0
  %4985 = vmatpush1.msra.mxu0 %v4943
  %4986 = vmatprep.subr.mxu0 0.0
  %4987 = vmatpush1.msra.mxu0 %v4941
  %4988 = vmatprep.subr.mxu0 0.0
  %4989 = vmatpush1.msra.mxu0 %v4939
  %4990 = vmatprep.subr.mxu0 0.0
  %4991 = vmatpush1.msra.mxu0 %v4937
  %4992 = vmatprep.subr.mxu0 0.0
  %4993 = vmatpush2.msra.mxu0 0.0
  %4994 = vmatprep.subr.mxu0 0.0
  %4995 = vmatpush2.msra.mxu0 0.0
  %4996 = vmatprep.subr.mxu0 0.0
  %4997 = vmatpush2.msra.mxu0 0.0
  %4998 = vmatprep.subr.mxu0 0.0
  %4999 = vmatpush2.msra.mxu0 0.0
  %5000 = vmatprep.subr.mxu0 0.0
  %5001 = vmatpush2.msra.mxu0 0.0
  %5002 = vmatprep.subr.mxu0 0.0
  %5003 = vmatpush2.msra.mxu0 0.0
  %5004 = vmatprep.subr.mxu0 0.0
  %5005 = vmatpush2.msra.mxu0 0.0
  %5006 = vmatprep.subr.mxu0 0.0
  %5007 = vmatpush2.msra.mxu0 0.0
  %5008 = vmatprep.subr.mxu0 0.0
  %5009 = vmatpush2.msra.mxu0 0.0
  %5010 = vmatprep.subr.mxu0 0.0
  %5011 = vmatpush2.msra.mxu0 0.0
  %5012 = vmatprep.subr.mxu0 0.0
  %5013 = vmatpush2.msra.mxu0 0.0
  %5014 = vmatprep.subr.mxu0 0.0
  %5015 = vmatpush2.msra.mxu0 0.0
  %5016 = vmatprep.subr.mxu0 0.0
  %5017 = vmatpush2.msra.mxu0 0.0
  %5018 = vmatprep.subr.mxu0 0.0
  %5019 = vmatpush2.msra.mxu0 0.0
  %5020 = vmatprep.subr.mxu0 0.0
  %5021 = vmatpush2.msra.mxu0 0.0
  %5022 = vmatprep.subr.mxu0 0.0
  %5023 = vmatpush2.msra.mxu0 0.0
  %5024 = vmatprep.mubr.f32.mxu0 0.0
  %5025 = vmatmul.mubr.f32.gmra.mxu0 %v4949
  %v5026 = vpop.f32.mrf.mxu0
  %v5027 = vadd.f32 0.0, %v5026
  %v5028 = vpop.f32.mrf.mxu0
  %5029 = vmatprep.mubr.f32.mxu0 0.0
  %5030 = vmatmul.mubr.f32.gmra.mxu0 %v4952
  %v5031 = vpop.f32.mrf.mxu0
  %v5032 = vadd.f32 0.0, %v5031
  %v5033 = vpop.f32.mrf.mxu0
  %5034 = vmatprep.mubr.f32.mxu0 0.0
  %5035 = vmatmul.mubr.f32.gmra.mxu0 %v4955
  %v5036 = vpop.f32.mrf.mxu0
  %v5037 = vadd.f32 0.0, %v5036
  %v5038 = vpop.f32.mrf.mxu0
  %5039 = vmatprep.mubr.f32.mxu0 0.0
  %5040 = vmatmul.mubr.f32.gmra.mxu0 %v4958
  %v5041 = vpop.f32.mrf.mxu0
  %v5042 = vadd.f32 0.0, %v5041
  %v5043 = vpop.f32.mrf.mxu0
  %5044 = vdwg.mxu0
  %v5045 = vadd.f32 %v4928, %v5027
  %v5046 = vadd.f32 %v4929, %v5032
  %v5047 = vadd.f32 %v4930, %v5037
  %v5048 = vadd.f32 %v4931, %v5042
  %v5050 = vlaneseq
  %v5051 = vshrl.u32 %v5050, 7
  %v5052 = vsub.s32 0, %v5051
  %v5053 = vrot.slane %v4586, %v5052
  %v5055 = vadd.f32 %v5045, %v5053
  %v5056 = vadd.f32 %v5046, %v5053
  %v5057 = vadd.f32 %v5047, %v5053
  %v5058 = vadd.f32 %v5048, %v5053
  %s5059 = scalar_lea.vmem %s10, 7
  %v5060 = vld [vmem:[%s5059] sm:$0x1]
  %s5061 = scalar_lea.vmem %s11, 7
  %v5062 = vld [vmem:[%s5061] sm:$0x1]
  %v5063 = vsel %vm550, %v5055, 0.0
  %v5064 = vsel %vm550, %v5056, 0.0
  %v5065 = vadd.f32 %v5063, %v5064
  %v5066 = vsel %vm550, %v5057, 0.0
  %v5067 = vadd.f32 %v5065, %v5066
  %v5068 = vsel %vm550, %v5058, 0.0
  %v5069 = vadd.f32 %v5067, %v5068
  %v5070 = vrot.slane %v5069, 4
  %v5071 = vadd.f32 %v5069, %v5070
  %v5072 = vrot.slane %v5071, 2
  %v5073 = vadd.f32 %v5071, %v5072
  %v5074 = vrot.slane %v5073, 1
  %v5075 = vadd.f32 %v5073, %v5074
  %v5076 = vmul.f32 %v5075, 0.03125
  %v5077 = vsub.f32 %v5055, %v5076
  %v5078 = vsub.f32 %v5056, %v5076
  %v5079 = vsub.f32 %v5057, %v5076
  %v5080 = vsub.f32 %v5058, %v5076
  %v5081 = vmul.f32 %v5077, %v5077
  %v5082 = vmul.f32 %v5078, %v5078
  %v5083 = vmul.f32 %v5079, %v5079
  %v5084 = vmul.f32 %v5080, %v5080
  %v5085 = vsel %vm550, %v5081, 0.0
  %v5086 = vsel %vm550, %v5082, 0.0
  %v5087 = vadd.f32 %v5085, %v5086
  %v5088 = vsel %vm550, %v5083, 0.0
  %v5089 = vadd.f32 %v5087, %v5088
  %v5090 = vsel %vm550, %v5084, 0.0
  %v5091 = vadd.f32 %v5089, %v5090
  %v5092 = vrot.slane %v5091, 4
  %v5093 = vadd.f32 %v5091, %v5092
  %v5094 = vrot.slane %v5093, 2
  %v5095 = vadd.f32 %v5093, %v5094
  %v5096 = vrot.slane %v5095, 1
  %v5097 = vadd.f32 %v5095, %v5096
  %v5098 = vmul.f32 %v5097, 0.03125
  %v5099 = vadd.f32 %v5098, 1e-05
  %v5100 = vrsqrt.pop %v5099
  %v5101 = vmul.f32 %v5077, %v5100
  %v5102 = vmul.f32 %v5078, %v5100
  %v5103 = vmul.f32 %v5079, %v5100
  %v5104 = vmul.f32 %v5080, %v5100
  %v5106 = vlaneseq
  %v5107 = vshrl.u32 %v5106, 7
  %v5108 = vsub.s32 0, %v5107
  %v5109 = vrot.slane %v5060, %v5108
  %v5111 = vmul.f32 %v5101, %v5109
  %v5112 = vmul.f32 %v5102, %v5109
  %v5113 = vmul.f32 %v5103, %v5109
  %v5114 = vmul.f32 %v5104, %v5109
  %v5116 = vlaneseq
  %v5117 = vshrl.u32 %v5116, 7
  %v5118 = vsub.s32 0, %v5117
  %v5119 = vrot.slane %v5062, %v5118
  %v5121 = vadd.f32 %v5111, %v5119
  %v5122 = vadd.f32 %v5112, %v5119
  %v5123 = vadd.f32 %v5113, %v5119
  %v5124 = vadd.f32 %v5114, %v5119
  %v5125 = vmax.f32 %v5121, 0.0
  %v5126 = vmax.f32 %v5122, 0.0
  %v5127 = vmax.f32 %v5123, 0.0
  %v5128 = vmax.f32 %v5124, 0.0
  %v5129 = vadd.f32 %v4027, %v5125
  %v5130 = vadd.f32 %v4028, %v5126
  %v5131 = vadd.f32 %v4029, %v5127
  %v5132 = vadd.f32 %v4030, %v5128
  %v5133 = vld [vmem:[%s12] sm:$0xff]
  %v5134 = vld [vmem:[%s12 + $0x8] sm:$0xff]
  %v5135 = vld [vmem:[%s12 + $0x10] sm:$0xff]
  %v5136 = vld [vmem:[%s12 + $0x18] sm:$0xff]
  %v5137 = vld [vmem:[%s13] sm:$0x1]
  %v5138 = vld [vmem:[%s14] sm:$0xff]
  %v5139 = vld [vmem:[%s14 + $0x8] sm:$0xff]
  %v5140 = vmul.f32 %v50, %v5138
  %v5141 = vmul.f32 %v51, %v5139
  %v5142 = vadd.f32 %v5140, %v162
  %v5143 = vadd.f32 %v5141, %v163
  %v5144 = vsel %vm176, %v5142, -inf
  %5145 = vmax.xlane.f32.xlu0 %v5144
  %v5146 = vpop.xlane.xlu0 %5145
  %v5147 = vsel %vm176, %v5143, -inf
  %5148 = vmax.xlane.f32.xlu0 %v5147
  %v5149 = vpop.xlane.xlu0 %5148
  %v5150 = vsub.f32 %v5142, %v5146
  %v5151 = vsub.f32 %v5143, %v5149
  %v5152 = vmul.f32 %v5150, 1.442695
  %v5153 = vpow.pop %v5152
  %v5154 = vmul.f32 %v5151, 1.442695
  %v5155 = vpow.pop %v5154
  %v5156 = vsel %vm176, %v5153, 0.0
  %5157 = vadd.xlane.f32.xlu0 %v5156
  %v5158 = vpop.xlane.xlu0 %5157
  %v5159 = vsel %vm176, %v5155, 0.0
  %5160 = vadd.xlane.f32.xlu0 %v5159
  %v5161 = vpop.xlane.xlu0 %5160
  %v5162 = vrcp.pop %v5158
  %v5163 = vmul.f32 %v5153, %v5162
  %v5164 = vrcp.pop %v5161
  %v5165 = vmul.f32 %v5155, %v5164
  %v5166 = vmul.f32 %v5163, %v61
  %v5167 = vmul.f32 %v5165, %v62
  %v5168 = vsel %vm176, %v5166, 0.0
  %v5169 = vsel %vm176, %v5167, 0.0
  %v5170 = vadd.f32 %v5168, %v5169
  %v5171 = vrot.slane %v5170, 4
  %v5172 = vadd.f32 %v5170, %v5171
  %v5173 = vrot.slane %v5172, 2
  %v5174 = vadd.f32 %v5172, %v5173
  %v5175 = vrot.slane %v5174, 1
  %v5176 = vadd.f32 %v5174, %v5175
  %v5177 = vmul.f32 %v119, %v5176
  %v5178 = vmul.f32 %v120, %v5176
  %v5179 = vmul.f32 %v121, %v5176
  %v5180 = vmul.f32 %v122, %v5176
  %v5181 = vsel %vm176, %v5177, 0.0
  %5182 = vadd.xlane.f32.xlu0 %v5181
  %v5183 = vpop.xlane.xlu0 %5182
  %v5184 = vsel %vm176, %v5178, 0.0
  %5185 = vadd.xlane.f32.xlu0 %v5184
  %v5186 = vpop.xlane.xlu0 %5185
  %v5187 = vsel %vm176, %v5179, 0.0
  %5188 = vadd.xlane.f32.xlu0 %v5187
  %v5189 = vpop.xlane.xlu0 %5188
  %v5190 = vsel %vm176, %v5180, 0.0
  %5191 = vadd.xlane.f32.xlu0 %v5190
  %v5192 = vpop.xlane.xlu0 %5191
  %v5193 = vmul.f32 %v5163, %v226
  %v5194 = vmul.f32 %v5165, %v227
  %5195 = vmatprep.subr.mxu0 0.0
  %5196 = vmatpush1.msra.mxu0 0.0
  %5197 = vmatprep.subr.mxu0 0.0
  %5198 = vmatpush1.msra.mxu0 0.0
  %5199 = vmatprep.subr.mxu0 0.0
  %5200 = vmatpush1.msra.mxu0 0.0
  %5201 = vmatprep.subr.mxu0 0.0
  %5202 = vmatpush1.msra.mxu0 0.0
  %5203 = vmatprep.subr.mxu0 0.0
  %5204 = vmatpush1.msra.mxu0 0.0
  %5205 = vmatprep.subr.mxu0 0.0
  %5206 = vmatpush1.msra.mxu0 0.0
  %5207 = vmatprep.subr.mxu0 0.0
  %5208 = vmatpush1.msra.mxu0 0.0
  %5209 = vmatprep.subr.mxu0 0.0
  %5210 = vmatpush1.msra.mxu0 0.0
  %5211 = vmatprep.subr.mxu0 0.0
  %5212 = vmatpush1.msra.mxu0 0.0
  %5213 = vmatprep.subr.mxu0 0.0
  %5214 = vmatpush1.msra.mxu0 0.0
  %5215 = vmatprep.subr.mxu0 0.0
  %5216 = vmatpush1.msra.mxu0 0.0
  %5217 = vmatprep.subr.mxu0 0.0
  %5218 = vmatpush1.msra.mxu0 0.0
  %5219 = vmatprep.subr.mxu0 0.0
  %5220 = vmatpush1.msra.mxu0 0.0
  %5221 = vmatprep.subr.mxu0 0.0
  %5222 = vmatpush1.msra.mxu0 0.0
  %5223 = vmatprep.subr.mxu0 0.0
  %5224 = vmatpush1.msra.mxu0 %v5194
  %5225 = vmatprep.subr.mxu0 0.0
  %5226 = vmatpush1.msra.mxu0 %v5193
  %5227 = vmatprep.subr.mxu0 0.0
  %5228 = vmatpush2.msra.mxu0 0.0
  %5229 = vmatprep.subr.mxu0 0.0
  %5230 = vmatpush2.msra.mxu0 0.0
  %5231 = vmatprep.subr.mxu0 0.0
  %5232 = vmatpush2.msra.mxu0 0.0
  %5233 = vmatprep.subr.mxu0 0.0
  %5234 = vmatpush2.msra.mxu0 0.0
  %5235 = vmatprep.subr.mxu0 0.0
  %5236 = vmatpush2.msra.mxu0 0.0
  %5237 = vmatprep.subr.mxu0 0.0
  %5238 = vmatpush2.msra.mxu0 0.0
  %5239 = vmatprep.subr.mxu0 0.0
  %5240 = vmatpush2.msra.mxu0 0.0
  %5241 = vmatprep.subr.mxu0 0.0
  %5242 = vmatpush2.msra.mxu0 0.0
  %5243 = vmatprep.subr.mxu0 0.0
  %5244 = vmatpush2.msra.mxu0 0.0
  %5245 = vmatprep.subr.mxu0 0.0
  %5246 = vmatpush2.msra.mxu0 0.0
  %5247 = vmatprep.subr.mxu0 0.0
  %5248 = vmatpush2.msra.mxu0 0.0
  %5249 = vmatprep.subr.mxu0 0.0
  %5250 = vmatpush2.msra.mxu0 0.0
  %5251 = vmatprep.subr.mxu0 0.0
  %5252 = vmatpush2.msra.mxu0 0.0
  %5253 = vmatprep.subr.mxu0 0.0
  %5254 = vmatpush2.msra.mxu0 0.0
  %5255 = vmatprep.subr.mxu0 0.0
  %5256 = vmatpush2.msra.mxu0 0.0
  %5257 = vmatprep.subr.mxu0 0.0
  %5258 = vmatpush2.msra.mxu0 0.0
  %5259 = vmatprep.mubr.f32.mxu0 0.0
  %5260 = vmatmul.mubr.f32.gmra.mxu0 %v231
  %v5261 = vpop.f32.mrf.mxu0
  %v5262 = vadd.f32 0.0, %v5261
  %v5263 = vpop.f32.mrf.mxu0
  %5264 = vmatprep.mubr.f32.mxu0 0.0
  %5265 = vmatmul.mubr.f32.gmra.mxu0 %v234
  %v5266 = vpop.f32.mrf.mxu0
  %v5267 = vadd.f32 0.0, %v5266
  %v5268 = vpop.f32.mrf.mxu0
  %5269 = vmatprep.mubr.f32.mxu0 0.0
  %5270 = vmatmul.mubr.f32.gmra.mxu0 %v237
  %v5271 = vpop.f32.mrf.mxu0
  %v5272 = vadd.f32 0.0, %v5271
  %v5273 = vpop.f32.mrf.mxu0
  %5274 = vmatprep.mubr.f32.mxu0 0.0
  %5275 = vmatmul.mubr.f32.gmra.mxu0 %v240
  %v5276 = vpop.f32.mrf.mxu0
  %v5277 = vadd.f32 0.0, %v5276
  %v5278 = vpop.f32.mrf.mxu0
  %5279 = vdwg.mxu0
  %v5281 = vsel %vm176, %v5262, 0
  %v5284 = vsel %vm176, %v5267, 0
  %v5287 = vsel %vm176, %v5272, 0
  %v5290 = vsel %vm176, %v5277, 0
  %5292 = vmatprep.subr.mxu0 0.0
  %5293 = vmatpush1.msra.mxu0 0.0
  %5294 = vmatprep.subr.mxu0 0.0
  %5295 = vmatpush1.msra.mxu0 0.0
  %5296 = vmatprep.subr.mxu0 0.0
  %5297 = vmatpush1.msra.mxu0 0.0
  %5298 = vmatprep.subr.mxu0 0.0
  %5299 = vmatpush1.msra.mxu0 0.0
  %5300 = vmatprep.subr.mxu0 0.0
  %5301 = vmatpush1.msra.mxu0 0.0
  %5302 = vmatprep.subr.mxu0 0.0
  %5303 = vmatpush1.msra.mxu0 0.0
  %5304 = vmatprep.subr.mxu0 0.0
  %5305 = vmatpush1.msra.mxu0 0.0
  %5306 = vmatprep.subr.mxu0 0.0
  %5307 = vmatpush1.msra.mxu0 0.0
  %5308 = vmatprep.subr.mxu0 0.0
  %5309 = vmatpush1.msra.mxu0 0.0
  %5310 = vmatprep.subr.mxu0 0.0
  %5311 = vmatpush1.msra.mxu0 0.0
  %5312 = vmatprep.subr.mxu0 0.0
  %5313 = vmatpush1.msra.mxu0 0.0
  %5314 = vmatprep.subr.mxu0 0.0
  %5315 = vmatpush1.msra.mxu0 0.0
  %5316 = vmatprep.subr.mxu0 0.0
  %5317 = vmatpush1.msra.mxu0 0.0
  %5318 = vmatprep.subr.mxu0 0.0
  %5319 = vmatpush1.msra.mxu0 0.0
  %5320 = vmatprep.subr.mxu0 0.0
  %5321 = vmatpush1.msra.mxu0 %v128
  %5322 = vmatprep.subr.mxu0 0.0
  %5323 = vmatpush1.msra.mxu0 %v127
  %5324 = vmatprep.subr.mxu0 0.0
  %5325 = vmatpush2.msra.mxu0 0.0
  %5326 = vmatprep.subr.mxu0 0.0
  %5327 = vmatpush2.msra.mxu0 0.0
  %5328 = vmatprep.subr.mxu0 0.0
  %5329 = vmatpush2.msra.mxu0 0.0
  %5330 = vmatprep.subr.mxu0 0.0
  %5331 = vmatpush2.msra.mxu0 0.0
  %5332 = vmatprep.subr.mxu0 0.0
  %5333 = vmatpush2.msra.mxu0 0.0
  %5334 = vmatprep.subr.mxu0 0.0
  %5335 = vmatpush2.msra.mxu0 0.0
  %5336 = vmatprep.subr.mxu0 0.0
  %5337 = vmatpush2.msra.mxu0 0.0
  %5338 = vmatprep.subr.mxu0 0.0
  %5339 = vmatpush2.msra.mxu0 0.0
  %5340 = vmatprep.subr.mxu0 0.0
  %5341 = vmatpush2.msra.mxu0 0.0
  %5342 = vmatprep.subr.mxu0 0.0
  %5343 = vmatpush2.msra.mxu0 0.0
  %5344 = vmatprep.subr.mxu0 0.0
  %5345 = vmatpush2.msra.mxu0 0.0
  %5346 = vmatprep.subr.mxu0 0.0
  %5347 = vmatpush2.msra.mxu0 0.0
  %5348 = vmatprep.subr.mxu0 0.0
  %5349 = vmatpush2.msra.mxu0 0.0
  %5350 = vmatprep.subr.mxu0 0.0
  %5351 = vmatpush2.msra.mxu0 0.0
  %5352 = vmatprep.subr.mxu0 0.0
  %5353 = vmatpush2.msra.mxu0 0.0
  %5354 = vmatprep.subr.mxu0 0.0
  %5355 = vmatpush2.msra.mxu0 0.0
  %5356 = vmatprep.mubr.f32.mxu0 0.0
  %5357 = vmatmul.mubr.f32.gmra.mxu0 %v5281
  %v5358 = vpop.f32.mrf.mxu0
  %v5359 = vadd.f32 0.0, %v5358
  %v5360 = vpop.f32.mrf.mxu0
  %5361 = vmatprep.mubr.f32.mxu0 0.0
  %5362 = vmatmul.mubr.f32.gmra.mxu0 %v5284
  %v5363 = vpop.f32.mrf.mxu0
  %v5364 = vadd.f32 0.0, %v5363
  %v5365 = vpop.f32.mrf.mxu0
  %5366 = vmatprep.mubr.f32.mxu0 0.0
  %5367 = vmatmul.mubr.f32.gmra.mxu0 %v5287
  %v5368 = vpop.f32.mrf.mxu0
  %v5369 = vadd.f32 0.0, %v5368
  %v5370 = vpop.f32.mrf.mxu0
  %5371 = vmatprep.mubr.f32.mxu0 0.0
  %5372 = vmatmul.mubr.f32.gmra.mxu0 %v5290
  %v5373 = vpop.f32.mrf.mxu0
  %v5374 = vadd.f32 0.0, %v5373
  %v5375 = vpop.f32.mrf.mxu0
  %5376 = vdwg.mxu0
  %v5377 = vmul.f32 %v5359, %v156
  %v5378 = vmul.f32 %v5364, %v157
  %v5379 = vmul.f32 %v5369, %v158
  %v5380 = vmul.f32 %v5374, %v159
  %v5382 = vsel %vm550, %v5129, 0
  %v5385 = vsel %vm550, %v5130, 0
  %v5388 = vsel %vm550, %v5131, 0
  %v5391 = vsel %vm550, %v5132, 0
  %5393 = vmatprep.subr.mxu0 0.0
  %5394 = vmatpush1.msra.mxu0 0.0
  %5395 = vmatprep.subr.mxu0 0.0
  %5396 = vmatpush1.msra.mxu0 0.0
  %5397 = vmatprep.subr.mxu0 0.0
  %5398 = vmatpush1.msra.mxu0 0.0
  %5399 = vmatprep.subr.mxu0 0.0
  %5400 = vmatpush1.msra.mxu0 0.0
  %5401 = vmatprep.subr.mxu0 0.0
  %5402 = vmatpush1.msra.mxu0 0.0
  %5403 = vmatprep.subr.mxu0 0.0
  %5404 = vmatpush1.msra.mxu0 0.0
  %5405 = vmatprep.subr.mxu0 0.0
  %5406 = vmatpush1.msra.mxu0 0.0
  %5407 = vmatprep.subr.mxu0 0.0
  %5408 = vmatpush1.msra.mxu0 0.0
  %5409 = vmatprep.subr.mxu0 0.0
  %5410 = vmatpush1.msra.mxu0 0.0
  %5411 = vmatprep.subr.mxu0 0.0
  %5412 = vmatpush1.msra.mxu0 0.0
  %5413 = vmatprep.subr.mxu0 0.0
  %5414 = vmatpush1.msra.mxu0 0.0
  %5415 = vmatprep.subr.mxu0 0.0
  %5416 = vmatpush1.msra.mxu0 0.0
  %5417 = vmatprep.subr.mxu0 0.0
  %5418 = vmatpush1.msra.mxu0 %v5136
  %5419 = vmatprep.subr.mxu0 0.0
  %5420 = vmatpush1.msra.mxu0 %v5135
  %5421 = vmatprep.subr.mxu0 0.0
  %5422 = vmatpush1.msra.mxu0 %v5134
  %5423 = vmatprep.subr.mxu0 0.0
  %5424 = vmatpush1.msra.mxu0 %v5133
  %5425 = vmatprep.subr.mxu0 0.0
  %5426 = vmatpush2.msra.mxu0 0.0
  %5427 = vmatprep.subr.mxu0 0.0
  %5428 = vmatpush2.msra.mxu0 0.0
  %5429 = vmatprep.subr.mxu0 0.0
  %5430 = vmatpush2.msra.mxu0 0.0
  %5431 = vmatprep.subr.mxu0 0.0
  %5432 = vmatpush2.msra.mxu0 0.0
  %5433 = vmatprep.subr.mxu0 0.0
  %5434 = vmatpush2.msra.mxu0 0.0
  %5435 = vmatprep.subr.mxu0 0.0
  %5436 = vmatpush2.msra.mxu0 0.0
  %5437 = vmatprep.subr.mxu0 0.0
  %5438 = vmatpush2.msra.mxu0 0.0
  %5439 = vmatprep.subr.mxu0 0.0
  %5440 = vmatpush2.msra.mxu0 0.0
  %5441 = vmatprep.subr.mxu0 0.0
  %5442 = vmatpush2.msra.mxu0 0.0
  %5443 = vmatprep.subr.mxu0 0.0
  %5444 = vmatpush2.msra.mxu0 0.0
  %5445 = vmatprep.subr.mxu0 0.0
  %5446 = vmatpush2.msra.mxu0 0.0
  %5447 = vmatprep.subr.mxu0 0.0
  %5448 = vmatpush2.msra.mxu0 0.0
  %5449 = vmatprep.subr.mxu0 0.0
  %5450 = vmatpush2.msra.mxu0 0.0
  %5451 = vmatprep.subr.mxu0 0.0
  %5452 = vmatpush2.msra.mxu0 0.0
  %5453 = vmatprep.subr.mxu0 0.0
  %5454 = vmatpush2.msra.mxu0 0.0
  %5455 = vmatprep.subr.mxu0 0.0
  %5456 = vmatpush2.msra.mxu0 0.0
  %5457 = vmatprep.mubr.f32.mxu0 0.0
  %5458 = vmatmul.mubr.f32.gmra.mxu0 %v5382
  %v5459 = vpop.f32.mrf.mxu0
  %v5460 = vadd.f32 0.0, %v5459
  %v5461 = vpop.f32.mrf.mxu0
  %5462 = vmatprep.mubr.f32.mxu0 0.0
  %5463 = vmatmul.mubr.f32.gmra.mxu0 %v5385
  %v5464 = vpop.f32.mrf.mxu0
  %v5465 = vadd.f32 0.0, %v5464
  %v5466 = vpop.f32.mrf.mxu0
  %5467 = vmatprep.mubr.f32.mxu0 0.0
  %5468 = vmatmul.mubr.f32.gmra.mxu0 %v5388
  %v5469 = vpop.f32.mrf.mxu0
  %v5470 = vadd.f32 0.0, %v5469
  %v5471 = vpop.f32.mrf.mxu0
  %5472 = vmatprep.mubr.f32.mxu0 0.0
  %5473 = vmatmul.mubr.f32.gmra.mxu0 %v5391
  %v5474 = vpop.f32.mrf.mxu0
  %v5475 = vadd.f32 0.0, %v5474
  %v5476 = vpop.f32.mrf.mxu0
  %5477 = vdwg.mxu0
  %v5478 = vmul.f32 %v5183, %v5460
  %v5479 = vmul.f32 %v5186, %v5465
  %v5480 = vmul.f32 %v5189, %v5470
  %v5481 = vmul.f32 %v5192, %v5475
  %5486 = vrot.lane.b32.xlu0 %v5460, 125
  %v5487 = vpop.permute.xlu0 %5486
  %5488 = vrot.lane.b32.xlu0 %v5465, 125
  %v5489 = vpop.permute.xlu0 %5488
  %5490 = vrot.lane.b32.xlu0 %v5470, 125
  %v5491 = vpop.permute.xlu0 %5490
  %5492 = vrot.lane.b32.xlu0 %v5475, 125
  %v5493 = vpop.permute.xlu0 %5492
  %v5499 = vsel %vm550, %v5377, 0
  %v5502 = vsel %vm550, %v5378, 0
  %v5505 = vsel %vm550, %v5379, 0
  %v5508 = vsel %vm550, %v5380, 0
  %5510 = vmatprep.subr.mxu0 0.0
  %5511 = vmatpush1.msra.mxu0 0.0
  %5512 = vmatprep.subr.mxu0 0.0
  %5513 = vmatpush1.msra.mxu0 0.0
  %5514 = vmatprep.subr.mxu0 0.0
  %5515 = vmatpush1.msra.mxu0 0.0
  %5516 = vmatprep.subr.mxu0 0.0
  %5517 = vmatpush1.msra.mxu0 0.0
  %5518 = vmatprep.subr.mxu0 0.0
  %5519 = vmatpush1.msra.mxu0 0.0
  %5520 = vmatprep.subr.mxu0 0.0
  %5521 = vmatpush1.msra.mxu0 0.0
  %5522 = vmatprep.subr.mxu0 0.0
  %5523 = vmatpush1.msra.mxu0 0.0
  %5524 = vmatprep.subr.mxu0 0.0
  %5525 = vmatpush1.msra.mxu0 0.0
  %5526 = vmatprep.subr.mxu0 0.0
  %5527 = vmatpush1.msra.mxu0 0.0
  %5528 = vmatprep.subr.mxu0 0.0
  %5529 = vmatpush1.msra.mxu0 0.0
  %5530 = vmatprep.subr.mxu0 0.0
  %5531 = vmatpush1.msra.mxu0 0.0
  %5532 = vmatprep.subr.mxu0 0.0
  %5533 = vmatpush1.msra.mxu0 0.0
  %5534 = vmatprep.subr.mxu0 0.0
  %5535 = vmatpush1.msra.mxu0 %v5493
  %5536 = vmatprep.subr.mxu0 0.0
  %5537 = vmatpush1.msra.mxu0 %v5491
  %5538 = vmatprep.subr.mxu0 0.0
  %5539 = vmatpush1.msra.mxu0 %v5489
  %5540 = vmatprep.subr.mxu0 0.0
  %5541 = vmatpush1.msra.mxu0 %v5487
  %5542 = vmatprep.subr.mxu0 0.0
  %5543 = vmatpush2.msra.mxu0 0.0
  %5544 = vmatprep.subr.mxu0 0.0
  %5545 = vmatpush2.msra.mxu0 0.0
  %5546 = vmatprep.subr.mxu0 0.0
  %5547 = vmatpush2.msra.mxu0 0.0
  %5548 = vmatprep.subr.mxu0 0.0
  %5549 = vmatpush2.msra.mxu0 0.0
  %5550 = vmatprep.subr.mxu0 0.0
  %5551 = vmatpush2.msra.mxu0 0.0
  %5552 = vmatprep.subr.mxu0 0.0
  %5553 = vmatpush2.msra.mxu0 0.0
  %5554 = vmatprep.subr.mxu0 0.0
  %5555 = vmatpush2.msra.mxu0 0.0
  %5556 = vmatprep.subr.mxu0 0.0
  %5557 = vmatpush2.msra.mxu0 0.0
  %5558 = vmatprep.subr.mxu0 0.0
  %5559 = vmatpush2.msra.mxu0 0.0
  %5560 = vmatprep.subr.mxu0 0.0
  %5561 = vmatpush2.msra.mxu0 0.0
  %5562 = vmatprep.subr.mxu0 0.0
  %5563 = vmatpush2.msra.mxu0 0.0
  %5564 = vmatprep.subr.mxu0 0.0
  %5565 = vmatpush2.msra.mxu0 0.0
  %5566 = vmatprep.subr.mxu0 0.0
  %5567 = vmatpush2.msra.mxu0 0.0
  %5568 = vmatprep.subr.mxu0 0.0
  %5569 = vmatpush2.msra.mxu0 0.0
  %5570 = vmatprep.subr.mxu0 0.0
  %5571 = vmatpush2.msra.mxu0 0.0
  %5572 = vmatprep.subr.mxu0 0.0
  %5573 = vmatpush2.msra.mxu0 0.0
  %5574 = vmatprep.mubr.f32.mxu0 0.0
  %5575 = vmatmul.mubr.f32.gmra.mxu0 %v5499
  %v5576 = vpop.f32.mrf.mxu0
  %v5577 = vadd.f32 0.0, %v5576
  %v5578 = vpop.f32.mrf.mxu0
  %5579 = vmatprep.mubr.f32.mxu0 0.0
  %5580 = vmatmul.mubr.f32.gmra.mxu0 %v5502
  %v5581 = vpop.f32.mrf.mxu0
  %v5582 = vadd.f32 0.0, %v5581
  %v5583 = vpop.f32.mrf.mxu0
  %5584 = vmatprep.mubr.f32.mxu0 0.0
  %5585 = vmatmul.mubr.f32.gmra.mxu0 %v5505
  %v5586 = vpop.f32.mrf.mxu0
  %v5587 = vadd.f32 0.0, %v5586
  %v5588 = vpop.f32.mrf.mxu0
  %5589 = vmatprep.mubr.f32.mxu0 0.0
  %5590 = vmatmul.mubr.f32.gmra.mxu0 %v5508
  %v5591 = vpop.f32.mrf.mxu0
  %v5592 = vadd.f32 0.0, %v5591
  %v5593 = vpop.f32.mrf.mxu0
  %5594 = vdwg.mxu0
  %v5595 = vadd.f32 %v5478, %v5577
  %v5596 = vadd.f32 %v5479, %v5582
  %v5597 = vadd.f32 %v5480, %v5587
  %v5598 = vadd.f32 %v5481, %v5592
  %v5600 = vlaneseq
  %v5601 = vshrl.u32 %v5600, 7
  %v5602 = vsub.s32 0, %v5601
  %v5603 = vrot.slane %v5137, %v5602
  %v5605 = vadd.f32 %v5595, %v5603
  %v5606 = vadd.f32 %v5596, %v5603
  %v5607 = vadd.f32 %v5597, %v5603
  %v5608 = vadd.f32 %v5598, %v5603
  %vm5609 = vcmask 23552
  %5610 = vst.msk [vmem:[%s15] sm:$0xff] %vm5609, %v5605
  %5611 = vst.msk [vmem:[%s15 + $0x8] sm:$0xff] %vm5609, %v5606
  %5612 = vst.msk [vmem:[%s15 + $0x10] sm:$0xff] %vm5609, %v5607
  %5613 = vst.msk [vmem:[%s15 + $0x18] sm:$0xff] %vm5609, %v5608
  // Predicated region
  $region62: #{semgcn_forward.1} parent=0 // pred_check
    _
  $region63: #{semgcn_forward.1} parent=0 // pred_check_branch
    %5615 = sbr.rel (0) target = $region65
  $region64: #{semgcn_forward.1} parent=0 // pred_region
    _
  $region65: #{semgcn_forward.1} parent=0 // pred_fallthru
    _
  // Predicated region
  $region66: #{semgcn_forward.1} parent=0 // pred_check
    _
  $region67: #{semgcn_forward.1} parent=0 // pred_check_branch
    %5617 = sbr.rel (0) target = $region69
  $region68: #{semgcn_forward.1} parent=0 // pred_region
    _
  $region69: #{semgcn_forward.1} parent=0 // pred_fallthru
    _

</llo_original>
